<compile_context>
chip_gen: v6e
topology: v6e:2x2x1
jax: 0.10.0
libtpu: 0.0.40
codegen_flags: <defaults>
</compile_context>

<pallas_src>
import functools
import numpy as np

import jax
import jax.numpy as jnp
from jax.experimental import pallas as pl
from jax.experimental.pallas import tpu as pltpu

_VMEM_LIMIT = 32 * 1024 * 1024     # explicit scoped-VMEM budget (safe on v5e/v6e/v7x)
_NEG_SLOPE = 0.2
_IN_EPS = 1e-5

_TAPS = [(a, b, c) for a in range(2) for b in range(2) for c in range(2)]
_PARITIES = _TAPS   # same (rd, rh, rw) enumeration order


# ----------------------------------------------------------------------------
# In-kernel helpers (pure jnp, f32)
# ----------------------------------------------------------------------------
def _smish(x):
    """Smish(x) = x * tanh(log1p(sigmoid(x))) via the exact rational form
    tanh(log(1+s)) = (s^2+2s)/(s^2+2s+2), s = sigmoid(x)."""
    s = 1.0 / (1.0 + jnp.exp(-x))
    t = s * (s + 2.0)
    return x * t / (t + 2.0)


def _leaky(x):
    return jnp.where(x >= 0.0, x, _NEG_SLOPE * x)


def _instance_norm(x):
    """InstanceNorm over all rows (spatial positions) of x [M, C], biased variance."""
    inv = 1.0 / x.shape[0]
    mean = jnp.sum(x, axis=0, keepdims=True) * inv
    xc = x - mean
    var = jnp.sum(xc * xc, axis=0, keepdims=True) * inv
    return xc * jax.lax.rsqrt(var + _IN_EPS)


# ----------------------------------------------------------------------------
# The fused 4-layer kernel (one grid step = one sample, everything in VMEM)
# ----------------------------------------------------------------------------
def fused_disc_kernel(p1_ref, w1_ref, b1_ref, perm_ref, w2_ref, b2_ref,
                      w3_ref, b3_ref, w4_ref, b4_ref, o_ref, z2_ref, z3_ref,
                      *, n1, n2, n3, c1, c2, c3):
    """n1/n2/n3: output spatial extent per axis of layers 1/2/3 (8/4/2 for a 16^3 input).
    c1/c2/c3: output channels (32/64/128).
    z2_ref: [(n2+1),(n2+1),(n2+1), 8*c1] f32  space-to-depth'ed padded layer-2 input.
    z3_ref: [(n3+1),(n3+1),(n3+1), 8*c2] f32  space-to-depth'ed padded layer-3 input."""
    # Zero the scratch so the padded (never-written) phase cells are zero.
    z2_ref[...] = jnp.zeros_like(z2_ref)
    z3_ref[...] = jnp.zeros_like(z3_ref)

    # ---- Layer 1: Conv3d(1,32,4,s=2,p=1) + Smish + LeakyReLU --------------------------
    # One lane-dense matmul; im2col rows were built parity-major in the glue.
    a1 = jnp.dot(p1_ref[0], w1_ref[...], preferred_element_type=jnp.float32)   # [n1^3, c1]
    a1 = _leaky(_smish(a1 + b1_ref[...]))
    m1 = n1 // 2
    blk1 = m1 * m1 * m1
    for r, (rd, rh, rw) in enumerate(_PARITIES):
        c0 = (((1 - rd) * 2 + (1 - rh)) * 2 + (1 - rw)) * c1
        blk = a1[r * blk1:(r + 1) * blk1, :].reshape(m1, m1, m1, c1)
        z2_ref[rd:rd + m1, rh:rh + m1, rw:rw + m1, c0:c0 + c1] = blk

    # ---- Layer 2: Conv3d(32,64,4,s=2,p=1) + Smish + InstanceNorm + LeakyReLU ----------
    z2 = z2_ref[...].astype(jnp.bfloat16)                 # single cast, reused by all 8 taps
    m2rows = n2 * n2 * n2
    acc2 = jnp.zeros((m2rows, c2), jnp.float32)
    for t, (qd, qh, qw) in enumerate(_TAPS):
        zt = z2[qd:qd + n2, qh:qh + n2, qw:qw + n2, :].reshape(m2rows, 8 * c1)
        acc2 = acc2 + jnp.dot(zt, w2_ref[t], preferred_element_type=jnp.float32)
    a2 = _leaky(_instance_norm(_smish(acc2 + b2_ref[...])))
    # Row-permute to parity-major with one tiny MXU matmul (exact up to the bf16 cast that
    # the next layer's MXU feed needs anyway).
    a2 = jnp.dot(perm_ref[...], a2.astype(jnp.bfloat16), preferred_element_type=jnp.float32)
    m2 = n2 // 2
    blk2 = m2 * m2 * m2
    for r, (rd, rh, rw) in enumerate(_PARITIES):
        c0 = (((1 - rd) * 2 + (1 - rh)) * 2 + (1 - rw)) * c2
        blk = a2[r * blk2:(r + 1) * blk2, :].reshape(m2, m2, m2, c2)
        z3_ref[rd:rd + m2, rh:rh + m2, rw:rw + m2, c0:c0 + c2] = blk

    # ---- Layer 3: Conv3d(64,128,4,s=2,p=1) + Smish + InstanceNorm + LeakyReLU ---------
    z3 = z3_ref[...].astype(jnp.bfloat16)
    m3rows = n3 * n3 * n3
    acc3 = jnp.zeros((m3rows, c3), jnp.float32)
    for t, (qd, qh, qw) in enumerate(_TAPS):
        zt = z3[qd:qd + n3, qh:qh + n3, qw:qw + n3, :].reshape(m3rows, 8 * c2)
        acc3 = acc3 + jnp.dot(zt, w3_ref[t], preferred_element_type=jnp.float32)
    a3 = _leaky(_instance_norm(_smish(acc3 + b3_ref[...])))                    # [8, 128] f32

    # ---- Layer 4: Conv3d(128,1,4,s=1,p=1) on 2^3 -> one voxel, + Smish ----------------
    # The 4^3 kernel covers the whole padded input; only the centre 2x2x2 weight slab hits
    # non-zero data, so this is an 8x128 multiply + full reduce (VPU/XLU, no N=1 MXU column).
    prod = a3 * w4_ref[...]
    red = jnp.sum(prod, axis=1, keepdims=True)            # lane reduce   -> [8, 1]
    red = jnp.sum(red, axis=0, keepdims=True)             # sublane reduce -> [1, 1]
    o_ref[0] = _smish(red + b4_ref[...])


# ----------------------------------------------------------------------------
# Cheap JAX glue: layer-1 im2col (parity-major rows), done once per forward.
# ----------------------------------------------------------------------------
def _build_l1_patches(x_ndhwc):
    """x: [N, D, H, W, 1] f32 -> [N, (D/2)^3, 64] bf16 im2col for the k=4,s=2,p=1,Cin=1 conv.
    Rows are parity-major (rd,rh,rw, md,mh,mw) so the kernel's layer-2 scatter is 8
    contiguous block writes.  Columns are (kd,kh,kw)."""
    n, d, h, w, _ = x_ndhwc.shape
    xp = jnp.pad(x_ndhwc[..., 0], ((0, 0), (1, 1), (1, 1), (1, 1)))
    n1 = d // 2
    cols = []
    for kd in range(4):
        for kh in range(4):
            for kw in range(4):
                cols.append(xp[:, kd:kd + 2 * n1 - 1:2,
                               kh:kh + 2 * n1 - 1:2,
                               kw:kw + 2 * n1 - 1:2])
    pat = jnp.stack(cols, axis=-1)                                   # [N, n1, n1, n1, 64]
    pat = pat.reshape(n, n1 // 2, 2, n1 // 2, 2, n1 // 2, 2, 64)     # od = 2*md + rd
    pat = pat.transpose(0, 2, 4, 6, 1, 3, 5, 7)                      # (rd,rh,rw,md,mh,mw)
    return pat.reshape(n, n1 * n1 * n1, 64).astype(jnp.bfloat16)


def _parity_perm(n):
    """Row-permutation matrix mapping (od,oh,ow)-ordered rows to parity-major order."""
    m = n // 2
    size = n * n * n
    perm = np.zeros((size, size), np.float32)
    row = 0
    for rd in range(2):
        for rh in range(2):
            for rw in range(2):
                for md in range(m):
                    for mh in range(m):
                        for mw in range(m):
                            src = ((2 * md + rd) * n + (2 * mh + rh)) * n + (2 * mw + rw)
                            perm[row, src] = 1.0
                            row += 1
    return jnp.asarray(perm, jnp.bfloat16)


def prep_conv_weight(w, s):
    """PyTorch Conv3d weight [Cout, Cin, k, k, k] -> per-tap matrices
    [(k//s)^3, s^3*Cin, Cout] matching the space-to-depth channel order (pd,ph,pw,cin)."""
    cout, cin, k = w.shape[0], w.shape[1], w.shape[2]
    kq = k // s
    wt = jnp.transpose(w, (2, 3, 4, 1, 0))                # [kd,kh,kw,cin,cout]
    wt = wt.reshape(kq, s, kq, s, kq, s, cin, cout)       # kd = s*qd + pd, ...
    wt = wt.transpose(0, 2, 4, 1, 3, 5, 6, 7)             # [qd,qh,qw,pd,ph,pw,cin,cout]
    return wt.reshape(kq ** 3, s ** 3 * cin, cout)


# ----------------------------------------------------------------------------
# Parameter construction (spectral norm = power iteration, init-time preprocessing)
# ----------------------------------------------------------------------------
def spectral_normalize(w, key, n_iter=1, eps=1e-12):
    cout = w.shape[0]
    w_mat = w.reshape(cout, -1)
    u = jax.random.normal(key, (cout,), dtype=w.dtype)
    u = u / (jnp.linalg.norm(u) + eps)
    v = None
    for _ in range(n_iter):
        v = w_mat.T @ u
        v = v / (jnp.linalg.norm(v) + eps)
        u = w_mat @ v
        u = u / (jnp.linalg.norm(u) + eps)
    sigma = u @ (w_mat @ v)
    return w / sigma


def make_conv_params(key, cin, cout, k):
    kw, kb, ku = jax.random.split(key, 3)
    fan_in = cin * k ** 3
    bound = 1.0 / (fan_in ** 0.5)
    w = jax.random.uniform(kw, (cout, cin, k, k, k), jnp.float32, -bound, bound)
    b = jax.random.uniform(kb, (cout,), jnp.float32, -bound, bound)
    return spectral_normalize(w, ku), b


def init_params(key):
    k1, k2, k3, k4 = jax.random.split(key, 4)
    w1, b1 = make_conv_params(k1, 1, 32, 4)
    w2, b2 = make_conv_params(k2, 32, 64, 4)
    w3, b3 = make_conv_params(k3, 64, 128, 4)
    w4, b4 = make_conv_params(k4, 128, 1, 4)
    return dict(
        # layer 1: (kd,kh,kw,cin)->cout matrix; columns match the glue im2col ordering.
        w1=jnp.transpose(w1, (2, 3, 4, 1, 0)).reshape(64, 32).astype(jnp.bfloat16),
        b1=b1.reshape(1, 32),
        # layers 2/3: per-tap matrices for the space-to-depth'ed VMEM activations.
        w2=prep_conv_weight(w2, 2).astype(jnp.bfloat16),
        b2=b2.reshape(1, 64),
        w3=prep_conv_weight(w3, 2).astype(jnp.bfloat16),
        b3=b3.reshape(1, 128),
        # layer 4 (k=4,s=1,p=1 on a 2^3 input -> 1 voxel): only the centre 2x2x2 slab matters.
        w4=jnp.transpose(w4[0, :, 1:3, 1:3, 1:3], (1, 2, 3, 0)).reshape(8, 128),
        b4=b4.reshape(1, 1),
        perm=_parity_perm(4),
    )


# ----------------------------------------------------------------------------
# Forward pass: one pallas_call for the whole network
# ----------------------------------------------------------------------------
def spectral_discriminator_forward(x_ncdhw, params):
    """x_ncdhw: [N, 1, D, H, W] (PyTorch layout). Returns [N, 1, 1, 1, 1]."""
    n, cin, d, h, w = x_ncdhw.shape
    assert cin == 1
    assert d == h == w == 16, "fused kernel is specialized to 16^3 inputs"

    x = jnp.transpose(x_ncdhw, (0, 2, 3, 4, 1)).astype(jnp.float32)   # -> NDHWC
    patches1 = _build_l1_patches(x)                                   # [N, 512, 64] bf16

    n1, n2, n3 = 8, 4, 2
    c1, c2, c3 = 32, 64, 128
    kernel = functools.partial(fused_disc_kernel, n1=n1, n2=n2, n3=n3,
                               c1=c1, c2=c2, c3=c3)

    out = pl.pallas_call(
        kernel,
        out_shape=jax.ShapeDtypeStruct((n, 1, 1), jnp.float32),
        grid=(n,),
        in_specs=[
            pl.BlockSpec((1, n1 ** 3, 64), lambda i: (i, 0, 0)),      # per-sample im2col
            pl.BlockSpec((64, c1), lambda i: (0, 0)),                 # w1 (resident)
            pl.BlockSpec((1, c1), lambda i: (0, 0)),                  # b1
            pl.BlockSpec((n2 ** 3, n2 ** 3), lambda i: (0, 0)),       # parity permutation
            pl.BlockSpec((8, 8 * c1, c2), lambda i: (0, 0, 0)),       # w2 taps
            pl.BlockSpec((1, c2), lambda i: (0, 0)),                  # b2
            pl.BlockSpec((8, 8 * c2, c3), lambda i: (0, 0, 0)),       # w3 taps
            pl.BlockSpec((1, c3), lambda i: (0, 0)),                  # b3
            pl.BlockSpec((8, c3), lambda i: (0, 0)),                  # w4 centre slab
            pl.BlockSpec((1, 1), lambda i: (0, 0)),                   # b4
        ],
        out_specs=pl.BlockSpec((1, 1, 1), lambda i: (i, 0, 0)),
        scratch_shapes=[
            pltpu.VMEM((n2 + 1, n2 + 1, n2 + 1, 8 * c1), jnp.float32),  # layer-2 s2d input
            pltpu.VMEM((n3 + 1, n3 + 1, n3 + 1, 8 * c2), jnp.float32),  # layer-3 s2d input
        ],
        compiler_params=pltpu.CompilerParams(
            dimension_semantics=("parallel",),
            vmem_limit_bytes=_VMEM_LIMIT),
    )(patches1, params["w1"], params["b1"], params["perm"],
      params["w2"], params["b2"], params["w3"], params["b3"],
      params["w4"], params["b4"])

    return out.reshape(n, 1, 1, 1, 1)


if __name__ == "__main__":
    key = jax.random.PRNGKey(0)
    k_in, k_par = jax.random.split(key)

    # PyTorch-style input: [batch=2, channels=1, D=16, H=16, W=16]
    x = jax.random.normal(k_in, (2, 1, 16, 16, 16), dtype=jnp.float32)
    params = init_params(k_par)

    fwd = jax.jit(spectral_discriminator_forward)
    y = fwd(x, params)
    jax.block_until_ready(y)

    assert y.shape == (2, 1, 1, 1, 1), y.shape
    assert bool(jnp.all(jnp.isfinite(y)))
    print("KERNEL_OK")
</pallas_src>

<mosaic_0001>
module attributes {stable_mosaic.version = 11 : i64} {
  func.func @fused_disc_kernel(%arg0: i32, %arg1: memref<1x512x64xbf16, #tpu.memory_space<vmem>>, %arg2: memref<64x32xbf16, #tpu.memory_space<vmem>>, %arg3: memref<1x32xf32, #tpu.memory_space<vmem>>, %arg4: memref<64x64xbf16, #tpu.memory_space<vmem>>, %arg5: memref<8x256x64xbf16, #tpu.memory_space<vmem>>, %arg6: memref<1x64xf32, #tpu.memory_space<vmem>>, %arg7: memref<8x512x128xbf16, #tpu.memory_space<vmem>>, %arg8: memref<1x128xf32, #tpu.memory_space<vmem>>, %arg9: memref<8x128xf32, #tpu.memory_space<vmem>>, %arg10: memref<1x1xf32, #tpu.memory_space<vmem>>, %arg11: memref<1x1x1xf32, #tpu.memory_space<vmem>>, %arg12: memref<5x5x5x256xf32, #tpu.memory_space<vmem>>, %arg13: memref<3x3x3x512xf32, #tpu.memory_space<vmem>>) attributes {dimension_semantics = [#tpu.dimension_semantics<parallel>], iteration_bounds = array<i64: 2>, scalar_prefetch = 0 : i64, scratch_operands = 2 : i64, tpu.core_type = #tpu.core_type<tc>, window_params = [{transform_indices = @transform_0, window_bounds = array<i64: 1, 512, 64>}, {pipeline_mode = #tpu.pipeline_mode<synchronous>, transform_indices = @transform_1, window_bounds = array<i64: 64, 32>}, {pipeline_mode = #tpu.pipeline_mode<synchronous>, transform_indices = @transform_2, window_bounds = array<i64: 1, 32>}, {pipeline_mode = #tpu.pipeline_mode<synchronous>, transform_indices = @transform_3, window_bounds = array<i64: 64, 64>}, {pipeline_mode = #tpu.pipeline_mode<synchronous>, transform_indices = @transform_4, window_bounds = array<i64: 8, 256, 64>}, {pipeline_mode = #tpu.pipeline_mode<synchronous>, transform_indices = @transform_5, window_bounds = array<i64: 1, 64>}, {pipeline_mode = #tpu.pipeline_mode<synchronous>, transform_indices = @transform_6, window_bounds = array<i64: 8, 512, 128>}, {pipeline_mode = #tpu.pipeline_mode<synchronous>, transform_indices = @transform_7, window_bounds = array<i64: 1, 128>}, {pipeline_mode = #tpu.pipeline_mode<synchronous>, transform_indices = @transform_8, window_bounds = array<i64: 8, 128>}, {pipeline_mode = #tpu.pipeline_mode<synchronous>, transform_indices = @transform_9, window_bounds = array<i64: 1, 1>}, {transform_indices = @transform_10, window_bounds = array<i64: 1, 1, 1>}]} {
    %cst = arith.constant 0.000000e+00 : f32
    %0 = vector.broadcast %cst : f32 to vector<5x5x5x256xf32>
    %c0 = arith.constant 0 : index
    %c0_0 = arith.constant 0 : index
    %c0_1 = arith.constant 0 : index
    %c0_2 = arith.constant 0 : index
    %1 = vector.load %arg12[%c0, %c0_0, %c0_1, %c0_2] : memref<5x5x5x256xf32, #tpu.memory_space<vmem>>, vector<5x5x5x256xf32>
    tpu.vector_store %arg12[%c0, %c0_0, %c0_1, %c0_2], %0 {strides = array<i32>} : memref<5x5x5x256xf32, #tpu.memory_space<vmem>>, vector<5x5x5x256xf32>,
    %cst_3 = arith.constant 0.000000e+00 : f32
    %2 = vector.broadcast %cst_3 : f32 to vector<3x3x3x512xf32>
    %c0_4 = arith.constant 0 : index
    %c0_5 = arith.constant 0 : index
    %c0_6 = arith.constant 0 : index
    %c0_7 = arith.constant 0 : index
    %3 = vector.load %arg13[%c0_4, %c0_5, %c0_6, %c0_7] : memref<3x3x3x512xf32, #tpu.memory_space<vmem>>, vector<3x3x3x512xf32>
    tpu.vector_store %arg13[%c0_4, %c0_5, %c0_6, %c0_7], %2 {strides = array<i32>} : memref<3x3x3x512xf32, #tpu.memory_space<vmem>>, vector<3x3x3x512xf32>,
    %c0_8 = arith.constant 0 : index
    %c0_9 = arith.constant 0 : index
    %c0_10 = arith.constant 0 : index
    %4 = vector.load %arg1[%c0_8, %c0_9, %c0_10] : memref<1x512x64xbf16, #tpu.memory_space<vmem>>, vector<1x512x64xbf16>
    %5 = vector.shape_cast %4 : vector<1x512x64xbf16> to vector<512x64xbf16>
    %c0_11 = arith.constant 0 : index
    %c0_12 = arith.constant 0 : index
    %6 = vector.load %arg2[%c0_11, %c0_12] : memref<64x32xbf16, #tpu.memory_space<vmem>>, vector<64x32xbf16>
    %cst_13 = arith.constant dense<0.000000e+00> : vector<512x32xf32>
    %7 = tpu.matmul %5, %6, %cst_13 {dimension_numbers = #tpu.dot_dimension_numbers<[1], [0], [0], [1], [0, 0, 1, 1], [], []>} : vector<512x64xbf16>, vector<64x32xbf16>, vector<512x32xf32> -> vector<512x32xf32>
    %c0_14 = arith.constant 0 : index
    %c0_15 = arith.constant 0 : index
    %8 = vector.load %arg3[%c0_14, %c0_15] : memref<1x32xf32, #tpu.memory_space<vmem>>, vector<1x32xf32>
    %9 = vector.broadcast %8 : vector<1x32xf32> to vector<512x32xf32>
    %10 = arith.addf %7, %9 : vector<512x32xf32>
    %cst_16 = arith.constant 0.000000e+00 : f32
    %11 = vector.broadcast %cst_16 : f32 to vector<512x32xf32>
    %12 = arith.subf %11, %10 : vector<512x32xf32>
    %13 = math.exp %12 : vector<512x32xf32>
    %cst_17 = arith.constant 1.000000e+00 : f32
    %14 = vector.broadcast %cst_17 : f32 to vector<512x32xf32>
    %15 = arith.addf %14, %13 : vector<512x32xf32>
    %cst_18 = arith.constant 1.000000e+00 : f32
    %16 = vector.broadcast %cst_18 : f32 to vector<512x32xf32>
    %17 = arith.divf %16, %15 : vector<512x32xf32>
    %cst_19 = arith.constant 2.000000e+00 : f32
    %18 = vector.broadcast %cst_19 : f32 to vector<512x32xf32>
    %19 = arith.addf %17, %18 : vector<512x32xf32>
    %20 = arith.mulf %17, %19 : vector<512x32xf32>
    %21 = arith.mulf %10, %20 : vector<512x32xf32>
    %cst_20 = arith.constant 2.000000e+00 : f32
    %22 = vector.broadcast %cst_20 : f32 to vector<512x32xf32>
    %23 = arith.addf %20, %22 : vector<512x32xf32>
    %24 = arith.divf %21, %23 : vector<512x32xf32>
    %cst_21 = arith.constant 0.000000e+00 : f32
    %25 = vector.broadcast %cst_21 : f32 to vector<512x32xf32>
    %26 = arith.cmpf oge, %24, %25 : vector<512x32xf32>
    %cst_22 = arith.constant 2.000000e-01 : f32
    %27 = vector.broadcast %cst_22 : f32 to vector<512x32xf32>
    %28 = arith.mulf %27, %24 : vector<512x32xf32>
    %29 = arith.select %26, %24, %28 : vector<512x32xi1>, vector<512x32xf32>
    %30 = vector.extract_strided_slice %29 {offsets = [0, 0], sizes = [64, 32], strides = [1, 1]} : vector<512x32xf32> to vector<64x32xf32>
    %31 = vector.shape_cast %30 : vector<64x32xf32> to vector<4x4x4x32xf32>
    %c0_23 = arith.constant 0 : index
    %c0_24 = arith.constant 0 : index
    %c0_25 = arith.constant 0 : index
    %c224 = arith.constant 224 : index
    %32 = vector.load %arg12[%c0_23, %c0_24, %c0_25, %c224] : memref<5x5x5x256xf32, #tpu.memory_space<vmem>>, vector<4x4x4x32xf32>
    tpu.vector_store %arg12[%c0_23, %c0_24, %c0_25, %c224], %31 {strides = array<i32>} : memref<5x5x5x256xf32, #tpu.memory_space<vmem>>, vector<4x4x4x32xf32>,
    %33 = vector.extract_strided_slice %29 {offsets = [64, 0], sizes = [64, 32], strides = [1, 1]} : vector<512x32xf32> to vector<64x32xf32>
    %34 = vector.shape_cast %33 : vector<64x32xf32> to vector<4x4x4x32xf32>
    %c0_26 = arith.constant 0 : index
    %c0_27 = arith.constant 0 : index
    %c1 = arith.constant 1 : index
    %c192 = arith.constant 192 : index
    %35 = vector.load %arg12[%c0_26, %c0_27, %c1, %c192] : memref<5x5x5x256xf32, #tpu.memory_space<vmem>>, vector<4x4x4x32xf32>
    tpu.vector_store %arg12[%c0_26, %c0_27, %c1, %c192], %34 {strides = array<i32>} : memref<5x5x5x256xf32, #tpu.memory_space<vmem>>, vector<4x4x4x32xf32>,
    %36 = vector.extract_strided_slice %29 {offsets = [128, 0], sizes = [64, 32], strides = [1, 1]} : vector<512x32xf32> to vector<64x32xf32>
    %37 = vector.shape_cast %36 : vector<64x32xf32> to vector<4x4x4x32xf32>
    %c0_28 = arith.constant 0 : index
    %c1_29 = arith.constant 1 : index
    %c0_30 = arith.constant 0 : index
    %c160 = arith.constant 160 : index
    %38 = vector.load %arg12[%c0_28, %c1_29, %c0_30, %c160] : memref<5x5x5x256xf32, #tpu.memory_space<vmem>>, vector<4x4x4x32xf32>
    tpu.vector_store %arg12[%c0_28, %c1_29, %c0_30, %c160], %37 {strides = array<i32>} : memref<5x5x5x256xf32, #tpu.memory_space<vmem>>, vector<4x4x4x32xf32>,
    %39 = vector.extract_strided_slice %29 {offsets = [192, 0], sizes = [64, 32], strides = [1, 1]} : vector<512x32xf32> to vector<64x32xf32>
    %40 = vector.shape_cast %39 : vector<64x32xf32> to vector<4x4x4x32xf32>
    %c0_31 = arith.constant 0 : index
    %c1_32 = arith.constant 1 : index
    %c1_33 = arith.constant 1 : index
    %c128 = arith.constant 128 : index
    %41 = vector.load %arg12[%c0_31, %c1_32, %c1_33, %c128] : memref<5x5x5x256xf32, #tpu.memory_space<vmem>>, vector<4x4x4x32xf32>
    tpu.vector_store %arg12[%c0_31, %c1_32, %c1_33, %c128], %40 {strides = array<i32>} : memref<5x5x5x256xf32, #tpu.memory_space<vmem>>, vector<4x4x4x32xf32>,
    %42 = vector.extract_strided_slice %29 {offsets = [256, 0], sizes = [64, 32], strides = [1, 1]} : vector<512x32xf32> to vector<64x32xf32>
    %43 = vector.shape_cast %42 : vector<64x32xf32> to vector<4x4x4x32xf32>
    %c1_34 = arith.constant 1 : index
    %c0_35 = arith.constant 0 : index
    %c0_36 = arith.constant 0 : index
    %c96 = arith.constant 96 : index
    %44 = vector.load %arg12[%c1_34, %c0_35, %c0_36, %c96] : memref<5x5x5x256xf32, #tpu.memory_space<vmem>>, vector<4x4x4x32xf32>
    tpu.vector_store %arg12[%c1_34, %c0_35, %c0_36, %c96], %43 {strides = array<i32>} : memref<5x5x5x256xf32, #tpu.memory_space<vmem>>, vector<4x4x4x32xf32>,
    %45 = vector.extract_strided_slice %29 {offsets = [320, 0], sizes = [64, 32], strides = [1, 1]} : vector<512x32xf32> to vector<64x32xf32>
    %46 = vector.shape_cast %45 : vector<64x32xf32> to vector<4x4x4x32xf32>
    %c1_37 = arith.constant 1 : index
    %c0_38 = arith.constant 0 : index
    %c1_39 = arith.constant 1 : index
    %c64 = arith.constant 64 : index
    %47 = vector.load %arg12[%c1_37, %c0_38, %c1_39, %c64] : memref<5x5x5x256xf32, #tpu.memory_space<vmem>>, vector<4x4x4x32xf32>
    tpu.vector_store %arg12[%c1_37, %c0_38, %c1_39, %c64], %46 {strides = array<i32>} : memref<5x5x5x256xf32, #tpu.memory_space<vmem>>, vector<4x4x4x32xf32>,
    %48 = vector.extract_strided_slice %29 {offsets = [384, 0], sizes = [64, 32], strides = [1, 1]} : vector<512x32xf32> to vector<64x32xf32>
    %49 = vector.shape_cast %48 : vector<64x32xf32> to vector<4x4x4x32xf32>
    %c1_40 = arith.constant 1 : index
    %c1_41 = arith.constant 1 : index
    %c0_42 = arith.constant 0 : index
    %c32 = arith.constant 32 : index
    %50 = vector.load %arg12[%c1_40, %c1_41, %c0_42, %c32] : memref<5x5x5x256xf32, #tpu.memory_space<vmem>>, vector<4x4x4x32xf32>
    tpu.vector_store %arg12[%c1_40, %c1_41, %c0_42, %c32], %49 {strides = array<i32>} : memref<5x5x5x256xf32, #tpu.memory_space<vmem>>, vector<4x4x4x32xf32>,
    %51 = vector.extract_strided_slice %29 {offsets = [448, 0], sizes = [64, 32], strides = [1, 1]} : vector<512x32xf32> to vector<64x32xf32>
    %52 = vector.shape_cast %51 : vector<64x32xf32> to vector<4x4x4x32xf32>
    %c1_43 = arith.constant 1 : index
    %c1_44 = arith.constant 1 : index
    %c1_45 = arith.constant 1 : index
    %c0_46 = arith.constant 0 : index
    %53 = vector.load %arg12[%c1_43, %c1_44, %c1_45, %c0_46] : memref<5x5x5x256xf32, #tpu.memory_space<vmem>>, vector<4x4x4x32xf32>
    tpu.vector_store %arg12[%c1_43, %c1_44, %c1_45, %c0_46], %52 {strides = array<i32>} : memref<5x5x5x256xf32, #tpu.memory_space<vmem>>, vector<4x4x4x32xf32>,
    %c0_47 = arith.constant 0 : index
    %c0_48 = arith.constant 0 : index
    %c0_49 = arith.constant 0 : index
    %c0_50 = arith.constant 0 : index
    %54 = vector.load %arg12[%c0_47, %c0_48, %c0_49, %c0_50] : memref<5x5x5x256xf32, #tpu.memory_space<vmem>>, vector<5x5x5x256xf32>
    %55 = arith.truncf %54 : vector<5x5x5x256xf32> to vector<5x5x5x256xbf16>
    %cst_51 = arith.constant 0.000000e+00 : f32
    %56 = vector.broadcast %cst_51 : f32 to vector<64x64xf32>
    %57 = vector.extract_strided_slice %55 {offsets = [0, 0, 0, 0], sizes = [4, 4, 4, 256], strides = [1, 1, 1, 1]} : vector<5x5x5x256xbf16> to vector<4x4x4x256xbf16>
    %58 = vector.shape_cast %57 : vector<4x4x4x256xbf16> to vector<64x256xbf16>
    %c0_52 = arith.constant 0 : index
    %c0_53 = arith.constant 0 : index
    %c0_54 = arith.constant 0 : index
    %59 = vector.load %arg5[%c0_52, %c0_53, %c0_54] : memref<8x256x64xbf16, #tpu.memory_space<vmem>>, vector<1x256x64xbf16>
    %60 = vector.shape_cast %59 : vector<1x256x64xbf16> to vector<256x64xbf16>
    %cst_55 = arith.constant dense<0.000000e+00> : vector<64x64xf32>
    %61 = tpu.matmul %58, %60, %cst_55 {dimension_numbers = #tpu.dot_dimension_numbers<[1], [0], [0], [1], [0, 0, 1, 1], [], []>} : vector<64x256xbf16>, vector<256x64xbf16>, vector<64x64xf32> -> vector<64x64xf32>
    %62 = arith.addf %56, %61 : vector<64x64xf32>
    %63 = vector.extract_strided_slice %55 {offsets = [0, 0, 1, 0], sizes = [4, 4, 4, 256], strides = [1, 1, 1, 1]} : vector<5x5x5x256xbf16> to vector<4x4x4x256xbf16>
    %64 = vector.shape_cast %63 : vector<4x4x4x256xbf16> to vector<64x256xbf16>
    %c1_56 = arith.constant 1 : index
    %c0_57 = arith.constant 0 : index
    %c0_58 = arith.constant 0 : index
    %65 = vector.load %arg5[%c1_56, %c0_57, %c0_58] : memref<8x256x64xbf16, #tpu.memory_space<vmem>>, vector<1x256x64xbf16>
    %66 = vector.shape_cast %65 : vector<1x256x64xbf16> to vector<256x64xbf16>
    %cst_59 = arith.constant dense<0.000000e+00> : vector<64x64xf32>
    %67 = tpu.matmul %64, %66, %cst_59 {dimension_numbers = #tpu.dot_dimension_numbers<[1], [0], [0], [1], [0, 0, 1, 1], [], []>} : vector<64x256xbf16>, vector<256x64xbf16>, vector<64x64xf32> -> vector<64x64xf32>
    %68 = arith.addf %62, %67 : vector<64x64xf32>
    %69 = vector.extract_strided_slice %55 {offsets = [0, 1, 0, 0], sizes = [4, 4, 4, 256], strides = [1, 1, 1, 1]} : vector<5x5x5x256xbf16> to vector<4x4x4x256xbf16>
    %70 = vector.shape_cast %69 : vector<4x4x4x256xbf16> to vector<64x256xbf16>
    %c2 = arith.constant 2 : index
    %c0_60 = arith.constant 0 : index
    %c0_61 = arith.constant 0 : index
    %71 = vector.load %arg5[%c2, %c0_60, %c0_61] : memref<8x256x64xbf16, #tpu.memory_space<vmem>>, vector<1x256x64xbf16>
    %72 = vector.shape_cast %71 : vector<1x256x64xbf16> to vector<256x64xbf16>
    %cst_62 = arith.constant dense<0.000000e+00> : vector<64x64xf32>
    %73 = tpu.matmul %70, %72, %cst_62 {dimension_numbers = #tpu.dot_dimension_numbers<[1], [0], [0], [1], [0, 0, 1, 1], [], []>} : vector<64x256xbf16>, vector<256x64xbf16>, vector<64x64xf32> -> vector<64x64xf32>
    %74 = arith.addf %68, %73 : vector<64x64xf32>
    %75 = vector.extract_strided_slice %55 {offsets = [0, 1, 1, 0], sizes = [4, 4, 4, 256], strides = [1, 1, 1, 1]} : vector<5x5x5x256xbf16> to vector<4x4x4x256xbf16>
    %76 = vector.shape_cast %75 : vector<4x4x4x256xbf16> to vector<64x256xbf16>
    %c3 = arith.constant 3 : index
    %c0_63 = arith.constant 0 : index
    %c0_64 = arith.constant 0 : index
    %77 = vector.load %arg5[%c3, %c0_63, %c0_64] : memref<8x256x64xbf16, #tpu.memory_space<vmem>>, vector<1x256x64xbf16>
    %78 = vector.shape_cast %77 : vector<1x256x64xbf16> to vector<256x64xbf16>
    %cst_65 = arith.constant dense<0.000000e+00> : vector<64x64xf32>
    %79 = tpu.matmul %76, %78, %cst_65 {dimension_numbers = #tpu.dot_dimension_numbers<[1], [0], [0], [1], [0, 0, 1, 1], [], []>} : vector<64x256xbf16>, vector<256x64xbf16>, vector<64x64xf32> -> vector<64x64xf32>
    %80 = arith.addf %74, %79 : vector<64x64xf32>
    %81 = vector.extract_strided_slice %55 {offsets = [1, 0, 0, 0], sizes = [4, 4, 4, 256], strides = [1, 1, 1, 1]} : vector<5x5x5x256xbf16> to vector<4x4x4x256xbf16>
    %82 = vector.shape_cast %81 : vector<4x4x4x256xbf16> to vector<64x256xbf16>
    %c4 = arith.constant 4 : index
    %c0_66 = arith.constant 0 : index
    %c0_67 = arith.constant 0 : index
    %83 = vector.load %arg5[%c4, %c0_66, %c0_67] : memref<8x256x64xbf16, #tpu.memory_space<vmem>>, vector<1x256x64xbf16>
    %84 = vector.shape_cast %83 : vector<1x256x64xbf16> to vector<256x64xbf16>
    %cst_68 = arith.constant dense<0.000000e+00> : vector<64x64xf32>
    %85 = tpu.matmul %82, %84, %cst_68 {dimension_numbers = #tpu.dot_dimension_numbers<[1], [0], [0], [1], [0, 0, 1, 1], [], []>} : vector<64x256xbf16>, vector<256x64xbf16>, vector<64x64xf32> -> vector<64x64xf32>
    %86 = arith.addf %80, %85 : vector<64x64xf32>
    %87 = vector.extract_strided_slice %55 {offsets = [1, 0, 1, 0], sizes = [4, 4, 4, 256], strides = [1, 1, 1, 1]} : vector<5x5x5x256xbf16> to vector<4x4x4x256xbf16>
    %88 = vector.shape_cast %87 : vector<4x4x4x256xbf16> to vector<64x256xbf16>
    %c5 = arith.constant 5 : index
    %c0_69 = arith.constant 0 : index
    %c0_70 = arith.constant 0 : index
    %89 = vector.load %arg5[%c5, %c0_69, %c0_70] : memref<8x256x64xbf16, #tpu.memory_space<vmem>>, vector<1x256x64xbf16>
    %90 = vector.shape_cast %89 : vector<1x256x64xbf16> to vector<256x64xbf16>
    %cst_71 = arith.constant dense<0.000000e+00> : vector<64x64xf32>
    %91 = tpu.matmul %88, %90, %cst_71 {dimension_numbers = #tpu.dot_dimension_numbers<[1], [0], [0], [1], [0, 0, 1, 1], [], []>} : vector<64x256xbf16>, vector<256x64xbf16>, vector<64x64xf32> -> vector<64x64xf32>
    %92 = arith.addf %86, %91 : vector<64x64xf32>
    %93 = vector.extract_strided_slice %55 {offsets = [1, 1, 0, 0], sizes = [4, 4, 4, 256], strides = [1, 1, 1, 1]} : vector<5x5x5x256xbf16> to vector<4x4x4x256xbf16>
    %94 = vector.shape_cast %93 : vector<4x4x4x256xbf16> to vector<64x256xbf16>
    %c6 = arith.constant 6 : index
    %c0_72 = arith.constant 0 : index
    %c0_73 = arith.constant 0 : index
    %95 = vector.load %arg5[%c6, %c0_72, %c0_73] : memref<8x256x64xbf16, #tpu.memory_space<vmem>>, vector<1x256x64xbf16>
    %96 = vector.shape_cast %95 : vector<1x256x64xbf16> to vector<256x64xbf16>
    %cst_74 = arith.constant dense<0.000000e+00> : vector<64x64xf32>
    %97 = tpu.matmul %94, %96, %cst_74 {dimension_numbers = #tpu.dot_dimension_numbers<[1], [0], [0], [1], [0, 0, 1, 1], [], []>} : vector<64x256xbf16>, vector<256x64xbf16>, vector<64x64xf32> -> vector<64x64xf32>
    %98 = arith.addf %92, %97 : vector<64x64xf32>
    %99 = vector.extract_strided_slice %55 {offsets = [1, 1, 1, 0], sizes = [4, 4, 4, 256], strides = [1, 1, 1, 1]} : vector<5x5x5x256xbf16> to vector<4x4x4x256xbf16>
    %100 = vector.shape_cast %99 : vector<4x4x4x256xbf16> to vector<64x256xbf16>
    %c7 = arith.constant 7 : index
    %c0_75 = arith.constant 0 : index
    %c0_76 = arith.constant 0 : index
    %101 = vector.load %arg5[%c7, %c0_75, %c0_76] : memref<8x256x64xbf16, #tpu.memory_space<vmem>>, vector<1x256x64xbf16>
    %102 = vector.shape_cast %101 : vector<1x256x64xbf16> to vector<256x64xbf16>
    %cst_77 = arith.constant dense<0.000000e+00> : vector<64x64xf32>
    %103 = tpu.matmul %100, %102, %cst_77 {dimension_numbers = #tpu.dot_dimension_numbers<[1], [0], [0], [1], [0, 0, 1, 1], [], []>} : vector<64x256xbf16>, vector<256x64xbf16>, vector<64x64xf32> -> vector<64x64xf32>
    %104 = arith.addf %98, %103 : vector<64x64xf32>
    %c0_78 = arith.constant 0 : index
    %c0_79 = arith.constant 0 : index
    %105 = vector.load %arg6[%c0_78, %c0_79] : memref<1x64xf32, #tpu.memory_space<vmem>>, vector<1x64xf32>
    %106 = vector.broadcast %105 : vector<1x64xf32> to vector<64x64xf32>
    %107 = arith.addf %104, %106 : vector<64x64xf32>
    %cst_80 = arith.constant 0.000000e+00 : f32
    %108 = vector.broadcast %cst_80 : f32 to vector<64x64xf32>
    %109 = arith.subf %108, %107 : vector<64x64xf32>
    %110 = math.exp %109 : vector<64x64xf32>
    %cst_81 = arith.constant 1.000000e+00 : f32
    %111 = vector.broadcast %cst_81 : f32 to vector<64x64xf32>
    %112 = arith.addf %111, %110 : vector<64x64xf32>
    %cst_82 = arith.constant 1.000000e+00 : f32
    %113 = vector.broadcast %cst_82 : f32 to vector<64x64xf32>
    %114 = arith.divf %113, %112 : vector<64x64xf32>
    %cst_83 = arith.constant 2.000000e+00 : f32
    %115 = vector.broadcast %cst_83 : f32 to vector<64x64xf32>
    %116 = arith.addf %114, %115 : vector<64x64xf32>
    %117 = arith.mulf %114, %116 : vector<64x64xf32>
    %118 = arith.mulf %107, %117 : vector<64x64xf32>
    %cst_84 = arith.constant 2.000000e+00 : f32
    %119 = vector.broadcast %cst_84 : f32 to vector<64x64xf32>
    %120 = arith.addf %117, %119 : vector<64x64xf32>
    %121 = arith.divf %118, %120 : vector<64x64xf32>
    %cst_85 = arith.constant dense<0.000000e+00> : vector<64xf32>
    %122 = vector.multi_reduction <add>, %121, %cst_85 [0] : vector<64x64xf32> to vector<64xf32>
    %123 = vector.shape_cast %122 : vector<64xf32> to vector<1x64xf32>
    %cst_86 = arith.constant 1.562500e-02 : f32
    %124 = vector.broadcast %cst_86 : f32 to vector<1x64xf32>
    %125 = arith.mulf %123, %124 : vector<1x64xf32>
    %126 = vector.broadcast %125 : vector<1x64xf32> to vector<64x64xf32>
    %127 = arith.subf %121, %126 : vector<64x64xf32>
    %128 = arith.mulf %127, %127 : vector<64x64xf32>
    %cst_87 = arith.constant dense<0.000000e+00> : vector<64xf32>
    %129 = vector.multi_reduction <add>, %128, %cst_87 [0] : vector<64x64xf32> to vector<64xf32>
    %130 = vector.shape_cast %129 : vector<64xf32> to vector<1x64xf32>
    %cst_88 = arith.constant 1.562500e-02 : f32
    %131 = vector.broadcast %cst_88 : f32 to vector<1x64xf32>
    %132 = arith.mulf %130, %131 : vector<1x64xf32>
    %cst_89 = arith.constant 9.99999974E-6 : f32
    %133 = vector.broadcast %cst_89 : f32 to vector<1x64xf32>
    %134 = arith.addf %132, %133 : vector<1x64xf32>
    %135 = math.rsqrt %134 : vector<1x64xf32>
    %136 = vector.broadcast %135 : vector<1x64xf32> to vector<64x64xf32>
    %137 = arith.mulf %127, %136 : vector<64x64xf32>
    %cst_90 = arith.constant 0.000000e+00 : f32
    %138 = vector.broadcast %cst_90 : f32 to vector<64x64xf32>
    %139 = arith.cmpf oge, %137, %138 : vector<64x64xf32>
    %cst_91 = arith.constant 2.000000e-01 : f32
    %140 = vector.broadcast %cst_91 : f32 to vector<64x64xf32>
    %141 = arith.mulf %140, %137 : vector<64x64xf32>
    %142 = arith.select %139, %137, %141 : vector<64x64xi1>, vector<64x64xf32>
    %c0_92 = arith.constant 0 : index
    %c0_93 = arith.constant 0 : index
    %143 = vector.load %arg4[%c0_92, %c0_93] : memref<64x64xbf16, #tpu.memory_space<vmem>>, vector<64x64xbf16>
    %144 = arith.truncf %142 : vector<64x64xf32> to vector<64x64xbf16>
    %cst_94 = arith.constant dense<0.000000e+00> : vector<64x64xf32>
    %145 = tpu.matmul %143, %144, %cst_94 {dimension_numbers = #tpu.dot_dimension_numbers<[1], [0], [0], [1], [0, 0, 1, 1], [], []>} : vector<64x64xbf16>, vector<64x64xbf16>, vector<64x64xf32> -> vector<64x64xf32>
    %146 = vector.extract_strided_slice %145 {offsets = [0, 0], sizes = [8, 64], strides = [1, 1]} : vector<64x64xf32> to vector<8x64xf32>
    %147 = vector.shape_cast %146 : vector<8x64xf32> to vector<2x2x2x64xf32>
    %c0_95 = arith.constant 0 : index
    %c0_96 = arith.constant 0 : index
    %c0_97 = arith.constant 0 : index
    %c448 = arith.constant 448 : index
    %148 = vector.load %arg13[%c0_95, %c0_96, %c0_97, %c448] : memref<3x3x3x512xf32, #tpu.memory_space<vmem>>, vector<2x2x2x64xf32>
    tpu.vector_store %arg13[%c0_95, %c0_96, %c0_97, %c448], %147 {strides = array<i32>} : memref<3x3x3x512xf32, #tpu.memory_space<vmem>>, vector<2x2x2x64xf32>,
    %149 = vector.extract_strided_slice %145 {offsets = [8, 0], sizes = [8, 64], strides = [1, 1]} : vector<64x64xf32> to vector<8x64xf32>
    %150 = vector.shape_cast %149 : vector<8x64xf32> to vector<2x2x2x64xf32>
    %c0_98 = arith.constant 0 : index
    %c0_99 = arith.constant 0 : index
    %c1_100 = arith.constant 1 : index
    %c384 = arith.constant 384 : index
    %151 = vector.load %arg13[%c0_98, %c0_99, %c1_100, %c384] : memref<3x3x3x512xf32, #tpu.memory_space<vmem>>, vector<2x2x2x64xf32>
    tpu.vector_store %arg13[%c0_98, %c0_99, %c1_100, %c384], %150 {strides = array<i32>} : memref<3x3x3x512xf32, #tpu.memory_space<vmem>>, vector<2x2x2x64xf32>,
    %152 = vector.extract_strided_slice %145 {offsets = [16, 0], sizes = [8, 64], strides = [1, 1]} : vector<64x64xf32> to vector<8x64xf32>
    %153 = vector.shape_cast %152 : vector<8x64xf32> to vector<2x2x2x64xf32>
    %c0_101 = arith.constant 0 : index
    %c1_102 = arith.constant 1 : index
    %c0_103 = arith.constant 0 : index
    %c320 = arith.constant 320 : index
    %154 = vector.load %arg13[%c0_101, %c1_102, %c0_103, %c320] : memref<3x3x3x512xf32, #tpu.memory_space<vmem>>, vector<2x2x2x64xf32>
    tpu.vector_store %arg13[%c0_101, %c1_102, %c0_103, %c320], %153 {strides = array<i32>} : memref<3x3x3x512xf32, #tpu.memory_space<vmem>>, vector<2x2x2x64xf32>,
    %155 = vector.extract_strided_slice %145 {offsets = [24, 0], sizes = [8, 64], strides = [1, 1]} : vector<64x64xf32> to vector<8x64xf32>
    %156 = vector.shape_cast %155 : vector<8x64xf32> to vector<2x2x2x64xf32>
    %c0_104 = arith.constant 0 : index
    %c1_105 = arith.constant 1 : index
    %c1_106 = arith.constant 1 : index
    %c256 = arith.constant 256 : index
    %157 = vector.load %arg13[%c0_104, %c1_105, %c1_106, %c256] : memref<3x3x3x512xf32, #tpu.memory_space<vmem>>, vector<2x2x2x64xf32>
    tpu.vector_store %arg13[%c0_104, %c1_105, %c1_106, %c256], %156 {strides = array<i32>} : memref<3x3x3x512xf32, #tpu.memory_space<vmem>>, vector<2x2x2x64xf32>,
    %158 = vector.extract_strided_slice %145 {offsets = [32, 0], sizes = [8, 64], strides = [1, 1]} : vector<64x64xf32> to vector<8x64xf32>
    %159 = vector.shape_cast %158 : vector<8x64xf32> to vector<2x2x2x64xf32>
    %c1_107 = arith.constant 1 : index
    %c0_108 = arith.constant 0 : index
    %c0_109 = arith.constant 0 : index
    %c192_110 = arith.constant 192 : index
    %160 = vector.load %arg13[%c1_107, %c0_108, %c0_109, %c192_110] : memref<3x3x3x512xf32, #tpu.memory_space<vmem>>, vector<2x2x2x64xf32>
    tpu.vector_store %arg13[%c1_107, %c0_108, %c0_109, %c192_110], %159 {strides = array<i32>} : memref<3x3x3x512xf32, #tpu.memory_space<vmem>>, vector<2x2x2x64xf32>,
    %161 = vector.extract_strided_slice %145 {offsets = [40, 0], sizes = [8, 64], strides = [1, 1]} : vector<64x64xf32> to vector<8x64xf32>
    %162 = vector.shape_cast %161 : vector<8x64xf32> to vector<2x2x2x64xf32>
    %c1_111 = arith.constant 1 : index
    %c0_112 = arith.constant 0 : index
    %c1_113 = arith.constant 1 : index
    %c128_114 = arith.constant 128 : index
    %163 = vector.load %arg13[%c1_111, %c0_112, %c1_113, %c128_114] : memref<3x3x3x512xf32, #tpu.memory_space<vmem>>, vector<2x2x2x64xf32>
    tpu.vector_store %arg13[%c1_111, %c0_112, %c1_113, %c128_114], %162 {strides = array<i32>} : memref<3x3x3x512xf32, #tpu.memory_space<vmem>>, vector<2x2x2x64xf32>,
    %164 = vector.extract_strided_slice %145 {offsets = [48, 0], sizes = [8, 64], strides = [1, 1]} : vector<64x64xf32> to vector<8x64xf32>
    %165 = vector.shape_cast %164 : vector<8x64xf32> to vector<2x2x2x64xf32>
    %c1_115 = arith.constant 1 : index
    %c1_116 = arith.constant 1 : index
    %c0_117 = arith.constant 0 : index
    %c64_118 = arith.constant 64 : index
    %166 = vector.load %arg13[%c1_115, %c1_116, %c0_117, %c64_118] : memref<3x3x3x512xf32, #tpu.memory_space<vmem>>, vector<2x2x2x64xf32>
    tpu.vector_store %arg13[%c1_115, %c1_116, %c0_117, %c64_118], %165 {strides = array<i32>} : memref<3x3x3x512xf32, #tpu.memory_space<vmem>>, vector<2x2x2x64xf32>,
    %167 = vector.extract_strided_slice %145 {offsets = [56, 0], sizes = [8, 64], strides = [1, 1]} : vector<64x64xf32> to vector<8x64xf32>
    %168 = vector.shape_cast %167 : vector<8x64xf32> to vector<2x2x2x64xf32>
    %c1_119 = arith.constant 1 : index
    %c1_120 = arith.constant 1 : index
    %c1_121 = arith.constant 1 : index
    %c0_122 = arith.constant 0 : index
    %169 = vector.load %arg13[%c1_119, %c1_120, %c1_121, %c0_122] : memref<3x3x3x512xf32, #tpu.memory_space<vmem>>, vector<2x2x2x64xf32>
    tpu.vector_store %arg13[%c1_119, %c1_120, %c1_121, %c0_122], %168 {strides = array<i32>} : memref<3x3x3x512xf32, #tpu.memory_space<vmem>>, vector<2x2x2x64xf32>,
    %c0_123 = arith.constant 0 : index
    %c0_124 = arith.constant 0 : index
    %c0_125 = arith.constant 0 : index
    %c0_126 = arith.constant 0 : index
    %170 = vector.load %arg13[%c0_123, %c0_124, %c0_125, %c0_126] : memref<3x3x3x512xf32, #tpu.memory_space<vmem>>, vector<3x3x3x512xf32>
    %171 = arith.truncf %170 : vector<3x3x3x512xf32> to vector<3x3x3x512xbf16>
    %cst_127 = arith.constant 0.000000e+00 : f32
    %172 = vector.broadcast %cst_127 : f32 to vector<8x128xf32>
    %173 = vector.extract_strided_slice %171 {offsets = [0, 0, 0, 0], sizes = [2, 2, 2, 512], strides = [1, 1, 1, 1]} : vector<3x3x3x512xbf16> to vector<2x2x2x512xbf16>
    %174 = vector.shape_cast %173 : vector<2x2x2x512xbf16> to vector<8x512xbf16>
    %c0_128 = arith.constant 0 : index
    %c0_129 = arith.constant 0 : index
    %c0_130 = arith.constant 0 : index
    %175 = vector.load %arg7[%c0_128, %c0_129, %c0_130] : memref<8x512x128xbf16, #tpu.memory_space<vmem>>, vector<1x512x128xbf16>
    %176 = vector.shape_cast %175 : vector<1x512x128xbf16> to vector<512x128xbf16>
    %cst_131 = arith.constant dense<0.000000e+00> : vector<8x128xf32>
    %177 = tpu.matmul %174, %176, %cst_131 {dimension_numbers = #tpu.dot_dimension_numbers<[1], [0], [0], [1], [0, 0, 1, 1], [], []>} : vector<8x512xbf16>, vector<512x128xbf16>, vector<8x128xf32> -> vector<8x128xf32>
    %178 = arith.addf %172, %177 : vector<8x128xf32>
    %179 = vector.extract_strided_slice %171 {offsets = [0, 0, 1, 0], sizes = [2, 2, 2, 512], strides = [1, 1, 1, 1]} : vector<3x3x3x512xbf16> to vector<2x2x2x512xbf16>
    %180 = vector.shape_cast %179 : vector<2x2x2x512xbf16> to vector<8x512xbf16>
    %c1_132 = arith.constant 1 : index
    %c0_133 = arith.constant 0 : index
    %c0_134 = arith.constant 0 : index
    %181 = vector.load %arg7[%c1_132, %c0_133, %c0_134] : memref<8x512x128xbf16, #tpu.memory_space<vmem>>, vector<1x512x128xbf16>
    %182 = vector.shape_cast %181 : vector<1x512x128xbf16> to vector<512x128xbf16>
    %cst_135 = arith.constant dense<0.000000e+00> : vector<8x128xf32>
    %183 = tpu.matmul %180, %182, %cst_135 {dimension_numbers = #tpu.dot_dimension_numbers<[1], [0], [0], [1], [0, 0, 1, 1], [], []>} : vector<8x512xbf16>, vector<512x128xbf16>, vector<8x128xf32> -> vector<8x128xf32>
    %184 = arith.addf %178, %183 : vector<8x128xf32>
    %185 = vector.extract_strided_slice %171 {offsets = [0, 1, 0, 0], sizes = [2, 2, 2, 512], strides = [1, 1, 1, 1]} : vector<3x3x3x512xbf16> to vector<2x2x2x512xbf16>
    %186 = vector.shape_cast %185 : vector<2x2x2x512xbf16> to vector<8x512xbf16>
    %c2_136 = arith.constant 2 : index
    %c0_137 = arith.constant 0 : index
    %c0_138 = arith.constant 0 : index
    %187 = vector.load %arg7[%c2_136, %c0_137, %c0_138] : memref<8x512x128xbf16, #tpu.memory_space<vmem>>, vector<1x512x128xbf16>
    %188 = vector.shape_cast %187 : vector<1x512x128xbf16> to vector<512x128xbf16>
    %cst_139 = arith.constant dense<0.000000e+00> : vector<8x128xf32>
    %189 = tpu.matmul %186, %188, %cst_139 {dimension_numbers = #tpu.dot_dimension_numbers<[1], [0], [0], [1], [0, 0, 1, 1], [], []>} : vector<8x512xbf16>, vector<512x128xbf16>, vector<8x128xf32> -> vector<8x128xf32>
    %190 = arith.addf %184, %189 : vector<8x128xf32>
    %191 = vector.extract_strided_slice %171 {offsets = [0, 1, 1, 0], sizes = [2, 2, 2, 512], strides = [1, 1, 1, 1]} : vector<3x3x3x512xbf16> to vector<2x2x2x512xbf16>
    %192 = vector.shape_cast %191 : vector<2x2x2x512xbf16> to vector<8x512xbf16>
    %c3_140 = arith.constant 3 : index
    %c0_141 = arith.constant 0 : index
    %c0_142 = arith.constant 0 : index
    %193 = vector.load %arg7[%c3_140, %c0_141, %c0_142] : memref<8x512x128xbf16, #tpu.memory_space<vmem>>, vector<1x512x128xbf16>
    %194 = vector.shape_cast %193 : vector<1x512x128xbf16> to vector<512x128xbf16>
    %cst_143 = arith.constant dense<0.000000e+00> : vector<8x128xf32>
    %195 = tpu.matmul %192, %194, %cst_143 {dimension_numbers = #tpu.dot_dimension_numbers<[1], [0], [0], [1], [0, 0, 1, 1], [], []>} : vector<8x512xbf16>, vector<512x128xbf16>, vector<8x128xf32> -> vector<8x128xf32>
    %196 = arith.addf %190, %195 : vector<8x128xf32>
    %197 = vector.extract_strided_slice %171 {offsets = [1, 0, 0, 0], sizes = [2, 2, 2, 512], strides = [1, 1, 1, 1]} : vector<3x3x3x512xbf16> to vector<2x2x2x512xbf16>
    %198 = vector.shape_cast %197 : vector<2x2x2x512xbf16> to vector<8x512xbf16>
    %c4_144 = arith.constant 4 : index
    %c0_145 = arith.constant 0 : index
    %c0_146 = arith.constant 0 : index
    %199 = vector.load %arg7[%c4_144, %c0_145, %c0_146] : memref<8x512x128xbf16, #tpu.memory_space<vmem>>, vector<1x512x128xbf16>
    %200 = vector.shape_cast %199 : vector<1x512x128xbf16> to vector<512x128xbf16>
    %cst_147 = arith.constant dense<0.000000e+00> : vector<8x128xf32>
    %201 = tpu.matmul %198, %200, %cst_147 {dimension_numbers = #tpu.dot_dimension_numbers<[1], [0], [0], [1], [0, 0, 1, 1], [], []>} : vector<8x512xbf16>, vector<512x128xbf16>, vector<8x128xf32> -> vector<8x128xf32>
    %202 = arith.addf %196, %201 : vector<8x128xf32>
    %203 = vector.extract_strided_slice %171 {offsets = [1, 0, 1, 0], sizes = [2, 2, 2, 512], strides = [1, 1, 1, 1]} : vector<3x3x3x512xbf16> to vector<2x2x2x512xbf16>
    %204 = vector.shape_cast %203 : vector<2x2x2x512xbf16> to vector<8x512xbf16>
    %c5_148 = arith.constant 5 : index
    %c0_149 = arith.constant 0 : index
    %c0_150 = arith.constant 0 : index
    %205 = vector.load %arg7[%c5_148, %c0_149, %c0_150] : memref<8x512x128xbf16, #tpu.memory_space<vmem>>, vector<1x512x128xbf16>
    %206 = vector.shape_cast %205 : vector<1x512x128xbf16> to vector<512x128xbf16>
    %cst_151 = arith.constant dense<0.000000e+00> : vector<8x128xf32>
    %207 = tpu.matmul %204, %206, %cst_151 {dimension_numbers = #tpu.dot_dimension_numbers<[1], [0], [0], [1], [0, 0, 1, 1], [], []>} : vector<8x512xbf16>, vector<512x128xbf16>, vector<8x128xf32> -> vector<8x128xf32>
    %208 = arith.addf %202, %207 : vector<8x128xf32>
    %209 = vector.extract_strided_slice %171 {offsets = [1, 1, 0, 0], sizes = [2, 2, 2, 512], strides = [1, 1, 1, 1]} : vector<3x3x3x512xbf16> to vector<2x2x2x512xbf16>
    %210 = vector.shape_cast %209 : vector<2x2x2x512xbf16> to vector<8x512xbf16>
    %c6_152 = arith.constant 6 : index
    %c0_153 = arith.constant 0 : index
    %c0_154 = arith.constant 0 : index
    %211 = vector.load %arg7[%c6_152, %c0_153, %c0_154] : memref<8x512x128xbf16, #tpu.memory_space<vmem>>, vector<1x512x128xbf16>
    %212 = vector.shape_cast %211 : vector<1x512x128xbf16> to vector<512x128xbf16>
    %cst_155 = arith.constant dense<0.000000e+00> : vector<8x128xf32>
    %213 = tpu.matmul %210, %212, %cst_155 {dimension_numbers = #tpu.dot_dimension_numbers<[1], [0], [0], [1], [0, 0, 1, 1], [], []>} : vector<8x512xbf16>, vector<512x128xbf16>, vector<8x128xf32> -> vector<8x128xf32>
    %214 = arith.addf %208, %213 : vector<8x128xf32>
    %215 = vector.extract_strided_slice %171 {offsets = [1, 1, 1, 0], sizes = [2, 2, 2, 512], strides = [1, 1, 1, 1]} : vector<3x3x3x512xbf16> to vector<2x2x2x512xbf16>
    %216 = vector.shape_cast %215 : vector<2x2x2x512xbf16> to vector<8x512xbf16>
    %c7_156 = arith.constant 7 : index
    %c0_157 = arith.constant 0 : index
    %c0_158 = arith.constant 0 : index
    %217 = vector.load %arg7[%c7_156, %c0_157, %c0_158] : memref<8x512x128xbf16, #tpu.memory_space<vmem>>, vector<1x512x128xbf16>
    %218 = vector.shape_cast %217 : vector<1x512x128xbf16> to vector<512x128xbf16>
    %cst_159 = arith.constant dense<0.000000e+00> : vector<8x128xf32>
    %219 = tpu.matmul %216, %218, %cst_159 {dimension_numbers = #tpu.dot_dimension_numbers<[1], [0], [0], [1], [0, 0, 1, 1], [], []>} : vector<8x512xbf16>, vector<512x128xbf16>, vector<8x128xf32> -> vector<8x128xf32>
    %220 = arith.addf %214, %219 : vector<8x128xf32>
    %c0_160 = arith.constant 0 : index
    %c0_161 = arith.constant 0 : index
    %221 = vector.load %arg8[%c0_160, %c0_161] : memref<1x128xf32, #tpu.memory_space<vmem>>, vector<1x128xf32>
    %222 = vector.broadcast %221 : vector<1x128xf32> to vector<8x128xf32>
    %223 = arith.addf %220, %222 : vector<8x128xf32>
    %cst_162 = arith.constant 0.000000e+00 : f32
    %224 = vector.broadcast %cst_162 : f32 to vector<8x128xf32>
    %225 = arith.subf %224, %223 : vector<8x128xf32>
    %226 = math.exp %225 : vector<8x128xf32>
    %cst_163 = arith.constant 1.000000e+00 : f32
    %227 = vector.broadcast %cst_163 : f32 to vector<8x128xf32>
    %228 = arith.addf %227, %226 : vector<8x128xf32>
    %cst_164 = arith.constant 1.000000e+00 : f32
    %229 = vector.broadcast %cst_164 : f32 to vector<8x128xf32>
    %230 = arith.divf %229, %228 : vector<8x128xf32>
    %cst_165 = arith.constant 2.000000e+00 : f32
    %231 = vector.broadcast %cst_165 : f32 to vector<8x128xf32>
    %232 = arith.addf %230, %231 : vector<8x128xf32>
    %233 = arith.mulf %230, %232 : vector<8x128xf32>
    %234 = arith.mulf %223, %233 : vector<8x128xf32>
    %cst_166 = arith.constant 2.000000e+00 : f32
    %235 = vector.broadcast %cst_166 : f32 to vector<8x128xf32>
    %236 = arith.addf %233, %235 : vector<8x128xf32>
    %237 = arith.divf %234, %236 : vector<8x128xf32>
    %cst_167 = arith.constant dense<0.000000e+00> : vector<128xf32>
    %238 = vector.multi_reduction <add>, %237, %cst_167 [0] : vector<8x128xf32> to vector<128xf32>
    %239 = vector.shape_cast %238 : vector<128xf32> to vector<1x128xf32>
    %cst_168 = arith.constant 1.250000e-01 : f32
    %240 = vector.broadcast %cst_168 : f32 to vector<1x128xf32>
    %241 = arith.mulf %239, %240 : vector<1x128xf32>
    %242 = vector.broadcast %241 : vector<1x128xf32> to vector<8x128xf32>
    %243 = arith.subf %237, %242 : vector<8x128xf32>
    %244 = arith.mulf %243, %243 : vector<8x128xf32>
    %cst_169 = arith.constant dense<0.000000e+00> : vector<128xf32>
    %245 = vector.multi_reduction <add>, %244, %cst_169 [0] : vector<8x128xf32> to vector<128xf32>
    %246 = vector.shape_cast %245 : vector<128xf32> to vector<1x128xf32>
    %cst_170 = arith.constant 1.250000e-01 : f32
    %247 = vector.broadcast %cst_170 : f32 to vector<1x128xf32>
    %248 = arith.mulf %246, %247 : vector<1x128xf32>
    %cst_171 = arith.constant 9.99999974E-6 : f32
    %249 = vector.broadcast %cst_171 : f32 to vector<1x128xf32>
    %250 = arith.addf %248, %249 : vector<1x128xf32>
    %251 = math.rsqrt %250 : vector<1x128xf32>
    %252 = vector.broadcast %251 : vector<1x128xf32> to vector<8x128xf32>
    %253 = arith.mulf %243, %252 : vector<8x128xf32>
    %cst_172 = arith.constant 0.000000e+00 : f32
    %254 = vector.broadcast %cst_172 : f32 to vector<8x128xf32>
    %255 = arith.cmpf oge, %253, %254 : vector<8x128xf32>
    %cst_173 = arith.constant 2.000000e-01 : f32
    %256 = vector.broadcast %cst_173 : f32 to vector<8x128xf32>
    %257 = arith.mulf %256, %253 : vector<8x128xf32>
    %258 = arith.select %255, %253, %257 : vector<8x128xi1>, vector<8x128xf32>
    %c0_174 = arith.constant 0 : index
    %c0_175 = arith.constant 0 : index
    %259 = vector.load %arg9[%c0_174, %c0_175] : memref<8x128xf32, #tpu.memory_space<vmem>>, vector<8x128xf32>
    %260 = arith.mulf %258, %259 : vector<8x128xf32>
    %cst_176 = arith.constant dense<0.000000e+00> : vector<8xf32>
    %261 = vector.multi_reduction <add>, %260, %cst_176 [1] : vector<8x128xf32> to vector<8xf32>
    %262 = vector.shape_cast %261 : vector<8xf32> to vector<8x1xf32>
    %cst_177 = arith.constant dense<0.000000e+00> : vector<1xf32>
    %263 = vector.multi_reduction <add>, %262, %cst_177 [0] : vector<8x1xf32> to vector<1xf32>
    %264 = vector.shape_cast %263 : vector<1xf32> to vector<1x1xf32>
    %c0_178 = arith.constant 0 : index
    %c0_179 = arith.constant 0 : index
    %265 = vector.load %arg10[%c0_178, %c0_179] : memref<1x1xf32, #tpu.memory_space<vmem>>, vector<1x1xf32>
    %266 = arith.addf %264, %265 : vector<1x1xf32>
    %cst_180 = arith.constant 0.000000e+00 : f32
    %267 = vector.broadcast %cst_180 : f32 to vector<1x1xf32>
    %268 = arith.subf %267, %266 : vector<1x1xf32>
    %269 = math.exp %268 : vector<1x1xf32>
    %cst_181 = arith.constant 1.000000e+00 : f32
    %270 = vector.broadcast %cst_181 : f32 to vector<1x1xf32>
    %271 = arith.addf %270, %269 : vector<1x1xf32>
    %cst_182 = arith.constant 1.000000e+00 : f32
    %272 = vector.broadcast %cst_182 : f32 to vector<1x1xf32>
    %273 = arith.divf %272, %271 : vector<1x1xf32>
    %cst_183 = arith.constant 2.000000e+00 : f32
    %274 = vector.broadcast %cst_183 : f32 to vector<1x1xf32>
    %275 = arith.addf %273, %274 : vector<1x1xf32>
    %276 = arith.mulf %273, %275 : vector<1x1xf32>
    %277 = arith.mulf %266, %276 : vector<1x1xf32>
    %cst_184 = arith.constant 2.000000e+00 : f32
    %278 = vector.broadcast %cst_184 : f32 to vector<1x1xf32>
    %279 = arith.addf %276, %278 : vector<1x1xf32>
    %280 = arith.divf %277, %279 : vector<1x1xf32>
    %c0_185 = arith.constant 0 : index
    %c0_186 = arith.constant 0 : index
    %c0_187 = arith.constant 0 : index
    %281 = vector.load %arg11[%c0_185, %c0_186, %c0_187] : memref<1x1x1xf32, #tpu.memory_space<vmem>>, vector<1x1x1xf32>
    %282 = vector.shape_cast %281 : vector<1x1x1xf32> to vector<1x1xf32>
    %283 = vector.shape_cast %280 : vector<1x1xf32> to vector<1x1x1xf32>
    tpu.vector_store %arg11[%c0_185, %c0_186, %c0_187], %283 {strides = array<i32>} : memref<1x1x1xf32, #tpu.memory_space<vmem>>, vector<1x1x1xf32>,
    return
  }
  func.func @transform_0(%arg0: i32) -> (i32, i32, i32) {
    %c0_i32 = arith.constant 0 : i32
    %c0_i32_0 = arith.constant 0 : i32
    %c0_i32_1 = arith.constant 0 : i32
    return %arg0, %c0_i32, %c0_i32_0 : i32, i32, i32
  }
  func.func @transform_1(%arg0: i32) -> (i32, i32) {
    %c0_i32 = arith.constant 0 : i32
    %c0_i32_0 = arith.constant 0 : i32
    %c0_i32_1 = arith.constant 0 : i32
    return %c0_i32, %c0_i32_0 : i32, i32
  }
  func.func @transform_2(%arg0: i32) -> (i32, i32) {
    %c0_i32 = arith.constant 0 : i32
    %c0_i32_0 = arith.constant 0 : i32
    %c0_i32_1 = arith.constant 0 : i32
    return %c0_i32, %c0_i32_0 : i32, i32
  }
  func.func @transform_3(%arg0: i32) -> (i32, i32) {
    %c0_i32 = arith.constant 0 : i32
    %c0_i32_0 = arith.constant 0 : i32
    %c0_i32_1 = arith.constant 0 : i32
    return %c0_i32, %c0_i32_0 : i32, i32
  }
  func.func @transform_4(%arg0: i32) -> (i32, i32, i32) {
    %c0_i32 = arith.constant 0 : i32
    %c0_i32_0 = arith.constant 0 : i32
    %c0_i32_1 = arith.constant 0 : i32
    %c0_i32_2 = arith.constant 0 : i32
    return %c0_i32, %c0_i32_0, %c0_i32_1 : i32, i32, i32
  }
  func.func @transform_5(%arg0: i32) -> (i32, i32) {
    %c0_i32 = arith.constant 0 : i32
    %c0_i32_0 = arith.constant 0 : i32
    %c0_i32_1 = arith.constant 0 : i32
    return %c0_i32, %c0_i32_0 : i32, i32
  }
  func.func @transform_6(%arg0: i32) -> (i32, i32, i32) {
    %c0_i32 = arith.constant 0 : i32
    %c0_i32_0 = arith.constant 0 : i32
    %c0_i32_1 = arith.constant 0 : i32
    %c0_i32_2 = arith.constant 0 : i32
    return %c0_i32, %c0_i32_0, %c0_i32_1 : i32, i32, i32
  }
  func.func @transform_7(%arg0: i32) -> (i32, i32) {
    %c0_i32 = arith.constant 0 : i32
    %c0_i32_0 = arith.constant 0 : i32
    %c0_i32_1 = arith.constant 0 : i32
    return %c0_i32, %c0_i32_0 : i32, i32
  }
  func.func @transform_8(%arg0: i32) -> (i32, i32) {
    %c0_i32 = arith.constant 0 : i32
    %c0_i32_0 = arith.constant 0 : i32
    %c0_i32_1 = arith.constant 0 : i32
    return %c0_i32, %c0_i32_0 : i32, i32
  }
  func.func @transform_9(%arg0: i32) -> (i32, i32) {
    %c0_i32 = arith.constant 0 : i32
    %c0_i32_0 = arith.constant 0 : i32
    %c0_i32_1 = arith.constant 0 : i32
    return %c0_i32, %c0_i32_0 : i32, i32
  }
  func.func @transform_10(%arg0: i32) -> (i32, i32, i32) {
    %c0_i32 = arith.constant 0 : i32
    %c0_i32_0 = arith.constant 0 : i32
    %c0_i32_1 = arith.constant 0 : i32
    return %arg0, %c0_i32, %c0_i32_0 : i32, i32, i32
  }
}

</mosaic_0001>

<llo_original>
// kernel: spectral_discriminator_forward.1
$region0: #{spectral_discriminator_forward.1}
  #allocation0 [shape = 'u32[]', space=smem, size = 0x4, offset = 0x4, fixed_abs, tag = 'smem constant byte address 0x4 - core index']
  #allocation1 [shape = 'u32[144,128]{1,0:T(1,128)}', space=vmem, size = 0x12000, scoped, tag = 'internal scratch']
  #allocation2 [shape = 'f32[5,5,5,256]{3,2,1,0:T(8,128)}', space=vmem, size = 0x32000, scoped, tag = 'scratch operand']
  #allocation3 [shape = 'f32[3,3,3,512]{3,2,1,0:T(4,128)}', space=vmem, size = 0x12000, scoped, tag = 'scratch operand']
  #allocation4 [shape = 'f32[1,1]{1,0:T(1,128)S(1)}', space=vmem, size = 0x200, scoped, tag = 'scoped memory for spectral_discriminator_forward.1']
  %s0 = inlined_call_operand.vmem [shape: bf16[2,512,64], index: 0, kind: input, shape index: {}]
  %s1 = inlined_call_operand.vmem [shape: bf16[64,32], index: 1, kind: input, shape index: {}]
  %s2 = inlined_call_operand.vmem [shape: f32[1,32], index: 2, kind: input, shape index: {}]
  %s3 = inlined_call_operand.vmem [shape: bf16[64,64], index: 3, kind: input, shape index: {}]
  %s4 = inlined_call_operand.vmem [shape: bf16[8,256,64], index: 4, kind: input, shape index: {}]
  %s5 = inlined_call_operand.vmem [shape: f32[1,64], index: 5, kind: input, shape index: {}]
  %s6 = inlined_call_operand.vmem [shape: bf16[8,512,128], index: 6, kind: input, shape index: {}]
  %s7 = inlined_call_operand.vmem [shape: f32[1,128], index: 7, kind: input, shape index: {}]
  %s8 = inlined_call_operand.vmem [shape: f32[8,128], index: 8, kind: input, shape index: {}]
  %s9 = inlined_call_operand.<no memory space> [shape: f32[1,1], index: 9, kind: input, shape index: {}]
  %s10 = inlined_call_operand.vmem [shape: f32[2,1,1], index: 10, kind: output, shape index: {}]
  %s11 = sld [smem:[#allocation0]]
  $region73: #{spectral_discriminator_forward.1} parent=0
    _
  %s13 = ssub.s32 1, %s11
  %s14 = scalar_select 0, %s13, %s11
  %v15 = vstv %s9
  %16 = vst [vmem:[#allocation4] sm:$0x1] %v15
  loop: start=0, step=1, limit=4
  $region2: #{spectral_discriminator_forward.1} parent=0 // loop_pre_header
    _
  $region3: #{spectral_discriminator_forward.1} parent=0 // loop_header
    %s18 = sphi 0, %s22
    %p19 = scmp.ge.s32.totalorder %s18, 4
    %s28 = sphi 0, %s30
    %s31 = sphi 0, %s28
    %s32 = sphi 0, %s31
    %s48 = sphi 0, %s32
    %s52 = sphi 0, %s52
    %s54 = sphi 0, %s52
    %s55 = sphi 0, %s54
    %s69 = sphi 0, %s55
    %s73 = sphi 0, %s73
    %s75 = sphi 0, %s73
    %s76 = sphi 0, %s75
    %s90 = sphi 0, %s76
    %s94 = sphi 0, %s94
    %s96 = sphi 0, %s94
    %s97 = sphi 0, %s96
    %s111 = sphi 0, %s97
    %s115 = sphi 0, %s115
    %s117 = sphi 0, %s115
    %s118 = sphi 0, %s117
    %s132 = sphi 0, %s118
    %s136 = sphi 0, %s136
    %s138 = sphi 0, %s136
    %s139 = sphi 0, %s138
    %s153 = sphi 0, %s139
    %s157 = sphi 0, %s157
    %s159 = sphi 0, %s157
    %s160 = sphi 0, %s159
    %s174 = sphi 0, %s160
    %s178 = sphi 0, %s178
    %s180 = sphi 0, %s178
    %s181 = sphi 0, %s180
    %s195 = sphi 0, %s181
    %s199 = sphi 0, %s199
    %s201 = sphi 0, %s199
    %s202 = sphi 0, %s201
    %s216 = sphi 0, %s202
    %s220 = sphi 0, %s220
    %s222 = sphi 0, %s220
    %s223 = sphi 0, %s222
    %s237 = sphi 0, %s223
    %s243 = sphi 0, %s245
    %s246 = sphi 0, %s243
    %s247 = sphi 0, %s246
    %s263 = sphi 0, %s247
  $region4: #{spectral_discriminator_forward.1} parent=0 // loop_header_branch
    %21 = sbr.rel (%p19) target = $region8
  $region5: #{spectral_discriminator_forward.1} parent=0 // loop_body
    %s23 = ssub.s32 %s18, 1
    %s24 = ssub.s32 %s18, 2
    %s25 = sadd.s32 %s18, 1
    %s26 = ssub.s32 %s18, %s25
    %p27 = scmp.eq.s32.totalorder %s26, 0
    %s29 = sadd.s32 %s28, 1
    %s30 = scalar_select %p27, %s28, %s29
    %p33 = pneg %p27
    %p34 = scmp.eq.s32.totalorder %s18, 1
    %p35 = por %p33, %p34
    %p36 = scmp.ne.s32.totalorder %s28, %s31
    %p37 = scmp.eq.s32.totalorder %s18, 0
    %p38 = por %p36, %p37
    %p39 = scmp.ne.s32.totalorder %s28, %s31
    %p40 = scmp.eq.s32.totalorder %s23, 1
    %p41 = por %p39, %p40
    %p42 = scmp.ne.s32.totalorder %s31, %s32
    %p43 = scmp.eq.s32.totalorder %s23, 0
    %p44 = por %p42, %p43
    %p45 = scmp.ne.s32.totalorder %s31, %s32
    %p46 = scmp.eq.s32.totalorder %s24, 1
    %p47 = por %p45, %p46
    %p49 = scmp.ne.s32.totalorder %s32, %s48
    %p50 = scmp.eq.s32.totalorder %s24, 0
    %p51 = por %p49, %p50
    %s53 = sadd.s32 %s52, 1
    %p56 = scmp.eq.s32.totalorder %s18, 1
    %p57 = scmp.ne.s32.totalorder %s52, %s54
    %p58 = scmp.eq.s32.totalorder %s18, 0
    %p59 = por %p57, %p58
    %p60 = scmp.ne.s32.totalorder %s52, %s54
    %p61 = scmp.eq.s32.totalorder %s23, 1
    %p62 = por %p60, %p61
    %p63 = scmp.ne.s32.totalorder %s54, %s55
    %p64 = scmp.eq.s32.totalorder %s23, 0
    %p65 = por %p63, %p64
    %p66 = scmp.ne.s32.totalorder %s54, %s55
    %p67 = scmp.eq.s32.totalorder %s24, 1
    %p68 = por %p66, %p67
    %p70 = scmp.ne.s32.totalorder %s55, %s69
    %p71 = scmp.eq.s32.totalorder %s24, 0
    %p72 = por %p70, %p71
    %s74 = sadd.s32 %s73, 1
    %p77 = scmp.eq.s32.totalorder %s18, 1
    %p78 = scmp.ne.s32.totalorder %s73, %s75
    %p79 = scmp.eq.s32.totalorder %s18, 0
    %p80 = por %p78, %p79
    %p81 = scmp.ne.s32.totalorder %s73, %s75
    %p82 = scmp.eq.s32.totalorder %s23, 1
    %p83 = por %p81, %p82
    %p84 = scmp.ne.s32.totalorder %s75, %s76
    %p85 = scmp.eq.s32.totalorder %s23, 0
    %p86 = por %p84, %p85
    %p87 = scmp.ne.s32.totalorder %s75, %s76
    %p88 = scmp.eq.s32.totalorder %s24, 1
    %p89 = por %p87, %p88
    %p91 = scmp.ne.s32.totalorder %s76, %s90
    %p92 = scmp.eq.s32.totalorder %s24, 0
    %p93 = por %p91, %p92
    %s95 = sadd.s32 %s94, 1
    %p98 = scmp.eq.s32.totalorder %s18, 1
    %p99 = scmp.ne.s32.totalorder %s94, %s96
    %p100 = scmp.eq.s32.totalorder %s18, 0
    %p101 = por %p99, %p100
    %p102 = scmp.ne.s32.totalorder %s94, %s96
    %p103 = scmp.eq.s32.totalorder %s23, 1
    %p104 = por %p102, %p103
    %p105 = scmp.ne.s32.totalorder %s96, %s97
    %p106 = scmp.eq.s32.totalorder %s23, 0
    %p107 = por %p105, %p106
    %p108 = scmp.ne.s32.totalorder %s96, %s97
    %p109 = scmp.eq.s32.totalorder %s24, 1
    %p110 = por %p108, %p109
    %p112 = scmp.ne.s32.totalorder %s97, %s111
    %p113 = scmp.eq.s32.totalorder %s24, 0
    %p114 = por %p112, %p113
    %s116 = sadd.s32 %s115, 1
    %p119 = scmp.eq.s32.totalorder %s18, 1
    %p120 = scmp.ne.s32.totalorder %s115, %s117
    %p121 = scmp.eq.s32.totalorder %s18, 0
    %p122 = por %p120, %p121
    %p123 = scmp.ne.s32.totalorder %s115, %s117
    %p124 = scmp.eq.s32.totalorder %s23, 1
    %p125 = por %p123, %p124
    %p126 = scmp.ne.s32.totalorder %s117, %s118
    %p127 = scmp.eq.s32.totalorder %s23, 0
    %p128 = por %p126, %p127
    %p129 = scmp.ne.s32.totalorder %s117, %s118
    %p130 = scmp.eq.s32.totalorder %s24, 1
    %p131 = por %p129, %p130
    %p133 = scmp.ne.s32.totalorder %s118, %s132
    %p134 = scmp.eq.s32.totalorder %s24, 0
    %p135 = por %p133, %p134
    %s137 = sadd.s32 %s136, 1
    %p140 = scmp.eq.s32.totalorder %s18, 1
    %p141 = scmp.ne.s32.totalorder %s136, %s138
    %p142 = scmp.eq.s32.totalorder %s18, 0
    %p143 = por %p141, %p142
    %p144 = scmp.ne.s32.totalorder %s136, %s138
    %p145 = scmp.eq.s32.totalorder %s23, 1
    %p146 = por %p144, %p145
    %p147 = scmp.ne.s32.totalorder %s138, %s139
    %p148 = scmp.eq.s32.totalorder %s23, 0
    %p149 = por %p147, %p148
    %p150 = scmp.ne.s32.totalorder %s138, %s139
    %p151 = scmp.eq.s32.totalorder %s24, 1
    %p152 = por %p150, %p151
    %p154 = scmp.ne.s32.totalorder %s139, %s153
    %p155 = scmp.eq.s32.totalorder %s24, 0
    %p156 = por %p154, %p155
    %s158 = sadd.s32 %s157, 1
    %p161 = scmp.eq.s32.totalorder %s18, 1
    %p162 = scmp.ne.s32.totalorder %s157, %s159
    %p163 = scmp.eq.s32.totalorder %s18, 0
    %p164 = por %p162, %p163
    %p165 = scmp.ne.s32.totalorder %s157, %s159
    %p166 = scmp.eq.s32.totalorder %s23, 1
    %p167 = por %p165, %p166
    %p168 = scmp.ne.s32.totalorder %s159, %s160
    %p169 = scmp.eq.s32.totalorder %s23, 0
    %p170 = por %p168, %p169
    %p171 = scmp.ne.s32.totalorder %s159, %s160
    %p172 = scmp.eq.s32.totalorder %s24, 1
    %p173 = por %p171, %p172
    %p175 = scmp.ne.s32.totalorder %s160, %s174
    %p176 = scmp.eq.s32.totalorder %s24, 0
    %p177 = por %p175, %p176
    %s179 = sadd.s32 %s178, 1
    %p182 = scmp.eq.s32.totalorder %s18, 1
    %p183 = scmp.ne.s32.totalorder %s178, %s180
    %p184 = scmp.eq.s32.totalorder %s18, 0
    %p185 = por %p183, %p184
    %p186 = scmp.ne.s32.totalorder %s178, %s180
    %p187 = scmp.eq.s32.totalorder %s23, 1
    %p188 = por %p186, %p187
    %p189 = scmp.ne.s32.totalorder %s180, %s181
    %p190 = scmp.eq.s32.totalorder %s23, 0
    %p191 = por %p189, %p190
    %p192 = scmp.ne.s32.totalorder %s180, %s181
    %p193 = scmp.eq.s32.totalorder %s24, 1
    %p194 = por %p192, %p193
    %p196 = scmp.ne.s32.totalorder %s181, %s195
    %p197 = scmp.eq.s32.totalorder %s24, 0
    %p198 = por %p196, %p197
    %s200 = sadd.s32 %s199, 1
    %p203 = scmp.eq.s32.totalorder %s18, 1
    %p204 = scmp.ne.s32.totalorder %s199, %s201
    %p205 = scmp.eq.s32.totalorder %s18, 0
    %p206 = por %p204, %p205
    %p207 = scmp.ne.s32.totalorder %s199, %s201
    %p208 = scmp.eq.s32.totalorder %s23, 1
    %p209 = por %p207, %p208
    %p210 = scmp.ne.s32.totalorder %s201, %s202
    %p211 = scmp.eq.s32.totalorder %s23, 0
    %p212 = por %p210, %p211
    %p213 = scmp.ne.s32.totalorder %s201, %s202
    %p214 = scmp.eq.s32.totalorder %s24, 1
    %p215 = por %p213, %p214
    %p217 = scmp.ne.s32.totalorder %s202, %s216
    %p218 = scmp.eq.s32.totalorder %s24, 0
    %p219 = por %p217, %p218
    %s221 = sadd.s32 %s220, 1
    %p224 = scmp.eq.s32.totalorder %s18, 1
    %p225 = scmp.ne.s32.totalorder %s220, %s222
    %p226 = scmp.eq.s32.totalorder %s18, 0
    %p227 = por %p225, %p226
    %p228 = scmp.ne.s32.totalorder %s220, %s222
    %p229 = scmp.eq.s32.totalorder %s23, 1
    %p230 = por %p228, %p229
    %p231 = scmp.ne.s32.totalorder %s222, %s223
    %p232 = scmp.eq.s32.totalorder %s23, 0
    %p233 = por %p231, %p232
    %p234 = scmp.ne.s32.totalorder %s222, %s223
    %p235 = scmp.eq.s32.totalorder %s24, 1
    %p236 = por %p234, %p235
    %p238 = scmp.ne.s32.totalorder %s223, %s237
    %p239 = scmp.eq.s32.totalorder %s24, 0
    %p240 = por %p238, %p239
    %s241 = ssub.s32 %s18, %s25
    %p242 = scmp.eq.s32.totalorder %s241, 0
    %s244 = sadd.s32 %s243, 1
    %s245 = scalar_select %p242, %s243, %s244
    %p248 = pneg %p242
    %p249 = scmp.eq.s32.totalorder %s18, 1
    %p250 = por %p248, %p249
    %p251 = scmp.ne.s32.totalorder %s243, %s246
    %p252 = scmp.eq.s32.totalorder %s18, 0
    %p253 = por %p251, %p252
    %p254 = scmp.ne.s32.totalorder %s243, %s246
    %p255 = scmp.eq.s32.totalorder %s23, 1
    %p256 = por %p254, %p255
    %p257 = scmp.ne.s32.totalorder %s246, %s247
    %p258 = scmp.eq.s32.totalorder %s23, 0
    %p259 = por %p257, %p258
    %p260 = scmp.ne.s32.totalorder %s246, %s247
    %p261 = scmp.eq.s32.totalorder %s24, 1
    %p262 = por %p260, %p261
    %p264 = scmp.ne.s32.totalorder %s247, %s263
    %p265 = scmp.eq.s32.totalorder %s24, 0
    %p266 = por %p264, %p265
    %p267 = scmp.le.s32.totalorder 1, %s18
    %p268 = scmp.lt.s32.totalorder %s18, 3
    %p269 = pnand %p267, %p268
    %p270 = pneg %p269
    // Predicated region
    $region9: #{spectral_discriminator_forward.1} parent=5 // pred_check
      _
    $region10: #{spectral_discriminator_forward.1} parent=5 // pred_check_branch
      %272 = sbr.rel (%p269) target = $region12
    $region11: #{spectral_discriminator_forward.1} parent=5 // pred_region
      %s273 = ssub.s32 %s18, 1
      // Predicated region
      $region13: #{spectral_discriminator_forward.1} parent=11 // pred_check
        %p274 = pneg %p65
      $region14: #{spectral_discriminator_forward.1} parent=11 // pred_check_branch
        %276 = sbr.rel (%p274) target = $region16
      $region15: #{spectral_discriminator_forward.1} parent=11 // pred_region
        _
      $region16: #{spectral_discriminator_forward.1} parent=11 // pred_fallthru
        _
      // Predicated region
      $region17: #{spectral_discriminator_forward.1} parent=11 // pred_check
        %p277 = pneg %p86
      $region18: #{spectral_discriminator_forward.1} parent=11 // pred_check_branch
        %279 = sbr.rel (%p277) target = $region20
      $region19: #{spectral_discriminator_forward.1} parent=11 // pred_region
        _
      $region20: #{spectral_discriminator_forward.1} parent=11 // pred_fallthru
        _
      // Predicated region
      $region21: #{spectral_discriminator_forward.1} parent=11 // pred_check
        %p280 = pneg %p107
      $region22: #{spectral_discriminator_forward.1} parent=11 // pred_check_branch
        %282 = sbr.rel (%p280) target = $region24
      $region23: #{spectral_discriminator_forward.1} parent=11 // pred_region
        _
      $region24: #{spectral_discriminator_forward.1} parent=11 // pred_fallthru
        _
      // Predicated region
      $region25: #{spectral_discriminator_forward.1} parent=11 // pred_check
        %p283 = pneg %p128
      $region26: #{spectral_discriminator_forward.1} parent=11 // pred_check_branch
        %285 = sbr.rel (%p283) target = $region28
      $region27: #{spectral_discriminator_forward.1} parent=11 // pred_region
        _
      $region28: #{spectral_discriminator_forward.1} parent=11 // pred_fallthru
        _
      // Predicated region
      $region29: #{spectral_discriminator_forward.1} parent=11 // pred_check
        %p286 = pneg %p149
      $region30: #{spectral_discriminator_forward.1} parent=11 // pred_check_branch
        %288 = sbr.rel (%p286) target = $region32
      $region31: #{spectral_discriminator_forward.1} parent=11 // pred_region
        _
      $region32: #{spectral_discriminator_forward.1} parent=11 // pred_fallthru
        _
      // Predicated region
      $region33: #{spectral_discriminator_forward.1} parent=11 // pred_check
        %p289 = pneg %p170
      $region34: #{spectral_discriminator_forward.1} parent=11 // pred_check_branch
        %291 = sbr.rel (%p289) target = $region36
      $region35: #{spectral_discriminator_forward.1} parent=11 // pred_region
        _
      $region36: #{spectral_discriminator_forward.1} parent=11 // pred_fallthru
        _
      // Predicated region
      $region37: #{spectral_discriminator_forward.1} parent=11 // pred_check
        %p292 = pneg %p191
      $region38: #{spectral_discriminator_forward.1} parent=11 // pred_check_branch
        %294 = sbr.rel (%p292) target = $region40
      $region39: #{spectral_discriminator_forward.1} parent=11 // pred_region
        _
      $region40: #{spectral_discriminator_forward.1} parent=11 // pred_fallthru
        _
      // Predicated region
      $region41: #{spectral_discriminator_forward.1} parent=11 // pred_check
        %p295 = pneg %p212
      $region42: #{spectral_discriminator_forward.1} parent=11 // pred_check_branch
        %297 = sbr.rel (%p295) target = $region44
      $region43: #{spectral_discriminator_forward.1} parent=11 // pred_region
        _
      $region44: #{spectral_discriminator_forward.1} parent=11 // pred_fallthru
        _
      // Predicated region
      $region45: #{spectral_discriminator_forward.1} parent=11 // pred_check
        %p298 = pneg %p233
      $region46: #{spectral_discriminator_forward.1} parent=11 // pred_check_branch
        %300 = sbr.rel (%p298) target = $region48
      $region47: #{spectral_discriminator_forward.1} parent=11 // pred_region
        _
      $region48: #{spectral_discriminator_forward.1} parent=11 // pred_fallthru
        _
    $region12: #{spectral_discriminator_forward.1} parent=5 // pred_fallthru
      _
    %p301 = scmp.lt.s32.totalorder %s18, 2
    // Predicated region
    $region49: #{spectral_discriminator_forward.1} parent=5 // pred_check
      %p302 = pneg %p301
    $region50: #{spectral_discriminator_forward.1} parent=5 // pred_check_branch
      %304 = sbr.rel (%p302) target = $region52
    $region51: #{spectral_discriminator_forward.1} parent=5 // pred_region
      // Predicated region
      $region53: #{spectral_discriminator_forward.1} parent=51 // pred_check
        %p305 = pneg %p38
      $region54: #{spectral_discriminator_forward.1} parent=51 // pred_check_branch
        %307 = sbr.rel (%p305) target = $region56
      $region55: #{spectral_discriminator_forward.1} parent=51 // pred_region
        %p308 = scmp.lt.s32.totalorder %s18, 1
        %s309 = scalar_select %p308, %s18, 1
        %s310 = smul.addr %s309, 64
        %s311 = smul.addr %s310, 4
        %s312 = scalar_lea.vmem %s0, %s311
      $region56: #{spectral_discriminator_forward.1} parent=51 // pred_fallthru
        _
    $region52: #{spectral_discriminator_forward.1} parent=5 // pred_fallthru
      _
    %p313 = scmp.le.s32.totalorder 1, %s18
    %p314 = scmp.lt.s32.totalorder %s18, 3
    %p315 = pnand %p313, %p314
    %p316 = pneg %p315
    // Predicated region
    $region57: #{spectral_discriminator_forward.1} parent=5 // pred_check
      _
    $region58: #{spectral_discriminator_forward.1} parent=5 // pred_check_branch
      %318 = sbr.rel (%p315) target = $region60
    $region59: #{spectral_discriminator_forward.1} parent=5 // pred_region
      %s319 = ssub.s32 %s18, 1
      %p320 = scmp.lt.s32.totalorder %s23, 1
      %s321 = scalar_select %p320, %s23, 1
      %s322 = smul.addr %s321, 64
      %s323 = smul.addr %s322, 4
      %s324 = scalar_lea.vmem %s0, %s323
      %p325 = pneg %p44
      %p326 = pneg %p41
      %p327 = pneg %p65
      %p328 = pneg %p62
      %p329 = pneg %p86
      %p330 = pneg %p83
      %p331 = pneg %p107
      %p332 = pneg %p104
      %p333 = pneg %p128
      %p334 = pneg %p125
      %p335 = pneg %p149
      %p336 = pneg %p146
      %p337 = pneg %p170
      %p338 = pneg %p167
      %p339 = pneg %p191
      %p340 = pneg %p188
      %p341 = pneg %p212
      %p342 = pneg %p209
      %p343 = pneg %p233
      %p344 = pneg %p230
      %p345 = pneg %p259
      %p346 = pneg %p256
      %p347 = scmp.lt.s32.totalorder %s23, 1
      %s348 = scalar_select %p347, %s23, 1
      %s349 = scalar_lea.vmem %s10, %s348
      %p350 = scmp.lt.s32.totalorder %s23, 1
      %s351 = scalar_select %p350, %s23, 1
      %s352 = smul.addr %s351, 64
      %s353 = smul.addr %s352, 4
      %s354 = scalar_lea.vmem %s0, %s353
      %p355 = scmp.lt.s32.totalorder %s23, 1
      %s356 = scalar_select %p355, %s23, 1
      %s357 = scalar_lea.vmem %s10, %s356
      %359 = vst [vmem:[#allocation2] sm:$0x1f] 0.0
      %360 = vst [vmem:[#allocation2 + $0x8] sm:$0x1f] 0.0
      %361 = vst [vmem:[#allocation2 + $0x10] sm:$0x1f] 0.0
      %362 = vst [vmem:[#allocation2 + $0x18] sm:$0x1f] 0.0
      %363 = vst [vmem:[#allocation2 + $0x20] sm:$0x1f] 0.0
      %364 = vst [vmem:[#allocation2 + $0x28] sm:$0x1f] 0.0
      %365 = vst [vmem:[#allocation2 + $0x30] sm:$0x1f] 0.0
      %366 = vst [vmem:[#allocation2 + $0x38] sm:$0x1f] 0.0
      %367 = vst [vmem:[#allocation2 + $0x40] sm:$0x1f] 0.0
      %368 = vst [vmem:[#allocation2 + $0x48] sm:$0x1f] 0.0
      %369 = vst [vmem:[#allocation2 + $0x50] sm:$0x1f] 0.0
      %370 = vst [vmem:[#allocation2 + $0x58] sm:$0x1f] 0.0
      %371 = vst [vmem:[#allocation2 + $0x60] sm:$0x1f] 0.0
      %372 = vst [vmem:[#allocation2 + $0x68] sm:$0x1f] 0.0
      %373 = vst [vmem:[#allocation2 + $0x70] sm:$0x1f] 0.0
      %374 = vst [vmem:[#allocation2 + $0x78] sm:$0x1f] 0.0
      %375 = vst [vmem:[#allocation2 + $0x80] sm:$0x1f] 0.0
      %376 = vst [vmem:[#allocation2 + $0x88] sm:$0x1f] 0.0
      %377 = vst [vmem:[#allocation2 + $0x90] sm:$0x1f] 0.0
      %378 = vst [vmem:[#allocation2 + $0x98] sm:$0x1f] 0.0
      %379 = vst [vmem:[#allocation2 + $0xa0] sm:$0x1f] 0.0
      %380 = vst [vmem:[#allocation2 + $0xa8] sm:$0x1f] 0.0
      %381 = vst [vmem:[#allocation2 + $0xb0] sm:$0x1f] 0.0
      %382 = vst [vmem:[#allocation2 + $0xb8] sm:$0x1f] 0.0
      %383 = vst [vmem:[#allocation2 + $0xc0] sm:$0x1f] 0.0
      %384 = vst [vmem:[#allocation2 + $0xc8] sm:$0x1f] 0.0
      %385 = vst [vmem:[#allocation2 + $0xd0] sm:$0x1f] 0.0
      %386 = vst [vmem:[#allocation2 + $0xd8] sm:$0x1f] 0.0
      %387 = vst [vmem:[#allocation2 + $0xe0] sm:$0x1f] 0.0
      %388 = vst [vmem:[#allocation2 + $0xe8] sm:$0x1f] 0.0
      %389 = vst [vmem:[#allocation2 + $0xf0] sm:$0x1f] 0.0
      %390 = vst [vmem:[#allocation2 + $0xf8] sm:$0x1f] 0.0
      %391 = vst [vmem:[#allocation2 + $0x100] sm:$0x1f] 0.0
      %392 = vst [vmem:[#allocation2 + $0x108] sm:$0x1f] 0.0
      %393 = vst [vmem:[#allocation2 + $0x110] sm:$0x1f] 0.0
      %394 = vst [vmem:[#allocation2 + $0x118] sm:$0x1f] 0.0
      %395 = vst [vmem:[#allocation2 + $0x120] sm:$0x1f] 0.0
      %396 = vst [vmem:[#allocation2 + $0x128] sm:$0x1f] 0.0
      %397 = vst [vmem:[#allocation2 + $0x130] sm:$0x1f] 0.0
      %398 = vst [vmem:[#allocation2 + $0x138] sm:$0x1f] 0.0
      %399 = vst [vmem:[#allocation2 + $0x140] sm:$0x1f] 0.0
      %400 = vst [vmem:[#allocation2 + $0x148] sm:$0x1f] 0.0
      %401 = vst [vmem:[#allocation2 + $0x150] sm:$0x1f] 0.0
      %402 = vst [vmem:[#allocation2 + $0x158] sm:$0x1f] 0.0
      %403 = vst [vmem:[#allocation2 + $0x160] sm:$0x1f] 0.0
      %404 = vst [vmem:[#allocation2 + $0x168] sm:$0x1f] 0.0
      %405 = vst [vmem:[#allocation2 + $0x170] sm:$0x1f] 0.0
      %406 = vst [vmem:[#allocation2 + $0x178] sm:$0x1f] 0.0
      %407 = vst [vmem:[#allocation2 + $0x180] sm:$0x1f] 0.0
      %408 = vst [vmem:[#allocation2 + $0x188] sm:$0x1f] 0.0
      %409 = vst [vmem:[#allocation3] sm:$0x77] 0.0
      %410 = vst [vmem:[#allocation3 + $0x8] sm:$0x77] 0.0
      %411 = vst [vmem:[#allocation3 + $0x10] sm:$0x77] 0.0
      %412 = vst [vmem:[#allocation3 + $0x18] sm:$0x77] 0.0
      %413 = vst [vmem:[#allocation3 + $0x20] sm:$0x77] 0.0
      %414 = vst [vmem:[#allocation3 + $0x28] sm:$0x77] 0.0
      %415 = vst [vmem:[#allocation3 + $0x30] sm:$0x77] 0.0
      %416 = vst [vmem:[#allocation3 + $0x38] sm:$0x77] 0.0
      %417 = vst [vmem:[#allocation3 + $0x40] sm:$0x77] 0.0
      %418 = vst [vmem:[#allocation3 + $0x48] sm:$0x77] 0.0
      %419 = vst [vmem:[#allocation3 + $0x50] sm:$0x77] 0.0
      %420 = vst [vmem:[#allocation3 + $0x58] sm:$0x77] 0.0
      %421 = vst [vmem:[#allocation3 + $0x60] sm:$0x77] 0.0
      %422 = vst [vmem:[#allocation3 + $0x68] sm:$0x77] 0.0
      %423 = vst [vmem:[#allocation3 + $0x70] sm:$0x77] 0.0
      %424 = vst [vmem:[#allocation3 + $0x78] sm:$0x77] 0.0
      %425 = vst [vmem:[#allocation3 + $0x80] sm:$0x77] 0.0
      %426 = vst [vmem:[#allocation3 + $0x88] sm:$0x77] 0.0
      %v427 = vld [vmem:[%s354] sm:$0xf]
      %v428 = vld [vmem:[%s354 + $0x4] sm:$0xf]
      %v429 = vld [vmem:[%s354 + $0x8] sm:$0xf]
      %v430 = vld [vmem:[%s354 + $0xc] sm:$0xf]
      %v431 = vld [vmem:[%s354 + $0x10] sm:$0xf]
      %v432 = vld [vmem:[%s354 + $0x14] sm:$0xf]
      %v433 = vld [vmem:[%s354 + $0x18] sm:$0xf]
      %v434 = vld [vmem:[%s354 + $0x1c] sm:$0xf]
      %v435 = vld [vmem:[%s354 + $0x20] sm:$0xf]
      %v436 = vld [vmem:[%s354 + $0x24] sm:$0xf]
      %v437 = vld [vmem:[%s354 + $0x28] sm:$0xf]
      %v438 = vld [vmem:[%s354 + $0x2c] sm:$0xf]
      %v439 = vld [vmem:[%s354 + $0x30] sm:$0xf]
      %v440 = vld [vmem:[%s354 + $0x34] sm:$0xf]
      %v441 = vld [vmem:[%s354 + $0x38] sm:$0xf]
      %v442 = vld [vmem:[%s354 + $0x3c] sm:$0xf]
      %v443 = vld [vmem:[%s354 + $0x40] sm:$0xf]
      %v444 = vld [vmem:[%s354 + $0x44] sm:$0xf]
      %v445 = vld [vmem:[%s354 + $0x48] sm:$0xf]
      %v446 = vld [vmem:[%s354 + $0x4c] sm:$0xf]
      %v447 = vld [vmem:[%s354 + $0x50] sm:$0xf]
      %v448 = vld [vmem:[%s354 + $0x54] sm:$0xf]
      %v449 = vld [vmem:[%s354 + $0x58] sm:$0xf]
      %v450 = vld [vmem:[%s354 + $0x5c] sm:$0xf]
      %v451 = vld [vmem:[%s354 + $0x60] sm:$0xf]
      %v452 = vld [vmem:[%s354 + $0x64] sm:$0xf]
      %v453 = vld [vmem:[%s354 + $0x68] sm:$0xf]
      %v454 = vld [vmem:[%s354 + $0x6c] sm:$0xf]
      %v455 = vld [vmem:[%s354 + $0x70] sm:$0xf]
      %v456 = vld [vmem:[%s354 + $0x74] sm:$0xf]
      %v457 = vld [vmem:[%s354 + $0x78] sm:$0xf]
      %v458 = vld [vmem:[%s354 + $0x7c] sm:$0xf]
      %v459 = vld [vmem:[%s354 + $0x80] sm:$0xf]
      %v460 = vld [vmem:[%s354 + $0x84] sm:$0xf]
      %v461 = vld [vmem:[%s354 + $0x88] sm:$0xf]
      %v462 = vld [vmem:[%s354 + $0x8c] sm:$0xf]
      %v463 = vld [vmem:[%s354 + $0x90] sm:$0xf]
      %v464 = vld [vmem:[%s354 + $0x94] sm:$0xf]
      %v465 = vld [vmem:[%s354 + $0x98] sm:$0xf]
      %v466 = vld [vmem:[%s354 + $0x9c] sm:$0xf]
      %v467 = vld [vmem:[%s354 + $0xa0] sm:$0xf]
      %v468 = vld [vmem:[%s354 + $0xa4] sm:$0xf]
      %v469 = vld [vmem:[%s354 + $0xa8] sm:$0xf]
      %v470 = vld [vmem:[%s354 + $0xac] sm:$0xf]
      %v471 = vld [vmem:[%s354 + $0xb0] sm:$0xf]
      %v472 = vld [vmem:[%s354 + $0xb4] sm:$0xf]
      %v473 = vld [vmem:[%s354 + $0xb8] sm:$0xf]
      %v474 = vld [vmem:[%s354 + $0xbc] sm:$0xf]
      %v475 = vld [vmem:[%s354 + $0xc0] sm:$0xf]
      %v476 = vld [vmem:[%s354 + $0xc4] sm:$0xf]
      %v477 = vld [vmem:[%s354 + $0xc8] sm:$0xf]
      %v478 = vld [vmem:[%s354 + $0xcc] sm:$0xf]
      %v479 = vld [vmem:[%s354 + $0xd0] sm:$0xf]
      %v480 = vld [vmem:[%s354 + $0xd4] sm:$0xf]
      %v481 = vld [vmem:[%s354 + $0xd8] sm:$0xf]
      %v482 = vld [vmem:[%s354 + $0xdc] sm:$0xf]
      %v483 = vld [vmem:[%s354 + $0xe0] sm:$0xf]
      %v484 = vld [vmem:[%s354 + $0xe4] sm:$0xf]
      %v485 = vld [vmem:[%s354 + $0xe8] sm:$0xf]
      %v486 = vld [vmem:[%s354 + $0xec] sm:$0xf]
      %v487 = vld [vmem:[%s354 + $0xf0] sm:$0xf]
      %v488 = vld [vmem:[%s354 + $0xf4] sm:$0xf]
      %v489 = vld [vmem:[%s354 + $0xf8] sm:$0xf]
      %v490 = vld [vmem:[%s354 + $0xfc] sm:$0xf]
      %v491 = vld [vmem:[%s1] sm:$0xf]
      %v492 = vld [vmem:[%s1 + $0x4] sm:$0xf]
      %v493 = vld [vmem:[%s1 + $0x8] sm:$0xf]
      %v494 = vld [vmem:[%s1 + $0xc] sm:$0xf]
      %v495 = vld [vmem:[%s1 + $0x10] sm:$0xf]
      %v496 = vld [vmem:[%s1 + $0x14] sm:$0xf]
      %v497 = vld [vmem:[%s1 + $0x18] sm:$0xf]
      %v498 = vld [vmem:[%s1 + $0x1c] sm:$0xf]
      %v499 = vld [vmem:[%s2] sm:$0x1]
      %v501 = vlaneseq
      %v502 = vshrl.u32 %v501, 7
      %v503 = vsub.s32 0, %v502
      %v504 = vrot.slane %v499, %v503
      %v570 = vunpack.c.l.b16 %v427
      %v571 = vunpack.c.l.b16 %v428
      %v572 = vunpack.c.l.b16 %v429
      %v573 = vunpack.c.l.b16 %v430
      %v574 = vunpack.c.l.b16 %v431
      %v575 = vunpack.c.l.b16 %v432
      %v576 = vunpack.c.l.b16 %v433
      %v577 = vunpack.c.l.b16 %v434
      %v578 = vunpack.c.l.b16 %v435
      %v579 = vunpack.c.l.b16 %v436
      %v580 = vunpack.c.l.b16 %v437
      %v581 = vunpack.c.l.b16 %v438
      %v582 = vunpack.c.l.b16 %v439
      %v583 = vunpack.c.l.b16 %v440
      %v584 = vunpack.c.l.b16 %v441
      %v585 = vunpack.c.l.b16 %v442
      %v586 = vunpack.c.l.b16 %v443
      %v587 = vunpack.c.l.b16 %v444
      %v588 = vunpack.c.l.b16 %v445
      %v589 = vunpack.c.l.b16 %v446
      %v590 = vunpack.c.l.b16 %v447
      %v591 = vunpack.c.l.b16 %v448
      %v592 = vunpack.c.l.b16 %v449
      %v593 = vunpack.c.l.b16 %v450
      %v594 = vunpack.c.l.b16 %v451
      %v595 = vunpack.c.l.b16 %v452
      %v596 = vunpack.c.l.b16 %v453
      %v597 = vunpack.c.l.b16 %v454
      %v598 = vunpack.c.l.b16 %v455
      %v599 = vunpack.c.l.b16 %v456
      %v600 = vunpack.c.l.b16 %v457
      %v601 = vunpack.c.l.b16 %v458
      %v602 = vunpack.c.l.b16 %v459
      %v603 = vunpack.c.l.b16 %v460
      %v604 = vunpack.c.l.b16 %v461
      %v605 = vunpack.c.l.b16 %v462
      %v606 = vunpack.c.l.b16 %v463
      %v607 = vunpack.c.l.b16 %v464
      %v608 = vunpack.c.l.b16 %v465
      %v609 = vunpack.c.l.b16 %v466
      %v610 = vunpack.c.l.b16 %v467
      %v611 = vunpack.c.l.b16 %v468
      %v612 = vunpack.c.l.b16 %v469
      %v613 = vunpack.c.l.b16 %v470
      %v614 = vunpack.c.l.b16 %v471
      %v615 = vunpack.c.l.b16 %v472
      %v616 = vunpack.c.l.b16 %v473
      %v617 = vunpack.c.l.b16 %v474
      %v618 = vunpack.c.l.b16 %v475
      %v619 = vunpack.c.l.b16 %v476
      %v620 = vunpack.c.l.b16 %v477
      %v621 = vunpack.c.l.b16 %v478
      %v622 = vunpack.c.l.b16 %v479
      %v623 = vunpack.c.l.b16 %v480
      %v624 = vunpack.c.l.b16 %v481
      %v625 = vunpack.c.l.b16 %v482
      %v626 = vunpack.c.l.b16 %v483
      %v627 = vunpack.c.l.b16 %v484
      %v628 = vunpack.c.l.b16 %v485
      %v629 = vunpack.c.l.b16 %v486
      %v630 = vunpack.c.l.b16 %v487
      %v631 = vunpack.c.l.b16 %v488
      %v632 = vunpack.c.l.b16 %v489
      %v633 = vunpack.c.l.b16 %v490
      %v634 = vpack.c.b16 %v571, %v570
      %v635 = vpack.c.b16 %v573, %v572
      %v636 = vpack.c.b16 %v575, %v574
      %v637 = vpack.c.b16 %v577, %v576
      %v638 = vpack.c.b16 %v579, %v578
      %v639 = vpack.c.b16 %v581, %v580
      %v640 = vpack.c.b16 %v583, %v582
      %v641 = vpack.c.b16 %v585, %v584
      %v642 = vpack.c.b16 %v587, %v586
      %v643 = vpack.c.b16 %v589, %v588
      %v644 = vpack.c.b16 %v591, %v590
      %v645 = vpack.c.b16 %v593, %v592
      %v646 = vpack.c.b16 %v595, %v594
      %v647 = vpack.c.b16 %v597, %v596
      %v648 = vpack.c.b16 %v599, %v598
      %v649 = vpack.c.b16 %v601, %v600
      %v650 = vpack.c.b16 %v603, %v602
      %v651 = vpack.c.b16 %v605, %v604
      %v652 = vpack.c.b16 %v607, %v606
      %v653 = vpack.c.b16 %v609, %v608
      %v654 = vpack.c.b16 %v611, %v610
      %v655 = vpack.c.b16 %v613, %v612
      %v656 = vpack.c.b16 %v615, %v614
      %v657 = vpack.c.b16 %v617, %v616
      %v658 = vpack.c.b16 %v619, %v618
      %v659 = vpack.c.b16 %v621, %v620
      %v660 = vpack.c.b16 %v623, %v622
      %v661 = vpack.c.b16 %v625, %v624
      %v662 = vpack.c.b16 %v627, %v626
      %v663 = vpack.c.b16 %v629, %v628
      %v664 = vpack.c.b16 %v631, %v630
      %v665 = vpack.c.b16 %v633, %v632
      %v674 = vunpack.c.l.b16 %v491
      %v675 = vunpack.c.l.b16 %v492
      %v676 = vunpack.c.l.b16 %v493
      %v677 = vunpack.c.l.b16 %v494
      %v678 = vunpack.c.l.b16 %v495
      %v679 = vunpack.c.l.b16 %v496
      %v680 = vunpack.c.l.b16 %v497
      %v681 = vunpack.c.l.b16 %v498
      %v682 = vpack.c.b16 %v675, %v674
      %v683 = vpack.c.b16 %v677, %v676
      %v684 = vpack.c.b16 %v679, %v678
      %v685 = vpack.c.b16 %v681, %v680
      %vm690 = vcmask 523264
      %v692 = vsel %vm690, %v634, 0
      %v695 = vsel %vm690, %v635, 0
      %v698 = vsel %vm690, %v636, 0
      %v701 = vsel %vm690, %v637, 0
      %v704 = vsel %vm690, %v638, 0
      %v707 = vsel %vm690, %v639, 0
      %v710 = vsel %vm690, %v640, 0
      %v713 = vsel %vm690, %v641, 0
      %v716 = vsel %vm690, %v642, 0
      %v719 = vsel %vm690, %v643, 0
      %v722 = vsel %vm690, %v644, 0
      %v725 = vsel %vm690, %v645, 0
      %v728 = vsel %vm690, %v646, 0
      %v731 = vsel %vm690, %v647, 0
      %v734 = vsel %vm690, %v648, 0
      %v737 = vsel %vm690, %v649, 0
      %v740 = vsel %vm690, %v650, 0
      %v743 = vsel %vm690, %v651, 0
      %v746 = vsel %vm690, %v652, 0
      %v749 = vsel %vm690, %v653, 0
      %v752 = vsel %vm690, %v654, 0
      %v755 = vsel %vm690, %v655, 0
      %v758 = vsel %vm690, %v656, 0
      %v761 = vsel %vm690, %v657, 0
      %v764 = vsel %vm690, %v658, 0
      %v767 = vsel %vm690, %v659, 0
      %v770 = vsel %vm690, %v660, 0
      %v773 = vsel %vm690, %v661, 0
      %v776 = vsel %vm690, %v662, 0
      %v779 = vsel %vm690, %v663, 0
      %v782 = vsel %vm690, %v664, 0
      %v785 = vsel %vm690, %v665, 0
      %787 = vmatprep.subr.bf16.mxu0 0
      %788 = vmatpush1.bf16.msra.mxu0 0
      %789 = vmatprep.subr.bf16.mxu0 0
      %790 = vmatpush1.bf16.msra.mxu0 0
      %791 = vmatprep.subr.bf16.mxu0 0
      %792 = vmatpush1.bf16.msra.mxu0 0
      %793 = vmatprep.subr.bf16.mxu0 0
      %794 = vmatpush1.bf16.msra.mxu0 0
      %795 = vmatprep.subr.bf16.mxu0 0
      %796 = vmatpush1.bf16.msra.mxu0 %v685
      %797 = vmatprep.subr.bf16.mxu0 0
      %798 = vmatpush1.bf16.msra.mxu0 %v684
      %799 = vmatprep.subr.bf16.mxu0 0
      %800 = vmatpush1.bf16.msra.mxu0 %v683
      %801 = vmatprep.subr.bf16.mxu0 0
      %802 = vmatpush1.bf16.msra.mxu0 %v682
      %803 = vmatprep.subr.bf16.mxu0 0
      %804 = vmatpush2.bf16.msra.mxu0 0
      %805 = vmatprep.subr.bf16.mxu0 0
      %806 = vmatpush2.bf16.msra.mxu0 0
      %807 = vmatprep.subr.bf16.mxu0 0
      %808 = vmatpush2.bf16.msra.mxu0 0
      %809 = vmatprep.subr.bf16.mxu0 0
      %810 = vmatpush2.bf16.msra.mxu0 0
      %811 = vmatprep.subr.bf16.mxu0 0
      %812 = vmatpush2.bf16.msra.mxu0 0
      %813 = vmatprep.subr.bf16.mxu0 0
      %814 = vmatpush2.bf16.msra.mxu0 0
      %815 = vmatprep.subr.bf16.mxu0 0
      %816 = vmatpush2.bf16.msra.mxu0 0
      %817 = vmatprep.subr.bf16.mxu0 0
      %818 = vmatpush2.bf16.msra.mxu0 0
      %819 = vmatprep.mubr.bf16.mxu0 0
      %820 = vmatmul.mubr.bf16.gmra.mxu0 %v692
      %v821 = vpop.f32.mrf.mxu0
      %v822 = vadd.f32 %v504, %v821
      %v823 = vpop.f32.mrf.mxu0
      %v824 = vpop.f32.mrf.mxu0
      %v825 = vadd.f32 %v504, %v824
      %v826 = vpop.f32.mrf.mxu0
      %827 = vmatprep.mubr.bf16.mxu0 0
      %828 = vmatmul.mubr.bf16.gmra.mxu0 %v695
      %v829 = vpop.f32.mrf.mxu0
      %v830 = vadd.f32 %v504, %v829
      %v831 = vpop.f32.mrf.mxu0
      %v832 = vpop.f32.mrf.mxu0
      %v833 = vadd.f32 %v504, %v832
      %v834 = vpop.f32.mrf.mxu0
      %835 = vmatprep.mubr.bf16.mxu0 0
      %836 = vmatmul.mubr.bf16.gmra.mxu0 %v698
      %v837 = vpop.f32.mrf.mxu0
      %v838 = vadd.f32 %v504, %v837
      %v839 = vpop.f32.mrf.mxu0
      %v840 = vpop.f32.mrf.mxu0
      %v841 = vadd.f32 %v504, %v840
      %v842 = vpop.f32.mrf.mxu0
      %843 = vmatprep.mubr.bf16.mxu0 0
      %844 = vmatmul.mubr.bf16.gmra.mxu0 %v701
      %v845 = vpop.f32.mrf.mxu0
      %v846 = vadd.f32 %v504, %v845
      %v847 = vpop.f32.mrf.mxu0
      %v848 = vpop.f32.mrf.mxu0
      %v849 = vadd.f32 %v504, %v848
      %v850 = vpop.f32.mrf.mxu0
      %851 = vmatprep.mubr.bf16.mxu0 0
      %852 = vmatmul.mubr.bf16.gmra.mxu0 %v704
      %v853 = vpop.f32.mrf.mxu0
      %v854 = vadd.f32 %v504, %v853
      %v855 = vpop.f32.mrf.mxu0
      %v856 = vpop.f32.mrf.mxu0
      %v857 = vadd.f32 %v504, %v856
      %v858 = vpop.f32.mrf.mxu0
      %859 = vmatprep.mubr.bf16.mxu0 0
      %860 = vmatmul.mubr.bf16.gmra.mxu0 %v707
      %v861 = vpop.f32.mrf.mxu0
      %v862 = vadd.f32 %v504, %v861
      %v863 = vpop.f32.mrf.mxu0
      %v864 = vpop.f32.mrf.mxu0
      %v865 = vadd.f32 %v504, %v864
      %v866 = vpop.f32.mrf.mxu0
      %867 = vmatprep.mubr.bf16.mxu0 0
      %868 = vmatmul.mubr.bf16.gmra.mxu0 %v710
      %v869 = vpop.f32.mrf.mxu0
      %v870 = vadd.f32 %v504, %v869
      %v871 = vpop.f32.mrf.mxu0
      %v872 = vpop.f32.mrf.mxu0
      %v873 = vadd.f32 %v504, %v872
      %v874 = vpop.f32.mrf.mxu0
      %875 = vmatprep.mubr.bf16.mxu0 0
      %876 = vmatmul.mubr.bf16.gmra.mxu0 %v713
      %v877 = vpop.f32.mrf.mxu0
      %v878 = vadd.f32 %v504, %v877
      %v879 = vpop.f32.mrf.mxu0
      %v880 = vpop.f32.mrf.mxu0
      %v881 = vadd.f32 %v504, %v880
      %v882 = vpop.f32.mrf.mxu0
      %883 = vmatprep.mubr.bf16.mxu0 0
      %884 = vmatmul.mubr.bf16.gmra.mxu0 %v716
      %v885 = vpop.f32.mrf.mxu0
      %v886 = vadd.f32 %v504, %v885
      %v887 = vpop.f32.mrf.mxu0
      %v888 = vpop.f32.mrf.mxu0
      %v889 = vadd.f32 %v504, %v888
      %v890 = vpop.f32.mrf.mxu0
      %891 = vmatprep.mubr.bf16.mxu0 0
      %892 = vmatmul.mubr.bf16.gmra.mxu0 %v719
      %v893 = vpop.f32.mrf.mxu0
      %v894 = vadd.f32 %v504, %v893
      %v895 = vpop.f32.mrf.mxu0
      %v896 = vpop.f32.mrf.mxu0
      %v897 = vadd.f32 %v504, %v896
      %v898 = vpop.f32.mrf.mxu0
      %899 = vmatprep.mubr.bf16.mxu0 0
      %900 = vmatmul.mubr.bf16.gmra.mxu0 %v722
      %v901 = vpop.f32.mrf.mxu0
      %v902 = vadd.f32 %v504, %v901
      %v903 = vpop.f32.mrf.mxu0
      %v904 = vpop.f32.mrf.mxu0
      %v905 = vadd.f32 %v504, %v904
      %v906 = vpop.f32.mrf.mxu0
      %907 = vmatprep.mubr.bf16.mxu0 0
      %908 = vmatmul.mubr.bf16.gmra.mxu0 %v725
      %v909 = vpop.f32.mrf.mxu0
      %v910 = vadd.f32 %v504, %v909
      %v911 = vpop.f32.mrf.mxu0
      %v912 = vpop.f32.mrf.mxu0
      %v913 = vadd.f32 %v504, %v912
      %v914 = vpop.f32.mrf.mxu0
      %915 = vmatprep.mubr.bf16.mxu0 0
      %916 = vmatmul.mubr.bf16.gmra.mxu0 %v728
      %v917 = vpop.f32.mrf.mxu0
      %v918 = vadd.f32 %v504, %v917
      %v919 = vpop.f32.mrf.mxu0
      %v920 = vpop.f32.mrf.mxu0
      %v921 = vadd.f32 %v504, %v920
      %v922 = vpop.f32.mrf.mxu0
      %923 = vmatprep.mubr.bf16.mxu0 0
      %924 = vmatmul.mubr.bf16.gmra.mxu0 %v731
      %v925 = vpop.f32.mrf.mxu0
      %v926 = vadd.f32 %v504, %v925
      %v927 = vpop.f32.mrf.mxu0
      %v928 = vpop.f32.mrf.mxu0
      %v929 = vadd.f32 %v504, %v928
      %v930 = vpop.f32.mrf.mxu0
      %931 = vmatprep.mubr.bf16.mxu0 0
      %932 = vmatmul.mubr.bf16.gmra.mxu0 %v734
      %v933 = vpop.f32.mrf.mxu0
      %v934 = vadd.f32 %v504, %v933
      %v935 = vpop.f32.mrf.mxu0
      %v936 = vpop.f32.mrf.mxu0
      %v937 = vadd.f32 %v504, %v936
      %v938 = vpop.f32.mrf.mxu0
      %939 = vmatprep.mubr.bf16.mxu0 0
      %940 = vmatmul.mubr.bf16.gmra.mxu0 %v737
      %v941 = vpop.f32.mrf.mxu0
      %v942 = vadd.f32 %v504, %v941
      %v943 = vpop.f32.mrf.mxu0
      %v944 = vpop.f32.mrf.mxu0
      %v945 = vadd.f32 %v504, %v944
      %v946 = vpop.f32.mrf.mxu0
      %947 = vmatprep.mubr.bf16.mxu0 0
      %948 = vmatmul.mubr.bf16.gmra.mxu0 %v740
      %v949 = vpop.f32.mrf.mxu0
      %v950 = vadd.f32 %v504, %v949
      %v951 = vpop.f32.mrf.mxu0
      %v952 = vpop.f32.mrf.mxu0
      %v953 = vadd.f32 %v504, %v952
      %v954 = vpop.f32.mrf.mxu0
      %955 = vmatprep.mubr.bf16.mxu0 0
      %956 = vmatmul.mubr.bf16.gmra.mxu0 %v743
      %v957 = vpop.f32.mrf.mxu0
      %v958 = vadd.f32 %v504, %v957
      %v959 = vpop.f32.mrf.mxu0
      %v960 = vpop.f32.mrf.mxu0
      %v961 = vadd.f32 %v504, %v960
      %v962 = vpop.f32.mrf.mxu0
      %963 = vmatprep.mubr.bf16.mxu0 0
      %964 = vmatmul.mubr.bf16.gmra.mxu0 %v746
      %v965 = vpop.f32.mrf.mxu0
      %v966 = vadd.f32 %v504, %v965
      %v967 = vpop.f32.mrf.mxu0
      %v968 = vpop.f32.mrf.mxu0
      %v969 = vadd.f32 %v504, %v968
      %v970 = vpop.f32.mrf.mxu0
      %971 = vmatprep.mubr.bf16.mxu0 0
      %972 = vmatmul.mubr.bf16.gmra.mxu0 %v749
      %v973 = vpop.f32.mrf.mxu0
      %v974 = vadd.f32 %v504, %v973
      %v975 = vpop.f32.mrf.mxu0
      %v976 = vpop.f32.mrf.mxu0
      %v977 = vadd.f32 %v504, %v976
      %v978 = vpop.f32.mrf.mxu0
      %979 = vmatprep.mubr.bf16.mxu0 0
      %980 = vmatmul.mubr.bf16.gmra.mxu0 %v752
      %v981 = vpop.f32.mrf.mxu0
      %v982 = vadd.f32 %v504, %v981
      %v983 = vpop.f32.mrf.mxu0
      %v984 = vpop.f32.mrf.mxu0
      %v985 = vadd.f32 %v504, %v984
      %v986 = vpop.f32.mrf.mxu0
      %987 = vmatprep.mubr.bf16.mxu0 0
      %988 = vmatmul.mubr.bf16.gmra.mxu0 %v755
      %v989 = vpop.f32.mrf.mxu0
      %v990 = vadd.f32 %v504, %v989
      %v991 = vpop.f32.mrf.mxu0
      %v992 = vpop.f32.mrf.mxu0
      %v993 = vadd.f32 %v504, %v992
      %v994 = vpop.f32.mrf.mxu0
      %995 = vmatprep.mubr.bf16.mxu0 0
      %996 = vmatmul.mubr.bf16.gmra.mxu0 %v758
      %v997 = vpop.f32.mrf.mxu0
      %v998 = vadd.f32 %v504, %v997
      %v999 = vpop.f32.mrf.mxu0
      %v1000 = vpop.f32.mrf.mxu0
      %v1001 = vadd.f32 %v504, %v1000
      %v1002 = vpop.f32.mrf.mxu0
      %1003 = vmatprep.mubr.bf16.mxu0 0
      %1004 = vmatmul.mubr.bf16.gmra.mxu0 %v761
      %v1005 = vpop.f32.mrf.mxu0
      %v1006 = vadd.f32 %v504, %v1005
      %v1007 = vpop.f32.mrf.mxu0
      %v1008 = vpop.f32.mrf.mxu0
      %v1009 = vadd.f32 %v504, %v1008
      %v1010 = vpop.f32.mrf.mxu0
      %1011 = vmatprep.mubr.bf16.mxu0 0
      %1012 = vmatmul.mubr.bf16.gmra.mxu0 %v764
      %v1013 = vpop.f32.mrf.mxu0
      %v1014 = vadd.f32 %v504, %v1013
      %v1015 = vpop.f32.mrf.mxu0
      %v1016 = vpop.f32.mrf.mxu0
      %v1017 = vadd.f32 %v504, %v1016
      %v1018 = vpop.f32.mrf.mxu0
      %1019 = vmatprep.mubr.bf16.mxu0 0
      %1020 = vmatmul.mubr.bf16.gmra.mxu0 %v767
      %v1021 = vpop.f32.mrf.mxu0
      %v1022 = vadd.f32 %v504, %v1021
      %v1023 = vpop.f32.mrf.mxu0
      %v1024 = vpop.f32.mrf.mxu0
      %v1025 = vadd.f32 %v504, %v1024
      %v1026 = vpop.f32.mrf.mxu0
      %1027 = vmatprep.mubr.bf16.mxu0 0
      %1028 = vmatmul.mubr.bf16.gmra.mxu0 %v770
      %v1029 = vpop.f32.mrf.mxu0
      %v1030 = vadd.f32 %v504, %v1029
      %v1031 = vpop.f32.mrf.mxu0
      %v1032 = vpop.f32.mrf.mxu0
      %v1033 = vadd.f32 %v504, %v1032
      %v1034 = vpop.f32.mrf.mxu0
      %1035 = vmatprep.mubr.bf16.mxu0 0
      %1036 = vmatmul.mubr.bf16.gmra.mxu0 %v773
      %v1037 = vpop.f32.mrf.mxu0
      %v1038 = vadd.f32 %v504, %v1037
      %v1039 = vpop.f32.mrf.mxu0
      %v1040 = vpop.f32.mrf.mxu0
      %v1041 = vadd.f32 %v504, %v1040
      %v1042 = vpop.f32.mrf.mxu0
      %1043 = vmatprep.mubr.bf16.mxu0 0
      %1044 = vmatmul.mubr.bf16.gmra.mxu0 %v776
      %v1045 = vpop.f32.mrf.mxu0
      %v1046 = vadd.f32 %v504, %v1045
      %v1047 = vpop.f32.mrf.mxu0
      %v1048 = vpop.f32.mrf.mxu0
      %v1049 = vadd.f32 %v504, %v1048
      %v1050 = vpop.f32.mrf.mxu0
      %1051 = vmatprep.mubr.bf16.mxu0 0
      %1052 = vmatmul.mubr.bf16.gmra.mxu0 %v779
      %v1053 = vpop.f32.mrf.mxu0
      %v1054 = vadd.f32 %v504, %v1053
      %v1055 = vpop.f32.mrf.mxu0
      %v1056 = vpop.f32.mrf.mxu0
      %v1057 = vadd.f32 %v504, %v1056
      %v1058 = vpop.f32.mrf.mxu0
      %1059 = vmatprep.mubr.bf16.mxu0 0
      %1060 = vmatmul.mubr.bf16.gmra.mxu0 %v782
      %v1061 = vpop.f32.mrf.mxu0
      %v1062 = vadd.f32 %v504, %v1061
      %v1063 = vpop.f32.mrf.mxu0
      %v1064 = vpop.f32.mrf.mxu0
      %v1065 = vadd.f32 %v504, %v1064
      %v1066 = vpop.f32.mrf.mxu0
      %1067 = vmatprep.mubr.bf16.mxu0 0
      %1068 = vmatmul.mubr.bf16.gmra.mxu0 %v785
      %v1069 = vpop.f32.mrf.mxu0
      %v1070 = vadd.f32 %v504, %v1069
      %v1071 = vpop.f32.mrf.mxu0
      %v1072 = vpop.f32.mrf.mxu0
      %v1073 = vadd.f32 %v504, %v1072
      %v1074 = vpop.f32.mrf.mxu0
      %1075 = vdwg.mxu0
      %v1076 = vsub.f32 0.0, %v822
      %v1077 = vsub.f32 0.0, %v825
      %v1078 = vsub.f32 0.0, %v830
      %v1079 = vsub.f32 0.0, %v833
      %v1080 = vsub.f32 0.0, %v838
      %v1081 = vsub.f32 0.0, %v841
      %v1082 = vsub.f32 0.0, %v846
      %v1083 = vsub.f32 0.0, %v849
      %v1084 = vsub.f32 0.0, %v854
      %v1085 = vsub.f32 0.0, %v857
      %v1086 = vsub.f32 0.0, %v862
      %v1087 = vsub.f32 0.0, %v865
      %v1088 = vsub.f32 0.0, %v870
      %v1089 = vsub.f32 0.0, %v873
      %v1090 = vsub.f32 0.0, %v878
      %v1091 = vsub.f32 0.0, %v881
      %v1092 = vsub.f32 0.0, %v886
      %v1093 = vsub.f32 0.0, %v889
      %v1094 = vsub.f32 0.0, %v894
      %v1095 = vsub.f32 0.0, %v897
      %v1096 = vsub.f32 0.0, %v902
      %v1097 = vsub.f32 0.0, %v905
      %v1098 = vsub.f32 0.0, %v910
      %v1099 = vsub.f32 0.0, %v913
      %v1100 = vsub.f32 0.0, %v918
      %v1101 = vsub.f32 0.0, %v921
      %v1102 = vsub.f32 0.0, %v926
      %v1103 = vsub.f32 0.0, %v929
      %v1104 = vsub.f32 0.0, %v934
      %v1105 = vsub.f32 0.0, %v937
      %v1106 = vsub.f32 0.0, %v942
      %v1107 = vsub.f32 0.0, %v945
      %v1108 = vsub.f32 0.0, %v950
      %v1109 = vsub.f32 0.0, %v953
      %v1110 = vsub.f32 0.0, %v958
      %v1111 = vsub.f32 0.0, %v961
      %v1112 = vsub.f32 0.0, %v966
      %v1113 = vsub.f32 0.0, %v969
      %v1114 = vsub.f32 0.0, %v974
      %v1115 = vsub.f32 0.0, %v977
      %v1116 = vsub.f32 0.0, %v982
      %v1117 = vsub.f32 0.0, %v985
      %v1118 = vsub.f32 0.0, %v990
      %v1119 = vsub.f32 0.0, %v993
      %v1120 = vsub.f32 0.0, %v998
      %v1121 = vsub.f32 0.0, %v1001
      %v1122 = vsub.f32 0.0, %v1006
      %v1123 = vsub.f32 0.0, %v1009
      %v1124 = vsub.f32 0.0, %v1014
      %v1125 = vsub.f32 0.0, %v1017
      %v1126 = vsub.f32 0.0, %v1022
      %v1127 = vsub.f32 0.0, %v1025
      %v1128 = vsub.f32 0.0, %v1030
      %v1129 = vsub.f32 0.0, %v1033
      %v1130 = vsub.f32 0.0, %v1038
      %v1131 = vsub.f32 0.0, %v1041
      %v1132 = vsub.f32 0.0, %v1046
      %v1133 = vsub.f32 0.0, %v1049
      %v1134 = vsub.f32 0.0, %v1054
      %v1135 = vsub.f32 0.0, %v1057
      %v1136 = vsub.f32 0.0, %v1062
      %v1137 = vsub.f32 0.0, %v1065
      %v1138 = vsub.f32 0.0, %v1070
      %v1139 = vsub.f32 0.0, %v1073
      %v1140 = vmul.f32 %v1076, 1.442695
      %v1141 = vpow.pop %v1140
      %v1142 = vmul.f32 %v1077, 1.442695
      %v1143 = vpow.pop %v1142
      %v1144 = vmul.f32 %v1078, 1.442695
      %v1145 = vpow.pop %v1144
      %v1146 = vmul.f32 %v1079, 1.442695
      %v1147 = vpow.pop %v1146
      %v1148 = vmul.f32 %v1080, 1.442695
      %v1149 = vpow.pop %v1148
      %v1150 = vmul.f32 %v1081, 1.442695
      %v1151 = vpow.pop %v1150
      %v1152 = vmul.f32 %v1082, 1.442695
      %v1153 = vpow.pop %v1152
      %v1154 = vmul.f32 %v1083, 1.442695
      %v1155 = vpow.pop %v1154
      %v1156 = vmul.f32 %v1084, 1.442695
      %v1157 = vpow.pop %v1156
      %v1158 = vmul.f32 %v1085, 1.442695
      %v1159 = vpow.pop %v1158
      %v1160 = vmul.f32 %v1086, 1.442695
      %v1161 = vpow.pop %v1160
      %v1162 = vmul.f32 %v1087, 1.442695
      %v1163 = vpow.pop %v1162
      %v1164 = vmul.f32 %v1088, 1.442695
      %v1165 = vpow.pop %v1164
      %v1166 = vmul.f32 %v1089, 1.442695
      %v1167 = vpow.pop %v1166
      %v1168 = vmul.f32 %v1090, 1.442695
      %v1169 = vpow.pop %v1168
      %v1170 = vmul.f32 %v1091, 1.442695
      %v1171 = vpow.pop %v1170
      %v1172 = vmul.f32 %v1092, 1.442695
      %v1173 = vpow.pop %v1172
      %v1174 = vmul.f32 %v1093, 1.442695
      %v1175 = vpow.pop %v1174
      %v1176 = vmul.f32 %v1094, 1.442695
      %v1177 = vpow.pop %v1176
      %v1178 = vmul.f32 %v1095, 1.442695
      %v1179 = vpow.pop %v1178
      %v1180 = vmul.f32 %v1096, 1.442695
      %v1181 = vpow.pop %v1180
      %v1182 = vmul.f32 %v1097, 1.442695
      %v1183 = vpow.pop %v1182
      %v1184 = vmul.f32 %v1098, 1.442695
      %v1185 = vpow.pop %v1184
      %v1186 = vmul.f32 %v1099, 1.442695
      %v1187 = vpow.pop %v1186
      %v1188 = vmul.f32 %v1100, 1.442695
      %v1189 = vpow.pop %v1188
      %v1190 = vmul.f32 %v1101, 1.442695
      %v1191 = vpow.pop %v1190
      %v1192 = vmul.f32 %v1102, 1.442695
      %v1193 = vpow.pop %v1192
      %v1194 = vmul.f32 %v1103, 1.442695
      %v1195 = vpow.pop %v1194
      %v1196 = vmul.f32 %v1104, 1.442695
      %v1197 = vpow.pop %v1196
      %v1198 = vmul.f32 %v1105, 1.442695
      %v1199 = vpow.pop %v1198
      %v1200 = vmul.f32 %v1106, 1.442695
      %v1201 = vpow.pop %v1200
      %v1202 = vmul.f32 %v1107, 1.442695
      %v1203 = vpow.pop %v1202
      %v1204 = vmul.f32 %v1108, 1.442695
      %v1205 = vpow.pop %v1204
      %v1206 = vmul.f32 %v1109, 1.442695
      %v1207 = vpow.pop %v1206
      %v1208 = vmul.f32 %v1110, 1.442695
      %v1209 = vpow.pop %v1208
      %v1210 = vmul.f32 %v1111, 1.442695
      %v1211 = vpow.pop %v1210
      %v1212 = vmul.f32 %v1112, 1.442695
      %v1213 = vpow.pop %v1212
      %v1214 = vmul.f32 %v1113, 1.442695
      %v1215 = vpow.pop %v1214
      %v1216 = vmul.f32 %v1114, 1.442695
      %v1217 = vpow.pop %v1216
      %v1218 = vmul.f32 %v1115, 1.442695
      %v1219 = vpow.pop %v1218
      %v1220 = vmul.f32 %v1116, 1.442695
      %v1221 = vpow.pop %v1220
      %v1222 = vmul.f32 %v1117, 1.442695
      %v1223 = vpow.pop %v1222
      %v1224 = vmul.f32 %v1118, 1.442695
      %v1225 = vpow.pop %v1224
      %v1226 = vmul.f32 %v1119, 1.442695
      %v1227 = vpow.pop %v1226
      %v1228 = vmul.f32 %v1120, 1.442695
      %v1229 = vpow.pop %v1228
      %v1230 = vmul.f32 %v1121, 1.442695
      %v1231 = vpow.pop %v1230
      %v1232 = vmul.f32 %v1122, 1.442695
      %v1233 = vpow.pop %v1232
      %v1234 = vmul.f32 %v1123, 1.442695
      %v1235 = vpow.pop %v1234
      %v1236 = vmul.f32 %v1124, 1.442695
      %v1237 = vpow.pop %v1236
      %v1238 = vmul.f32 %v1125, 1.442695
      %v1239 = vpow.pop %v1238
      %v1240 = vmul.f32 %v1126, 1.442695
      %v1241 = vpow.pop %v1240
      %v1242 = vmul.f32 %v1127, 1.442695
      %v1243 = vpow.pop %v1242
      %v1244 = vmul.f32 %v1128, 1.442695
      %v1245 = vpow.pop %v1244
      %v1246 = vmul.f32 %v1129, 1.442695
      %v1247 = vpow.pop %v1246
      %v1248 = vmul.f32 %v1130, 1.442695
      %v1249 = vpow.pop %v1248
      %v1250 = vmul.f32 %v1131, 1.442695
      %v1251 = vpow.pop %v1250
      %v1252 = vmul.f32 %v1132, 1.442695
      %v1253 = vpow.pop %v1252
      %v1254 = vmul.f32 %v1133, 1.442695
      %v1255 = vpow.pop %v1254
      %v1256 = vmul.f32 %v1134, 1.442695
      %v1257 = vpow.pop %v1256
      %v1258 = vmul.f32 %v1135, 1.442695
      %v1259 = vpow.pop %v1258
      %v1260 = vmul.f32 %v1136, 1.442695
      %v1261 = vpow.pop %v1260
      %v1262 = vmul.f32 %v1137, 1.442695
      %v1263 = vpow.pop %v1262
      %v1264 = vmul.f32 %v1138, 1.442695
      %v1265 = vpow.pop %v1264
      %v1266 = vmul.f32 %v1139, 1.442695
      %v1267 = vpow.pop %v1266
      %v1268 = vadd.f32 %v1141, 1.0
      %v1269 = vadd.f32 %v1143, 1.0
      %v1270 = vadd.f32 %v1145, 1.0
      %v1271 = vadd.f32 %v1147, 1.0
      %v1272 = vadd.f32 %v1149, 1.0
      %v1273 = vadd.f32 %v1151, 1.0
      %v1274 = vadd.f32 %v1153, 1.0
      %v1275 = vadd.f32 %v1155, 1.0
      %v1276 = vadd.f32 %v1157, 1.0
      %v1277 = vadd.f32 %v1159, 1.0
      %v1278 = vadd.f32 %v1161, 1.0
      %v1279 = vadd.f32 %v1163, 1.0
      %v1280 = vadd.f32 %v1165, 1.0
      %v1281 = vadd.f32 %v1167, 1.0
      %v1282 = vadd.f32 %v1169, 1.0
      %v1283 = vadd.f32 %v1171, 1.0
      %v1284 = vadd.f32 %v1173, 1.0
      %v1285 = vadd.f32 %v1175, 1.0
      %v1286 = vadd.f32 %v1177, 1.0
      %v1287 = vadd.f32 %v1179, 1.0
      %v1288 = vadd.f32 %v1181, 1.0
      %v1289 = vadd.f32 %v1183, 1.0
      %v1290 = vadd.f32 %v1185, 1.0
      %v1291 = vadd.f32 %v1187, 1.0
      %v1292 = vadd.f32 %v1189, 1.0
      %v1293 = vadd.f32 %v1191, 1.0
      %v1294 = vadd.f32 %v1193, 1.0
      %v1295 = vadd.f32 %v1195, 1.0
      %v1296 = vadd.f32 %v1197, 1.0
      %v1297 = vadd.f32 %v1199, 1.0
      %v1298 = vadd.f32 %v1201, 1.0
      %v1299 = vadd.f32 %v1203, 1.0
      %v1300 = vadd.f32 %v1205, 1.0
      %v1301 = vadd.f32 %v1207, 1.0
      %v1302 = vadd.f32 %v1209, 1.0
      %v1303 = vadd.f32 %v1211, 1.0
      %v1304 = vadd.f32 %v1213, 1.0
      %v1305 = vadd.f32 %v1215, 1.0
      %v1306 = vadd.f32 %v1217, 1.0
      %v1307 = vadd.f32 %v1219, 1.0
      %v1308 = vadd.f32 %v1221, 1.0
      %v1309 = vadd.f32 %v1223, 1.0
      %v1310 = vadd.f32 %v1225, 1.0
      %v1311 = vadd.f32 %v1227, 1.0
      %v1312 = vadd.f32 %v1229, 1.0
      %v1313 = vadd.f32 %v1231, 1.0
      %v1314 = vadd.f32 %v1233, 1.0
      %v1315 = vadd.f32 %v1235, 1.0
      %v1316 = vadd.f32 %v1237, 1.0
      %v1317 = vadd.f32 %v1239, 1.0
      %v1318 = vadd.f32 %v1241, 1.0
      %v1319 = vadd.f32 %v1243, 1.0
      %v1320 = vadd.f32 %v1245, 1.0
      %v1321 = vadd.f32 %v1247, 1.0
      %v1322 = vadd.f32 %v1249, 1.0
      %v1323 = vadd.f32 %v1251, 1.0
      %v1324 = vadd.f32 %v1253, 1.0
      %v1325 = vadd.f32 %v1255, 1.0
      %v1326 = vadd.f32 %v1257, 1.0
      %v1327 = vadd.f32 %v1259, 1.0
      %v1328 = vadd.f32 %v1261, 1.0
      %v1329 = vadd.f32 %v1263, 1.0
      %v1330 = vadd.f32 %v1265, 1.0
      %v1331 = vadd.f32 %v1267, 1.0
      %v1332 = vrcp.pop %v1268
      %v1333 = vmul.f32 1.0, %v1332
      %v1334 = vrcp.pop %v1269
      %v1335 = vmul.f32 1.0, %v1334
      %v1336 = vrcp.pop %v1270
      %v1337 = vmul.f32 1.0, %v1336
      %v1338 = vrcp.pop %v1271
      %v1339 = vmul.f32 1.0, %v1338
      %v1340 = vrcp.pop %v1272
      %v1341 = vmul.f32 1.0, %v1340
      %v1342 = vrcp.pop %v1273
      %v1343 = vmul.f32 1.0, %v1342
      %v1344 = vrcp.pop %v1274
      %v1345 = vmul.f32 1.0, %v1344
      %v1346 = vrcp.pop %v1275
      %v1347 = vmul.f32 1.0, %v1346
      %v1348 = vrcp.pop %v1276
      %v1349 = vmul.f32 1.0, %v1348
      %v1350 = vrcp.pop %v1277
      %v1351 = vmul.f32 1.0, %v1350
      %v1352 = vrcp.pop %v1278
      %v1353 = vmul.f32 1.0, %v1352
      %v1354 = vrcp.pop %v1279
      %v1355 = vmul.f32 1.0, %v1354
      %v1356 = vrcp.pop %v1280
      %v1357 = vmul.f32 1.0, %v1356
      %v1358 = vrcp.pop %v1281
      %v1359 = vmul.f32 1.0, %v1358
      %v1360 = vrcp.pop %v1282
      %v1361 = vmul.f32 1.0, %v1360
      %v1362 = vrcp.pop %v1283
      %v1363 = vmul.f32 1.0, %v1362
      %v1364 = vrcp.pop %v1284
      %v1365 = vmul.f32 1.0, %v1364
      %v1366 = vrcp.pop %v1285
      %v1367 = vmul.f32 1.0, %v1366
      %v1368 = vrcp.pop %v1286
      %v1369 = vmul.f32 1.0, %v1368
      %v1370 = vrcp.pop %v1287
      %v1371 = vmul.f32 1.0, %v1370
      %v1372 = vrcp.pop %v1288
      %v1373 = vmul.f32 1.0, %v1372
      %v1374 = vrcp.pop %v1289
      %v1375 = vmul.f32 1.0, %v1374
      %v1376 = vrcp.pop %v1290
      %v1377 = vmul.f32 1.0, %v1376
      %v1378 = vrcp.pop %v1291
      %v1379 = vmul.f32 1.0, %v1378
      %v1380 = vrcp.pop %v1292
      %v1381 = vmul.f32 1.0, %v1380
      %v1382 = vrcp.pop %v1293
      %v1383 = vmul.f32 1.0, %v1382
      %v1384 = vrcp.pop %v1294
      %v1385 = vmul.f32 1.0, %v1384
      %v1386 = vrcp.pop %v1295
      %v1387 = vmul.f32 1.0, %v1386
      %v1388 = vrcp.pop %v1296
      %v1389 = vmul.f32 1.0, %v1388
      %v1390 = vrcp.pop %v1297
      %v1391 = vmul.f32 1.0, %v1390
      %v1392 = vrcp.pop %v1298
      %v1393 = vmul.f32 1.0, %v1392
      %v1394 = vrcp.pop %v1299
      %v1395 = vmul.f32 1.0, %v1394
      %v1396 = vrcp.pop %v1300
      %v1397 = vmul.f32 1.0, %v1396
      %v1398 = vrcp.pop %v1301
      %v1399 = vmul.f32 1.0, %v1398
      %v1400 = vrcp.pop %v1302
      %v1401 = vmul.f32 1.0, %v1400
      %v1402 = vrcp.pop %v1303
      %v1403 = vmul.f32 1.0, %v1402
      %v1404 = vrcp.pop %v1304
      %v1405 = vmul.f32 1.0, %v1404
      %v1406 = vrcp.pop %v1305
      %v1407 = vmul.f32 1.0, %v1406
      %v1408 = vrcp.pop %v1306
      %v1409 = vmul.f32 1.0, %v1408
      %v1410 = vrcp.pop %v1307
      %v1411 = vmul.f32 1.0, %v1410
      %v1412 = vrcp.pop %v1308
      %v1413 = vmul.f32 1.0, %v1412
      %v1414 = vrcp.pop %v1309
      %v1415 = vmul.f32 1.0, %v1414
      %v1416 = vrcp.pop %v1310
      %v1417 = vmul.f32 1.0, %v1416
      %v1418 = vrcp.pop %v1311
      %v1419 = vmul.f32 1.0, %v1418
      %v1420 = vrcp.pop %v1312
      %v1421 = vmul.f32 1.0, %v1420
      %v1422 = vrcp.pop %v1313
      %v1423 = vmul.f32 1.0, %v1422
      %v1424 = vrcp.pop %v1314
      %v1425 = vmul.f32 1.0, %v1424
      %v1426 = vrcp.pop %v1315
      %v1427 = vmul.f32 1.0, %v1426
      %v1428 = vrcp.pop %v1316
      %v1429 = vmul.f32 1.0, %v1428
      %v1430 = vrcp.pop %v1317
      %v1431 = vmul.f32 1.0, %v1430
      %v1432 = vrcp.pop %v1318
      %v1433 = vmul.f32 1.0, %v1432
      %v1434 = vrcp.pop %v1319
      %v1435 = vmul.f32 1.0, %v1434
      %v1436 = vrcp.pop %v1320
      %v1437 = vmul.f32 1.0, %v1436
      %v1438 = vrcp.pop %v1321
      %v1439 = vmul.f32 1.0, %v1438
      %v1440 = vrcp.pop %v1322
      %v1441 = vmul.f32 1.0, %v1440
      %v1442 = vrcp.pop %v1323
      %v1443 = vmul.f32 1.0, %v1442
      %v1444 = vrcp.pop %v1324
      %v1445 = vmul.f32 1.0, %v1444
      %v1446 = vrcp.pop %v1325
      %v1447 = vmul.f32 1.0, %v1446
      %v1448 = vrcp.pop %v1326
      %v1449 = vmul.f32 1.0, %v1448
      %v1450 = vrcp.pop %v1327
      %v1451 = vmul.f32 1.0, %v1450
      %v1452 = vrcp.pop %v1328
      %v1453 = vmul.f32 1.0, %v1452
      %v1454 = vrcp.pop %v1329
      %v1455 = vmul.f32 1.0, %v1454
      %v1456 = vrcp.pop %v1330
      %v1457 = vmul.f32 1.0, %v1456
      %v1458 = vrcp.pop %v1331
      %v1459 = vmul.f32 1.0, %v1458
      %v1460 = vadd.f32 %v1333, 2.0
      %v1461 = vadd.f32 %v1335, 2.0
      %v1462 = vadd.f32 %v1337, 2.0
      %v1463 = vadd.f32 %v1339, 2.0
      %v1464 = vadd.f32 %v1341, 2.0
      %v1465 = vadd.f32 %v1343, 2.0
      %v1466 = vadd.f32 %v1345, 2.0
      %v1467 = vadd.f32 %v1347, 2.0
      %v1468 = vadd.f32 %v1349, 2.0
      %v1469 = vadd.f32 %v1351, 2.0
      %v1470 = vadd.f32 %v1353, 2.0
      %v1471 = vadd.f32 %v1355, 2.0
      %v1472 = vadd.f32 %v1357, 2.0
      %v1473 = vadd.f32 %v1359, 2.0
      %v1474 = vadd.f32 %v1361, 2.0
      %v1475 = vadd.f32 %v1363, 2.0
      %v1476 = vadd.f32 %v1365, 2.0
      %v1477 = vadd.f32 %v1367, 2.0
      %v1478 = vadd.f32 %v1369, 2.0
      %v1479 = vadd.f32 %v1371, 2.0
      %v1480 = vadd.f32 %v1373, 2.0
      %v1481 = vadd.f32 %v1375, 2.0
      %v1482 = vadd.f32 %v1377, 2.0
      %v1483 = vadd.f32 %v1379, 2.0
      %v1484 = vadd.f32 %v1381, 2.0
      %v1485 = vadd.f32 %v1383, 2.0
      %v1486 = vadd.f32 %v1385, 2.0
      %v1487 = vadd.f32 %v1387, 2.0
      %v1488 = vadd.f32 %v1389, 2.0
      %v1489 = vadd.f32 %v1391, 2.0
      %v1490 = vadd.f32 %v1393, 2.0
      %v1491 = vadd.f32 %v1395, 2.0
      %v1492 = vadd.f32 %v1397, 2.0
      %v1493 = vadd.f32 %v1399, 2.0
      %v1494 = vadd.f32 %v1401, 2.0
      %v1495 = vadd.f32 %v1403, 2.0
      %v1496 = vadd.f32 %v1405, 2.0
      %v1497 = vadd.f32 %v1407, 2.0
      %v1498 = vadd.f32 %v1409, 2.0
      %v1499 = vadd.f32 %v1411, 2.0
      %v1500 = vadd.f32 %v1413, 2.0
      %v1501 = vadd.f32 %v1415, 2.0
      %v1502 = vadd.f32 %v1417, 2.0
      %v1503 = vadd.f32 %v1419, 2.0
      %v1504 = vadd.f32 %v1421, 2.0
      %v1505 = vadd.f32 %v1423, 2.0
      %v1506 = vadd.f32 %v1425, 2.0
      %v1507 = vadd.f32 %v1427, 2.0
      %v1508 = vadd.f32 %v1429, 2.0
      %v1509 = vadd.f32 %v1431, 2.0
      %v1510 = vadd.f32 %v1433, 2.0
      %v1511 = vadd.f32 %v1435, 2.0
      %v1512 = vadd.f32 %v1437, 2.0
      %v1513 = vadd.f32 %v1439, 2.0
      %v1514 = vadd.f32 %v1441, 2.0
      %v1515 = vadd.f32 %v1443, 2.0
      %v1516 = vadd.f32 %v1445, 2.0
      %v1517 = vadd.f32 %v1447, 2.0
      %v1518 = vadd.f32 %v1449, 2.0
      %v1519 = vadd.f32 %v1451, 2.0
      %v1520 = vadd.f32 %v1453, 2.0
      %v1521 = vadd.f32 %v1455, 2.0
      %v1522 = vadd.f32 %v1457, 2.0
      %v1523 = vadd.f32 %v1459, 2.0
      %v1524 = vmul.f32 %v1333, %v1460
      %v1525 = vmul.f32 %v1335, %v1461
      %v1526 = vmul.f32 %v1337, %v1462
      %v1527 = vmul.f32 %v1339, %v1463
      %v1528 = vmul.f32 %v1341, %v1464
      %v1529 = vmul.f32 %v1343, %v1465
      %v1530 = vmul.f32 %v1345, %v1466
      %v1531 = vmul.f32 %v1347, %v1467
      %v1532 = vmul.f32 %v1349, %v1468
      %v1533 = vmul.f32 %v1351, %v1469
      %v1534 = vmul.f32 %v1353, %v1470
      %v1535 = vmul.f32 %v1355, %v1471
      %v1536 = vmul.f32 %v1357, %v1472
      %v1537 = vmul.f32 %v1359, %v1473
      %v1538 = vmul.f32 %v1361, %v1474
      %v1539 = vmul.f32 %v1363, %v1475
      %v1540 = vmul.f32 %v1365, %v1476
      %v1541 = vmul.f32 %v1367, %v1477
      %v1542 = vmul.f32 %v1369, %v1478
      %v1543 = vmul.f32 %v1371, %v1479
      %v1544 = vmul.f32 %v1373, %v1480
      %v1545 = vmul.f32 %v1375, %v1481
      %v1546 = vmul.f32 %v1377, %v1482
      %v1547 = vmul.f32 %v1379, %v1483
      %v1548 = vmul.f32 %v1381, %v1484
      %v1549 = vmul.f32 %v1383, %v1485
      %v1550 = vmul.f32 %v1385, %v1486
      %v1551 = vmul.f32 %v1387, %v1487
      %v1552 = vmul.f32 %v1389, %v1488
      %v1553 = vmul.f32 %v1391, %v1489
      %v1554 = vmul.f32 %v1393, %v1490
      %v1555 = vmul.f32 %v1395, %v1491
      %v1556 = vmul.f32 %v1397, %v1492
      %v1557 = vmul.f32 %v1399, %v1493
      %v1558 = vmul.f32 %v1401, %v1494
      %v1559 = vmul.f32 %v1403, %v1495
      %v1560 = vmul.f32 %v1405, %v1496
      %v1561 = vmul.f32 %v1407, %v1497
      %v1562 = vmul.f32 %v1409, %v1498
      %v1563 = vmul.f32 %v1411, %v1499
      %v1564 = vmul.f32 %v1413, %v1500
      %v1565 = vmul.f32 %v1415, %v1501
      %v1566 = vmul.f32 %v1417, %v1502
      %v1567 = vmul.f32 %v1419, %v1503
      %v1568 = vmul.f32 %v1421, %v1504
      %v1569 = vmul.f32 %v1423, %v1505
      %v1570 = vmul.f32 %v1425, %v1506
      %v1571 = vmul.f32 %v1427, %v1507
      %v1572 = vmul.f32 %v1429, %v1508
      %v1573 = vmul.f32 %v1431, %v1509
      %v1574 = vmul.f32 %v1433, %v1510
      %v1575 = vmul.f32 %v1435, %v1511
      %v1576 = vmul.f32 %v1437, %v1512
      %v1577 = vmul.f32 %v1439, %v1513
      %v1578 = vmul.f32 %v1441, %v1514
      %v1579 = vmul.f32 %v1443, %v1515
      %v1580 = vmul.f32 %v1445, %v1516
      %v1581 = vmul.f32 %v1447, %v1517
      %v1582 = vmul.f32 %v1449, %v1518
      %v1583 = vmul.f32 %v1451, %v1519
      %v1584 = vmul.f32 %v1453, %v1520
      %v1585 = vmul.f32 %v1455, %v1521
      %v1586 = vmul.f32 %v1457, %v1522
      %v1587 = vmul.f32 %v1459, %v1523
      %v1588 = vmul.f32 %v822, %v1524
      %v1589 = vmul.f32 %v825, %v1525
      %v1590 = vmul.f32 %v830, %v1526
      %v1591 = vmul.f32 %v833, %v1527
      %v1592 = vmul.f32 %v838, %v1528
      %v1593 = vmul.f32 %v841, %v1529
      %v1594 = vmul.f32 %v846, %v1530
      %v1595 = vmul.f32 %v849, %v1531
      %v1596 = vmul.f32 %v854, %v1532
      %v1597 = vmul.f32 %v857, %v1533
      %v1598 = vmul.f32 %v862, %v1534
      %v1599 = vmul.f32 %v865, %v1535
      %v1600 = vmul.f32 %v870, %v1536
      %v1601 = vmul.f32 %v873, %v1537
      %v1602 = vmul.f32 %v878, %v1538
      %v1603 = vmul.f32 %v881, %v1539
      %v1604 = vmul.f32 %v886, %v1540
      %v1605 = vmul.f32 %v889, %v1541
      %v1606 = vmul.f32 %v894, %v1542
      %v1607 = vmul.f32 %v897, %v1543
      %v1608 = vmul.f32 %v902, %v1544
      %v1609 = vmul.f32 %v905, %v1545
      %v1610 = vmul.f32 %v910, %v1546
      %v1611 = vmul.f32 %v913, %v1547
      %v1612 = vmul.f32 %v918, %v1548
      %v1613 = vmul.f32 %v921, %v1549
      %v1614 = vmul.f32 %v926, %v1550
      %v1615 = vmul.f32 %v929, %v1551
      %v1616 = vmul.f32 %v934, %v1552
      %v1617 = vmul.f32 %v937, %v1553
      %v1618 = vmul.f32 %v942, %v1554
      %v1619 = vmul.f32 %v945, %v1555
      %v1620 = vmul.f32 %v950, %v1556
      %v1621 = vmul.f32 %v953, %v1557
      %v1622 = vmul.f32 %v958, %v1558
      %v1623 = vmul.f32 %v961, %v1559
      %v1624 = vmul.f32 %v966, %v1560
      %v1625 = vmul.f32 %v969, %v1561
      %v1626 = vmul.f32 %v974, %v1562
      %v1627 = vmul.f32 %v977, %v1563
      %v1628 = vmul.f32 %v982, %v1564
      %v1629 = vmul.f32 %v985, %v1565
      %v1630 = vmul.f32 %v990, %v1566
      %v1631 = vmul.f32 %v993, %v1567
      %v1632 = vmul.f32 %v998, %v1568
      %v1633 = vmul.f32 %v1001, %v1569
      %v1634 = vmul.f32 %v1006, %v1570
      %v1635 = vmul.f32 %v1009, %v1571
      %v1636 = vmul.f32 %v1014, %v1572
      %v1637 = vmul.f32 %v1017, %v1573
      %v1638 = vmul.f32 %v1022, %v1574
      %v1639 = vmul.f32 %v1025, %v1575
      %v1640 = vmul.f32 %v1030, %v1576
      %v1641 = vmul.f32 %v1033, %v1577
      %v1642 = vmul.f32 %v1038, %v1578
      %v1643 = vmul.f32 %v1041, %v1579
      %v1644 = vmul.f32 %v1046, %v1580
      %v1645 = vmul.f32 %v1049, %v1581
      %v1646 = vmul.f32 %v1054, %v1582
      %v1647 = vmul.f32 %v1057, %v1583
      %v1648 = vmul.f32 %v1062, %v1584
      %v1649 = vmul.f32 %v1065, %v1585
      %v1650 = vmul.f32 %v1070, %v1586
      %v1651 = vmul.f32 %v1073, %v1587
      %v1652 = vadd.f32 %v1524, 2.0
      %v1653 = vadd.f32 %v1525, 2.0
      %v1654 = vadd.f32 %v1526, 2.0
      %v1655 = vadd.f32 %v1527, 2.0
      %v1656 = vadd.f32 %v1528, 2.0
      %v1657 = vadd.f32 %v1529, 2.0
      %v1658 = vadd.f32 %v1530, 2.0
      %v1659 = vadd.f32 %v1531, 2.0
      %v1660 = vadd.f32 %v1532, 2.0
      %v1661 = vadd.f32 %v1533, 2.0
      %v1662 = vadd.f32 %v1534, 2.0
      %v1663 = vadd.f32 %v1535, 2.0
      %v1664 = vadd.f32 %v1536, 2.0
      %v1665 = vadd.f32 %v1537, 2.0
      %v1666 = vadd.f32 %v1538, 2.0
      %v1667 = vadd.f32 %v1539, 2.0
      %v1668 = vadd.f32 %v1540, 2.0
      %v1669 = vadd.f32 %v1541, 2.0
      %v1670 = vadd.f32 %v1542, 2.0
      %v1671 = vadd.f32 %v1543, 2.0
      %v1672 = vadd.f32 %v1544, 2.0
      %v1673 = vadd.f32 %v1545, 2.0
      %v1674 = vadd.f32 %v1546, 2.0
      %v1675 = vadd.f32 %v1547, 2.0
      %v1676 = vadd.f32 %v1548, 2.0
      %v1677 = vadd.f32 %v1549, 2.0
      %v1678 = vadd.f32 %v1550, 2.0
      %v1679 = vadd.f32 %v1551, 2.0
      %v1680 = vadd.f32 %v1552, 2.0
      %v1681 = vadd.f32 %v1553, 2.0
      %v1682 = vadd.f32 %v1554, 2.0
      %v1683 = vadd.f32 %v1555, 2.0
      %v1684 = vadd.f32 %v1556, 2.0
      %v1685 = vadd.f32 %v1557, 2.0
      %v1686 = vadd.f32 %v1558, 2.0
      %v1687 = vadd.f32 %v1559, 2.0
      %v1688 = vadd.f32 %v1560, 2.0
      %v1689 = vadd.f32 %v1561, 2.0
      %v1690 = vadd.f32 %v1562, 2.0
      %v1691 = vadd.f32 %v1563, 2.0
      %v1692 = vadd.f32 %v1564, 2.0
      %v1693 = vadd.f32 %v1565, 2.0
      %v1694 = vadd.f32 %v1566, 2.0
      %v1695 = vadd.f32 %v1567, 2.0
      %v1696 = vadd.f32 %v1568, 2.0
      %v1697 = vadd.f32 %v1569, 2.0
      %v1698 = vadd.f32 %v1570, 2.0
      %v1699 = vadd.f32 %v1571, 2.0
      %v1700 = vadd.f32 %v1572, 2.0
      %v1701 = vadd.f32 %v1573, 2.0
      %v1702 = vadd.f32 %v1574, 2.0
      %v1703 = vadd.f32 %v1575, 2.0
      %v1704 = vadd.f32 %v1576, 2.0
      %v1705 = vadd.f32 %v1577, 2.0
      %v1706 = vadd.f32 %v1578, 2.0
      %v1707 = vadd.f32 %v1579, 2.0
      %v1708 = vadd.f32 %v1580, 2.0
      %v1709 = vadd.f32 %v1581, 2.0
      %v1710 = vadd.f32 %v1582, 2.0
      %v1711 = vadd.f32 %v1583, 2.0
      %v1712 = vadd.f32 %v1584, 2.0
      %v1713 = vadd.f32 %v1585, 2.0
      %v1714 = vadd.f32 %v1586, 2.0
      %v1715 = vadd.f32 %v1587, 2.0
      %v1716 = vrcp.pop %v1652
      %v1717 = vmul.f32 %v1588, %v1716
      %v1718 = vrcp.pop %v1653
      %v1719 = vmul.f32 %v1589, %v1718
      %v1720 = vrcp.pop %v1654
      %v1721 = vmul.f32 %v1590, %v1720
      %v1722 = vrcp.pop %v1655
      %v1723 = vmul.f32 %v1591, %v1722
      %v1724 = vrcp.pop %v1656
      %v1725 = vmul.f32 %v1592, %v1724
      %v1726 = vrcp.pop %v1657
      %v1727 = vmul.f32 %v1593, %v1726
      %v1728 = vrcp.pop %v1658
      %v1729 = vmul.f32 %v1594, %v1728
      %v1730 = vrcp.pop %v1659
      %v1731 = vmul.f32 %v1595, %v1730
      %v1732 = vrcp.pop %v1660
      %v1733 = vmul.f32 %v1596, %v1732
      %v1734 = vrcp.pop %v1661
      %v1735 = vmul.f32 %v1597, %v1734
      %v1736 = vrcp.pop %v1662
      %v1737 = vmul.f32 %v1598, %v1736
      %v1738 = vrcp.pop %v1663
      %v1739 = vmul.f32 %v1599, %v1738
      %v1740 = vrcp.pop %v1664
      %v1741 = vmul.f32 %v1600, %v1740
      %v1742 = vrcp.pop %v1665
      %v1743 = vmul.f32 %v1601, %v1742
      %v1744 = vrcp.pop %v1666
      %v1745 = vmul.f32 %v1602, %v1744
      %v1746 = vrcp.pop %v1667
      %v1747 = vmul.f32 %v1603, %v1746
      %v1748 = vrcp.pop %v1668
      %v1749 = vmul.f32 %v1604, %v1748
      %v1750 = vrcp.pop %v1669
      %v1751 = vmul.f32 %v1605, %v1750
      %v1752 = vrcp.pop %v1670
      %v1753 = vmul.f32 %v1606, %v1752
      %v1754 = vrcp.pop %v1671
      %v1755 = vmul.f32 %v1607, %v1754
      %v1756 = vrcp.pop %v1672
      %v1757 = vmul.f32 %v1608, %v1756
      %v1758 = vrcp.pop %v1673
      %v1759 = vmul.f32 %v1609, %v1758
      %v1760 = vrcp.pop %v1674
      %v1761 = vmul.f32 %v1610, %v1760
      %v1762 = vrcp.pop %v1675
      %v1763 = vmul.f32 %v1611, %v1762
      %v1764 = vrcp.pop %v1676
      %v1765 = vmul.f32 %v1612, %v1764
      %v1766 = vrcp.pop %v1677
      %v1767 = vmul.f32 %v1613, %v1766
      %v1768 = vrcp.pop %v1678
      %v1769 = vmul.f32 %v1614, %v1768
      %v1770 = vrcp.pop %v1679
      %v1771 = vmul.f32 %v1615, %v1770
      %v1772 = vrcp.pop %v1680
      %v1773 = vmul.f32 %v1616, %v1772
      %v1774 = vrcp.pop %v1681
      %v1775 = vmul.f32 %v1617, %v1774
      %v1776 = vrcp.pop %v1682
      %v1777 = vmul.f32 %v1618, %v1776
      %v1778 = vrcp.pop %v1683
      %v1779 = vmul.f32 %v1619, %v1778
      %v1780 = vrcp.pop %v1684
      %v1781 = vmul.f32 %v1620, %v1780
      %v1782 = vrcp.pop %v1685
      %v1783 = vmul.f32 %v1621, %v1782
      %v1784 = vrcp.pop %v1686
      %v1785 = vmul.f32 %v1622, %v1784
      %v1786 = vrcp.pop %v1687
      %v1787 = vmul.f32 %v1623, %v1786
      %v1788 = vrcp.pop %v1688
      %v1789 = vmul.f32 %v1624, %v1788
      %v1790 = vrcp.pop %v1689
      %v1791 = vmul.f32 %v1625, %v1790
      %v1792 = vrcp.pop %v1690
      %v1793 = vmul.f32 %v1626, %v1792
      %v1794 = vrcp.pop %v1691
      %v1795 = vmul.f32 %v1627, %v1794
      %v1796 = vrcp.pop %v1692
      %v1797 = vmul.f32 %v1628, %v1796
      %v1798 = vrcp.pop %v1693
      %v1799 = vmul.f32 %v1629, %v1798
      %v1800 = vrcp.pop %v1694
      %v1801 = vmul.f32 %v1630, %v1800
      %v1802 = vrcp.pop %v1695
      %v1803 = vmul.f32 %v1631, %v1802
      %v1804 = vrcp.pop %v1696
      %v1805 = vmul.f32 %v1632, %v1804
      %v1806 = vrcp.pop %v1697
      %v1807 = vmul.f32 %v1633, %v1806
      %v1808 = vrcp.pop %v1698
      %v1809 = vmul.f32 %v1634, %v1808
      %v1810 = vrcp.pop %v1699
      %v1811 = vmul.f32 %v1635, %v1810
      %v1812 = vrcp.pop %v1700
      %v1813 = vmul.f32 %v1636, %v1812
      %v1814 = vrcp.pop %v1701
      %v1815 = vmul.f32 %v1637, %v1814
      %v1816 = vrcp.pop %v1702
      %v1817 = vmul.f32 %v1638, %v1816
      %v1818 = vrcp.pop %v1703
      %v1819 = vmul.f32 %v1639, %v1818
      %v1820 = vrcp.pop %v1704
      %v1821 = vmul.f32 %v1640, %v1820
      %v1822 = vrcp.pop %v1705
      %v1823 = vmul.f32 %v1641, %v1822
      %v1824 = vrcp.pop %v1706
      %v1825 = vmul.f32 %v1642, %v1824
      %v1826 = vrcp.pop %v1707
      %v1827 = vmul.f32 %v1643, %v1826
      %v1828 = vrcp.pop %v1708
      %v1829 = vmul.f32 %v1644, %v1828
      %v1830 = vrcp.pop %v1709
      %v1831 = vmul.f32 %v1645, %v1830
      %v1832 = vrcp.pop %v1710
      %v1833 = vmul.f32 %v1646, %v1832
      %v1834 = vrcp.pop %v1711
      %v1835 = vmul.f32 %v1647, %v1834
      %v1836 = vrcp.pop %v1712
      %v1837 = vmul.f32 %v1648, %v1836
      %v1838 = vrcp.pop %v1713
      %v1839 = vmul.f32 %v1649, %v1838
      %v1840 = vrcp.pop %v1714
      %v1841 = vmul.f32 %v1650, %v1840
      %v1842 = vrcp.pop %v1715
      %v1843 = vmul.f32 %v1651, %v1842
      %vm1844 = vcmp.ge.f32.partialorder %v1717, 0.0
      %vm1845 = vcmp.ge.f32.partialorder %v1719, 0.0
      %vm1846 = vcmp.ge.f32.partialorder %v1721, 0.0
      %vm1847 = vcmp.ge.f32.partialorder %v1723, 0.0
      %vm1848 = vcmp.ge.f32.partialorder %v1725, 0.0
      %vm1849 = vcmp.ge.f32.partialorder %v1727, 0.0
      %vm1850 = vcmp.ge.f32.partialorder %v1729, 0.0
      %vm1851 = vcmp.ge.f32.partialorder %v1731, 0.0
      %vm1852 = vcmp.ge.f32.partialorder %v1733, 0.0
      %vm1853 = vcmp.ge.f32.partialorder %v1735, 0.0
      %vm1854 = vcmp.ge.f32.partialorder %v1737, 0.0
      %vm1855 = vcmp.ge.f32.partialorder %v1739, 0.0
      %vm1856 = vcmp.ge.f32.partialorder %v1741, 0.0
      %vm1857 = vcmp.ge.f32.partialorder %v1743, 0.0
      %vm1858 = vcmp.ge.f32.partialorder %v1745, 0.0
      %vm1859 = vcmp.ge.f32.partialorder %v1747, 0.0
      %vm1860 = vcmp.ge.f32.partialorder %v1749, 0.0
      %vm1861 = vcmp.ge.f32.partialorder %v1751, 0.0
      %vm1862 = vcmp.ge.f32.partialorder %v1753, 0.0
      %vm1863 = vcmp.ge.f32.partialorder %v1755, 0.0
      %vm1864 = vcmp.ge.f32.partialorder %v1757, 0.0
      %vm1865 = vcmp.ge.f32.partialorder %v1759, 0.0
      %vm1866 = vcmp.ge.f32.partialorder %v1761, 0.0
      %vm1867 = vcmp.ge.f32.partialorder %v1763, 0.0
      %vm1868 = vcmp.ge.f32.partialorder %v1765, 0.0
      %vm1869 = vcmp.ge.f32.partialorder %v1767, 0.0
      %vm1870 = vcmp.ge.f32.partialorder %v1769, 0.0
      %vm1871 = vcmp.ge.f32.partialorder %v1771, 0.0
      %vm1872 = vcmp.ge.f32.partialorder %v1773, 0.0
      %vm1873 = vcmp.ge.f32.partialorder %v1775, 0.0
      %vm1874 = vcmp.ge.f32.partialorder %v1777, 0.0
      %vm1875 = vcmp.ge.f32.partialorder %v1779, 0.0
      %vm1876 = vcmp.ge.f32.partialorder %v1781, 0.0
      %vm1877 = vcmp.ge.f32.partialorder %v1783, 0.0
      %vm1878 = vcmp.ge.f32.partialorder %v1785, 0.0
      %vm1879 = vcmp.ge.f32.partialorder %v1787, 0.0
      %vm1880 = vcmp.ge.f32.partialorder %v1789, 0.0
      %vm1881 = vcmp.ge.f32.partialorder %v1791, 0.0
      %vm1882 = vcmp.ge.f32.partialorder %v1793, 0.0
      %vm1883 = vcmp.ge.f32.partialorder %v1795, 0.0
      %vm1884 = vcmp.ge.f32.partialorder %v1797, 0.0
      %vm1885 = vcmp.ge.f32.partialorder %v1799, 0.0
      %vm1886 = vcmp.ge.f32.partialorder %v1801, 0.0
      %vm1887 = vcmp.ge.f32.partialorder %v1803, 0.0
      %vm1888 = vcmp.ge.f32.partialorder %v1805, 0.0
      %vm1889 = vcmp.ge.f32.partialorder %v1807, 0.0
      %vm1890 = vcmp.ge.f32.partialorder %v1809, 0.0
      %vm1891 = vcmp.ge.f32.partialorder %v1811, 0.0
      %vm1892 = vcmp.ge.f32.partialorder %v1813, 0.0
      %vm1893 = vcmp.ge.f32.partialorder %v1815, 0.0
      %vm1894 = vcmp.ge.f32.partialorder %v1817, 0.0
      %vm1895 = vcmp.ge.f32.partialorder %v1819, 0.0
      %vm1896 = vcmp.ge.f32.partialorder %v1821, 0.0
      %vm1897 = vcmp.ge.f32.partialorder %v1823, 0.0
      %vm1898 = vcmp.ge.f32.partialorder %v1825, 0.0
      %vm1899 = vcmp.ge.f32.partialorder %v1827, 0.0
      %vm1900 = vcmp.ge.f32.partialorder %v1829, 0.0
      %vm1901 = vcmp.ge.f32.partialorder %v1831, 0.0
      %vm1902 = vcmp.ge.f32.partialorder %v1833, 0.0
      %vm1903 = vcmp.ge.f32.partialorder %v1835, 0.0
      %vm1904 = vcmp.ge.f32.partialorder %v1837, 0.0
      %vm1905 = vcmp.ge.f32.partialorder %v1839, 0.0
      %vm1906 = vcmp.ge.f32.partialorder %v1841, 0.0
      %vm1907 = vcmp.ge.f32.partialorder %v1843, 0.0
      %v1908 = vmul.f32 %v1717, 0.2
      %v1909 = vmul.f32 %v1719, 0.2
      %v1910 = vmul.f32 %v1721, 0.2
      %v1911 = vmul.f32 %v1723, 0.2
      %v1912 = vmul.f32 %v1725, 0.2
      %v1913 = vmul.f32 %v1727, 0.2
      %v1914 = vmul.f32 %v1729, 0.2
      %v1915 = vmul.f32 %v1731, 0.2
      %v1916 = vmul.f32 %v1733, 0.2
      %v1917 = vmul.f32 %v1735, 0.2
      %v1918 = vmul.f32 %v1737, 0.2
      %v1919 = vmul.f32 %v1739, 0.2
      %v1920 = vmul.f32 %v1741, 0.2
      %v1921 = vmul.f32 %v1743, 0.2
      %v1922 = vmul.f32 %v1745, 0.2
      %v1923 = vmul.f32 %v1747, 0.2
      %v1924 = vmul.f32 %v1749, 0.2
      %v1925 = vmul.f32 %v1751, 0.2
      %v1926 = vmul.f32 %v1753, 0.2
      %v1927 = vmul.f32 %v1755, 0.2
      %v1928 = vmul.f32 %v1757, 0.2
      %v1929 = vmul.f32 %v1759, 0.2
      %v1930 = vmul.f32 %v1761, 0.2
      %v1931 = vmul.f32 %v1763, 0.2
      %v1932 = vmul.f32 %v1765, 0.2
      %v1933 = vmul.f32 %v1767, 0.2
      %v1934 = vmul.f32 %v1769, 0.2
      %v1935 = vmul.f32 %v1771, 0.2
      %v1936 = vmul.f32 %v1773, 0.2
      %v1937 = vmul.f32 %v1775, 0.2
      %v1938 = vmul.f32 %v1777, 0.2
      %v1939 = vmul.f32 %v1779, 0.2
      %v1940 = vmul.f32 %v1781, 0.2
      %v1941 = vmul.f32 %v1783, 0.2
      %v1942 = vmul.f32 %v1785, 0.2
      %v1943 = vmul.f32 %v1787, 0.2
      %v1944 = vmul.f32 %v1789, 0.2
      %v1945 = vmul.f32 %v1791, 0.2
      %v1946 = vmul.f32 %v1793, 0.2
      %v1947 = vmul.f32 %v1795, 0.2
      %v1948 = vmul.f32 %v1797, 0.2
      %v1949 = vmul.f32 %v1799, 0.2
      %v1950 = vmul.f32 %v1801, 0.2
      %v1951 = vmul.f32 %v1803, 0.2
      %v1952 = vmul.f32 %v1805, 0.2
      %v1953 = vmul.f32 %v1807, 0.2
      %v1954 = vmul.f32 %v1809, 0.2
      %v1955 = vmul.f32 %v1811, 0.2
      %v1956 = vmul.f32 %v1813, 0.2
      %v1957 = vmul.f32 %v1815, 0.2
      %v1958 = vmul.f32 %v1817, 0.2
      %v1959 = vmul.f32 %v1819, 0.2
      %v1960 = vmul.f32 %v1821, 0.2
      %v1961 = vmul.f32 %v1823, 0.2
      %v1962 = vmul.f32 %v1825, 0.2
      %v1963 = vmul.f32 %v1827, 0.2
      %v1964 = vmul.f32 %v1829, 0.2
      %v1965 = vmul.f32 %v1831, 0.2
      %v1966 = vmul.f32 %v1833, 0.2
      %v1967 = vmul.f32 %v1835, 0.2
      %v1968 = vmul.f32 %v1837, 0.2
      %v1969 = vmul.f32 %v1839, 0.2
      %v1970 = vmul.f32 %v1841, 0.2
      %v1971 = vmul.f32 %v1843, 0.2
      %v1972 = vsel %vm1844, %v1717, %v1908
      %v1973 = vsel %vm1845, %v1719, %v1909
      %v1974 = vsel %vm1846, %v1721, %v1910
      %v1975 = vsel %vm1847, %v1723, %v1911
      %v1976 = vsel %vm1848, %v1725, %v1912
      %v1977 = vsel %vm1849, %v1727, %v1913
      %v1978 = vsel %vm1850, %v1729, %v1914
      %v1979 = vsel %vm1851, %v1731, %v1915
      %v1980 = vsel %vm1852, %v1733, %v1916
      %v1981 = vsel %vm1853, %v1735, %v1917
      %v1982 = vsel %vm1854, %v1737, %v1918
      %v1983 = vsel %vm1855, %v1739, %v1919
      %v1984 = vsel %vm1856, %v1741, %v1920
      %v1985 = vsel %vm1857, %v1743, %v1921
      %v1986 = vsel %vm1858, %v1745, %v1922
      %v1987 = vsel %vm1859, %v1747, %v1923
      %v1988 = vsel %vm1860, %v1749, %v1924
      %v1989 = vsel %vm1861, %v1751, %v1925
      %v1990 = vsel %vm1862, %v1753, %v1926
      %v1991 = vsel %vm1863, %v1755, %v1927
      %v1992 = vsel %vm1864, %v1757, %v1928
      %v1993 = vsel %vm1865, %v1759, %v1929
      %v1994 = vsel %vm1866, %v1761, %v1930
      %v1995 = vsel %vm1867, %v1763, %v1931
      %v1996 = vsel %vm1868, %v1765, %v1932
      %v1997 = vsel %vm1869, %v1767, %v1933
      %v1998 = vsel %vm1870, %v1769, %v1934
      %v1999 = vsel %vm1871, %v1771, %v1935
      %v2000 = vsel %vm1872, %v1773, %v1936
      %v2001 = vsel %vm1873, %v1775, %v1937
      %v2002 = vsel %vm1874, %v1777, %v1938
      %v2003 = vsel %vm1875, %v1779, %v1939
      %v2004 = vsel %vm1876, %v1781, %v1940
      %v2005 = vsel %vm1877, %v1783, %v1941
      %v2006 = vsel %vm1878, %v1785, %v1942
      %v2007 = vsel %vm1879, %v1787, %v1943
      %v2008 = vsel %vm1880, %v1789, %v1944
      %v2009 = vsel %vm1881, %v1791, %v1945
      %v2010 = vsel %vm1882, %v1793, %v1946
      %v2011 = vsel %vm1883, %v1795, %v1947
      %v2012 = vsel %vm1884, %v1797, %v1948
      %v2013 = vsel %vm1885, %v1799, %v1949
      %v2014 = vsel %vm1886, %v1801, %v1950
      %v2015 = vsel %vm1887, %v1803, %v1951
      %v2016 = vsel %vm1888, %v1805, %v1952
      %v2017 = vsel %vm1889, %v1807, %v1953
      %v2018 = vsel %vm1890, %v1809, %v1954
      %v2019 = vsel %vm1891, %v1811, %v1955
      %v2020 = vsel %vm1892, %v1813, %v1956
      %v2021 = vsel %vm1893, %v1815, %v1957
      %v2022 = vsel %vm1894, %v1817, %v1958
      %v2023 = vsel %vm1895, %v1819, %v1959
      %v2024 = vsel %vm1896, %v1821, %v1960
      %v2025 = vsel %vm1897, %v1823, %v1961
      %v2026 = vsel %vm1898, %v1825, %v1962
      %v2027 = vsel %vm1899, %v1827, %v1963
      %v2028 = vsel %vm1900, %v1829, %v1964
      %v2029 = vsel %vm1901, %v1831, %v1965
      %v2030 = vsel %vm1902, %v1833, %v1966
      %v2031 = vsel %vm1903, %v1835, %v1967
      %v2032 = vsel %vm1904, %v1837, %v1968
      %v2033 = vsel %vm1905, %v1839, %v1969
      %v2034 = vsel %vm1906, %v1841, %v1970
      %v2035 = vsel %vm1907, %v1843, %v1971
      %v2044 = vcombine.high %v1972, %v1972
      %v2045 = vcombine.high %v1973, %v1973
      %v2046 = vcombine.high %v1974, %v1974
      %v2047 = vcombine.high %v1975, %v1975
      %v2048 = vcombine.high %v1976, %v1976
      %v2049 = vcombine.high %v1977, %v1977
      %v2050 = vcombine.high %v1978, %v1978
      %v2051 = vcombine.high %v1979, %v1979
      %2052 = vrot.lane.b32.xlu0 %v1972, 96
      %v2053 = vpop.permute.xlu0 %2052
      %2054 = vrot.lane.b32.xlu0 %v2044, 96
      %v2055 = vpop.permute.xlu0 %2054
      %2056 = vrot.lane.b32.xlu0 %v1973, 96
      %v2057 = vpop.permute.xlu0 %2056
      %2058 = vrot.lane.b32.xlu0 %v2045, 96
      %v2059 = vpop.permute.xlu0 %2058
      %2060 = vrot.lane.b32.xlu0 %v1974, 96
      %v2061 = vpop.permute.xlu0 %2060
      %2062 = vrot.lane.b32.xlu0 %v2046, 96
      %v2063 = vpop.permute.xlu0 %2062
      %2064 = vrot.lane.b32.xlu0 %v1975, 96
      %v2065 = vpop.permute.xlu0 %2064
      %2066 = vrot.lane.b32.xlu0 %v2047, 96
      %v2067 = vpop.permute.xlu0 %2066
      %2068 = vrot.lane.b32.xlu0 %v1976, 96
      %v2069 = vpop.permute.xlu0 %2068
      %2070 = vrot.lane.b32.xlu0 %v2048, 96
      %v2071 = vpop.permute.xlu0 %2070
      %2072 = vrot.lane.b32.xlu0 %v1977, 96
      %v2073 = vpop.permute.xlu0 %2072
      %2074 = vrot.lane.b32.xlu0 %v2049, 96
      %v2075 = vpop.permute.xlu0 %2074
      %2076 = vrot.lane.b32.xlu0 %v1978, 96
      %v2077 = vpop.permute.xlu0 %2076
      %2078 = vrot.lane.b32.xlu0 %v2050, 96
      %v2079 = vpop.permute.xlu0 %2078
      %2080 = vrot.lane.b32.xlu0 %v1979, 96
      %v2081 = vpop.permute.xlu0 %2080
      %2082 = vrot.lane.b32.xlu0 %v2051, 96
      %v2083 = vpop.permute.xlu0 %2082
      %vm2100 = vcmask 1044224
      %2101 = vst.msk [vmem:[#allocation2 + $0x8] sm:$0xf] %vm2100, %v2053
      %2102 = vst.msk [vmem:[#allocation2 + $0x18] sm:$0xf] %vm2100, %v2055
      %2103 = vst.msk [vmem:[#allocation2 + $0x28] sm:$0xf] %vm2100, %v2057
      %2104 = vst.msk [vmem:[#allocation2 + $0x38] sm:$0xf] %vm2100, %v2059
      %2105 = vst.msk [vmem:[#allocation2 + $0x58] sm:$0xf] %vm2100, %v2061
      %2106 = vst.msk [vmem:[#allocation2 + $0x68] sm:$0xf] %vm2100, %v2063
      %2107 = vst.msk [vmem:[#allocation2 + $0x78] sm:$0xf] %vm2100, %v2065
      %2108 = vst.msk [vmem:[#allocation2 + $0x88] sm:$0xf] %vm2100, %v2067
      %2109 = vst.msk [vmem:[#allocation2 + $0xa8] sm:$0xf] %vm2100, %v2069
      %2110 = vst.msk [vmem:[#allocation2 + $0xb8] sm:$0xf] %vm2100, %v2071
      %2111 = vst.msk [vmem:[#allocation2 + $0xc8] sm:$0xf] %vm2100, %v2073
      %2112 = vst.msk [vmem:[#allocation2 + $0xd8] sm:$0xf] %vm2100, %v2075
      %2113 = vst.msk [vmem:[#allocation2 + $0xf8] sm:$0xf] %vm2100, %v2077
      %2114 = vst.msk [vmem:[#allocation2 + $0x108] sm:$0xf] %vm2100, %v2079
      %2115 = vst.msk [vmem:[#allocation2 + $0x118] sm:$0xf] %vm2100, %v2081
      %2116 = vst.msk [vmem:[#allocation2 + $0x128] sm:$0xf] %vm2100, %v2083
      %v2125 = vcombine.high %v1980, %v1980
      %v2126 = vcombine.high %v1981, %v1981
      %v2127 = vcombine.high %v1982, %v1982
      %v2128 = vcombine.high %v1983, %v1983
      %v2129 = vcombine.high %v1984, %v1984
      %v2130 = vcombine.high %v1985, %v1985
      %v2131 = vcombine.high %v1986, %v1986
      %v2132 = vcombine.high %v1987, %v1987
      %v2133 = vrot.slane %v1980, 7
      %v2134 = vrot.slane %v2125, 7
      %v2135 = vrot.slane %v1981, 7
      %v2136 = vrot.slane %v2126, 7
      %v2137 = vrot.slane %v1982, 7
      %v2138 = vrot.slane %v2127, 7
      %v2139 = vrot.slane %v1983, 7
      %v2140 = vrot.slane %v2128, 7
      %v2141 = vrot.slane %v1984, 7
      %v2142 = vrot.slane %v2129, 7
      %v2143 = vrot.slane %v1985, 7
      %v2144 = vrot.slane %v2130, 7
      %v2145 = vrot.slane %v1986, 7
      %v2146 = vrot.slane %v2131, 7
      %v2147 = vrot.slane %v1987, 7
      %v2148 = vrot.slane %v2132, 7
      %2149 = vrot.lane.b32.xlu0 %v2133, 64
      %v2150 = vpop.permute.xlu0 %2149
      %2151 = vrot.lane.b32.xlu0 %v2134, 64
      %v2152 = vpop.permute.xlu0 %2151
      %2153 = vrot.lane.b32.xlu0 %v2135, 64
      %v2154 = vpop.permute.xlu0 %2153
      %2155 = vrot.lane.b32.xlu0 %v2136, 64
      %v2156 = vpop.permute.xlu0 %2155
      %2157 = vrot.lane.b32.xlu0 %v2137, 64
      %v2158 = vpop.permute.xlu0 %2157
      %2159 = vrot.lane.b32.xlu0 %v2138, 64
      %v2160 = vpop.permute.xlu0 %2159
      %2161 = vrot.lane.b32.xlu0 %v2139, 64
      %v2162 = vpop.permute.xlu0 %2161
      %2163 = vrot.lane.b32.xlu0 %v2140, 64
      %v2164 = vpop.permute.xlu0 %2163
      %2165 = vrot.lane.b32.xlu0 %v2141, 64
      %v2166 = vpop.permute.xlu0 %2165
      %2167 = vrot.lane.b32.xlu0 %v2142, 64
      %v2168 = vpop.permute.xlu0 %2167
      %2169 = vrot.lane.b32.xlu0 %v2143, 64
      %v2170 = vpop.permute.xlu0 %2169
      %2171 = vrot.lane.b32.xlu0 %v2144, 64
      %v2172 = vpop.permute.xlu0 %2171
      %2173 = vrot.lane.b32.xlu0 %v2145, 64
      %v2174 = vpop.permute.xlu0 %2173
      %2175 = vrot.lane.b32.xlu0 %v2146, 64
      %v2176 = vpop.permute.xlu0 %2175
      %2177 = vrot.lane.b32.xlu0 %v2147, 64
      %v2178 = vpop.permute.xlu0 %2177
      %2179 = vrot.lane.b32.xlu0 %v2148, 64
      %v2180 = vpop.permute.xlu0 %2179
      %vm2197 = vcmask 782849
      %2198 = vst.msk [vmem:[#allocation2 + $0x8] sm:$0x1e] %vm2197, %v2150
      %2199 = vst.msk [vmem:[#allocation2 + $0x18] sm:$0x1e] %vm2197, %v2152
      %2200 = vst.msk [vmem:[#allocation2 + $0x28] sm:$0x1e] %vm2197, %v2154
      %2201 = vst.msk [vmem:[#allocation2 + $0x38] sm:$0x1e] %vm2197, %v2156
      %2202 = vst.msk [vmem:[#allocation2 + $0x58] sm:$0x1e] %vm2197, %v2158
      %2203 = vst.msk [vmem:[#allocation2 + $0x68] sm:$0x1e] %vm2197, %v2160
      %2204 = vst.msk [vmem:[#allocation2 + $0x78] sm:$0x1e] %vm2197, %v2162
      %2205 = vst.msk [vmem:[#allocation2 + $0x88] sm:$0x1e] %vm2197, %v2164
      %2206 = vst.msk [vmem:[#allocation2 + $0xa8] sm:$0x1e] %vm2197, %v2166
      %2207 = vst.msk [vmem:[#allocation2 + $0xb8] sm:$0x1e] %vm2197, %v2168
      %2208 = vst.msk [vmem:[#allocation2 + $0xc8] sm:$0x1e] %vm2197, %v2170
      %2209 = vst.msk [vmem:[#allocation2 + $0xd8] sm:$0x1e] %vm2197, %v2172
      %2210 = vst.msk [vmem:[#allocation2 + $0xf8] sm:$0x1e] %vm2197, %v2174
      %2211 = vst.msk [vmem:[#allocation2 + $0x108] sm:$0x1e] %vm2197, %v2176
      %2212 = vst.msk [vmem:[#allocation2 + $0x118] sm:$0x1e] %vm2197, %v2178
      %2213 = vst.msk [vmem:[#allocation2 + $0x128] sm:$0x1e] %vm2197, %v2180
      %v2222 = vcombine.high %v1988, %v1988
      %v2223 = vcombine.high %v1989, %v1989
      %v2224 = vcombine.high %v1990, %v1990
      %v2225 = vcombine.high %v1991, %v1991
      %v2226 = vcombine.high %v1992, %v1992
      %v2227 = vcombine.high %v1993, %v1993
      %v2228 = vcombine.high %v1994, %v1994
      %v2229 = vcombine.high %v1995, %v1995
      %2230 = vrot.lane.b32.xlu0 %v1988, 32
      %v2231 = vpop.permute.xlu0 %2230
      %2232 = vrot.lane.b32.xlu0 %v2222, 32
      %v2233 = vpop.permute.xlu0 %2232
      %2234 = vrot.lane.b32.xlu0 %v1989, 32
      %v2235 = vpop.permute.xlu0 %2234
      %2236 = vrot.lane.b32.xlu0 %v2223, 32
      %v2237 = vpop.permute.xlu0 %2236
      %2238 = vrot.lane.b32.xlu0 %v1990, 32
      %v2239 = vpop.permute.xlu0 %2238
      %2240 = vrot.lane.b32.xlu0 %v2224, 32
      %v2241 = vpop.permute.xlu0 %2240
      %2242 = vrot.lane.b32.xlu0 %v1991, 32
      %v2243 = vpop.permute.xlu0 %2242
      %2244 = vrot.lane.b32.xlu0 %v2225, 32
      %v2245 = vpop.permute.xlu0 %2244
      %2246 = vrot.lane.b32.xlu0 %v1992, 32
      %v2247 = vpop.permute.xlu0 %2246
      %2248 = vrot.lane.b32.xlu0 %v2226, 32
      %v2249 = vpop.permute.xlu0 %2248
      %2250 = vrot.lane.b32.xlu0 %v1993, 32
      %v2251 = vpop.permute.xlu0 %2250
      %2252 = vrot.lane.b32.xlu0 %v2227, 32
      %v2253 = vpop.permute.xlu0 %2252
      %2254 = vrot.lane.b32.xlu0 %v1994, 32
      %v2255 = vpop.permute.xlu0 %2254
      %2256 = vrot.lane.b32.xlu0 %v2228, 32
      %v2257 = vpop.permute.xlu0 %2256
      %2258 = vrot.lane.b32.xlu0 %v1995, 32
      %v2259 = vpop.permute.xlu0 %2258
      %2260 = vrot.lane.b32.xlu0 %v2229, 32
      %v2261 = vpop.permute.xlu0 %2260
      %s2278 = scalar_lea.vmem [#allocation2], 16
      %vm2279 = vcmask 519424
      %2280 = vst.msk [vmem:[%s2278 + $0x8] sm:$0xf] %vm2279, %v2231
      %2281 = vst.msk [vmem:[%s2278 + $0x18] sm:$0xf] %vm2279, %v2233
      %2282 = vst.msk [vmem:[%s2278 + $0x28] sm:$0xf] %vm2279, %v2235
      %2283 = vst.msk [vmem:[%s2278 + $0x38] sm:$0xf] %vm2279, %v2237
      %2284 = vst.msk [vmem:[%s2278 + $0x58] sm:$0xf] %vm2279, %v2239
      %2285 = vst.msk [vmem:[%s2278 + $0x68] sm:$0xf] %vm2279, %v2241
      %2286 = vst.msk [vmem:[%s2278 + $0x78] sm:$0xf] %vm2279, %v2243
      %2287 = vst.msk [vmem:[%s2278 + $0x88] sm:$0xf] %vm2279, %v2245
      %2288 = vst.msk [vmem:[%s2278 + $0xa8] sm:$0xf] %vm2279, %v2247
      %2289 = vst.msk [vmem:[%s2278 + $0xb8] sm:$0xf] %vm2279, %v2249
      %2290 = vst.msk [vmem:[%s2278 + $0xc8] sm:$0xf] %vm2279, %v2251
      %2291 = vst.msk [vmem:[%s2278 + $0xd8] sm:$0xf] %vm2279, %v2253
      %2292 = vst.msk [vmem:[%s2278 + $0xf8] sm:$0xf] %vm2279, %v2255
      %2293 = vst.msk [vmem:[%s2278 + $0x108] sm:$0xf] %vm2279, %v2257
      %2294 = vst.msk [vmem:[%s2278 + $0x118] sm:$0xf] %vm2279, %v2259
      %2295 = vst.msk [vmem:[%s2278 + $0x128] sm:$0xf] %vm2279, %v2261
      %v2304 = vcombine.high %v1996, %v1996
      %v2305 = vcombine.high %v1997, %v1997
      %v2306 = vcombine.high %v1998, %v1998
      %v2307 = vcombine.high %v1999, %v1999
      %v2308 = vcombine.high %v2000, %v2000
      %v2309 = vcombine.high %v2001, %v2001
      %v2310 = vcombine.high %v2002, %v2002
      %v2311 = vcombine.high %v2003, %v2003
      %v2312 = vrot.slane %v1996, 7
      %v2313 = vrot.slane %v2304, 7
      %v2314 = vrot.slane %v1997, 7
      %v2315 = vrot.slane %v2305, 7
      %v2316 = vrot.slane %v1998, 7
      %v2317 = vrot.slane %v2306, 7
      %v2318 = vrot.slane %v1999, 7
      %v2319 = vrot.slane %v2307, 7
      %v2320 = vrot.slane %v2000, 7
      %v2321 = vrot.slane %v2308, 7
      %v2322 = vrot.slane %v2001, 7
      %v2323 = vrot.slane %v2309, 7
      %v2324 = vrot.slane %v2002, 7
      %v2325 = vrot.slane %v2310, 7
      %v2326 = vrot.slane %v2003, 7
      %v2327 = vrot.slane %v2311, 7
      %vm2344 = vcmask 258049
      %2345 = vst.msk [vmem:[%s2278 + $0x8] sm:$0x1e] %vm2344, %v2312
      %2346 = vst.msk [vmem:[%s2278 + $0x18] sm:$0x1e] %vm2344, %v2313
      %2347 = vst.msk [vmem:[%s2278 + $0x28] sm:$0x1e] %vm2344, %v2314
      %2348 = vst.msk [vmem:[%s2278 + $0x38] sm:$0x1e] %vm2344, %v2315
      %2349 = vst.msk [vmem:[%s2278 + $0x58] sm:$0x1e] %vm2344, %v2316
      %2350 = vst.msk [vmem:[%s2278 + $0x68] sm:$0x1e] %vm2344, %v2317
      %2351 = vst.msk [vmem:[%s2278 + $0x78] sm:$0x1e] %vm2344, %v2318
      %2352 = vst.msk [vmem:[%s2278 + $0x88] sm:$0x1e] %vm2344, %v2319
      %2353 = vst.msk [vmem:[%s2278 + $0xa8] sm:$0x1e] %vm2344, %v2320
      %2354 = vst.msk [vmem:[%s2278 + $0xb8] sm:$0x1e] %vm2344, %v2321
      %2355 = vst.msk [vmem:[%s2278 + $0xc8] sm:$0x1e] %vm2344, %v2322
      %2356 = vst.msk [vmem:[%s2278 + $0xd8] sm:$0x1e] %vm2344, %v2323
      %2357 = vst.msk [vmem:[%s2278 + $0xf8] sm:$0x1e] %vm2344, %v2324
      %2358 = vst.msk [vmem:[%s2278 + $0x108] sm:$0x1e] %vm2344, %v2325
      %2359 = vst.msk [vmem:[%s2278 + $0x118] sm:$0x1e] %vm2344, %v2326
      %2360 = vst.msk [vmem:[%s2278 + $0x128] sm:$0x1e] %vm2344, %v2327
      %v2369 = vcombine.high %v2004, %v2004
      %v2370 = vcombine.high %v2005, %v2005
      %v2371 = vcombine.high %v2006, %v2006
      %v2372 = vcombine.high %v2007, %v2007
      %v2373 = vcombine.high %v2008, %v2008
      %v2374 = vcombine.high %v2009, %v2009
      %v2375 = vcombine.high %v2010, %v2010
      %v2376 = vcombine.high %v2011, %v2011
      %2377 = vrot.lane.b32.xlu0 %v2004, 96
      %v2378 = vpop.permute.xlu0 %2377
      %2379 = vrot.lane.b32.xlu0 %v2369, 96
      %v2380 = vpop.permute.xlu0 %2379
      %2381 = vrot.lane.b32.xlu0 %v2005, 96
      %v2382 = vpop.permute.xlu0 %2381
      %2383 = vrot.lane.b32.xlu0 %v2370, 96
      %v2384 = vpop.permute.xlu0 %2383
      %2385 = vrot.lane.b32.xlu0 %v2006, 96
      %v2386 = vpop.permute.xlu0 %2385
      %2387 = vrot.lane.b32.xlu0 %v2371, 96
      %v2388 = vpop.permute.xlu0 %2387
      %2389 = vrot.lane.b32.xlu0 %v2007, 96
      %v2390 = vpop.permute.xlu0 %2389
      %2391 = vrot.lane.b32.xlu0 %v2372, 96
      %v2392 = vpop.permute.xlu0 %2391
      %2393 = vrot.lane.b32.xlu0 %v2008, 96
      %v2394 = vpop.permute.xlu0 %2393
      %2395 = vrot.lane.b32.xlu0 %v2373, 96
      %v2396 = vpop.permute.xlu0 %2395
      %2397 = vrot.lane.b32.xlu0 %v2009, 96
      %v2398 = vpop.permute.xlu0 %2397
      %2399 = vrot.lane.b32.xlu0 %v2374, 96
      %v2400 = vpop.permute.xlu0 %2399
      %2401 = vrot.lane.b32.xlu0 %v2010, 96
      %v2402 = vpop.permute.xlu0 %2401
      %2403 = vrot.lane.b32.xlu0 %v2375, 96
      %v2404 = vpop.permute.xlu0 %2403
      %2405 = vrot.lane.b32.xlu0 %v2011, 96
      %v2406 = vpop.permute.xlu0 %2405
      %2407 = vrot.lane.b32.xlu0 %v2376, 96
      %v2408 = vpop.permute.xlu0 %2407
      %s2425 = scalar_lea.vmem [#allocation2], 80
      %2426 = vst.msk [vmem:[%s2425] sm:$0xf] %vm2100, %v2378
      %2427 = vst.msk [vmem:[%s2425 + $0x10] sm:$0xf] %vm2100, %v2380
      %2428 = vst.msk [vmem:[%s2425 + $0x20] sm:$0xf] %vm2100, %v2382
      %2429 = vst.msk [vmem:[%s2425 + $0x30] sm:$0xf] %vm2100, %v2384
      %2430 = vst.msk [vmem:[%s2425 + $0x50] sm:$0xf] %vm2100, %v2386
      %2431 = vst.msk [vmem:[%s2425 + $0x60] sm:$0xf] %vm2100, %v2388
      %2432 = vst.msk [vmem:[%s2425 + $0x70] sm:$0xf] %vm2100, %v2390
      %2433 = vst.msk [vmem:[%s2425 + $0x80] sm:$0xf] %vm2100, %v2392
      %2434 = vst.msk [vmem:[%s2425 + $0xa0] sm:$0xf] %vm2100, %v2394
      %2435 = vst.msk [vmem:[%s2425 + $0xb0] sm:$0xf] %vm2100, %v2396
      %2436 = vst.msk [vmem:[%s2425 + $0xc0] sm:$0xf] %vm2100, %v2398
      %2437 = vst.msk [vmem:[%s2425 + $0xd0] sm:$0xf] %vm2100, %v2400
      %2438 = vst.msk [vmem:[%s2425 + $0xf0] sm:$0xf] %vm2100, %v2402
      %2439 = vst.msk [vmem:[%s2425 + $0x100] sm:$0xf] %vm2100, %v2404
      %2440 = vst.msk [vmem:[%s2425 + $0x110] sm:$0xf] %vm2100, %v2406
      %2441 = vst.msk [vmem:[%s2425 + $0x120] sm:$0xf] %vm2100, %v2408
      %v2450 = vcombine.high %v2012, %v2012
      %v2451 = vcombine.high %v2013, %v2013
      %v2452 = vcombine.high %v2014, %v2014
      %v2453 = vcombine.high %v2015, %v2015
      %v2454 = vcombine.high %v2016, %v2016
      %v2455 = vcombine.high %v2017, %v2017
      %v2456 = vcombine.high %v2018, %v2018
      %v2457 = vcombine.high %v2019, %v2019
      %v2458 = vrot.slane %v2012, 7
      %v2459 = vrot.slane %v2450, 7
      %v2460 = vrot.slane %v2013, 7
      %v2461 = vrot.slane %v2451, 7
      %v2462 = vrot.slane %v2014, 7
      %v2463 = vrot.slane %v2452, 7
      %v2464 = vrot.slane %v2015, 7
      %v2465 = vrot.slane %v2453, 7
      %v2466 = vrot.slane %v2016, 7
      %v2467 = vrot.slane %v2454, 7
      %v2468 = vrot.slane %v2017, 7
      %v2469 = vrot.slane %v2455, 7
      %v2470 = vrot.slane %v2018, 7
      %v2471 = vrot.slane %v2456, 7
      %v2472 = vrot.slane %v2019, 7
      %v2473 = vrot.slane %v2457, 7
      %2474 = vrot.lane.b32.xlu0 %v2458, 64
      %v2475 = vpop.permute.xlu0 %2474
      %2476 = vrot.lane.b32.xlu0 %v2459, 64
      %v2477 = vpop.permute.xlu0 %2476
      %2478 = vrot.lane.b32.xlu0 %v2460, 64
      %v2479 = vpop.permute.xlu0 %2478
      %2480 = vrot.lane.b32.xlu0 %v2461, 64
      %v2481 = vpop.permute.xlu0 %2480
      %2482 = vrot.lane.b32.xlu0 %v2462, 64
      %v2483 = vpop.permute.xlu0 %2482
      %2484 = vrot.lane.b32.xlu0 %v2463, 64
      %v2485 = vpop.permute.xlu0 %2484
      %2486 = vrot.lane.b32.xlu0 %v2464, 64
      %v2487 = vpop.permute.xlu0 %2486
      %2488 = vrot.lane.b32.xlu0 %v2465, 64
      %v2489 = vpop.permute.xlu0 %2488
      %2490 = vrot.lane.b32.xlu0 %v2466, 64
      %v2491 = vpop.permute.xlu0 %2490
      %2492 = vrot.lane.b32.xlu0 %v2467, 64
      %v2493 = vpop.permute.xlu0 %2492
      %2494 = vrot.lane.b32.xlu0 %v2468, 64
      %v2495 = vpop.permute.xlu0 %2494
      %2496 = vrot.lane.b32.xlu0 %v2469, 64
      %v2497 = vpop.permute.xlu0 %2496
      %2498 = vrot.lane.b32.xlu0 %v2470, 64
      %v2499 = vpop.permute.xlu0 %2498
      %2500 = vrot.lane.b32.xlu0 %v2471, 64
      %v2501 = vpop.permute.xlu0 %2500
      %2502 = vrot.lane.b32.xlu0 %v2472, 64
      %v2503 = vpop.permute.xlu0 %2502
      %2504 = vrot.lane.b32.xlu0 %v2473, 64
      %v2505 = vpop.permute.xlu0 %2504
      %2522 = vst.msk [vmem:[%s2425] sm:$0x1e] %vm2197, %v2475
      %2523 = vst.msk [vmem:[%s2425 + $0x10] sm:$0x1e] %vm2197, %v2477
      %2524 = vst.msk [vmem:[%s2425 + $0x20] sm:$0x1e] %vm2197, %v2479
      %2525 = vst.msk [vmem:[%s2425 + $0x30] sm:$0x1e] %vm2197, %v2481
      %2526 = vst.msk [vmem:[%s2425 + $0x50] sm:$0x1e] %vm2197, %v2483
      %2527 = vst.msk [vmem:[%s2425 + $0x60] sm:$0x1e] %vm2197, %v2485
      %2528 = vst.msk [vmem:[%s2425 + $0x70] sm:$0x1e] %vm2197, %v2487
      %2529 = vst.msk [vmem:[%s2425 + $0x80] sm:$0x1e] %vm2197, %v2489
      %2530 = vst.msk [vmem:[%s2425 + $0xa0] sm:$0x1e] %vm2197, %v2491
      %2531 = vst.msk [vmem:[%s2425 + $0xb0] sm:$0x1e] %vm2197, %v2493
      %2532 = vst.msk [vmem:[%s2425 + $0xc0] sm:$0x1e] %vm2197, %v2495
      %2533 = vst.msk [vmem:[%s2425 + $0xd0] sm:$0x1e] %vm2197, %v2497
      %2534 = vst.msk [vmem:[%s2425 + $0xf0] sm:$0x1e] %vm2197, %v2499
      %2535 = vst.msk [vmem:[%s2425 + $0x100] sm:$0x1e] %vm2197, %v2501
      %2536 = vst.msk [vmem:[%s2425 + $0x110] sm:$0x1e] %vm2197, %v2503
      %2537 = vst.msk [vmem:[%s2425 + $0x120] sm:$0x1e] %vm2197, %v2505
      %v2546 = vcombine.high %v2020, %v2020
      %v2547 = vcombine.high %v2021, %v2021
      %v2548 = vcombine.high %v2022, %v2022
      %v2549 = vcombine.high %v2023, %v2023
      %v2550 = vcombine.high %v2024, %v2024
      %v2551 = vcombine.high %v2025, %v2025
      %v2552 = vcombine.high %v2026, %v2026
      %v2553 = vcombine.high %v2027, %v2027
      %2554 = vrot.lane.b32.xlu0 %v2020, 32
      %v2555 = vpop.permute.xlu0 %2554
      %2556 = vrot.lane.b32.xlu0 %v2546, 32
      %v2557 = vpop.permute.xlu0 %2556
      %2558 = vrot.lane.b32.xlu0 %v2021, 32
      %v2559 = vpop.permute.xlu0 %2558
      %2560 = vrot.lane.b32.xlu0 %v2547, 32
      %v2561 = vpop.permute.xlu0 %2560
      %2562 = vrot.lane.b32.xlu0 %v2022, 32
      %v2563 = vpop.permute.xlu0 %2562
      %2564 = vrot.lane.b32.xlu0 %v2548, 32
      %v2565 = vpop.permute.xlu0 %2564
      %2566 = vrot.lane.b32.xlu0 %v2023, 32
      %v2567 = vpop.permute.xlu0 %2566
      %2568 = vrot.lane.b32.xlu0 %v2549, 32
      %v2569 = vpop.permute.xlu0 %2568
      %2570 = vrot.lane.b32.xlu0 %v2024, 32
      %v2571 = vpop.permute.xlu0 %2570
      %2572 = vrot.lane.b32.xlu0 %v2550, 32
      %v2573 = vpop.permute.xlu0 %2572
      %2574 = vrot.lane.b32.xlu0 %v2025, 32
      %v2575 = vpop.permute.xlu0 %2574
      %2576 = vrot.lane.b32.xlu0 %v2551, 32
      %v2577 = vpop.permute.xlu0 %2576
      %2578 = vrot.lane.b32.xlu0 %v2026, 32
      %v2579 = vpop.permute.xlu0 %2578
      %2580 = vrot.lane.b32.xlu0 %v2552, 32
      %v2581 = vpop.permute.xlu0 %2580
      %2582 = vrot.lane.b32.xlu0 %v2027, 32
      %v2583 = vpop.permute.xlu0 %2582
      %2584 = vrot.lane.b32.xlu0 %v2553, 32
      %v2585 = vpop.permute.xlu0 %2584
      %s2602 = scalar_lea.vmem [#allocation2], 96
      %2603 = vst.msk [vmem:[%s2602] sm:$0xf] %vm2279, %v2555
      %2604 = vst.msk [vmem:[%s2602 + $0x10] sm:$0xf] %vm2279, %v2557
      %2605 = vst.msk [vmem:[%s2602 + $0x20] sm:$0xf] %vm2279, %v2559
      %2606 = vst.msk [vmem:[%s2602 + $0x30] sm:$0xf] %vm2279, %v2561
      %2607 = vst.msk [vmem:[%s2602 + $0x50] sm:$0xf] %vm2279, %v2563
      %2608 = vst.msk [vmem:[%s2602 + $0x60] sm:$0xf] %vm2279, %v2565
      %2609 = vst.msk [vmem:[%s2602 + $0x70] sm:$0xf] %vm2279, %v2567
      %2610 = vst.msk [vmem:[%s2602 + $0x80] sm:$0xf] %vm2279, %v2569
      %2611 = vst.msk [vmem:[%s2602 + $0xa0] sm:$0xf] %vm2279, %v2571
      %2612 = vst.msk [vmem:[%s2602 + $0xb0] sm:$0xf] %vm2279, %v2573
      %2613 = vst.msk [vmem:[%s2602 + $0xc0] sm:$0xf] %vm2279, %v2575
      %2614 = vst.msk [vmem:[%s2602 + $0xd0] sm:$0xf] %vm2279, %v2577
      %2615 = vst.msk [vmem:[%s2602 + $0xf0] sm:$0xf] %vm2279, %v2579
      %2616 = vst.msk [vmem:[%s2602 + $0x100] sm:$0xf] %vm2279, %v2581
      %2617 = vst.msk [vmem:[%s2602 + $0x110] sm:$0xf] %vm2279, %v2583
      %2618 = vst.msk [vmem:[%s2602 + $0x120] sm:$0xf] %vm2279, %v2585
      %v2627 = vcombine.high %v2028, %v2028
      %v2628 = vcombine.high %v2029, %v2029
      %v2629 = vcombine.high %v2030, %v2030
      %v2630 = vcombine.high %v2031, %v2031
      %v2631 = vcombine.high %v2032, %v2032
      %v2632 = vcombine.high %v2033, %v2033
      %v2633 = vcombine.high %v2034, %v2034
      %v2634 = vcombine.high %v2035, %v2035
      %v2635 = vrot.slane %v2028, 7
      %v2636 = vrot.slane %v2627, 7
      %v2637 = vrot.slane %v2029, 7
      %v2638 = vrot.slane %v2628, 7
      %v2639 = vrot.slane %v2030, 7
      %v2640 = vrot.slane %v2629, 7
      %v2641 = vrot.slane %v2031, 7
      %v2642 = vrot.slane %v2630, 7
      %v2643 = vrot.slane %v2032, 7
      %v2644 = vrot.slane %v2631, 7
      %v2645 = vrot.slane %v2033, 7
      %v2646 = vrot.slane %v2632, 7
      %v2647 = vrot.slane %v2034, 7
      %v2648 = vrot.slane %v2633, 7
      %v2649 = vrot.slane %v2035, 7
      %v2650 = vrot.slane %v2634, 7
      %2667 = vst.msk [vmem:[%s2602] sm:$0x1e] %vm2344, %v2635
      %2668 = vst.msk [vmem:[%s2602 + $0x10] sm:$0x1e] %vm2344, %v2636
      %2669 = vst.msk [vmem:[%s2602 + $0x20] sm:$0x1e] %vm2344, %v2637
      %2670 = vst.msk [vmem:[%s2602 + $0x30] sm:$0x1e] %vm2344, %v2638
      %2671 = vst.msk [vmem:[%s2602 + $0x50] sm:$0x1e] %vm2344, %v2639
      %2672 = vst.msk [vmem:[%s2602 + $0x60] sm:$0x1e] %vm2344, %v2640
      %2673 = vst.msk [vmem:[%s2602 + $0x70] sm:$0x1e] %vm2344, %v2641
      %2674 = vst.msk [vmem:[%s2602 + $0x80] sm:$0x1e] %vm2344, %v2642
      %2675 = vst.msk [vmem:[%s2602 + $0xa0] sm:$0x1e] %vm2344, %v2643
      %2676 = vst.msk [vmem:[%s2602 + $0xb0] sm:$0x1e] %vm2344, %v2644
      %2677 = vst.msk [vmem:[%s2602 + $0xc0] sm:$0x1e] %vm2344, %v2645
      %2678 = vst.msk [vmem:[%s2602 + $0xd0] sm:$0x1e] %vm2344, %v2646
      %2679 = vst.msk [vmem:[%s2602 + $0xf0] sm:$0x1e] %vm2344, %v2647
      %2680 = vst.msk [vmem:[%s2602 + $0x100] sm:$0x1e] %vm2344, %v2648
      %2681 = vst.msk [vmem:[%s2602 + $0x110] sm:$0x1e] %vm2344, %v2649
      %2682 = vst.msk [vmem:[%s2602 + $0x120] sm:$0x1e] %vm2344, %v2650
      %v2683 = vld [vmem:[#allocation2] sm:$0x1f]
      %v2684 = vld [vmem:[#allocation2 + $0x8] sm:$0x1f]
      %v2685 = vld [vmem:[#allocation2 + $0x10] sm:$0x1f]
      %v2686 = vld [vmem:[#allocation2 + $0x18] sm:$0x1f]
      %v2687 = vld [vmem:[#allocation2 + $0x20] sm:$0x1f]
      %v2688 = vld [vmem:[#allocation2 + $0x28] sm:$0x1f]
      %v2689 = vld [vmem:[#allocation2 + $0x30] sm:$0x1f]
      %v2690 = vld [vmem:[#allocation2 + $0x38] sm:$0x1f]
      %v2691 = vld [vmem:[#allocation2 + $0x40] sm:$0x1f]
      %v2692 = vld [vmem:[#allocation2 + $0x48] sm:$0x1f]
      %v2693 = vld [vmem:[#allocation2 + $0x50] sm:$0x1f]
      %v2694 = vld [vmem:[#allocation2 + $0x58] sm:$0x1f]
      %v2695 = vld [vmem:[#allocation2 + $0x60] sm:$0x1f]
      %v2696 = vld [vmem:[#allocation2 + $0x68] sm:$0x1f]
      %v2697 = vld [vmem:[#allocation2 + $0x70] sm:$0x1f]
      %v2698 = vld [vmem:[#allocation2 + $0x78] sm:$0x1f]
      %v2699 = vld [vmem:[#allocation2 + $0x80] sm:$0x1f]
      %v2700 = vld [vmem:[#allocation2 + $0x88] sm:$0x1f]
      %v2701 = vld [vmem:[#allocation2 + $0x90] sm:$0x1f]
      %v2702 = vld [vmem:[#allocation2 + $0x98] sm:$0x1f]
      %v2703 = vld [vmem:[#allocation2 + $0xa0] sm:$0x1f]
      %v2704 = vld [vmem:[#allocation2 + $0xa8] sm:$0x1f]
      %v2705 = vld [vmem:[#allocation2 + $0xb0] sm:$0x1f]
      %v2706 = vld [vmem:[#allocation2 + $0xb8] sm:$0x1f]
      %v2707 = vld [vmem:[#allocation2 + $0xc0] sm:$0x1f]
      %v2708 = vld [vmem:[#allocation2 + $0xc8] sm:$0x1f]
      %v2709 = vld [vmem:[#allocation2 + $0xd0] sm:$0x1f]
      %v2710 = vld [vmem:[#allocation2 + $0xd8] sm:$0x1f]
      %v2711 = vld [vmem:[#allocation2 + $0xe0] sm:$0x1f]
      %v2712 = vld [vmem:[#allocation2 + $0xe8] sm:$0x1f]
      %v2713 = vld [vmem:[#allocation2 + $0xf0] sm:$0x1f]
      %v2714 = vld [vmem:[#allocation2 + $0xf8] sm:$0x1f]
      %v2715 = vld [vmem:[#allocation2 + $0x100] sm:$0x1f]
      %v2716 = vld [vmem:[#allocation2 + $0x108] sm:$0x1f]
      %v2717 = vld [vmem:[#allocation2 + $0x110] sm:$0x1f]
      %v2718 = vld [vmem:[#allocation2 + $0x118] sm:$0x1f]
      %v2719 = vld [vmem:[#allocation2 + $0x120] sm:$0x1f]
      %v2720 = vld [vmem:[#allocation2 + $0x128] sm:$0x1f]
      %v2721 = vld [vmem:[#allocation2 + $0x130] sm:$0x1f]
      %v2722 = vld [vmem:[#allocation2 + $0x138] sm:$0x1f]
      %v2723 = vld [vmem:[#allocation2 + $0x140] sm:$0x1f]
      %v2724 = vld [vmem:[#allocation2 + $0x148] sm:$0x1f]
      %v2725 = vld [vmem:[#allocation2 + $0x150] sm:$0x1f]
      %v2726 = vld [vmem:[#allocation2 + $0x158] sm:$0x1f]
      %v2727 = vld [vmem:[#allocation2 + $0x160] sm:$0x1f]
      %v2728 = vld [vmem:[#allocation2 + $0x168] sm:$0x1f]
      %v2729 = vld [vmem:[#allocation2 + $0x170] sm:$0x1f]
      %v2730 = vld [vmem:[#allocation2 + $0x178] sm:$0x1f]
      %v2731 = vld [vmem:[#allocation2 + $0x180] sm:$0x1f]
      %v2732 = vld [vmem:[#allocation2 + $0x188] sm:$0x1f]
      %v2733 = vpack.c.bf16 %v2683, %v2683
      %v2734 = vpack.c.bf16 %v2684, %v2684
      %v2735 = vpack.c.bf16 %v2685, %v2685
      %v2736 = vpack.c.bf16 %v2686, %v2686
      %v2737 = vpack.c.bf16 %v2687, %v2687
      %v2738 = vpack.c.bf16 %v2688, %v2688
      %v2739 = vpack.c.bf16 %v2689, %v2689
      %v2740 = vpack.c.bf16 %v2690, %v2690
      %v2741 = vpack.c.bf16 %v2691, %v2691
      %v2742 = vpack.c.bf16 %v2692, %v2692
      %v2743 = vpack.c.bf16 %v2693, %v2693
      %v2744 = vpack.c.bf16 %v2694, %v2694
      %v2745 = vpack.c.bf16 %v2695, %v2695
      %v2746 = vpack.c.bf16 %v2696, %v2696
      %v2747 = vpack.c.bf16 %v2697, %v2697
      %v2748 = vpack.c.bf16 %v2698, %v2698
      %v2749 = vpack.c.bf16 %v2699, %v2699
      %v2750 = vpack.c.bf16 %v2700, %v2700
      %v2751 = vpack.c.bf16 %v2701, %v2701
      %v2752 = vpack.c.bf16 %v2702, %v2702
      %v2753 = vpack.c.bf16 %v2703, %v2703
      %v2754 = vpack.c.bf16 %v2704, %v2704
      %v2755 = vpack.c.bf16 %v2705, %v2705
      %v2756 = vpack.c.bf16 %v2706, %v2706
      %v2757 = vpack.c.bf16 %v2707, %v2707
      %v2758 = vpack.c.bf16 %v2708, %v2708
      %v2759 = vpack.c.bf16 %v2709, %v2709
      %v2760 = vpack.c.bf16 %v2710, %v2710
      %v2761 = vpack.c.bf16 %v2711, %v2711
      %v2762 = vpack.c.bf16 %v2712, %v2712
      %v2763 = vpack.c.bf16 %v2713, %v2713
      %v2764 = vpack.c.bf16 %v2714, %v2714
      %v2765 = vpack.c.bf16 %v2715, %v2715
      %v2766 = vpack.c.bf16 %v2716, %v2716
      %v2767 = vpack.c.bf16 %v2717, %v2717
      %v2768 = vpack.c.bf16 %v2718, %v2718
      %v2769 = vpack.c.bf16 %v2719, %v2719
      %v2770 = vpack.c.bf16 %v2720, %v2720
      %v2771 = vpack.c.bf16 %v2721, %v2721
      %v2772 = vpack.c.bf16 %v2722, %v2722
      %v2773 = vpack.c.bf16 %v2723, %v2723
      %v2774 = vpack.c.bf16 %v2724, %v2724
      %v2775 = vpack.c.bf16 %v2725, %v2725
      %v2776 = vpack.c.bf16 %v2726, %v2726
      %v2777 = vpack.c.bf16 %v2727, %v2727
      %v2778 = vpack.c.bf16 %v2728, %v2728
      %v2779 = vpack.c.bf16 %v2729, %v2729
      %v2780 = vpack.c.bf16 %v2730, %v2730
      %v2781 = vpack.c.bf16 %v2731, %v2731
      %v2782 = vpack.c.bf16 %v2732, %v2732
      %v2815 = vcombine.low %v2733, %v2734
      %v2817 = vunpack.c.l.s4 1983009808
      %v2818 = vunpack.c.0.s8 %v2817
      %v2819 = vlaneseq
      %v2820 = vshrl.u32 %v2819, 7
      %v2821 = vsub.s32 %v2818, %v2820
      %v2822 = vrot.slane %v2815, %v2821
      %v2823 = vcombine.low %v2735, %v2736
      %v2825 = vunpack.c.l.s4 1983009808
      %v2826 = vunpack.c.0.s8 %v2825
      %v2827 = vlaneseq
      %v2828 = vshrl.u32 %v2827, 7
      %v2829 = vsub.s32 %v2826, %v2828
      %v2830 = vrot.slane %v2823, %v2829
      %v2831 = vcombine.low %v2737, %v2738
      %v2833 = vunpack.c.l.s4 1983009808
      %v2834 = vunpack.c.0.s8 %v2833
      %v2835 = vlaneseq
      %v2836 = vshrl.u32 %v2835, 7
      %v2837 = vsub.s32 %v2834, %v2836
      %v2838 = vrot.slane %v2831, %v2837
      %v2839 = vcombine.low %v2739, %v2740
      %v2841 = vunpack.c.l.s4 1983009808
      %v2842 = vunpack.c.0.s8 %v2841
      %v2843 = vlaneseq
      %v2844 = vshrl.u32 %v2843, 7
      %v2845 = vsub.s32 %v2842, %v2844
      %v2846 = vrot.slane %v2839, %v2845
      %v2847 = vcombine.low %v2743, %v2744
      %v2849 = vunpack.c.l.s4 1983009808
      %v2850 = vunpack.c.0.s8 %v2849
      %v2851 = vlaneseq
      %v2852 = vshrl.u32 %v2851, 7
      %v2853 = vsub.s32 %v2850, %v2852
      %v2854 = vrot.slane %v2847, %v2853
      %v2855 = vcombine.low %v2745, %v2746
      %v2857 = vunpack.c.l.s4 1983009808
      %v2858 = vunpack.c.0.s8 %v2857
      %v2859 = vlaneseq
      %v2860 = vshrl.u32 %v2859, 7
      %v2861 = vsub.s32 %v2858, %v2860
      %v2862 = vrot.slane %v2855, %v2861
      %v2863 = vcombine.low %v2747, %v2748
      %v2865 = vunpack.c.l.s4 1983009808
      %v2866 = vunpack.c.0.s8 %v2865
      %v2867 = vlaneseq
      %v2868 = vshrl.u32 %v2867, 7
      %v2869 = vsub.s32 %v2866, %v2868
      %v2870 = vrot.slane %v2863, %v2869
      %v2871 = vcombine.low %v2749, %v2750
      %v2873 = vunpack.c.l.s4 1983009808
      %v2874 = vunpack.c.0.s8 %v2873
      %v2875 = vlaneseq
      %v2876 = vshrl.u32 %v2875, 7
      %v2877 = vsub.s32 %v2874, %v2876
      %v2878 = vrot.slane %v2871, %v2877
      %v2879 = vcombine.low %v2753, %v2754
      %v2881 = vunpack.c.l.s4 1983009808
      %v2882 = vunpack.c.0.s8 %v2881
      %v2883 = vlaneseq
      %v2884 = vshrl.u32 %v2883, 7
      %v2885 = vsub.s32 %v2882, %v2884
      %v2886 = vrot.slane %v2879, %v2885
      %v2887 = vcombine.low %v2755, %v2756
      %v2889 = vunpack.c.l.s4 1983009808
      %v2890 = vunpack.c.0.s8 %v2889
      %v2891 = vlaneseq
      %v2892 = vshrl.u32 %v2891, 7
      %v2893 = vsub.s32 %v2890, %v2892
      %v2894 = vrot.slane %v2887, %v2893
      %v2895 = vcombine.low %v2757, %v2758
      %v2897 = vunpack.c.l.s4 1983009808
      %v2898 = vunpack.c.0.s8 %v2897
      %v2899 = vlaneseq
      %v2900 = vshrl.u32 %v2899, 7
      %v2901 = vsub.s32 %v2898, %v2900
      %v2902 = vrot.slane %v2895, %v2901
      %v2903 = vcombine.low %v2759, %v2760
      %v2905 = vunpack.c.l.s4 1983009808
      %v2906 = vunpack.c.0.s8 %v2905
      %v2907 = vlaneseq
      %v2908 = vshrl.u32 %v2907, 7
      %v2909 = vsub.s32 %v2906, %v2908
      %v2910 = vrot.slane %v2903, %v2909
      %v2911 = vcombine.low %v2763, %v2764
      %v2913 = vunpack.c.l.s4 1983009808
      %v2914 = vunpack.c.0.s8 %v2913
      %v2915 = vlaneseq
      %v2916 = vshrl.u32 %v2915, 7
      %v2917 = vsub.s32 %v2914, %v2916
      %v2918 = vrot.slane %v2911, %v2917
      %v2919 = vcombine.low %v2765, %v2766
      %v2921 = vunpack.c.l.s4 1983009808
      %v2922 = vunpack.c.0.s8 %v2921
      %v2923 = vlaneseq
      %v2924 = vshrl.u32 %v2923, 7
      %v2925 = vsub.s32 %v2922, %v2924
      %v2926 = vrot.slane %v2919, %v2925
      %v2927 = vcombine.low %v2767, %v2768
      %v2929 = vunpack.c.l.s4 1983009808
      %v2930 = vunpack.c.0.s8 %v2929
      %v2931 = vlaneseq
      %v2932 = vshrl.u32 %v2931, 7
      %v2933 = vsub.s32 %v2930, %v2932
      %v2934 = vrot.slane %v2927, %v2933
      %v2935 = vcombine.low %v2769, %v2770
      %v2937 = vunpack.c.l.s4 1983009808
      %v2938 = vunpack.c.0.s8 %v2937
      %v2939 = vlaneseq
      %v2940 = vshrl.u32 %v2939, 7
      %v2941 = vsub.s32 %v2938, %v2940
      %v2942 = vrot.slane %v2935, %v2941
      %v2943 = vld [vmem:[%s4] sm:$0xf]
      %v2944 = vld [vmem:[%s4 + $0x4] sm:$0xf]
      %v2945 = vld [vmem:[%s4 + $0x8] sm:$0xf]
      %v2946 = vld [vmem:[%s4 + $0xc] sm:$0xf]
      %v2947 = vld [vmem:[%s4 + $0x10] sm:$0xf]
      %v2948 = vld [vmem:[%s4 + $0x14] sm:$0xf]
      %v2949 = vld [vmem:[%s4 + $0x18] sm:$0xf]
      %v2950 = vld [vmem:[%s4 + $0x1c] sm:$0xf]
      %v2951 = vld [vmem:[%s4 + $0x20] sm:$0xf]
      %v2952 = vld [vmem:[%s4 + $0x24] sm:$0xf]
      %v2953 = vld [vmem:[%s4 + $0x28] sm:$0xf]
      %v2954 = vld [vmem:[%s4 + $0x2c] sm:$0xf]
      %v2955 = vld [vmem:[%s4 + $0x30] sm:$0xf]
      %v2956 = vld [vmem:[%s4 + $0x34] sm:$0xf]
      %v2957 = vld [vmem:[%s4 + $0x38] sm:$0xf]
      %v2958 = vld [vmem:[%s4 + $0x3c] sm:$0xf]
      %v2959 = vld [vmem:[%s4 + $0x40] sm:$0xf]
      %v2960 = vld [vmem:[%s4 + $0x44] sm:$0xf]
      %v2961 = vld [vmem:[%s4 + $0x48] sm:$0xf]
      %v2962 = vld [vmem:[%s4 + $0x4c] sm:$0xf]
      %v2963 = vld [vmem:[%s4 + $0x50] sm:$0xf]
      %v2964 = vld [vmem:[%s4 + $0x54] sm:$0xf]
      %v2965 = vld [vmem:[%s4 + $0x58] sm:$0xf]
      %v2966 = vld [vmem:[%s4 + $0x5c] sm:$0xf]
      %v2967 = vld [vmem:[%s4 + $0x60] sm:$0xf]
      %v2968 = vld [vmem:[%s4 + $0x64] sm:$0xf]
      %v2969 = vld [vmem:[%s4 + $0x68] sm:$0xf]
      %v2970 = vld [vmem:[%s4 + $0x6c] sm:$0xf]
      %v2971 = vld [vmem:[%s4 + $0x70] sm:$0xf]
      %v2972 = vld [vmem:[%s4 + $0x74] sm:$0xf]
      %v2973 = vld [vmem:[%s4 + $0x78] sm:$0xf]
      %v2974 = vld [vmem:[%s4 + $0x7c] sm:$0xf]
      %v2975 = vcombine.high %v2822, %v2822
      %v2976 = vcombine.high %v2830, %v2830
      %v2977 = vcombine.high %v2838, %v2838
      %v2978 = vcombine.high %v2846, %v2846
      %v2979 = vcombine.high %v2854, %v2854
      %v2980 = vcombine.high %v2862, %v2862
      %v2981 = vcombine.high %v2870, %v2870
      %v2982 = vcombine.high %v2878, %v2878
      %v2983 = vcombine.high %v2886, %v2886
      %v2984 = vcombine.high %v2894, %v2894
      %v2985 = vcombine.high %v2902, %v2902
      %v2986 = vcombine.high %v2910, %v2910
      %v2987 = vcombine.high %v2918, %v2918
      %v2988 = vcombine.high %v2926, %v2926
      %v2989 = vcombine.high %v2934, %v2934
      %v2990 = vcombine.high %v2942, %v2942
      %vm2991 = vsmask.f32 1280
      %vm2992 = vsmask.f32 3336
      %vm2993 = vmor %vm2991, %vm2992
      %vm2994 = vsmask.f32 5392
      %vm2995 = vmor %vm2993, %vm2994
      %vm2996 = vsmask.f32 7448
      %vm2997 = vmor %vm2995, %vm2996
      %v2999 = vshrl.u32 %v2822, 16
      %v3001 = vrot.slane %v2999, 6
      %v3002 = vshll.u32 %v2822, 16
      %v3004 = vrot.slane %v3002, 7
      %v3005 = vor.u32 %v3001, %v3004
      %v3006 = vrot.slane %v3005, 2
      %v3008 = vshll.u32 %v2975, 16
      %v3010 = vrot.slane %v3008, 7
      %v3011 = vsel %vm2997, %v3006, %v3010
      %v3013 = vshrl.u32 %v2830, 16
      %v3015 = vrot.slane %v3013, 6
      %v3016 = vshll.u32 %v2830, 16
      %v3018 = vrot.slane %v3016, 7
      %v3019 = vor.u32 %v3015, %v3018
      %v3020 = vrot.slane %v3019, 2
      %v3022 = vshll.u32 %v2976, 16
      %v3024 = vrot.slane %v3022, 7
      %v3025 = vsel %vm2997, %v3020, %v3024
      %v3027 = vshrl.u32 %v2838, 16
      %v3029 = vrot.slane %v3027, 6
      %v3030 = vshll.u32 %v2838, 16
      %v3032 = vrot.slane %v3030, 7
      %v3033 = vor.u32 %v3029, %v3032
      %v3034 = vrot.slane %v3033, 2
      %v3036 = vshll.u32 %v2977, 16
      %v3038 = vrot.slane %v3036, 7
      %v3039 = vsel %vm2997, %v3034, %v3038
      %v3041 = vshrl.u32 %v2846, 16
      %v3043 = vrot.slane %v3041, 6
      %v3044 = vshll.u32 %v2846, 16
      %v3046 = vrot.slane %v3044, 7
      %v3047 = vor.u32 %v3043, %v3046
      %v3048 = vrot.slane %v3047, 2
      %v3050 = vshll.u32 %v2978, 16
      %v3052 = vrot.slane %v3050, 7
      %v3053 = vsel %vm2997, %v3048, %v3052
      %v3055 = vshrl.u32 %v2854, 16
      %v3057 = vrot.slane %v3055, 6
      %v3058 = vshll.u32 %v2854, 16
      %v3060 = vrot.slane %v3058, 7
      %v3061 = vor.u32 %v3057, %v3060
      %v3062 = vrot.slane %v3061, 2
      %v3064 = vshll.u32 %v2979, 16
      %v3066 = vrot.slane %v3064, 7
      %v3067 = vsel %vm2997, %v3062, %v3066
      %v3069 = vshrl.u32 %v2862, 16
      %v3071 = vrot.slane %v3069, 6
      %v3072 = vshll.u32 %v2862, 16
      %v3074 = vrot.slane %v3072, 7
      %v3075 = vor.u32 %v3071, %v3074
      %v3076 = vrot.slane %v3075, 2
      %v3078 = vshll.u32 %v2980, 16
      %v3080 = vrot.slane %v3078, 7
      %v3081 = vsel %vm2997, %v3076, %v3080
      %v3083 = vshrl.u32 %v2870, 16
      %v3085 = vrot.slane %v3083, 6
      %v3086 = vshll.u32 %v2870, 16
      %v3088 = vrot.slane %v3086, 7
      %v3089 = vor.u32 %v3085, %v3088
      %v3090 = vrot.slane %v3089, 2
      %v3092 = vshll.u32 %v2981, 16
      %v3094 = vrot.slane %v3092, 7
      %v3095 = vsel %vm2997, %v3090, %v3094
      %v3097 = vshrl.u32 %v2878, 16
      %v3099 = vrot.slane %v3097, 6
      %v3100 = vshll.u32 %v2878, 16
      %v3102 = vrot.slane %v3100, 7
      %v3103 = vor.u32 %v3099, %v3102
      %v3104 = vrot.slane %v3103, 2
      %v3106 = vshll.u32 %v2982, 16
      %v3108 = vrot.slane %v3106, 7
      %v3109 = vsel %vm2997, %v3104, %v3108
      %v3111 = vshrl.u32 %v2886, 16
      %v3113 = vrot.slane %v3111, 6
      %v3114 = vshll.u32 %v2886, 16
      %v3116 = vrot.slane %v3114, 7
      %v3117 = vor.u32 %v3113, %v3116
      %v3118 = vrot.slane %v3117, 2
      %v3120 = vshll.u32 %v2983, 16
      %v3122 = vrot.slane %v3120, 7
      %v3123 = vsel %vm2997, %v3118, %v3122
      %v3125 = vshrl.u32 %v2894, 16
      %v3127 = vrot.slane %v3125, 6
      %v3128 = vshll.u32 %v2894, 16
      %v3130 = vrot.slane %v3128, 7
      %v3131 = vor.u32 %v3127, %v3130
      %v3132 = vrot.slane %v3131, 2
      %v3134 = vshll.u32 %v2984, 16
      %v3136 = vrot.slane %v3134, 7
      %v3137 = vsel %vm2997, %v3132, %v3136
      %v3139 = vshrl.u32 %v2902, 16
      %v3141 = vrot.slane %v3139, 6
      %v3142 = vshll.u32 %v2902, 16
      %v3144 = vrot.slane %v3142, 7
      %v3145 = vor.u32 %v3141, %v3144
      %v3146 = vrot.slane %v3145, 2
      %v3148 = vshll.u32 %v2985, 16
      %v3150 = vrot.slane %v3148, 7
      %v3151 = vsel %vm2997, %v3146, %v3150
      %v3153 = vshrl.u32 %v2910, 16
      %v3155 = vrot.slane %v3153, 6
      %v3156 = vshll.u32 %v2910, 16
      %v3158 = vrot.slane %v3156, 7
      %v3159 = vor.u32 %v3155, %v3158
      %v3160 = vrot.slane %v3159, 2
      %v3162 = vshll.u32 %v2986, 16
      %v3164 = vrot.slane %v3162, 7
      %v3165 = vsel %vm2997, %v3160, %v3164
      %v3167 = vshrl.u32 %v2918, 16
      %v3169 = vrot.slane %v3167, 6
      %v3170 = vshll.u32 %v2918, 16
      %v3172 = vrot.slane %v3170, 7
      %v3173 = vor.u32 %v3169, %v3172
      %v3174 = vrot.slane %v3173, 2
      %v3176 = vshll.u32 %v2987, 16
      %v3178 = vrot.slane %v3176, 7
      %v3179 = vsel %vm2997, %v3174, %v3178
      %v3181 = vshrl.u32 %v2926, 16
      %v3183 = vrot.slane %v3181, 6
      %v3184 = vshll.u32 %v2926, 16
      %v3186 = vrot.slane %v3184, 7
      %v3187 = vor.u32 %v3183, %v3186
      %v3188 = vrot.slane %v3187, 2
      %v3190 = vshll.u32 %v2988, 16
      %v3192 = vrot.slane %v3190, 7
      %v3193 = vsel %vm2997, %v3188, %v3192
      %v3195 = vshrl.u32 %v2934, 16
      %v3197 = vrot.slane %v3195, 6
      %v3198 = vshll.u32 %v2934, 16
      %v3200 = vrot.slane %v3198, 7
      %v3201 = vor.u32 %v3197, %v3200
      %v3202 = vrot.slane %v3201, 2
      %v3204 = vshll.u32 %v2989, 16
      %v3206 = vrot.slane %v3204, 7
      %v3207 = vsel %vm2997, %v3202, %v3206
      %v3209 = vshrl.u32 %v2942, 16
      %v3211 = vrot.slane %v3209, 6
      %v3212 = vshll.u32 %v2942, 16
      %v3214 = vrot.slane %v3212, 7
      %v3215 = vor.u32 %v3211, %v3214
      %v3216 = vrot.slane %v3215, 2
      %v3218 = vshll.u32 %v2990, 16
      %v3220 = vrot.slane %v3218, 7
      %v3221 = vsel %vm2997, %v3216, %v3220
      %s3222 = scalar_lea.vmem %s4, 128
      %v3223 = vld [vmem:[%s3222] sm:$0xf]
      %v3224 = vld [vmem:[%s3222 + $0x4] sm:$0xf]
      %v3225 = vld [vmem:[%s3222 + $0x8] sm:$0xf]
      %v3226 = vld [vmem:[%s3222 + $0xc] sm:$0xf]
      %v3227 = vld [vmem:[%s3222 + $0x10] sm:$0xf]
      %v3228 = vld [vmem:[%s3222 + $0x14] sm:$0xf]
      %v3229 = vld [vmem:[%s3222 + $0x18] sm:$0xf]
      %v3230 = vld [vmem:[%s3222 + $0x1c] sm:$0xf]
      %v3231 = vld [vmem:[%s3222 + $0x20] sm:$0xf]
      %v3232 = vld [vmem:[%s3222 + $0x24] sm:$0xf]
      %v3233 = vld [vmem:[%s3222 + $0x28] sm:$0xf]
      %v3234 = vld [vmem:[%s3222 + $0x2c] sm:$0xf]
      %v3235 = vld [vmem:[%s3222 + $0x30] sm:$0xf]
      %v3236 = vld [vmem:[%s3222 + $0x34] sm:$0xf]
      %v3237 = vld [vmem:[%s3222 + $0x38] sm:$0xf]
      %v3238 = vld [vmem:[%s3222 + $0x3c] sm:$0xf]
      %v3239 = vld [vmem:[%s3222 + $0x40] sm:$0xf]
      %v3240 = vld [vmem:[%s3222 + $0x44] sm:$0xf]
      %v3241 = vld [vmem:[%s3222 + $0x48] sm:$0xf]
      %v3242 = vld [vmem:[%s3222 + $0x4c] sm:$0xf]
      %v3243 = vld [vmem:[%s3222 + $0x50] sm:$0xf]
      %v3244 = vld [vmem:[%s3222 + $0x54] sm:$0xf]
      %v3245 = vld [vmem:[%s3222 + $0x58] sm:$0xf]
      %v3246 = vld [vmem:[%s3222 + $0x5c] sm:$0xf]
      %v3247 = vld [vmem:[%s3222 + $0x60] sm:$0xf]
      %v3248 = vld [vmem:[%s3222 + $0x64] sm:$0xf]
      %v3249 = vld [vmem:[%s3222 + $0x68] sm:$0xf]
      %v3250 = vld [vmem:[%s3222 + $0x6c] sm:$0xf]
      %v3251 = vld [vmem:[%s3222 + $0x70] sm:$0xf]
      %v3252 = vld [vmem:[%s3222 + $0x74] sm:$0xf]
      %v3253 = vld [vmem:[%s3222 + $0x78] sm:$0xf]
      %v3254 = vld [vmem:[%s3222 + $0x7c] sm:$0xf]
      %v3255 = vcombine.low %v3011, %v3025
      %v3256 = vcombine.low %v3039, %v3053
      %v3258 = vunpack.c.l.s4 1983009808
      %v3259 = vunpack.c.0.s8 %v3258
      %v3260 = vlaneseq
      %v3261 = vshrl.u32 %v3260, 7
      %v3262 = vsub.s32 %v3259, %v3261
      %v3263 = vrot.slane %v3255, %v3262
      %v3265 = vunpack.c.l.s4 1983009808
      %v3266 = vunpack.c.0.s8 %v3265
      %v3267 = vlaneseq
      %v3268 = vshrl.u32 %v3267, 7
      %v3269 = vsub.s32 %v3266, %v3268
      %v3270 = vrot.slane %v3256, %v3269
      %v3271 = vcombine.low %v3263, %v3270
      %v3272 = vcombine.high %v3263, %v3270
      %v3273 = vcombine.low %v3067, %v3081
      %v3274 = vcombine.low %v3095, %v3109
      %v3276 = vunpack.c.l.s4 1983009808
      %v3277 = vunpack.c.0.s8 %v3276
      %v3278 = vlaneseq
      %v3279 = vshrl.u32 %v3278, 7
      %v3280 = vsub.s32 %v3277, %v3279
      %v3281 = vrot.slane %v3273, %v3280
      %v3283 = vunpack.c.l.s4 1983009808
      %v3284 = vunpack.c.0.s8 %v3283
      %v3285 = vlaneseq
      %v3286 = vshrl.u32 %v3285, 7
      %v3287 = vsub.s32 %v3284, %v3286
      %v3288 = vrot.slane %v3274, %v3287
      %v3289 = vcombine.low %v3281, %v3288
      %v3290 = vcombine.high %v3281, %v3288
      %v3291 = vcombine.low %v3123, %v3137
      %v3292 = vcombine.low %v3151, %v3165
      %v3294 = vunpack.c.l.s4 1983009808
      %v3295 = vunpack.c.0.s8 %v3294
      %v3296 = vlaneseq
      %v3297 = vshrl.u32 %v3296, 7
      %v3298 = vsub.s32 %v3295, %v3297
      %v3299 = vrot.slane %v3291, %v3298
      %v3301 = vunpack.c.l.s4 1983009808
      %v3302 = vunpack.c.0.s8 %v3301
      %v3303 = vlaneseq
      %v3304 = vshrl.u32 %v3303, 7
      %v3305 = vsub.s32 %v3302, %v3304
      %v3306 = vrot.slane %v3292, %v3305
      %v3307 = vcombine.low %v3299, %v3306
      %v3308 = vcombine.high %v3299, %v3306
      %v3309 = vcombine.low %v3179, %v3193
      %v3310 = vcombine.low %v3207, %v3221
      %v3312 = vunpack.c.l.s4 1983009808
      %v3313 = vunpack.c.0.s8 %v3312
      %v3314 = vlaneseq
      %v3315 = vshrl.u32 %v3314, 7
      %v3316 = vsub.s32 %v3313, %v3315
      %v3317 = vrot.slane %v3309, %v3316
      %v3319 = vunpack.c.l.s4 1983009808
      %v3320 = vunpack.c.0.s8 %v3319
      %v3321 = vlaneseq
      %v3322 = vshrl.u32 %v3321, 7
      %v3323 = vsub.s32 %v3320, %v3322
      %v3324 = vrot.slane %v3310, %v3323
      %v3325 = vcombine.low %v3317, %v3324
      %v3326 = vcombine.high %v3317, %v3324
      %v3367 = vunpack.c.l.b16 %v3223
      %v3368 = vunpack.c.l.b16 %v3224
      %v3369 = vunpack.c.l.b16 %v3225
      %v3370 = vunpack.c.l.b16 %v3226
      %v3371 = vunpack.c.l.b16 %v3227
      %v3372 = vunpack.c.l.b16 %v3228
      %v3373 = vunpack.c.l.b16 %v3229
      %v3374 = vunpack.c.l.b16 %v3230
      %v3375 = vunpack.c.l.b16 %v3231
      %v3376 = vunpack.c.l.b16 %v3232
      %v3377 = vunpack.c.l.b16 %v3233
      %v3378 = vunpack.c.l.b16 %v3234
      %v3379 = vunpack.c.l.b16 %v3235
      %v3380 = vunpack.c.l.b16 %v3236
      %v3381 = vunpack.c.l.b16 %v3237
      %v3382 = vunpack.c.l.b16 %v3238
      %v3383 = vunpack.c.l.b16 %v3239
      %v3384 = vunpack.c.l.b16 %v3240
      %v3385 = vunpack.c.l.b16 %v3241
      %v3386 = vunpack.c.l.b16 %v3242
      %v3387 = vunpack.c.l.b16 %v3243
      %v3388 = vunpack.c.l.b16 %v3244
      %v3389 = vunpack.c.l.b16 %v3245
      %v3390 = vunpack.c.l.b16 %v3246
      %v3391 = vunpack.c.l.b16 %v3247
      %v3392 = vunpack.c.l.b16 %v3248
      %v3393 = vunpack.c.l.b16 %v3249
      %v3394 = vunpack.c.l.b16 %v3250
      %v3395 = vunpack.c.l.b16 %v3251
      %v3396 = vunpack.c.l.b16 %v3252
      %v3397 = vunpack.c.l.b16 %v3253
      %v3398 = vunpack.c.l.b16 %v3254
      %v3399 = vpack.c.b16 %v3368, %v3367
      %v3400 = vpack.c.b16 %v3370, %v3369
      %v3401 = vpack.c.b16 %v3372, %v3371
      %v3402 = vpack.c.b16 %v3374, %v3373
      %v3403 = vpack.c.b16 %v3376, %v3375
      %v3404 = vpack.c.b16 %v3378, %v3377
      %v3405 = vpack.c.b16 %v3380, %v3379
      %v3406 = vpack.c.b16 %v3382, %v3381
      %v3407 = vpack.c.b16 %v3384, %v3383
      %v3408 = vpack.c.b16 %v3386, %v3385
      %v3409 = vpack.c.b16 %v3388, %v3387
      %v3410 = vpack.c.b16 %v3390, %v3389
      %v3411 = vpack.c.b16 %v3392, %v3391
      %v3412 = vpack.c.b16 %v3394, %v3393
      %v3413 = vpack.c.b16 %v3396, %v3395
      %v3414 = vpack.c.b16 %v3398, %v3397
      %3431 = vmatprep.subr.bf16.mxu0 0
      %3432 = vmatpush1.bf16.msra.mxu0 %v3406
      %3433 = vmatprep.subr.bf16.mxu0 0
      %3434 = vmatpush1.bf16.msra.mxu0 %v3405
      %3435 = vmatprep.subr.bf16.mxu0 0
      %3436 = vmatpush1.bf16.msra.mxu0 %v3404
      %3437 = vmatprep.subr.bf16.mxu0 0
      %3438 = vmatpush1.bf16.msra.mxu0 %v3403
      %3439 = vmatprep.subr.bf16.mxu0 0
      %3440 = vmatpush1.bf16.msra.mxu0 %v3402
      %3441 = vmatprep.subr.bf16.mxu0 0
      %3442 = vmatpush1.bf16.msra.mxu0 %v3401
      %3443 = vmatprep.subr.bf16.mxu0 0
      %3444 = vmatpush1.bf16.msra.mxu0 %v3400
      %3445 = vmatprep.subr.bf16.mxu0 0
      %3446 = vmatpush1.bf16.msra.mxu0 %v3399
      %3447 = vmatprep.subr.bf16.mxu0 0
      %3448 = vmatpush2.bf16.msra.mxu0 %v3414
      %3449 = vmatprep.subr.bf16.mxu0 0
      %3450 = vmatpush2.bf16.msra.mxu0 %v3413
      %3451 = vmatprep.subr.bf16.mxu0 0
      %3452 = vmatpush2.bf16.msra.mxu0 %v3412
      %3453 = vmatprep.subr.bf16.mxu0 0
      %3454 = vmatpush2.bf16.msra.mxu0 %v3411
      %3455 = vmatprep.subr.bf16.mxu0 0
      %3456 = vmatpush2.bf16.msra.mxu0 %v3410
      %3457 = vmatprep.subr.bf16.mxu0 0
      %3458 = vmatpush2.bf16.msra.mxu0 %v3409
      %3459 = vmatprep.subr.bf16.mxu0 0
      %3460 = vmatpush2.bf16.msra.mxu0 %v3408
      %3461 = vmatprep.subr.bf16.mxu0 0
      %3462 = vmatpush2.bf16.msra.mxu0 %v3407
      %3463 = vmatprep.mubr.bf16.mxu0 %v3272
      %3464 = vmatmul.mubr.bf16.gmra.mxu0 %v3271
      %v3465 = vpop.f32.mrf.mxu0
      %v3466 = vadd.f32 0.0, %v3465
      %v3467 = vpop.f32.mrf.mxu0
      %v3468 = vpop.f32.mrf.mxu0
      %v3469 = vadd.f32 0.0, %v3468
      %v3470 = vpop.f32.mrf.mxu0
      %3471 = vmatprep.mubr.bf16.mxu0 %v3290
      %3472 = vmatmul.mubr.bf16.gmra.mxu0 %v3289
      %v3473 = vpop.f32.mrf.mxu0
      %v3474 = vadd.f32 0.0, %v3473
      %v3475 = vpop.f32.mrf.mxu0
      %v3476 = vpop.f32.mrf.mxu0
      %v3477 = vadd.f32 0.0, %v3476
      %v3478 = vpop.f32.mrf.mxu0
      %3479 = vmatprep.mubr.bf16.mxu0 %v3308
      %3480 = vmatmul.mubr.bf16.gmra.mxu0 %v3307
      %v3481 = vpop.f32.mrf.mxu0
      %v3482 = vadd.f32 0.0, %v3481
      %v3483 = vpop.f32.mrf.mxu0
      %v3484 = vpop.f32.mrf.mxu0
      %v3485 = vadd.f32 0.0, %v3484
      %v3486 = vpop.f32.mrf.mxu0
      %3487 = vmatprep.mubr.bf16.mxu0 %v3326
      %3488 = vmatmul.mubr.bf16.gmra.mxu0 %v3325
      %v3489 = vpop.f32.mrf.mxu0
      %v3490 = vadd.f32 0.0, %v3489
      %v3491 = vpop.f32.mrf.mxu0
      %v3492 = vpop.f32.mrf.mxu0
      %v3493 = vadd.f32 0.0, %v3492
      %v3494 = vpop.f32.mrf.mxu0
      %3495 = vdwg.mxu0
      %v3496 = vcombine.low %v2822, %v2830
      %v3497 = vcombine.low %v2838, %v2846
      %v3499 = vunpack.c.l.s4 1983009808
      %v3500 = vunpack.c.0.s8 %v3499
      %v3501 = vlaneseq
      %v3502 = vshrl.u32 %v3501, 7
      %v3503 = vsub.s32 %v3500, %v3502
      %v3504 = vrot.slane %v3496, %v3503
      %v3506 = vunpack.c.l.s4 1983009808
      %v3507 = vunpack.c.0.s8 %v3506
      %v3508 = vlaneseq
      %v3509 = vshrl.u32 %v3508, 7
      %v3510 = vsub.s32 %v3507, %v3509
      %v3511 = vrot.slane %v3497, %v3510
      %v3512 = vcombine.low %v3504, %v3511
      %v3513 = vcombine.high %v3504, %v3511
      %v3514 = vcombine.low %v2854, %v2862
      %v3515 = vcombine.low %v2870, %v2878
      %v3517 = vunpack.c.l.s4 1983009808
      %v3518 = vunpack.c.0.s8 %v3517
      %v3519 = vlaneseq
      %v3520 = vshrl.u32 %v3519, 7
      %v3521 = vsub.s32 %v3518, %v3520
      %v3522 = vrot.slane %v3514, %v3521
      %v3524 = vunpack.c.l.s4 1983009808
      %v3525 = vunpack.c.0.s8 %v3524
      %v3526 = vlaneseq
      %v3527 = vshrl.u32 %v3526, 7
      %v3528 = vsub.s32 %v3525, %v3527
      %v3529 = vrot.slane %v3515, %v3528
      %v3530 = vcombine.low %v3522, %v3529
      %v3531 = vcombine.high %v3522, %v3529
      %v3532 = vcombine.low %v2886, %v2894
      %v3533 = vcombine.low %v2902, %v2910
      %v3535 = vunpack.c.l.s4 1983009808
      %v3536 = vunpack.c.0.s8 %v3535
      %v3537 = vlaneseq
      %v3538 = vshrl.u32 %v3537, 7
      %v3539 = vsub.s32 %v3536, %v3538
      %v3540 = vrot.slane %v3532, %v3539
      %v3542 = vunpack.c.l.s4 1983009808
      %v3543 = vunpack.c.0.s8 %v3542
      %v3544 = vlaneseq
      %v3545 = vshrl.u32 %v3544, 7
      %v3546 = vsub.s32 %v3543, %v3545
      %v3547 = vrot.slane %v3533, %v3546
      %v3548 = vcombine.low %v3540, %v3547
      %v3549 = vcombine.high %v3540, %v3547
      %v3550 = vcombine.low %v2918, %v2926
      %v3551 = vcombine.low %v2934, %v2942
      %v3553 = vunpack.c.l.s4 1983009808
      %v3554 = vunpack.c.0.s8 %v3553
      %v3555 = vlaneseq
      %v3556 = vshrl.u32 %v3555, 7
      %v3557 = vsub.s32 %v3554, %v3556
      %v3558 = vrot.slane %v3550, %v3557
      %v3560 = vunpack.c.l.s4 1983009808
      %v3561 = vunpack.c.0.s8 %v3560
      %v3562 = vlaneseq
      %v3563 = vshrl.u32 %v3562, 7
      %v3564 = vsub.s32 %v3561, %v3563
      %v3565 = vrot.slane %v3551, %v3564
      %v3566 = vcombine.low %v3558, %v3565
      %v3567 = vcombine.high %v3558, %v3565
      %v3608 = vunpack.c.l.b16 %v2943
      %v3609 = vunpack.c.l.b16 %v2944
      %v3610 = vunpack.c.l.b16 %v2945
      %v3611 = vunpack.c.l.b16 %v2946
      %v3612 = vunpack.c.l.b16 %v2947
      %v3613 = vunpack.c.l.b16 %v2948
      %v3614 = vunpack.c.l.b16 %v2949
      %v3615 = vunpack.c.l.b16 %v2950
      %v3616 = vunpack.c.l.b16 %v2951
      %v3617 = vunpack.c.l.b16 %v2952
      %v3618 = vunpack.c.l.b16 %v2953
      %v3619 = vunpack.c.l.b16 %v2954
      %v3620 = vunpack.c.l.b16 %v2955
      %v3621 = vunpack.c.l.b16 %v2956
      %v3622 = vunpack.c.l.b16 %v2957
      %v3623 = vunpack.c.l.b16 %v2958
      %v3624 = vunpack.c.l.b16 %v2959
      %v3625 = vunpack.c.l.b16 %v2960
      %v3626 = vunpack.c.l.b16 %v2961
      %v3627 = vunpack.c.l.b16 %v2962
      %v3628 = vunpack.c.l.b16 %v2963
      %v3629 = vunpack.c.l.b16 %v2964
      %v3630 = vunpack.c.l.b16 %v2965
      %v3631 = vunpack.c.l.b16 %v2966
      %v3632 = vunpack.c.l.b16 %v2967
      %v3633 = vunpack.c.l.b16 %v2968
      %v3634 = vunpack.c.l.b16 %v2969
      %v3635 = vunpack.c.l.b16 %v2970
      %v3636 = vunpack.c.l.b16 %v2971
      %v3637 = vunpack.c.l.b16 %v2972
      %v3638 = vunpack.c.l.b16 %v2973
      %v3639 = vunpack.c.l.b16 %v2974
      %v3640 = vpack.c.b16 %v3609, %v3608
      %v3641 = vpack.c.b16 %v3611, %v3610
      %v3642 = vpack.c.b16 %v3613, %v3612
      %v3643 = vpack.c.b16 %v3615, %v3614
      %v3644 = vpack.c.b16 %v3617, %v3616
      %v3645 = vpack.c.b16 %v3619, %v3618
      %v3646 = vpack.c.b16 %v3621, %v3620
      %v3647 = vpack.c.b16 %v3623, %v3622
      %v3648 = vpack.c.b16 %v3625, %v3624
      %v3649 = vpack.c.b16 %v3627, %v3626
      %v3650 = vpack.c.b16 %v3629, %v3628
      %v3651 = vpack.c.b16 %v3631, %v3630
      %v3652 = vpack.c.b16 %v3633, %v3632
      %v3653 = vpack.c.b16 %v3635, %v3634
      %v3654 = vpack.c.b16 %v3637, %v3636
      %v3655 = vpack.c.b16 %v3639, %v3638
      %3672 = vmatprep.subr.bf16.mxu0 0
      %3673 = vmatpush1.bf16.msra.mxu0 %v3647
      %3674 = vmatprep.subr.bf16.mxu0 0
      %3675 = vmatpush1.bf16.msra.mxu0 %v3646
      %3676 = vmatprep.subr.bf16.mxu0 0
      %3677 = vmatpush1.bf16.msra.mxu0 %v3645
      %3678 = vmatprep.subr.bf16.mxu0 0
      %3679 = vmatpush1.bf16.msra.mxu0 %v3644
      %3680 = vmatprep.subr.bf16.mxu0 0
      %3681 = vmatpush1.bf16.msra.mxu0 %v3643
      %3682 = vmatprep.subr.bf16.mxu0 0
      %3683 = vmatpush1.bf16.msra.mxu0 %v3642
      %3684 = vmatprep.subr.bf16.mxu0 0
      %3685 = vmatpush1.bf16.msra.mxu0 %v3641
      %3686 = vmatprep.subr.bf16.mxu0 0
      %3687 = vmatpush1.bf16.msra.mxu0 %v3640
      %3688 = vmatprep.subr.bf16.mxu0 0
      %3689 = vmatpush2.bf16.msra.mxu0 %v3655
      %3690 = vmatprep.subr.bf16.mxu0 0
      %3691 = vmatpush2.bf16.msra.mxu0 %v3654
      %3692 = vmatprep.subr.bf16.mxu0 0
      %3693 = vmatpush2.bf16.msra.mxu0 %v3653
      %3694 = vmatprep.subr.bf16.mxu0 0
      %3695 = vmatpush2.bf16.msra.mxu0 %v3652
      %3696 = vmatprep.subr.bf16.mxu0 0
      %3697 = vmatpush2.bf16.msra.mxu0 %v3651
      %3698 = vmatprep.subr.bf16.mxu0 0
      %3699 = vmatpush2.bf16.msra.mxu0 %v3650
      %3700 = vmatprep.subr.bf16.mxu0 0
      %3701 = vmatpush2.bf16.msra.mxu0 %v3649
      %3702 = vmatprep.subr.bf16.mxu0 0
      %3703 = vmatpush2.bf16.msra.mxu0 %v3648
      %3704 = vmatprep.mubr.bf16.mxu0 %v3513
      %3705 = vmatmul.mubr.bf16.gmra.mxu0 %v3512
      %v3706 = vpop.f32.mrf.mxu0
      %v3707 = vadd.f32 %v3466, %v3706
      %v3708 = vpop.f32.mrf.mxu0
      %v3709 = vpop.f32.mrf.mxu0
      %v3710 = vadd.f32 %v3469, %v3709
      %v3711 = vpop.f32.mrf.mxu0
      %3712 = vmatprep.mubr.bf16.mxu0 %v3531
      %3713 = vmatmul.mubr.bf16.gmra.mxu0 %v3530
      %v3714 = vpop.f32.mrf.mxu0
      %v3715 = vadd.f32 %v3474, %v3714
      %v3716 = vpop.f32.mrf.mxu0
      %v3717 = vpop.f32.mrf.mxu0
      %v3718 = vadd.f32 %v3477, %v3717
      %v3719 = vpop.f32.mrf.mxu0
      %3720 = vmatprep.mubr.bf16.mxu0 %v3549
      %3721 = vmatmul.mubr.bf16.gmra.mxu0 %v3548
      %v3722 = vpop.f32.mrf.mxu0
      %v3723 = vadd.f32 %v3482, %v3722
      %v3724 = vpop.f32.mrf.mxu0
      %v3725 = vpop.f32.mrf.mxu0
      %v3726 = vadd.f32 %v3485, %v3725
      %v3727 = vpop.f32.mrf.mxu0
      %3728 = vmatprep.mubr.bf16.mxu0 %v3567
      %3729 = vmatmul.mubr.bf16.gmra.mxu0 %v3566
      %v3730 = vpop.f32.mrf.mxu0
      %v3731 = vadd.f32 %v3490, %v3730
      %v3732 = vpop.f32.mrf.mxu0
      %v3733 = vpop.f32.mrf.mxu0
      %v3734 = vadd.f32 %v3493, %v3733
      %v3735 = vpop.f32.mrf.mxu0
      %3736 = vdwg.mxu0
      %v3745 = vcombine.low %v2741, %v2742
      %v3747 = vunpack.c.l.s4 1983009808
      %v3748 = vunpack.c.0.s8 %v3747
      %v3749 = vlaneseq
      %v3750 = vshrl.u32 %v3749, 7
      %v3751 = vsub.s32 %v3748, %v3750
      %v3752 = vrot.slane %v3745, %v3751
      %v3753 = vcombine.low %v2751, %v2752
      %v3755 = vunpack.c.l.s4 1983009808
      %v3756 = vunpack.c.0.s8 %v3755
      %v3757 = vlaneseq
      %v3758 = vshrl.u32 %v3757, 7
      %v3759 = vsub.s32 %v3756, %v3758
      %v3760 = vrot.slane %v3753, %v3759
      %v3761 = vcombine.low %v2761, %v2762
      %v3763 = vunpack.c.l.s4 1983009808
      %v3764 = vunpack.c.0.s8 %v3763
      %v3765 = vlaneseq
      %v3766 = vshrl.u32 %v3765, 7
      %v3767 = vsub.s32 %v3764, %v3766
      %v3768 = vrot.slane %v3761, %v3767
      %v3769 = vcombine.low %v2771, %v2772
      %v3771 = vunpack.c.l.s4 1983009808
      %v3772 = vunpack.c.0.s8 %v3771
      %v3773 = vlaneseq
      %v3774 = vshrl.u32 %v3773, 7
      %v3775 = vsub.s32 %v3772, %v3774
      %v3776 = vrot.slane %v3769, %v3775
      %s3777 = scalar_lea.vmem %s4, 256
      %v3778 = vld [vmem:[%s3777] sm:$0xf]
      %v3779 = vld [vmem:[%s3777 + $0x4] sm:$0xf]
      %v3780 = vld [vmem:[%s3777 + $0x8] sm:$0xf]
      %v3781 = vld [vmem:[%s3777 + $0xc] sm:$0xf]
      %v3782 = vld [vmem:[%s3777 + $0x10] sm:$0xf]
      %v3783 = vld [vmem:[%s3777 + $0x14] sm:$0xf]
      %v3784 = vld [vmem:[%s3777 + $0x18] sm:$0xf]
      %v3785 = vld [vmem:[%s3777 + $0x1c] sm:$0xf]
      %v3786 = vld [vmem:[%s3777 + $0x20] sm:$0xf]
      %v3787 = vld [vmem:[%s3777 + $0x24] sm:$0xf]
      %v3788 = vld [vmem:[%s3777 + $0x28] sm:$0xf]
      %v3789 = vld [vmem:[%s3777 + $0x2c] sm:$0xf]
      %v3790 = vld [vmem:[%s3777 + $0x30] sm:$0xf]
      %v3791 = vld [vmem:[%s3777 + $0x34] sm:$0xf]
      %v3792 = vld [vmem:[%s3777 + $0x38] sm:$0xf]
      %v3793 = vld [vmem:[%s3777 + $0x3c] sm:$0xf]
      %v3794 = vld [vmem:[%s3777 + $0x40] sm:$0xf]
      %v3795 = vld [vmem:[%s3777 + $0x44] sm:$0xf]
      %v3796 = vld [vmem:[%s3777 + $0x48] sm:$0xf]
      %v3797 = vld [vmem:[%s3777 + $0x4c] sm:$0xf]
      %v3798 = vld [vmem:[%s3777 + $0x50] sm:$0xf]
      %v3799 = vld [vmem:[%s3777 + $0x54] sm:$0xf]
      %v3800 = vld [vmem:[%s3777 + $0x58] sm:$0xf]
      %v3801 = vld [vmem:[%s3777 + $0x5c] sm:$0xf]
      %v3802 = vld [vmem:[%s3777 + $0x60] sm:$0xf]
      %v3803 = vld [vmem:[%s3777 + $0x64] sm:$0xf]
      %v3804 = vld [vmem:[%s3777 + $0x68] sm:$0xf]
      %v3805 = vld [vmem:[%s3777 + $0x6c] sm:$0xf]
      %v3806 = vld [vmem:[%s3777 + $0x70] sm:$0xf]
      %v3807 = vld [vmem:[%s3777 + $0x74] sm:$0xf]
      %v3808 = vld [vmem:[%s3777 + $0x78] sm:$0xf]
      %v3809 = vld [vmem:[%s3777 + $0x7c] sm:$0xf]
      %v3810 = vcombine.low %v2830, %v2838
      %v3811 = vcombine.low %v2846, %v3752
      %v3813 = vunpack.c.l.s4 1983009808
      %v3814 = vunpack.c.0.s8 %v3813
      %v3815 = vlaneseq
      %v3816 = vshrl.u32 %v3815, 7
      %v3817 = vsub.s32 %v3814, %v3816
      %v3818 = vrot.slane %v3810, %v3817
      %v3820 = vunpack.c.l.s4 1983009808
      %v3821 = vunpack.c.0.s8 %v3820
      %v3822 = vlaneseq
      %v3823 = vshrl.u32 %v3822, 7
      %v3824 = vsub.s32 %v3821, %v3823
      %v3825 = vrot.slane %v3811, %v3824
      %v3826 = vcombine.low %v3818, %v3825
      %v3827 = vcombine.high %v3818, %v3825
      %v3828 = vcombine.low %v2862, %v2870
      %v3829 = vcombine.low %v2878, %v3760
      %v3831 = vunpack.c.l.s4 1983009808
      %v3832 = vunpack.c.0.s8 %v3831
      %v3833 = vlaneseq
      %v3834 = vshrl.u32 %v3833, 7
      %v3835 = vsub.s32 %v3832, %v3834
      %v3836 = vrot.slane %v3828, %v3835
      %v3838 = vunpack.c.l.s4 1983009808
      %v3839 = vunpack.c.0.s8 %v3838
      %v3840 = vlaneseq
      %v3841 = vshrl.u32 %v3840, 7
      %v3842 = vsub.s32 %v3839, %v3841
      %v3843 = vrot.slane %v3829, %v3842
      %v3844 = vcombine.low %v3836, %v3843
      %v3845 = vcombine.high %v3836, %v3843
      %v3846 = vcombine.low %v2894, %v2902
      %v3847 = vcombine.low %v2910, %v3768
      %v3849 = vunpack.c.l.s4 1983009808
      %v3850 = vunpack.c.0.s8 %v3849
      %v3851 = vlaneseq
      %v3852 = vshrl.u32 %v3851, 7
      %v3853 = vsub.s32 %v3850, %v3852
      %v3854 = vrot.slane %v3846, %v3853
      %v3856 = vunpack.c.l.s4 1983009808
      %v3857 = vunpack.c.0.s8 %v3856
      %v3858 = vlaneseq
      %v3859 = vshrl.u32 %v3858, 7
      %v3860 = vsub.s32 %v3857, %v3859
      %v3861 = vrot.slane %v3847, %v3860
      %v3862 = vcombine.low %v3854, %v3861
      %v3863 = vcombine.high %v3854, %v3861
      %v3864 = vcombine.low %v2926, %v2934
      %v3865 = vcombine.low %v2942, %v3776
      %v3867 = vunpack.c.l.s4 1983009808
      %v3868 = vunpack.c.0.s8 %v3867
      %v3869 = vlaneseq
      %v3870 = vshrl.u32 %v3869, 7
      %v3871 = vsub.s32 %v3868, %v3870
      %v3872 = vrot.slane %v3864, %v3871
      %v3874 = vunpack.c.l.s4 1983009808
      %v3875 = vunpack.c.0.s8 %v3874
      %v3876 = vlaneseq
      %v3877 = vshrl.u32 %v3876, 7
      %v3878 = vsub.s32 %v3875, %v3877
      %v3879 = vrot.slane %v3865, %v3878
      %v3880 = vcombine.low %v3872, %v3879
      %v3881 = vcombine.high %v3872, %v3879
      %v3922 = vunpack.c.l.b16 %v3778
      %v3923 = vunpack.c.l.b16 %v3779
      %v3924 = vunpack.c.l.b16 %v3780
      %v3925 = vunpack.c.l.b16 %v3781
      %v3926 = vunpack.c.l.b16 %v3782
      %v3927 = vunpack.c.l.b16 %v3783
      %v3928 = vunpack.c.l.b16 %v3784
      %v3929 = vunpack.c.l.b16 %v3785
      %v3930 = vunpack.c.l.b16 %v3786
      %v3931 = vunpack.c.l.b16 %v3787
      %v3932 = vunpack.c.l.b16 %v3788
      %v3933 = vunpack.c.l.b16 %v3789
      %v3934 = vunpack.c.l.b16 %v3790
      %v3935 = vunpack.c.l.b16 %v3791
      %v3936 = vunpack.c.l.b16 %v3792
      %v3937 = vunpack.c.l.b16 %v3793
      %v3938 = vunpack.c.l.b16 %v3794
      %v3939 = vunpack.c.l.b16 %v3795
      %v3940 = vunpack.c.l.b16 %v3796
      %v3941 = vunpack.c.l.b16 %v3797
      %v3942 = vunpack.c.l.b16 %v3798
      %v3943 = vunpack.c.l.b16 %v3799
      %v3944 = vunpack.c.l.b16 %v3800
      %v3945 = vunpack.c.l.b16 %v3801
      %v3946 = vunpack.c.l.b16 %v3802
      %v3947 = vunpack.c.l.b16 %v3803
      %v3948 = vunpack.c.l.b16 %v3804
      %v3949 = vunpack.c.l.b16 %v3805
      %v3950 = vunpack.c.l.b16 %v3806
      %v3951 = vunpack.c.l.b16 %v3807
      %v3952 = vunpack.c.l.b16 %v3808
      %v3953 = vunpack.c.l.b16 %v3809
      %v3954 = vpack.c.b16 %v3923, %v3922
      %v3955 = vpack.c.b16 %v3925, %v3924
      %v3956 = vpack.c.b16 %v3927, %v3926
      %v3957 = vpack.c.b16 %v3929, %v3928
      %v3958 = vpack.c.b16 %v3931, %v3930
      %v3959 = vpack.c.b16 %v3933, %v3932
      %v3960 = vpack.c.b16 %v3935, %v3934
      %v3961 = vpack.c.b16 %v3937, %v3936
      %v3962 = vpack.c.b16 %v3939, %v3938
      %v3963 = vpack.c.b16 %v3941, %v3940
      %v3964 = vpack.c.b16 %v3943, %v3942
      %v3965 = vpack.c.b16 %v3945, %v3944
      %v3966 = vpack.c.b16 %v3947, %v3946
      %v3967 = vpack.c.b16 %v3949, %v3948
      %v3968 = vpack.c.b16 %v3951, %v3950
      %v3969 = vpack.c.b16 %v3953, %v3952
      %3986 = vmatprep.subr.bf16.mxu0 0
      %3987 = vmatpush1.bf16.msra.mxu0 %v3961
      %3988 = vmatprep.subr.bf16.mxu0 0
      %3989 = vmatpush1.bf16.msra.mxu0 %v3960
      %3990 = vmatprep.subr.bf16.mxu0 0
      %3991 = vmatpush1.bf16.msra.mxu0 %v3959
      %3992 = vmatprep.subr.bf16.mxu0 0
      %3993 = vmatpush1.bf16.msra.mxu0 %v3958
      %3994 = vmatprep.subr.bf16.mxu0 0
      %3995 = vmatpush1.bf16.msra.mxu0 %v3957
      %3996 = vmatprep.subr.bf16.mxu0 0
      %3997 = vmatpush1.bf16.msra.mxu0 %v3956
      %3998 = vmatprep.subr.bf16.mxu0 0
      %3999 = vmatpush1.bf16.msra.mxu0 %v3955
      %4000 = vmatprep.subr.bf16.mxu0 0
      %4001 = vmatpush1.bf16.msra.mxu0 %v3954
      %4002 = vmatprep.subr.bf16.mxu0 0
      %4003 = vmatpush2.bf16.msra.mxu0 %v3969
      %4004 = vmatprep.subr.bf16.mxu0 0
      %4005 = vmatpush2.bf16.msra.mxu0 %v3968
      %4006 = vmatprep.subr.bf16.mxu0 0
      %4007 = vmatpush2.bf16.msra.mxu0 %v3967
      %4008 = vmatprep.subr.bf16.mxu0 0
      %4009 = vmatpush2.bf16.msra.mxu0 %v3966
      %4010 = vmatprep.subr.bf16.mxu0 0
      %4011 = vmatpush2.bf16.msra.mxu0 %v3965
      %4012 = vmatprep.subr.bf16.mxu0 0
      %4013 = vmatpush2.bf16.msra.mxu0 %v3964
      %4014 = vmatprep.subr.bf16.mxu0 0
      %4015 = vmatpush2.bf16.msra.mxu0 %v3963
      %4016 = vmatprep.subr.bf16.mxu0 0
      %4017 = vmatpush2.bf16.msra.mxu0 %v3962
      %4018 = vmatprep.mubr.bf16.mxu0 %v3827
      %4019 = vmatmul.mubr.bf16.gmra.mxu0 %v3826
      %v4020 = vpop.f32.mrf.mxu0
      %v4021 = vadd.f32 0.0, %v4020
      %v4022 = vpop.f32.mrf.mxu0
      %v4023 = vpop.f32.mrf.mxu0
      %v4024 = vadd.f32 0.0, %v4023
      %v4025 = vpop.f32.mrf.mxu0
      %4026 = vmatprep.mubr.bf16.mxu0 %v3845
      %4027 = vmatmul.mubr.bf16.gmra.mxu0 %v3844
      %v4028 = vpop.f32.mrf.mxu0
      %v4029 = vadd.f32 0.0, %v4028
      %v4030 = vpop.f32.mrf.mxu0
      %v4031 = vpop.f32.mrf.mxu0
      %v4032 = vadd.f32 0.0, %v4031
      %v4033 = vpop.f32.mrf.mxu0
      %4034 = vmatprep.mubr.bf16.mxu0 %v3863
      %4035 = vmatmul.mubr.bf16.gmra.mxu0 %v3862
      %v4036 = vpop.f32.mrf.mxu0
      %v4037 = vadd.f32 0.0, %v4036
      %v4038 = vpop.f32.mrf.mxu0
      %v4039 = vpop.f32.mrf.mxu0
      %v4040 = vadd.f32 0.0, %v4039
      %v4041 = vpop.f32.mrf.mxu0
      %4042 = vmatprep.mubr.bf16.mxu0 %v3881
      %4043 = vmatmul.mubr.bf16.gmra.mxu0 %v3880
      %v4044 = vpop.f32.mrf.mxu0
      %v4045 = vadd.f32 0.0, %v4044
      %v4046 = vpop.f32.mrf.mxu0
      %v4047 = vpop.f32.mrf.mxu0
      %v4048 = vadd.f32 0.0, %v4047
      %v4049 = vpop.f32.mrf.mxu0
      %4050 = vdwg.mxu0
      %v4051 = vadd.f32 %v3707, %v4021
      %v4052 = vadd.f32 %v3710, %v4024
      %v4053 = vadd.f32 %v3715, %v4029
      %v4054 = vadd.f32 %v3718, %v4032
      %v4055 = vadd.f32 %v3723, %v4037
      %v4056 = vadd.f32 %v3726, %v4040
      %v4057 = vadd.f32 %v3731, %v4045
      %v4058 = vadd.f32 %v3734, %v4048
      %v4059 = vcombine.high %v3752, %v3752
      %v4060 = vcombine.high %v3760, %v3760
      %v4061 = vcombine.high %v3768, %v3768
      %v4062 = vcombine.high %v3776, %v3776
      %v4064 = vshrl.u32 %v3752, 16
      %v4066 = vrot.slane %v4064, 6
      %v4067 = vshll.u32 %v3752, 16
      %v4069 = vrot.slane %v4067, 7
      %v4070 = vor.u32 %v4066, %v4069
      %v4071 = vrot.slane %v4070, 2
      %v4073 = vshll.u32 %v4059, 16
      %v4075 = vrot.slane %v4073, 7
      %v4076 = vsel %vm2997, %v4071, %v4075
      %v4078 = vshrl.u32 %v3760, 16
      %v4080 = vrot.slane %v4078, 6
      %v4081 = vshll.u32 %v3760, 16
      %v4083 = vrot.slane %v4081, 7
      %v4084 = vor.u32 %v4080, %v4083
      %v4085 = vrot.slane %v4084, 2
      %v4087 = vshll.u32 %v4060, 16
      %v4089 = vrot.slane %v4087, 7
      %v4090 = vsel %vm2997, %v4085, %v4089
      %v4092 = vshrl.u32 %v3768, 16
      %v4094 = vrot.slane %v4092, 6
      %v4095 = vshll.u32 %v3768, 16
      %v4097 = vrot.slane %v4095, 7
      %v4098 = vor.u32 %v4094, %v4097
      %v4099 = vrot.slane %v4098, 2
      %v4101 = vshll.u32 %v4061, 16
      %v4103 = vrot.slane %v4101, 7
      %v4104 = vsel %vm2997, %v4099, %v4103
      %v4106 = vshrl.u32 %v3776, 16
      %v4108 = vrot.slane %v4106, 6
      %v4109 = vshll.u32 %v3776, 16
      %v4111 = vrot.slane %v4109, 7
      %v4112 = vor.u32 %v4108, %v4111
      %v4113 = vrot.slane %v4112, 2
      %v4115 = vshll.u32 %v4062, 16
      %v4117 = vrot.slane %v4115, 7
      %v4118 = vsel %vm2997, %v4113, %v4117
      %s4119 = scalar_lea.vmem %s4, 384
      %v4120 = vld [vmem:[%s4119] sm:$0xf]
      %v4121 = vld [vmem:[%s4119 + $0x4] sm:$0xf]
      %v4122 = vld [vmem:[%s4119 + $0x8] sm:$0xf]
      %v4123 = vld [vmem:[%s4119 + $0xc] sm:$0xf]
      %v4124 = vld [vmem:[%s4119 + $0x10] sm:$0xf]
      %v4125 = vld [vmem:[%s4119 + $0x14] sm:$0xf]
      %v4126 = vld [vmem:[%s4119 + $0x18] sm:$0xf]
      %v4127 = vld [vmem:[%s4119 + $0x1c] sm:$0xf]
      %v4128 = vld [vmem:[%s4119 + $0x20] sm:$0xf]
      %v4129 = vld [vmem:[%s4119 + $0x24] sm:$0xf]
      %v4130 = vld [vmem:[%s4119 + $0x28] sm:$0xf]
      %v4131 = vld [vmem:[%s4119 + $0x2c] sm:$0xf]
      %v4132 = vld [vmem:[%s4119 + $0x30] sm:$0xf]
      %v4133 = vld [vmem:[%s4119 + $0x34] sm:$0xf]
      %v4134 = vld [vmem:[%s4119 + $0x38] sm:$0xf]
      %v4135 = vld [vmem:[%s4119 + $0x3c] sm:$0xf]
      %v4136 = vld [vmem:[%s4119 + $0x40] sm:$0xf]
      %v4137 = vld [vmem:[%s4119 + $0x44] sm:$0xf]
      %v4138 = vld [vmem:[%s4119 + $0x48] sm:$0xf]
      %v4139 = vld [vmem:[%s4119 + $0x4c] sm:$0xf]
      %v4140 = vld [vmem:[%s4119 + $0x50] sm:$0xf]
      %v4141 = vld [vmem:[%s4119 + $0x54] sm:$0xf]
      %v4142 = vld [vmem:[%s4119 + $0x58] sm:$0xf]
      %v4143 = vld [vmem:[%s4119 + $0x5c] sm:$0xf]
      %v4144 = vld [vmem:[%s4119 + $0x60] sm:$0xf]
      %v4145 = vld [vmem:[%s4119 + $0x64] sm:$0xf]
      %v4146 = vld [vmem:[%s4119 + $0x68] sm:$0xf]
      %v4147 = vld [vmem:[%s4119 + $0x6c] sm:$0xf]
      %v4148 = vld [vmem:[%s4119 + $0x70] sm:$0xf]
      %v4149 = vld [vmem:[%s4119 + $0x74] sm:$0xf]
      %v4150 = vld [vmem:[%s4119 + $0x78] sm:$0xf]
      %v4151 = vld [vmem:[%s4119 + $0x7c] sm:$0xf]
      %v4152 = vcombine.low %v3025, %v3039
      %v4153 = vcombine.low %v3053, %v4076
      %v4155 = vunpack.c.l.s4 1983009808
      %v4156 = vunpack.c.0.s8 %v4155
      %v4157 = vlaneseq
      %v4158 = vshrl.u32 %v4157, 7
      %v4159 = vsub.s32 %v4156, %v4158
      %v4160 = vrot.slane %v4152, %v4159
      %v4162 = vunpack.c.l.s4 1983009808
      %v4163 = vunpack.c.0.s8 %v4162
      %v4164 = vlaneseq
      %v4165 = vshrl.u32 %v4164, 7
      %v4166 = vsub.s32 %v4163, %v4165
      %v4167 = vrot.slane %v4153, %v4166
      %v4168 = vcombine.low %v4160, %v4167
      %v4169 = vcombine.high %v4160, %v4167
      %v4170 = vcombine.low %v3081, %v3095
      %v4171 = vcombine.low %v3109, %v4090
      %v4173 = vunpack.c.l.s4 1983009808
      %v4174 = vunpack.c.0.s8 %v4173
      %v4175 = vlaneseq
      %v4176 = vshrl.u32 %v4175, 7
      %v4177 = vsub.s32 %v4174, %v4176
      %v4178 = vrot.slane %v4170, %v4177
      %v4180 = vunpack.c.l.s4 1983009808
      %v4181 = vunpack.c.0.s8 %v4180
      %v4182 = vlaneseq
      %v4183 = vshrl.u32 %v4182, 7
      %v4184 = vsub.s32 %v4181, %v4183
      %v4185 = vrot.slane %v4171, %v4184
      %v4186 = vcombine.low %v4178, %v4185
      %v4187 = vcombine.high %v4178, %v4185
      %v4188 = vcombine.low %v3137, %v3151
      %v4189 = vcombine.low %v3165, %v4104
      %v4191 = vunpack.c.l.s4 1983009808
      %v4192 = vunpack.c.0.s8 %v4191
      %v4193 = vlaneseq
      %v4194 = vshrl.u32 %v4193, 7
      %v4195 = vsub.s32 %v4192, %v4194
      %v4196 = vrot.slane %v4188, %v4195
      %v4198 = vunpack.c.l.s4 1983009808
      %v4199 = vunpack.c.0.s8 %v4198
      %v4200 = vlaneseq
      %v4201 = vshrl.u32 %v4200, 7
      %v4202 = vsub.s32 %v4199, %v4201
      %v4203 = vrot.slane %v4189, %v4202
      %v4204 = vcombine.low %v4196, %v4203
      %v4205 = vcombine.high %v4196, %v4203
      %v4206 = vcombine.low %v3193, %v3207
      %v4207 = vcombine.low %v3221, %v4118
      %v4209 = vunpack.c.l.s4 1983009808
      %v4210 = vunpack.c.0.s8 %v4209
      %v4211 = vlaneseq
      %v4212 = vshrl.u32 %v4211, 7
      %v4213 = vsub.s32 %v4210, %v4212
      %v4214 = vrot.slane %v4206, %v4213
      %v4216 = vunpack.c.l.s4 1983009808
      %v4217 = vunpack.c.0.s8 %v4216
      %v4218 = vlaneseq
      %v4219 = vshrl.u32 %v4218, 7
      %v4220 = vsub.s32 %v4217, %v4219
      %v4221 = vrot.slane %v4207, %v4220
      %v4222 = vcombine.low %v4214, %v4221
      %v4223 = vcombine.high %v4214, %v4221
      %v4264 = vunpack.c.l.b16 %v4120
      %v4265 = vunpack.c.l.b16 %v4121
      %v4266 = vunpack.c.l.b16 %v4122
      %v4267 = vunpack.c.l.b16 %v4123
      %v4268 = vunpack.c.l.b16 %v4124
      %v4269 = vunpack.c.l.b16 %v4125
      %v4270 = vunpack.c.l.b16 %v4126
      %v4271 = vunpack.c.l.b16 %v4127
      %v4272 = vunpack.c.l.b16 %v4128
      %v4273 = vunpack.c.l.b16 %v4129
      %v4274 = vunpack.c.l.b16 %v4130
      %v4275 = vunpack.c.l.b16 %v4131
      %v4276 = vunpack.c.l.b16 %v4132
      %v4277 = vunpack.c.l.b16 %v4133
      %v4278 = vunpack.c.l.b16 %v4134
      %v4279 = vunpack.c.l.b16 %v4135
      %v4280 = vunpack.c.l.b16 %v4136
      %v4281 = vunpack.c.l.b16 %v4137
      %v4282 = vunpack.c.l.b16 %v4138
      %v4283 = vunpack.c.l.b16 %v4139
      %v4284 = vunpack.c.l.b16 %v4140
      %v4285 = vunpack.c.l.b16 %v4141
      %v4286 = vunpack.c.l.b16 %v4142
      %v4287 = vunpack.c.l.b16 %v4143
      %v4288 = vunpack.c.l.b16 %v4144
      %v4289 = vunpack.c.l.b16 %v4145
      %v4290 = vunpack.c.l.b16 %v4146
      %v4291 = vunpack.c.l.b16 %v4147
      %v4292 = vunpack.c.l.b16 %v4148
      %v4293 = vunpack.c.l.b16 %v4149
      %v4294 = vunpack.c.l.b16 %v4150
      %v4295 = vunpack.c.l.b16 %v4151
      %v4296 = vpack.c.b16 %v4265, %v4264
      %v4297 = vpack.c.b16 %v4267, %v4266
      %v4298 = vpack.c.b16 %v4269, %v4268
      %v4299 = vpack.c.b16 %v4271, %v4270
      %v4300 = vpack.c.b16 %v4273, %v4272
      %v4301 = vpack.c.b16 %v4275, %v4274
      %v4302 = vpack.c.b16 %v4277, %v4276
      %v4303 = vpack.c.b16 %v4279, %v4278
      %v4304 = vpack.c.b16 %v4281, %v4280
      %v4305 = vpack.c.b16 %v4283, %v4282
      %v4306 = vpack.c.b16 %v4285, %v4284
      %v4307 = vpack.c.b16 %v4287, %v4286
      %v4308 = vpack.c.b16 %v4289, %v4288
      %v4309 = vpack.c.b16 %v4291, %v4290
      %v4310 = vpack.c.b16 %v4293, %v4292
      %v4311 = vpack.c.b16 %v4295, %v4294
      %4328 = vmatprep.subr.bf16.mxu0 0
      %4329 = vmatpush1.bf16.msra.mxu0 %v4303
      %4330 = vmatprep.subr.bf16.mxu0 0
      %4331 = vmatpush1.bf16.msra.mxu0 %v4302
      %4332 = vmatprep.subr.bf16.mxu0 0
      %4333 = vmatpush1.bf16.msra.mxu0 %v4301
      %4334 = vmatprep.subr.bf16.mxu0 0
      %4335 = vmatpush1.bf16.msra.mxu0 %v4300
      %4336 = vmatprep.subr.bf16.mxu0 0
      %4337 = vmatpush1.bf16.msra.mxu0 %v4299
      %4338 = vmatprep.subr.bf16.mxu0 0
      %4339 = vmatpush1.bf16.msra.mxu0 %v4298
      %4340 = vmatprep.subr.bf16.mxu0 0
      %4341 = vmatpush1.bf16.msra.mxu0 %v4297
      %4342 = vmatprep.subr.bf16.mxu0 0
      %4343 = vmatpush1.bf16.msra.mxu0 %v4296
      %4344 = vmatprep.subr.bf16.mxu0 0
      %4345 = vmatpush2.bf16.msra.mxu0 %v4311
      %4346 = vmatprep.subr.bf16.mxu0 0
      %4347 = vmatpush2.bf16.msra.mxu0 %v4310
      %4348 = vmatprep.subr.bf16.mxu0 0
      %4349 = vmatpush2.bf16.msra.mxu0 %v4309
      %4350 = vmatprep.subr.bf16.mxu0 0
      %4351 = vmatpush2.bf16.msra.mxu0 %v4308
      %4352 = vmatprep.subr.bf16.mxu0 0
      %4353 = vmatpush2.bf16.msra.mxu0 %v4307
      %4354 = vmatprep.subr.bf16.mxu0 0
      %4355 = vmatpush2.bf16.msra.mxu0 %v4306
      %4356 = vmatprep.subr.bf16.mxu0 0
      %4357 = vmatpush2.bf16.msra.mxu0 %v4305
      %4358 = vmatprep.subr.bf16.mxu0 0
      %4359 = vmatpush2.bf16.msra.mxu0 %v4304
      %4360 = vmatprep.mubr.bf16.mxu0 %v4169
      %4361 = vmatmul.mubr.bf16.gmra.mxu0 %v4168
      %v4362 = vpop.f32.mrf.mxu0
      %v4363 = vadd.f32 0.0, %v4362
      %v4364 = vpop.f32.mrf.mxu0
      %v4365 = vpop.f32.mrf.mxu0
      %v4366 = vadd.f32 0.0, %v4365
      %v4367 = vpop.f32.mrf.mxu0
      %4368 = vmatprep.mubr.bf16.mxu0 %v4187
      %4369 = vmatmul.mubr.bf16.gmra.mxu0 %v4186
      %v4370 = vpop.f32.mrf.mxu0
      %v4371 = vadd.f32 0.0, %v4370
      %v4372 = vpop.f32.mrf.mxu0
      %v4373 = vpop.f32.mrf.mxu0
      %v4374 = vadd.f32 0.0, %v4373
      %v4375 = vpop.f32.mrf.mxu0
      %4376 = vmatprep.mubr.bf16.mxu0 %v4205
      %4377 = vmatmul.mubr.bf16.gmra.mxu0 %v4204
      %v4378 = vpop.f32.mrf.mxu0
      %v4379 = vadd.f32 0.0, %v4378
      %v4380 = vpop.f32.mrf.mxu0
      %v4381 = vpop.f32.mrf.mxu0
      %v4382 = vadd.f32 0.0, %v4381
      %v4383 = vpop.f32.mrf.mxu0
      %4384 = vmatprep.mubr.bf16.mxu0 %v4223
      %4385 = vmatmul.mubr.bf16.gmra.mxu0 %v4222
      %v4386 = vpop.f32.mrf.mxu0
      %v4387 = vadd.f32 0.0, %v4386
      %v4388 = vpop.f32.mrf.mxu0
      %v4389 = vpop.f32.mrf.mxu0
      %v4390 = vadd.f32 0.0, %v4389
      %v4391 = vpop.f32.mrf.mxu0
      %4392 = vdwg.mxu0
      %v4393 = vadd.f32 %v4051, %v4363
      %v4394 = vadd.f32 %v4052, %v4366
      %v4395 = vadd.f32 %v4053, %v4371
      %v4396 = vadd.f32 %v4054, %v4374
      %v4397 = vadd.f32 %v4055, %v4379
      %v4398 = vadd.f32 %v4056, %v4382
      %v4399 = vadd.f32 %v4057, %v4387
      %v4400 = vadd.f32 %v4058, %v4390
      %v4409 = vcombine.low %v2773, %v2774
      %v4411 = vunpack.c.l.s4 1983009808
      %v4412 = vunpack.c.0.s8 %v4411
      %v4413 = vlaneseq
      %v4414 = vshrl.u32 %v4413, 7
      %v4415 = vsub.s32 %v4412, %v4414
      %v4416 = vrot.slane %v4409, %v4415
      %v4417 = vcombine.low %v2775, %v2776
      %v4419 = vunpack.c.l.s4 1983009808
      %v4420 = vunpack.c.0.s8 %v4419
      %v4421 = vlaneseq
      %v4422 = vshrl.u32 %v4421, 7
      %v4423 = vsub.s32 %v4420, %v4422
      %v4424 = vrot.slane %v4417, %v4423
      %v4425 = vcombine.low %v2777, %v2778
      %v4427 = vunpack.c.l.s4 1983009808
      %v4428 = vunpack.c.0.s8 %v4427
      %v4429 = vlaneseq
      %v4430 = vshrl.u32 %v4429, 7
      %v4431 = vsub.s32 %v4428, %v4430
      %v4432 = vrot.slane %v4425, %v4431
      %v4433 = vcombine.low %v2779, %v2780
      %v4435 = vunpack.c.l.s4 1983009808
      %v4436 = vunpack.c.0.s8 %v4435
      %v4437 = vlaneseq
      %v4438 = vshrl.u32 %v4437, 7
      %v4439 = vsub.s32 %v4436, %v4438
      %v4440 = vrot.slane %v4433, %v4439
      %s4441 = scalar_lea.vmem %s4, 512
      %v4442 = vld [vmem:[%s4441] sm:$0xf]
      %v4443 = vld [vmem:[%s4441 + $0x4] sm:$0xf]
      %v4444 = vld [vmem:[%s4441 + $0x8] sm:$0xf]
      %v4445 = vld [vmem:[%s4441 + $0xc] sm:$0xf]
      %v4446 = vld [vmem:[%s4441 + $0x10] sm:$0xf]
      %v4447 = vld [vmem:[%s4441 + $0x14] sm:$0xf]
      %v4448 = vld [vmem:[%s4441 + $0x18] sm:$0xf]
      %v4449 = vld [vmem:[%s4441 + $0x1c] sm:$0xf]
      %v4450 = vld [vmem:[%s4441 + $0x20] sm:$0xf]
      %v4451 = vld [vmem:[%s4441 + $0x24] sm:$0xf]
      %v4452 = vld [vmem:[%s4441 + $0x28] sm:$0xf]
      %v4453 = vld [vmem:[%s4441 + $0x2c] sm:$0xf]
      %v4454 = vld [vmem:[%s4441 + $0x30] sm:$0xf]
      %v4455 = vld [vmem:[%s4441 + $0x34] sm:$0xf]
      %v4456 = vld [vmem:[%s4441 + $0x38] sm:$0xf]
      %v4457 = vld [vmem:[%s4441 + $0x3c] sm:$0xf]
      %v4458 = vld [vmem:[%s4441 + $0x40] sm:$0xf]
      %v4459 = vld [vmem:[%s4441 + $0x44] sm:$0xf]
      %v4460 = vld [vmem:[%s4441 + $0x48] sm:$0xf]
      %v4461 = vld [vmem:[%s4441 + $0x4c] sm:$0xf]
      %v4462 = vld [vmem:[%s4441 + $0x50] sm:$0xf]
      %v4463 = vld [vmem:[%s4441 + $0x54] sm:$0xf]
      %v4464 = vld [vmem:[%s4441 + $0x58] sm:$0xf]
      %v4465 = vld [vmem:[%s4441 + $0x5c] sm:$0xf]
      %v4466 = vld [vmem:[%s4441 + $0x60] sm:$0xf]
      %v4467 = vld [vmem:[%s4441 + $0x64] sm:$0xf]
      %v4468 = vld [vmem:[%s4441 + $0x68] sm:$0xf]
      %v4469 = vld [vmem:[%s4441 + $0x6c] sm:$0xf]
      %v4470 = vld [vmem:[%s4441 + $0x70] sm:$0xf]
      %v4471 = vld [vmem:[%s4441 + $0x74] sm:$0xf]
      %v4472 = vld [vmem:[%s4441 + $0x78] sm:$0xf]
      %v4473 = vld [vmem:[%s4441 + $0x7c] sm:$0xf]
      %v4474 = vcombine.low %v4416, %v4424
      %v4475 = vcombine.low %v4432, %v4440
      %v4477 = vunpack.c.l.s4 1983009808
      %v4478 = vunpack.c.0.s8 %v4477
      %v4479 = vlaneseq
      %v4480 = vshrl.u32 %v4479, 7
      %v4481 = vsub.s32 %v4478, %v4480
      %v4482 = vrot.slane %v4474, %v4481
      %v4484 = vunpack.c.l.s4 1983009808
      %v4485 = vunpack.c.0.s8 %v4484
      %v4486 = vlaneseq
      %v4487 = vshrl.u32 %v4486, 7
      %v4488 = vsub.s32 %v4485, %v4487
      %v4489 = vrot.slane %v4475, %v4488
      %v4490 = vcombine.low %v4482, %v4489
      %v4491 = vcombine.high %v4482, %v4489
      %v4526 = vunpack.c.l.b16 %v4442
      %v4527 = vunpack.c.l.b16 %v4443
      %v4528 = vunpack.c.l.b16 %v4444
      %v4529 = vunpack.c.l.b16 %v4445
      %v4530 = vunpack.c.l.b16 %v4446
      %v4531 = vunpack.c.l.b16 %v4447
      %v4532 = vunpack.c.l.b16 %v4448
      %v4533 = vunpack.c.l.b16 %v4449
      %v4534 = vunpack.c.l.b16 %v4450
      %v4535 = vunpack.c.l.b16 %v4451
      %v4536 = vunpack.c.l.b16 %v4452
      %v4537 = vunpack.c.l.b16 %v4453
      %v4538 = vunpack.c.l.b16 %v4454
      %v4539 = vunpack.c.l.b16 %v4455
      %v4540 = vunpack.c.l.b16 %v4456
      %v4541 = vunpack.c.l.b16 %v4457
      %v4542 = vunpack.c.l.b16 %v4458
      %v4543 = vunpack.c.l.b16 %v4459
      %v4544 = vunpack.c.l.b16 %v4460
      %v4545 = vunpack.c.l.b16 %v4461
      %v4546 = vunpack.c.l.b16 %v4462
      %v4547 = vunpack.c.l.b16 %v4463
      %v4548 = vunpack.c.l.b16 %v4464
      %v4549 = vunpack.c.l.b16 %v4465
      %v4550 = vunpack.c.l.b16 %v4466
      %v4551 = vunpack.c.l.b16 %v4467
      %v4552 = vunpack.c.l.b16 %v4468
      %v4553 = vunpack.c.l.b16 %v4469
      %v4554 = vunpack.c.l.b16 %v4470
      %v4555 = vunpack.c.l.b16 %v4471
      %v4556 = vunpack.c.l.b16 %v4472
      %v4557 = vunpack.c.l.b16 %v4473
      %v4558 = vpack.c.b16 %v4527, %v4526
      %v4559 = vpack.c.b16 %v4529, %v4528
      %v4560 = vpack.c.b16 %v4531, %v4530
      %v4561 = vpack.c.b16 %v4533, %v4532
      %v4562 = vpack.c.b16 %v4535, %v4534
      %v4563 = vpack.c.b16 %v4537, %v4536
      %v4564 = vpack.c.b16 %v4539, %v4538
      %v4565 = vpack.c.b16 %v4541, %v4540
      %v4566 = vpack.c.b16 %v4543, %v4542
      %v4567 = vpack.c.b16 %v4545, %v4544
      %v4568 = vpack.c.b16 %v4547, %v4546
      %v4569 = vpack.c.b16 %v4549, %v4548
      %v4570 = vpack.c.b16 %v4551, %v4550
      %v4571 = vpack.c.b16 %v4553, %v4552
      %v4572 = vpack.c.b16 %v4555, %v4554
      %v4573 = vpack.c.b16 %v4557, %v4556
      %4590 = vmatprep.subr.bf16.mxu0 0
      %4591 = vmatpush1.bf16.msra.mxu0 %v4565
      %4592 = vmatprep.subr.bf16.mxu0 0
      %4593 = vmatpush1.bf16.msra.mxu0 %v4564
      %4594 = vmatprep.subr.bf16.mxu0 0
      %4595 = vmatpush1.bf16.msra.mxu0 %v4563
      %4596 = vmatprep.subr.bf16.mxu0 0
      %4597 = vmatpush1.bf16.msra.mxu0 %v4562
      %4598 = vmatprep.subr.bf16.mxu0 0
      %4599 = vmatpush1.bf16.msra.mxu0 %v4561
      %4600 = vmatprep.subr.bf16.mxu0 0
      %4601 = vmatpush1.bf16.msra.mxu0 %v4560
      %4602 = vmatprep.subr.bf16.mxu0 0
      %4603 = vmatpush1.bf16.msra.mxu0 %v4559
      %4604 = vmatprep.subr.bf16.mxu0 0
      %4605 = vmatpush1.bf16.msra.mxu0 %v4558
      %4606 = vmatprep.subr.bf16.mxu0 0
      %4607 = vmatpush2.bf16.msra.mxu0 %v4573
      %4608 = vmatprep.subr.bf16.mxu0 0
      %4609 = vmatpush2.bf16.msra.mxu0 %v4572
      %4610 = vmatprep.subr.bf16.mxu0 0
      %4611 = vmatpush2.bf16.msra.mxu0 %v4571
      %4612 = vmatprep.subr.bf16.mxu0 0
      %4613 = vmatpush2.bf16.msra.mxu0 %v4570
      %4614 = vmatprep.subr.bf16.mxu0 0
      %4615 = vmatpush2.bf16.msra.mxu0 %v4569
      %4616 = vmatprep.subr.bf16.mxu0 0
      %4617 = vmatpush2.bf16.msra.mxu0 %v4568
      %4618 = vmatprep.subr.bf16.mxu0 0
      %4619 = vmatpush2.bf16.msra.mxu0 %v4567
      %4620 = vmatprep.subr.bf16.mxu0 0
      %4621 = vmatpush2.bf16.msra.mxu0 %v4566
      %4622 = vmatprep.mubr.bf16.mxu0 %v3531
      %4623 = vmatmul.mubr.bf16.gmra.mxu0 %v3530
      %v4624 = vpop.f32.mrf.mxu0
      %v4625 = vadd.f32 0.0, %v4624
      %v4626 = vpop.f32.mrf.mxu0
      %v4627 = vpop.f32.mrf.mxu0
      %v4628 = vadd.f32 0.0, %v4627
      %v4629 = vpop.f32.mrf.mxu0
      %4630 = vmatprep.mubr.bf16.mxu0 %v3549
      %4631 = vmatmul.mubr.bf16.gmra.mxu0 %v3548
      %v4632 = vpop.f32.mrf.mxu0
      %v4633 = vadd.f32 0.0, %v4632
      %v4634 = vpop.f32.mrf.mxu0
      %v4635 = vpop.f32.mrf.mxu0
      %v4636 = vadd.f32 0.0, %v4635
      %v4637 = vpop.f32.mrf.mxu0
      %4638 = vmatprep.mubr.bf16.mxu0 %v3567
      %4639 = vmatmul.mubr.bf16.gmra.mxu0 %v3566
      %v4640 = vpop.f32.mrf.mxu0
      %v4641 = vadd.f32 0.0, %v4640
      %v4642 = vpop.f32.mrf.mxu0
      %v4643 = vpop.f32.mrf.mxu0
      %v4644 = vadd.f32 0.0, %v4643
      %v4645 = vpop.f32.mrf.mxu0
      %4646 = vmatprep.mubr.bf16.mxu0 %v4491
      %4647 = vmatmul.mubr.bf16.gmra.mxu0 %v4490
      %v4648 = vpop.f32.mrf.mxu0
      %v4649 = vadd.f32 0.0, %v4648
      %v4650 = vpop.f32.mrf.mxu0
      %v4651 = vpop.f32.mrf.mxu0
      %v4652 = vadd.f32 0.0, %v4651
      %v4653 = vpop.f32.mrf.mxu0
      %4654 = vdwg.mxu0
      %v4655 = vadd.f32 %v4393, %v4625
      %v4656 = vadd.f32 %v4394, %v4628
      %v4657 = vadd.f32 %v4395, %v4633
      %v4658 = vadd.f32 %v4396, %v4636
      %v4659 = vadd.f32 %v4397, %v4641
      %v4660 = vadd.f32 %v4398, %v4644
      %v4661 = vadd.f32 %v4399, %v4649
      %v4662 = vadd.f32 %v4400, %v4652
      %v4663 = vcombine.high %v4416, %v4416
      %v4664 = vcombine.high %v4424, %v4424
      %v4665 = vcombine.high %v4432, %v4432
      %v4666 = vcombine.high %v4440, %v4440
      %v4668 = vshrl.u32 %v4416, 16
      %v4670 = vrot.slane %v4668, 6
      %v4671 = vshll.u32 %v4416, 16
      %v4673 = vrot.slane %v4671, 7
      %v4674 = vor.u32 %v4670, %v4673
      %v4675 = vrot.slane %v4674, 2
      %v4677 = vshll.u32 %v4663, 16
      %v4679 = vrot.slane %v4677, 7
      %v4680 = vsel %vm2997, %v4675, %v4679
      %v4682 = vshrl.u32 %v4424, 16
      %v4684 = vrot.slane %v4682, 6
      %v4685 = vshll.u32 %v4424, 16
      %v4687 = vrot.slane %v4685, 7
      %v4688 = vor.u32 %v4684, %v4687
      %v4689 = vrot.slane %v4688, 2
      %v4691 = vshll.u32 %v4664, 16
      %v4693 = vrot.slane %v4691, 7
      %v4694 = vsel %vm2997, %v4689, %v4693
      %v4696 = vshrl.u32 %v4432, 16
      %v4698 = vrot.slane %v4696, 6
      %v4699 = vshll.u32 %v4432, 16
      %v4701 = vrot.slane %v4699, 7
      %v4702 = vor.u32 %v4698, %v4701
      %v4703 = vrot.slane %v4702, 2
      %v4705 = vshll.u32 %v4665, 16
      %v4707 = vrot.slane %v4705, 7
      %v4708 = vsel %vm2997, %v4703, %v4707
      %v4710 = vshrl.u32 %v4440, 16
      %v4712 = vrot.slane %v4710, 6
      %v4713 = vshll.u32 %v4440, 16
      %v4715 = vrot.slane %v4713, 7
      %v4716 = vor.u32 %v4712, %v4715
      %v4717 = vrot.slane %v4716, 2
      %v4719 = vshll.u32 %v4666, 16
      %v4721 = vrot.slane %v4719, 7
      %v4722 = vsel %vm2997, %v4717, %v4721
      %s4723 = scalar_lea.vmem %s4, 640
      %v4724 = vld [vmem:[%s4723] sm:$0xf]
      %v4725 = vld [vmem:[%s4723 + $0x4] sm:$0xf]
      %v4726 = vld [vmem:[%s4723 + $0x8] sm:$0xf]
      %v4727 = vld [vmem:[%s4723 + $0xc] sm:$0xf]
      %v4728 = vld [vmem:[%s4723 + $0x10] sm:$0xf]
      %v4729 = vld [vmem:[%s4723 + $0x14] sm:$0xf]
      %v4730 = vld [vmem:[%s4723 + $0x18] sm:$0xf]
      %v4731 = vld [vmem:[%s4723 + $0x1c] sm:$0xf]
      %v4732 = vld [vmem:[%s4723 + $0x20] sm:$0xf]
      %v4733 = vld [vmem:[%s4723 + $0x24] sm:$0xf]
      %v4734 = vld [vmem:[%s4723 + $0x28] sm:$0xf]
      %v4735 = vld [vmem:[%s4723 + $0x2c] sm:$0xf]
      %v4736 = vld [vmem:[%s4723 + $0x30] sm:$0xf]
      %v4737 = vld [vmem:[%s4723 + $0x34] sm:$0xf]
      %v4738 = vld [vmem:[%s4723 + $0x38] sm:$0xf]
      %v4739 = vld [vmem:[%s4723 + $0x3c] sm:$0xf]
      %v4740 = vld [vmem:[%s4723 + $0x40] sm:$0xf]
      %v4741 = vld [vmem:[%s4723 + $0x44] sm:$0xf]
      %v4742 = vld [vmem:[%s4723 + $0x48] sm:$0xf]
      %v4743 = vld [vmem:[%s4723 + $0x4c] sm:$0xf]
      %v4744 = vld [vmem:[%s4723 + $0x50] sm:$0xf]
      %v4745 = vld [vmem:[%s4723 + $0x54] sm:$0xf]
      %v4746 = vld [vmem:[%s4723 + $0x58] sm:$0xf]
      %v4747 = vld [vmem:[%s4723 + $0x5c] sm:$0xf]
      %v4748 = vld [vmem:[%s4723 + $0x60] sm:$0xf]
      %v4749 = vld [vmem:[%s4723 + $0x64] sm:$0xf]
      %v4750 = vld [vmem:[%s4723 + $0x68] sm:$0xf]
      %v4751 = vld [vmem:[%s4723 + $0x6c] sm:$0xf]
      %v4752 = vld [vmem:[%s4723 + $0x70] sm:$0xf]
      %v4753 = vld [vmem:[%s4723 + $0x74] sm:$0xf]
      %v4754 = vld [vmem:[%s4723 + $0x78] sm:$0xf]
      %v4755 = vld [vmem:[%s4723 + $0x7c] sm:$0xf]
      %v4756 = vcombine.low %v4680, %v4694
      %v4757 = vcombine.low %v4708, %v4722
      %v4759 = vunpack.c.l.s4 1983009808
      %v4760 = vunpack.c.0.s8 %v4759
      %v4761 = vlaneseq
      %v4762 = vshrl.u32 %v4761, 7
      %v4763 = vsub.s32 %v4760, %v4762
      %v4764 = vrot.slane %v4756, %v4763
      %v4766 = vunpack.c.l.s4 1983009808
      %v4767 = vunpack.c.0.s8 %v4766
      %v4768 = vlaneseq
      %v4769 = vshrl.u32 %v4768, 7
      %v4770 = vsub.s32 %v4767, %v4769
      %v4771 = vrot.slane %v4757, %v4770
      %v4772 = vcombine.low %v4764, %v4771
      %v4773 = vcombine.high %v4764, %v4771
      %v4808 = vunpack.c.l.b16 %v4724
      %v4809 = vunpack.c.l.b16 %v4725
      %v4810 = vunpack.c.l.b16 %v4726
      %v4811 = vunpack.c.l.b16 %v4727
      %v4812 = vunpack.c.l.b16 %v4728
      %v4813 = vunpack.c.l.b16 %v4729
      %v4814 = vunpack.c.l.b16 %v4730
      %v4815 = vunpack.c.l.b16 %v4731
      %v4816 = vunpack.c.l.b16 %v4732
      %v4817 = vunpack.c.l.b16 %v4733
      %v4818 = vunpack.c.l.b16 %v4734
      %v4819 = vunpack.c.l.b16 %v4735
      %v4820 = vunpack.c.l.b16 %v4736
      %v4821 = vunpack.c.l.b16 %v4737
      %v4822 = vunpack.c.l.b16 %v4738
      %v4823 = vunpack.c.l.b16 %v4739
      %v4824 = vunpack.c.l.b16 %v4740
      %v4825 = vunpack.c.l.b16 %v4741
      %v4826 = vunpack.c.l.b16 %v4742
      %v4827 = vunpack.c.l.b16 %v4743
      %v4828 = vunpack.c.l.b16 %v4744
      %v4829 = vunpack.c.l.b16 %v4745
      %v4830 = vunpack.c.l.b16 %v4746
      %v4831 = vunpack.c.l.b16 %v4747
      %v4832 = vunpack.c.l.b16 %v4748
      %v4833 = vunpack.c.l.b16 %v4749
      %v4834 = vunpack.c.l.b16 %v4750
      %v4835 = vunpack.c.l.b16 %v4751
      %v4836 = vunpack.c.l.b16 %v4752
      %v4837 = vunpack.c.l.b16 %v4753
      %v4838 = vunpack.c.l.b16 %v4754
      %v4839 = vunpack.c.l.b16 %v4755
      %v4840 = vpack.c.b16 %v4809, %v4808
      %v4841 = vpack.c.b16 %v4811, %v4810
      %v4842 = vpack.c.b16 %v4813, %v4812
      %v4843 = vpack.c.b16 %v4815, %v4814
      %v4844 = vpack.c.b16 %v4817, %v4816
      %v4845 = vpack.c.b16 %v4819, %v4818
      %v4846 = vpack.c.b16 %v4821, %v4820
      %v4847 = vpack.c.b16 %v4823, %v4822
      %v4848 = vpack.c.b16 %v4825, %v4824
      %v4849 = vpack.c.b16 %v4827, %v4826
      %v4850 = vpack.c.b16 %v4829, %v4828
      %v4851 = vpack.c.b16 %v4831, %v4830
      %v4852 = vpack.c.b16 %v4833, %v4832
      %v4853 = vpack.c.b16 %v4835, %v4834
      %v4854 = vpack.c.b16 %v4837, %v4836
      %v4855 = vpack.c.b16 %v4839, %v4838
      %4872 = vmatprep.subr.bf16.mxu0 0
      %4873 = vmatpush1.bf16.msra.mxu0 %v4847
      %4874 = vmatprep.subr.bf16.mxu0 0
      %4875 = vmatpush1.bf16.msra.mxu0 %v4846
      %4876 = vmatprep.subr.bf16.mxu0 0
      %4877 = vmatpush1.bf16.msra.mxu0 %v4845
      %4878 = vmatprep.subr.bf16.mxu0 0
      %4879 = vmatpush1.bf16.msra.mxu0 %v4844
      %4880 = vmatprep.subr.bf16.mxu0 0
      %4881 = vmatpush1.bf16.msra.mxu0 %v4843
      %4882 = vmatprep.subr.bf16.mxu0 0
      %4883 = vmatpush1.bf16.msra.mxu0 %v4842
      %4884 = vmatprep.subr.bf16.mxu0 0
      %4885 = vmatpush1.bf16.msra.mxu0 %v4841
      %4886 = vmatprep.subr.bf16.mxu0 0
      %4887 = vmatpush1.bf16.msra.mxu0 %v4840
      %4888 = vmatprep.subr.bf16.mxu0 0
      %4889 = vmatpush2.bf16.msra.mxu0 %v4855
      %4890 = vmatprep.subr.bf16.mxu0 0
      %4891 = vmatpush2.bf16.msra.mxu0 %v4854
      %4892 = vmatprep.subr.bf16.mxu0 0
      %4893 = vmatpush2.bf16.msra.mxu0 %v4853
      %4894 = vmatprep.subr.bf16.mxu0 0
      %4895 = vmatpush2.bf16.msra.mxu0 %v4852
      %4896 = vmatprep.subr.bf16.mxu0 0
      %4897 = vmatpush2.bf16.msra.mxu0 %v4851
      %4898 = vmatprep.subr.bf16.mxu0 0
      %4899 = vmatpush2.bf16.msra.mxu0 %v4850
      %4900 = vmatprep.subr.bf16.mxu0 0
      %4901 = vmatpush2.bf16.msra.mxu0 %v4849
      %4902 = vmatprep.subr.bf16.mxu0 0
      %4903 = vmatpush2.bf16.msra.mxu0 %v4848
      %4904 = vmatprep.mubr.bf16.mxu0 %v3290
      %4905 = vmatmul.mubr.bf16.gmra.mxu0 %v3289
      %v4906 = vpop.f32.mrf.mxu0
      %v4907 = vadd.f32 0.0, %v4906
      %v4908 = vpop.f32.mrf.mxu0
      %v4909 = vpop.f32.mrf.mxu0
      %v4910 = vadd.f32 0.0, %v4909
      %v4911 = vpop.f32.mrf.mxu0
      %4912 = vmatprep.mubr.bf16.mxu0 %v3308
      %4913 = vmatmul.mubr.bf16.gmra.mxu0 %v3307
      %v4914 = vpop.f32.mrf.mxu0
      %v4915 = vadd.f32 0.0, %v4914
      %v4916 = vpop.f32.mrf.mxu0
      %v4917 = vpop.f32.mrf.mxu0
      %v4918 = vadd.f32 0.0, %v4917
      %v4919 = vpop.f32.mrf.mxu0
      %4920 = vmatprep.mubr.bf16.mxu0 %v3326
      %4921 = vmatmul.mubr.bf16.gmra.mxu0 %v3325
      %v4922 = vpop.f32.mrf.mxu0
      %v4923 = vadd.f32 0.0, %v4922
      %v4924 = vpop.f32.mrf.mxu0
      %v4925 = vpop.f32.mrf.mxu0
      %v4926 = vadd.f32 0.0, %v4925
      %v4927 = vpop.f32.mrf.mxu0
      %4928 = vmatprep.mubr.bf16.mxu0 %v4773
      %4929 = vmatmul.mubr.bf16.gmra.mxu0 %v4772
      %v4930 = vpop.f32.mrf.mxu0
      %v4931 = vadd.f32 0.0, %v4930
      %v4932 = vpop.f32.mrf.mxu0
      %v4933 = vpop.f32.mrf.mxu0
      %v4934 = vadd.f32 0.0, %v4933
      %v4935 = vpop.f32.mrf.mxu0
      %4936 = vdwg.mxu0
      %v4937 = vadd.f32 %v4655, %v4907
      %v4938 = vadd.f32 %v4656, %v4910
      %v4939 = vadd.f32 %v4657, %v4915
      %v4940 = vadd.f32 %v4658, %v4918
      %v4941 = vadd.f32 %v4659, %v4923
      %v4942 = vadd.f32 %v4660, %v4926
      %v4943 = vadd.f32 %v4661, %v4931
      %v4944 = vadd.f32 %v4662, %v4934
      %v4947 = vcombine.low %v2781, %v2782
      %v4949 = vunpack.c.l.s4 1983009808
      %v4950 = vunpack.c.0.s8 %v4949
      %v4951 = vlaneseq
      %v4952 = vshrl.u32 %v4951, 7
      %v4953 = vsub.s32 %v4950, %v4952
      %v4954 = vrot.slane %v4947, %v4953
      %s4955 = scalar_lea.vmem %s4, 768
      %v4956 = vld [vmem:[%s4955] sm:$0xf]
      %v4957 = vld [vmem:[%s4955 + $0x4] sm:$0xf]
      %v4958 = vld [vmem:[%s4955 + $0x8] sm:$0xf]
      %v4959 = vld [vmem:[%s4955 + $0xc] sm:$0xf]
      %v4960 = vld [vmem:[%s4955 + $0x10] sm:$0xf]
      %v4961 = vld [vmem:[%s4955 + $0x14] sm:$0xf]
      %v4962 = vld [vmem:[%s4955 + $0x18] sm:$0xf]
      %v4963 = vld [vmem:[%s4955 + $0x1c] sm:$0xf]
      %v4964 = vld [vmem:[%s4955 + $0x20] sm:$0xf]
      %v4965 = vld [vmem:[%s4955 + $0x24] sm:$0xf]
      %v4966 = vld [vmem:[%s4955 + $0x28] sm:$0xf]
      %v4967 = vld [vmem:[%s4955 + $0x2c] sm:$0xf]
      %v4968 = vld [vmem:[%s4955 + $0x30] sm:$0xf]
      %v4969 = vld [vmem:[%s4955 + $0x34] sm:$0xf]
      %v4970 = vld [vmem:[%s4955 + $0x38] sm:$0xf]
      %v4971 = vld [vmem:[%s4955 + $0x3c] sm:$0xf]
      %v4972 = vld [vmem:[%s4955 + $0x40] sm:$0xf]
      %v4973 = vld [vmem:[%s4955 + $0x44] sm:$0xf]
      %v4974 = vld [vmem:[%s4955 + $0x48] sm:$0xf]
      %v4975 = vld [vmem:[%s4955 + $0x4c] sm:$0xf]
      %v4976 = vld [vmem:[%s4955 + $0x50] sm:$0xf]
      %v4977 = vld [vmem:[%s4955 + $0x54] sm:$0xf]
      %v4978 = vld [vmem:[%s4955 + $0x58] sm:$0xf]
      %v4979 = vld [vmem:[%s4955 + $0x5c] sm:$0xf]
      %v4980 = vld [vmem:[%s4955 + $0x60] sm:$0xf]
      %v4981 = vld [vmem:[%s4955 + $0x64] sm:$0xf]
      %v4982 = vld [vmem:[%s4955 + $0x68] sm:$0xf]
      %v4983 = vld [vmem:[%s4955 + $0x6c] sm:$0xf]
      %v4984 = vld [vmem:[%s4955 + $0x70] sm:$0xf]
      %v4985 = vld [vmem:[%s4955 + $0x74] sm:$0xf]
      %v4986 = vld [vmem:[%s4955 + $0x78] sm:$0xf]
      %v4987 = vld [vmem:[%s4955 + $0x7c] sm:$0xf]
      %v4988 = vcombine.low %v4424, %v4432
      %v4989 = vcombine.low %v4440, %v4954
      %v4991 = vunpack.c.l.s4 1983009808
      %v4992 = vunpack.c.0.s8 %v4991
      %v4993 = vlaneseq
      %v4994 = vshrl.u32 %v4993, 7
      %v4995 = vsub.s32 %v4992, %v4994
      %v4996 = vrot.slane %v4988, %v4995
      %v4998 = vunpack.c.l.s4 1983009808
      %v4999 = vunpack.c.0.s8 %v4998
      %v5000 = vlaneseq
      %v5001 = vshrl.u32 %v5000, 7
      %v5002 = vsub.s32 %v4999, %v5001
      %v5003 = vrot.slane %v4989, %v5002
      %v5004 = vcombine.low %v4996, %v5003
      %v5005 = vcombine.high %v4996, %v5003
      %v5040 = vunpack.c.l.b16 %v4956
      %v5041 = vunpack.c.l.b16 %v4957
      %v5042 = vunpack.c.l.b16 %v4958
      %v5043 = vunpack.c.l.b16 %v4959
      %v5044 = vunpack.c.l.b16 %v4960
      %v5045 = vunpack.c.l.b16 %v4961
      %v5046 = vunpack.c.l.b16 %v4962
      %v5047 = vunpack.c.l.b16 %v4963
      %v5048 = vunpack.c.l.b16 %v4964
      %v5049 = vunpack.c.l.b16 %v4965
      %v5050 = vunpack.c.l.b16 %v4966
      %v5051 = vunpack.c.l.b16 %v4967
      %v5052 = vunpack.c.l.b16 %v4968
      %v5053 = vunpack.c.l.b16 %v4969
      %v5054 = vunpack.c.l.b16 %v4970
      %v5055 = vunpack.c.l.b16 %v4971
      %v5056 = vunpack.c.l.b16 %v4972
      %v5057 = vunpack.c.l.b16 %v4973
      %v5058 = vunpack.c.l.b16 %v4974
      %v5059 = vunpack.c.l.b16 %v4975
      %v5060 = vunpack.c.l.b16 %v4976
      %v5061 = vunpack.c.l.b16 %v4977
      %v5062 = vunpack.c.l.b16 %v4978
      %v5063 = vunpack.c.l.b16 %v4979
      %v5064 = vunpack.c.l.b16 %v4980
      %v5065 = vunpack.c.l.b16 %v4981
      %v5066 = vunpack.c.l.b16 %v4982
      %v5067 = vunpack.c.l.b16 %v4983
      %v5068 = vunpack.c.l.b16 %v4984
      %v5069 = vunpack.c.l.b16 %v4985
      %v5070 = vunpack.c.l.b16 %v4986
      %v5071 = vunpack.c.l.b16 %v4987
      %v5072 = vpack.c.b16 %v5041, %v5040
      %v5073 = vpack.c.b16 %v5043, %v5042
      %v5074 = vpack.c.b16 %v5045, %v5044
      %v5075 = vpack.c.b16 %v5047, %v5046
      %v5076 = vpack.c.b16 %v5049, %v5048
      %v5077 = vpack.c.b16 %v5051, %v5050
      %v5078 = vpack.c.b16 %v5053, %v5052
      %v5079 = vpack.c.b16 %v5055, %v5054
      %v5080 = vpack.c.b16 %v5057, %v5056
      %v5081 = vpack.c.b16 %v5059, %v5058
      %v5082 = vpack.c.b16 %v5061, %v5060
      %v5083 = vpack.c.b16 %v5063, %v5062
      %v5084 = vpack.c.b16 %v5065, %v5064
      %v5085 = vpack.c.b16 %v5067, %v5066
      %v5086 = vpack.c.b16 %v5069, %v5068
      %v5087 = vpack.c.b16 %v5071, %v5070
      %5104 = vmatprep.subr.bf16.mxu0 0
      %5105 = vmatpush1.bf16.msra.mxu0 %v5079
      %5106 = vmatprep.subr.bf16.mxu0 0
      %5107 = vmatpush1.bf16.msra.mxu0 %v5078
      %5108 = vmatprep.subr.bf16.mxu0 0
      %5109 = vmatpush1.bf16.msra.mxu0 %v5077
      %5110 = vmatprep.subr.bf16.mxu0 0
      %5111 = vmatpush1.bf16.msra.mxu0 %v5076
      %5112 = vmatprep.subr.bf16.mxu0 0
      %5113 = vmatpush1.bf16.msra.mxu0 %v5075
      %5114 = vmatprep.subr.bf16.mxu0 0
      %5115 = vmatpush1.bf16.msra.mxu0 %v5074
      %5116 = vmatprep.subr.bf16.mxu0 0
      %5117 = vmatpush1.bf16.msra.mxu0 %v5073
      %5118 = vmatprep.subr.bf16.mxu0 0
      %5119 = vmatpush1.bf16.msra.mxu0 %v5072
      %5120 = vmatprep.subr.bf16.mxu0 0
      %5121 = vmatpush2.bf16.msra.mxu0 %v5087
      %5122 = vmatprep.subr.bf16.mxu0 0
      %5123 = vmatpush2.bf16.msra.mxu0 %v5086
      %5124 = vmatprep.subr.bf16.mxu0 0
      %5125 = vmatpush2.bf16.msra.mxu0 %v5085
      %5126 = vmatprep.subr.bf16.mxu0 0
      %5127 = vmatpush2.bf16.msra.mxu0 %v5084
      %5128 = vmatprep.subr.bf16.mxu0 0
      %5129 = vmatpush2.bf16.msra.mxu0 %v5083
      %5130 = vmatprep.subr.bf16.mxu0 0
      %5131 = vmatpush2.bf16.msra.mxu0 %v5082
      %5132 = vmatprep.subr.bf16.mxu0 0
      %5133 = vmatpush2.bf16.msra.mxu0 %v5081
      %5134 = vmatprep.subr.bf16.mxu0 0
      %5135 = vmatpush2.bf16.msra.mxu0 %v5080
      %5136 = vmatprep.mubr.bf16.mxu0 %v3845
      %5137 = vmatmul.mubr.bf16.gmra.mxu0 %v3844
      %v5138 = vpop.f32.mrf.mxu0
      %v5139 = vadd.f32 0.0, %v5138
      %v5140 = vpop.f32.mrf.mxu0
      %v5141 = vpop.f32.mrf.mxu0
      %v5142 = vadd.f32 0.0, %v5141
      %v5143 = vpop.f32.mrf.mxu0
      %5144 = vmatprep.mubr.bf16.mxu0 %v3863
      %5145 = vmatmul.mubr.bf16.gmra.mxu0 %v3862
      %v5146 = vpop.f32.mrf.mxu0
      %v5147 = vadd.f32 0.0, %v5146
      %v5148 = vpop.f32.mrf.mxu0
      %v5149 = vpop.f32.mrf.mxu0
      %v5150 = vadd.f32 0.0, %v5149
      %v5151 = vpop.f32.mrf.mxu0
      %5152 = vmatprep.mubr.bf16.mxu0 %v3881
      %5153 = vmatmul.mubr.bf16.gmra.mxu0 %v3880
      %v5154 = vpop.f32.mrf.mxu0
      %v5155 = vadd.f32 0.0, %v5154
      %v5156 = vpop.f32.mrf.mxu0
      %v5157 = vpop.f32.mrf.mxu0
      %v5158 = vadd.f32 0.0, %v5157
      %v5159 = vpop.f32.mrf.mxu0
      %5160 = vmatprep.mubr.bf16.mxu0 %v5005
      %5161 = vmatmul.mubr.bf16.gmra.mxu0 %v5004
      %v5162 = vpop.f32.mrf.mxu0
      %v5163 = vadd.f32 0.0, %v5162
      %v5164 = vpop.f32.mrf.mxu0
      %v5165 = vpop.f32.mrf.mxu0
      %v5166 = vadd.f32 0.0, %v5165
      %v5167 = vpop.f32.mrf.mxu0
      %5168 = vdwg.mxu0
      %v5169 = vadd.f32 %v4937, %v5139
      %v5170 = vadd.f32 %v4938, %v5142
      %v5171 = vadd.f32 %v4939, %v5147
      %v5172 = vadd.f32 %v4940, %v5150
      %v5173 = vadd.f32 %v4941, %v5155
      %v5174 = vadd.f32 %v4942, %v5158
      %v5175 = vadd.f32 %v4943, %v5163
      %v5176 = vadd.f32 %v4944, %v5166
      %v5177 = vcombine.high %v4954, %v4954
      %v5179 = vshrl.u32 %v4954, 16
      %v5181 = vrot.slane %v5179, 6
      %v5182 = vshll.u32 %v4954, 16
      %v5184 = vrot.slane %v5182, 7
      %v5185 = vor.u32 %v5181, %v5184
      %v5186 = vrot.slane %v5185, 2
      %v5188 = vshll.u32 %v5177, 16
      %v5190 = vrot.slane %v5188, 7
      %v5191 = vsel %vm2997, %v5186, %v5190
      %s5192 = scalar_lea.vmem %s4, 896
      %v5193 = vld [vmem:[%s5192] sm:$0xf]
      %v5194 = vld [vmem:[%s5192 + $0x4] sm:$0xf]
      %v5195 = vld [vmem:[%s5192 + $0x8] sm:$0xf]
      %v5196 = vld [vmem:[%s5192 + $0xc] sm:$0xf]
      %v5197 = vld [vmem:[%s5192 + $0x10] sm:$0xf]
      %v5198 = vld [vmem:[%s5192 + $0x14] sm:$0xf]
      %v5199 = vld [vmem:[%s5192 + $0x18] sm:$0xf]
      %v5200 = vld [vmem:[%s5192 + $0x1c] sm:$0xf]
      %v5201 = vld [vmem:[%s5192 + $0x20] sm:$0xf]
      %v5202 = vld [vmem:[%s5192 + $0x24] sm:$0xf]
      %v5203 = vld [vmem:[%s5192 + $0x28] sm:$0xf]
      %v5204 = vld [vmem:[%s5192 + $0x2c] sm:$0xf]
      %v5205 = vld [vmem:[%s5192 + $0x30] sm:$0xf]
      %v5206 = vld [vmem:[%s5192 + $0x34] sm:$0xf]
      %v5207 = vld [vmem:[%s5192 + $0x38] sm:$0xf]
      %v5208 = vld [vmem:[%s5192 + $0x3c] sm:$0xf]
      %v5209 = vld [vmem:[%s5192 + $0x40] sm:$0xf]
      %v5210 = vld [vmem:[%s5192 + $0x44] sm:$0xf]
      %v5211 = vld [vmem:[%s5192 + $0x48] sm:$0xf]
      %v5212 = vld [vmem:[%s5192 + $0x4c] sm:$0xf]
      %v5213 = vld [vmem:[%s5192 + $0x50] sm:$0xf]
      %v5214 = vld [vmem:[%s5192 + $0x54] sm:$0xf]
      %v5215 = vld [vmem:[%s5192 + $0x58] sm:$0xf]
      %v5216 = vld [vmem:[%s5192 + $0x5c] sm:$0xf]
      %v5217 = vld [vmem:[%s5192 + $0x60] sm:$0xf]
      %v5218 = vld [vmem:[%s5192 + $0x64] sm:$0xf]
      %v5219 = vld [vmem:[%s5192 + $0x68] sm:$0xf]
      %v5220 = vld [vmem:[%s5192 + $0x6c] sm:$0xf]
      %v5221 = vld [vmem:[%s5192 + $0x70] sm:$0xf]
      %v5222 = vld [vmem:[%s5192 + $0x74] sm:$0xf]
      %v5223 = vld [vmem:[%s5192 + $0x78] sm:$0xf]
      %v5224 = vld [vmem:[%s5192 + $0x7c] sm:$0xf]
      %v5225 = vcombine.low %v4694, %v4708
      %v5226 = vcombine.low %v4722, %v5191
      %v5228 = vunpack.c.l.s4 1983009808
      %v5229 = vunpack.c.0.s8 %v5228
      %v5230 = vlaneseq
      %v5231 = vshrl.u32 %v5230, 7
      %v5232 = vsub.s32 %v5229, %v5231
      %v5233 = vrot.slane %v5225, %v5232
      %v5235 = vunpack.c.l.s4 1983009808
      %v5236 = vunpack.c.0.s8 %v5235
      %v5237 = vlaneseq
      %v5238 = vshrl.u32 %v5237, 7
      %v5239 = vsub.s32 %v5236, %v5238
      %v5240 = vrot.slane %v5226, %v5239
      %v5241 = vcombine.low %v5233, %v5240
      %v5242 = vcombine.high %v5233, %v5240
      %v5277 = vunpack.c.l.b16 %v5193
      %v5278 = vunpack.c.l.b16 %v5194
      %v5279 = vunpack.c.l.b16 %v5195
      %v5280 = vunpack.c.l.b16 %v5196
      %v5281 = vunpack.c.l.b16 %v5197
      %v5282 = vunpack.c.l.b16 %v5198
      %v5283 = vunpack.c.l.b16 %v5199
      %v5284 = vunpack.c.l.b16 %v5200
      %v5285 = vunpack.c.l.b16 %v5201
      %v5286 = vunpack.c.l.b16 %v5202
      %v5287 = vunpack.c.l.b16 %v5203
      %v5288 = vunpack.c.l.b16 %v5204
      %v5289 = vunpack.c.l.b16 %v5205
      %v5290 = vunpack.c.l.b16 %v5206
      %v5291 = vunpack.c.l.b16 %v5207
      %v5292 = vunpack.c.l.b16 %v5208
      %v5293 = vunpack.c.l.b16 %v5209
      %v5294 = vunpack.c.l.b16 %v5210
      %v5295 = vunpack.c.l.b16 %v5211
      %v5296 = vunpack.c.l.b16 %v5212
      %v5297 = vunpack.c.l.b16 %v5213
      %v5298 = vunpack.c.l.b16 %v5214
      %v5299 = vunpack.c.l.b16 %v5215
      %v5300 = vunpack.c.l.b16 %v5216
      %v5301 = vunpack.c.l.b16 %v5217
      %v5302 = vunpack.c.l.b16 %v5218
      %v5303 = vunpack.c.l.b16 %v5219
      %v5304 = vunpack.c.l.b16 %v5220
      %v5305 = vunpack.c.l.b16 %v5221
      %v5306 = vunpack.c.l.b16 %v5222
      %v5307 = vunpack.c.l.b16 %v5223
      %v5308 = vunpack.c.l.b16 %v5224
      %v5309 = vpack.c.b16 %v5278, %v5277
      %v5310 = vpack.c.b16 %v5280, %v5279
      %v5311 = vpack.c.b16 %v5282, %v5281
      %v5312 = vpack.c.b16 %v5284, %v5283
      %v5313 = vpack.c.b16 %v5286, %v5285
      %v5314 = vpack.c.b16 %v5288, %v5287
      %v5315 = vpack.c.b16 %v5290, %v5289
      %v5316 = vpack.c.b16 %v5292, %v5291
      %v5317 = vpack.c.b16 %v5294, %v5293
      %v5318 = vpack.c.b16 %v5296, %v5295
      %v5319 = vpack.c.b16 %v5298, %v5297
      %v5320 = vpack.c.b16 %v5300, %v5299
      %v5321 = vpack.c.b16 %v5302, %v5301
      %v5322 = vpack.c.b16 %v5304, %v5303
      %v5323 = vpack.c.b16 %v5306, %v5305
      %v5324 = vpack.c.b16 %v5308, %v5307
      %5341 = vmatprep.subr.bf16.mxu0 0
      %5342 = vmatpush1.bf16.msra.mxu0 %v5316
      %5343 = vmatprep.subr.bf16.mxu0 0
      %5344 = vmatpush1.bf16.msra.mxu0 %v5315
      %5345 = vmatprep.subr.bf16.mxu0 0
      %5346 = vmatpush1.bf16.msra.mxu0 %v5314
      %5347 = vmatprep.subr.bf16.mxu0 0
      %5348 = vmatpush1.bf16.msra.mxu0 %v5313
      %5349 = vmatprep.subr.bf16.mxu0 0
      %5350 = vmatpush1.bf16.msra.mxu0 %v5312
      %5351 = vmatprep.subr.bf16.mxu0 0
      %5352 = vmatpush1.bf16.msra.mxu0 %v5311
      %5353 = vmatprep.subr.bf16.mxu0 0
      %5354 = vmatpush1.bf16.msra.mxu0 %v5310
      %5355 = vmatprep.subr.bf16.mxu0 0
      %5356 = vmatpush1.bf16.msra.mxu0 %v5309
      %5357 = vmatprep.subr.bf16.mxu0 0
      %5358 = vmatpush2.bf16.msra.mxu0 %v5324
      %5359 = vmatprep.subr.bf16.mxu0 0
      %5360 = vmatpush2.bf16.msra.mxu0 %v5323
      %5361 = vmatprep.subr.bf16.mxu0 0
      %5362 = vmatpush2.bf16.msra.mxu0 %v5322
      %5363 = vmatprep.subr.bf16.mxu0 0
      %5364 = vmatpush2.bf16.msra.mxu0 %v5321
      %5365 = vmatprep.subr.bf16.mxu0 0
      %5366 = vmatpush2.bf16.msra.mxu0 %v5320
      %5367 = vmatprep.subr.bf16.mxu0 0
      %5368 = vmatpush2.bf16.msra.mxu0 %v5319
      %5369 = vmatprep.subr.bf16.mxu0 0
      %5370 = vmatpush2.bf16.msra.mxu0 %v5318
      %5371 = vmatprep.subr.bf16.mxu0 0
      %5372 = vmatpush2.bf16.msra.mxu0 %v5317
      %5373 = vmatprep.mubr.bf16.mxu0 %v4187
      %5374 = vmatmul.mubr.bf16.gmra.mxu0 %v4186
      %v5375 = vpop.f32.mrf.mxu0
      %v5376 = vadd.f32 0.0, %v5375
      %v5377 = vpop.f32.mrf.mxu0
      %v5378 = vpop.f32.mrf.mxu0
      %v5379 = vadd.f32 0.0, %v5378
      %v5380 = vpop.f32.mrf.mxu0
      %5381 = vmatprep.mubr.bf16.mxu0 %v4205
      %5382 = vmatmul.mubr.bf16.gmra.mxu0 %v4204
      %v5383 = vpop.f32.mrf.mxu0
      %v5384 = vadd.f32 0.0, %v5383
      %v5385 = vpop.f32.mrf.mxu0
      %v5386 = vpop.f32.mrf.mxu0
      %v5387 = vadd.f32 0.0, %v5386
      %v5388 = vpop.f32.mrf.mxu0
      %5389 = vmatprep.mubr.bf16.mxu0 %v4223
      %5390 = vmatmul.mubr.bf16.gmra.mxu0 %v4222
      %v5391 = vpop.f32.mrf.mxu0
      %v5392 = vadd.f32 0.0, %v5391
      %v5393 = vpop.f32.mrf.mxu0
      %v5394 = vpop.f32.mrf.mxu0
      %v5395 = vadd.f32 0.0, %v5394
      %v5396 = vpop.f32.mrf.mxu0
      %5397 = vmatprep.mubr.bf16.mxu0 %v5242
      %5398 = vmatmul.mubr.bf16.gmra.mxu0 %v5241
      %v5399 = vpop.f32.mrf.mxu0
      %v5400 = vadd.f32 0.0, %v5399
      %v5401 = vpop.f32.mrf.mxu0
      %v5402 = vpop.f32.mrf.mxu0
      %v5403 = vadd.f32 0.0, %v5402
      %v5404 = vpop.f32.mrf.mxu0
      %5405 = vdwg.mxu0
      %v5406 = vadd.f32 %v5169, %v5376
      %v5407 = vadd.f32 %v5170, %v5379
      %v5408 = vadd.f32 %v5171, %v5384
      %v5409 = vadd.f32 %v5172, %v5387
      %v5410 = vadd.f32 %v5173, %v5392
      %v5411 = vadd.f32 %v5174, %v5395
      %v5412 = vadd.f32 %v5175, %v5400
      %v5413 = vadd.f32 %v5176, %v5403
      %v5414 = vld [vmem:[%s5] sm:$0x1]
      %v5416 = vlaneseq
      %v5417 = vshrl.u32 %v5416, 7
      %v5418 = vsub.s32 0, %v5417
      %v5419 = vrot.slane %v5414, %v5418
      %v5421 = vadd.f32 %v5406, %v5419
      %v5422 = vadd.f32 %v5407, %v5419
      %v5423 = vadd.f32 %v5408, %v5419
      %v5424 = vadd.f32 %v5409, %v5419
      %v5425 = vadd.f32 %v5410, %v5419
      %v5426 = vadd.f32 %v5411, %v5419
      %v5427 = vadd.f32 %v5412, %v5419
      %v5428 = vadd.f32 %v5413, %v5419
      %v5429 = vsub.f32 0.0, %v5421
      %v5430 = vsub.f32 0.0, %v5422
      %v5431 = vsub.f32 0.0, %v5423
      %v5432 = vsub.f32 0.0, %v5424
      %v5433 = vsub.f32 0.0, %v5425
      %v5434 = vsub.f32 0.0, %v5426
      %v5435 = vsub.f32 0.0, %v5427
      %v5436 = vsub.f32 0.0, %v5428
      %v5437 = vmul.f32 %v5429, 1.442695
      %v5438 = vpow.pop %v5437
      %v5439 = vmul.f32 %v5430, 1.442695
      %v5440 = vpow.pop %v5439
      %v5441 = vmul.f32 %v5431, 1.442695
      %v5442 = vpow.pop %v5441
      %v5443 = vmul.f32 %v5432, 1.442695
      %v5444 = vpow.pop %v5443
      %v5445 = vmul.f32 %v5433, 1.442695
      %v5446 = vpow.pop %v5445
      %v5447 = vmul.f32 %v5434, 1.442695
      %v5448 = vpow.pop %v5447
      %v5449 = vmul.f32 %v5435, 1.442695
      %v5450 = vpow.pop %v5449
      %v5451 = vmul.f32 %v5436, 1.442695
      %v5452 = vpow.pop %v5451
      %v5453 = vadd.f32 %v5438, 1.0
      %v5454 = vadd.f32 %v5440, 1.0
      %v5455 = vadd.f32 %v5442, 1.0
      %v5456 = vadd.f32 %v5444, 1.0
      %v5457 = vadd.f32 %v5446, 1.0
      %v5458 = vadd.f32 %v5448, 1.0
      %v5459 = vadd.f32 %v5450, 1.0
      %v5460 = vadd.f32 %v5452, 1.0
      %v5461 = vrcp.pop %v5453
      %v5462 = vmul.f32 1.0, %v5461
      %v5463 = vrcp.pop %v5454
      %v5464 = vmul.f32 1.0, %v5463
      %v5465 = vrcp.pop %v5455
      %v5466 = vmul.f32 1.0, %v5465
      %v5467 = vrcp.pop %v5456
      %v5468 = vmul.f32 1.0, %v5467
      %v5469 = vrcp.pop %v5457
      %v5470 = vmul.f32 1.0, %v5469
      %v5471 = vrcp.pop %v5458
      %v5472 = vmul.f32 1.0, %v5471
      %v5473 = vrcp.pop %v5459
      %v5474 = vmul.f32 1.0, %v5473
      %v5475 = vrcp.pop %v5460
      %v5476 = vmul.f32 1.0, %v5475
      %v5477 = vadd.f32 %v5462, 2.0
      %v5478 = vadd.f32 %v5464, 2.0
      %v5479 = vadd.f32 %v5466, 2.0
      %v5480 = vadd.f32 %v5468, 2.0
      %v5481 = vadd.f32 %v5470, 2.0
      %v5482 = vadd.f32 %v5472, 2.0
      %v5483 = vadd.f32 %v5474, 2.0
      %v5484 = vadd.f32 %v5476, 2.0
      %v5485 = vmul.f32 %v5462, %v5477
      %v5486 = vmul.f32 %v5464, %v5478
      %v5487 = vmul.f32 %v5466, %v5479
      %v5488 = vmul.f32 %v5468, %v5480
      %v5489 = vmul.f32 %v5470, %v5481
      %v5490 = vmul.f32 %v5472, %v5482
      %v5491 = vmul.f32 %v5474, %v5483
      %v5492 = vmul.f32 %v5476, %v5484
      %v5493 = vmul.f32 %v5421, %v5485
      %v5494 = vmul.f32 %v5422, %v5486
      %v5495 = vmul.f32 %v5423, %v5487
      %v5496 = vmul.f32 %v5424, %v5488
      %v5497 = vmul.f32 %v5425, %v5489
      %v5498 = vmul.f32 %v5426, %v5490
      %v5499 = vmul.f32 %v5427, %v5491
      %v5500 = vmul.f32 %v5428, %v5492
      %v5501 = vadd.f32 %v5485, 2.0
      %v5502 = vadd.f32 %v5486, 2.0
      %v5503 = vadd.f32 %v5487, 2.0
      %v5504 = vadd.f32 %v5488, 2.0
      %v5505 = vadd.f32 %v5489, 2.0
      %v5506 = vadd.f32 %v5490, 2.0
      %v5507 = vadd.f32 %v5491, 2.0
      %v5508 = vadd.f32 %v5492, 2.0
      %v5509 = vrcp.pop %v5501
      %v5510 = vmul.f32 %v5493, %v5509
      %v5511 = vrcp.pop %v5502
      %v5512 = vmul.f32 %v5494, %v5511
      %v5513 = vrcp.pop %v5503
      %v5514 = vmul.f32 %v5495, %v5513
      %v5515 = vrcp.pop %v5504
      %v5516 = vmul.f32 %v5496, %v5515
      %v5517 = vrcp.pop %v5505
      %v5518 = vmul.f32 %v5497, %v5517
      %v5519 = vrcp.pop %v5506
      %v5520 = vmul.f32 %v5498, %v5519
      %v5521 = vrcp.pop %v5507
      %v5522 = vmul.f32 %v5499, %v5521
      %v5523 = vrcp.pop %v5508
      %v5524 = vmul.f32 %v5500, %v5523
      %v5525 = vsel %vm690, %v5510, 0.0
      %v5526 = vsel %vm690, %v5512, 0.0
      %v5527 = vadd.f32 %v5525, %v5526
      %v5528 = vsel %vm690, %v5514, 0.0
      %v5529 = vadd.f32 %v5527, %v5528
      %v5530 = vsel %vm690, %v5516, 0.0
      %v5531 = vadd.f32 %v5529, %v5530
      %v5532 = vsel %vm690, %v5518, 0.0
      %v5533 = vadd.f32 %v5531, %v5532
      %v5534 = vsel %vm690, %v5520, 0.0
      %v5535 = vadd.f32 %v5533, %v5534
      %v5536 = vsel %vm690, %v5522, 0.0
      %v5537 = vadd.f32 %v5535, %v5536
      %v5538 = vsel %vm690, %v5524, 0.0
      %v5539 = vadd.f32 %v5537, %v5538
      %v5540 = vrot.slane %v5539, 4
      %v5541 = vadd.f32 %v5539, %v5540
      %v5542 = vrot.slane %v5541, 2
      %v5543 = vadd.f32 %v5541, %v5542
      %v5544 = vrot.slane %v5543, 1
      %v5545 = vadd.f32 %v5543, %v5544
      %v5546 = vmul.f32 %v5545, 0.015625
      %v5547 = vsub.f32 %v5510, %v5546
      %v5548 = vsub.f32 %v5512, %v5546
      %v5549 = vsub.f32 %v5514, %v5546
      %v5550 = vsub.f32 %v5516, %v5546
      %v5551 = vsub.f32 %v5518, %v5546
      %v5552 = vsub.f32 %v5520, %v5546
      %v5553 = vsub.f32 %v5522, %v5546
      %v5554 = vsub.f32 %v5524, %v5546
      %v5555 = vmul.f32 %v5547, %v5547
      %v5556 = vmul.f32 %v5548, %v5548
      %v5557 = vmul.f32 %v5549, %v5549
      %v5558 = vmul.f32 %v5550, %v5550
      %v5559 = vmul.f32 %v5551, %v5551
      %v5560 = vmul.f32 %v5552, %v5552
      %v5561 = vmul.f32 %v5553, %v5553
      %v5562 = vmul.f32 %v5554, %v5554
      %v5563 = vsel %vm690, %v5555, 0.0
      %v5564 = vsel %vm690, %v5556, 0.0
      %v5565 = vadd.f32 %v5563, %v5564
      %v5566 = vsel %vm690, %v5557, 0.0
      %v5567 = vadd.f32 %v5565, %v5566
      %v5568 = vsel %vm690, %v5558, 0.0
      %v5569 = vadd.f32 %v5567, %v5568
      %v5570 = vsel %vm690, %v5559, 0.0
      %v5571 = vadd.f32 %v5569, %v5570
      %v5572 = vsel %vm690, %v5560, 0.0
      %v5573 = vadd.f32 %v5571, %v5572
      %v5574 = vsel %vm690, %v5561, 0.0
      %v5575 = vadd.f32 %v5573, %v5574
      %v5576 = vsel %vm690, %v5562, 0.0
      %v5577 = vadd.f32 %v5575, %v5576
      %v5578 = vrot.slane %v5577, 4
      %v5579 = vadd.f32 %v5577, %v5578
      %v5580 = vrot.slane %v5579, 2
      %v5581 = vadd.f32 %v5579, %v5580
      %v5582 = vrot.slane %v5581, 1
      %v5583 = vadd.f32 %v5581, %v5582
      %v5584 = vmul.f32 %v5583, 0.015625
      %v5585 = vadd.f32 %v5584, 1e-05
      %v5586 = vrsqrt.pop %v5585
      %v5587 = vmul.f32 %v5547, %v5586
      %v5588 = vmul.f32 %v5548, %v5586
      %v5589 = vmul.f32 %v5549, %v5586
      %v5590 = vmul.f32 %v5550, %v5586
      %v5591 = vmul.f32 %v5551, %v5586
      %v5592 = vmul.f32 %v5552, %v5586
      %v5593 = vmul.f32 %v5553, %v5586
      %v5594 = vmul.f32 %v5554, %v5586
      %vm5595 = vcmp.ge.f32.partialorder %v5587, 0.0
      %vm5596 = vcmp.ge.f32.partialorder %v5588, 0.0
      %vm5597 = vcmp.ge.f32.partialorder %v5589, 0.0
      %vm5598 = vcmp.ge.f32.partialorder %v5590, 0.0
      %vm5599 = vcmp.ge.f32.partialorder %v5591, 0.0
      %vm5600 = vcmp.ge.f32.partialorder %v5592, 0.0
      %vm5601 = vcmp.ge.f32.partialorder %v5593, 0.0
      %vm5602 = vcmp.ge.f32.partialorder %v5594, 0.0
      %v5603 = vmul.f32 %v5587, 0.2
      %v5604 = vmul.f32 %v5588, 0.2
      %v5605 = vmul.f32 %v5589, 0.2
      %v5606 = vmul.f32 %v5590, 0.2
      %v5607 = vmul.f32 %v5591, 0.2
      %v5608 = vmul.f32 %v5592, 0.2
      %v5609 = vmul.f32 %v5593, 0.2
      %v5610 = vmul.f32 %v5594, 0.2
      %v5611 = vsel %vm5595, %v5587, %v5603
      %v5612 = vsel %vm5596, %v5588, %v5604
      %v5613 = vsel %vm5597, %v5589, %v5605
      %v5614 = vsel %vm5598, %v5590, %v5606
      %v5615 = vsel %vm5599, %v5591, %v5607
      %v5616 = vsel %vm5600, %v5592, %v5608
      %v5617 = vsel %vm5601, %v5593, %v5609
      %v5618 = vsel %vm5602, %v5594, %v5610
      %v5619 = vld [vmem:[%s3] sm:$0xf]
      %v5620 = vld [vmem:[%s3 + $0x4] sm:$0xf]
      %v5621 = vld [vmem:[%s3 + $0x8] sm:$0xf]
      %v5622 = vld [vmem:[%s3 + $0xc] sm:$0xf]
      %v5623 = vld [vmem:[%s3 + $0x10] sm:$0xf]
      %v5624 = vld [vmem:[%s3 + $0x14] sm:$0xf]
      %v5625 = vld [vmem:[%s3 + $0x18] sm:$0xf]
      %v5626 = vld [vmem:[%s3 + $0x1c] sm:$0xf]
      %v5627 = vpack.c.bf16 %v5612, %v5611
      %v5628 = vpack.c.bf16 %v5614, %v5613
      %v5629 = vpack.c.bf16 %v5616, %v5615
      %v5630 = vpack.c.bf16 %v5618, %v5617
      %v5639 = vunpack.c.l.b16 %v5619
      %v5640 = vunpack.c.l.b16 %v5620
      %v5641 = vunpack.c.l.b16 %v5621
      %v5642 = vunpack.c.l.b16 %v5622
      %v5643 = vunpack.c.l.b16 %v5623
      %v5644 = vunpack.c.l.b16 %v5624
      %v5645 = vunpack.c.l.b16 %v5625
      %v5646 = vunpack.c.l.b16 %v5626
      %v5647 = vpack.c.b16 %v5640, %v5639
      %v5648 = vpack.c.b16 %v5642, %v5641
      %v5649 = vpack.c.b16 %v5644, %v5643
      %v5650 = vpack.c.b16 %v5646, %v5645
      %v5652 = vsel %vm690, %v5647, 0
      %v5655 = vsel %vm690, %v5648, 0
      %v5658 = vsel %vm690, %v5649, 0
      %v5661 = vsel %vm690, %v5650, 0
      %5663 = vmatprep.subr.bf16.mxu0 0
      %5664 = vmatpush1.bf16.msra.mxu0 0
      %5665 = vmatprep.subr.bf16.mxu0 0
      %5666 = vmatpush1.bf16.msra.mxu0 0
      %5667 = vmatprep.subr.bf16.mxu0 0
      %5668 = vmatpush1.bf16.msra.mxu0 0
      %5669 = vmatprep.subr.bf16.mxu0 0
      %5670 = vmatpush1.bf16.msra.mxu0 0
      %5671 = vmatprep.subr.bf16.mxu0 0
      %5672 = vmatpush1.bf16.msra.mxu0 %v5630
      %5673 = vmatprep.subr.bf16.mxu0 0
      %5674 = vmatpush1.bf16.msra.mxu0 %v5629
      %5675 = vmatprep.subr.bf16.mxu0 0
      %5676 = vmatpush1.bf16.msra.mxu0 %v5628
      %5677 = vmatprep.subr.bf16.mxu0 0
      %5678 = vmatpush1.bf16.msra.mxu0 %v5627
      %5679 = vmatprep.subr.bf16.mxu0 0
      %5680 = vmatpush2.bf16.msra.mxu0 0
      %5681 = vmatprep.subr.bf16.mxu0 0
      %5682 = vmatpush2.bf16.msra.mxu0 0
      %5683 = vmatprep.subr.bf16.mxu0 0
      %5684 = vmatpush2.bf16.msra.mxu0 0
      %5685 = vmatprep.subr.bf16.mxu0 0
      %5686 = vmatpush2.bf16.msra.mxu0 0
      %5687 = vmatprep.subr.bf16.mxu0 0
      %5688 = vmatpush2.bf16.msra.mxu0 0
      %5689 = vmatprep.subr.bf16.mxu0 0
      %5690 = vmatpush2.bf16.msra.mxu0 0
      %5691 = vmatprep.subr.bf16.mxu0 0
      %5692 = vmatpush2.bf16.msra.mxu0 0
      %5693 = vmatprep.subr.bf16.mxu0 0
      %5694 = vmatpush2.bf16.msra.mxu0 0
      %5695 = vmatprep.mubr.bf16.mxu0 0
      %5696 = vmatmul.mubr.bf16.gmra.mxu0 %v5652
      %v5697 = vpop.f32.mrf.mxu0
      %v5698 = vadd.f32 0.0, %v5697
      %v5699 = vpop.f32.mrf.mxu0
      %v5700 = vpop.f32.mrf.mxu0
      %v5701 = vadd.f32 0.0, %v5700
      %v5702 = vpop.f32.mrf.mxu0
      %5703 = vmatprep.mubr.bf16.mxu0 0
      %5704 = vmatmul.mubr.bf16.gmra.mxu0 %v5655
      %v5705 = vpop.f32.mrf.mxu0
      %v5706 = vadd.f32 0.0, %v5705
      %v5707 = vpop.f32.mrf.mxu0
      %v5708 = vpop.f32.mrf.mxu0
      %v5709 = vadd.f32 0.0, %v5708
      %v5710 = vpop.f32.mrf.mxu0
      %5711 = vmatprep.mubr.bf16.mxu0 0
      %5712 = vmatmul.mubr.bf16.gmra.mxu0 %v5658
      %v5713 = vpop.f32.mrf.mxu0
      %v5714 = vadd.f32 0.0, %v5713
      %v5715 = vpop.f32.mrf.mxu0
      %v5716 = vpop.f32.mrf.mxu0
      %v5717 = vadd.f32 0.0, %v5716
      %v5718 = vpop.f32.mrf.mxu0
      %5719 = vmatprep.mubr.bf16.mxu0 0
      %5720 = vmatmul.mubr.bf16.gmra.mxu0 %v5661
      %v5721 = vpop.f32.mrf.mxu0
      %v5722 = vadd.f32 0.0, %v5721
      %v5723 = vpop.f32.mrf.mxu0
      %v5724 = vpop.f32.mrf.mxu0
      %v5725 = vadd.f32 0.0, %v5724
      %v5726 = vpop.f32.mrf.mxu0
      %5727 = vdwg.mxu0
      %v5729 = vcombine.high %v5698, %v5698
      %v5731 = vunpack.c.l.s4 1983009808
      %v5732 = vunpack.c.0.s8 %v5731
      %v5733 = vlaneseq
      %v5734 = vshrl.u32 %v5733, 7
      %v5735 = vsub.s32 %v5732, %v5734
      %v5736 = vrot.slane %v5698, %v5735
      %v5738 = vunpack.c.l.s4 1983009808
      %v5739 = vunpack.c.0.s8 %v5738
      %v5740 = vlaneseq
      %v5741 = vshrl.u32 %v5740, 7
      %v5742 = vsub.s32 %v5739, %v5741
      %v5743 = vrot.slane %v5729, %v5742
      %v5744 = vcombine.high %v5736, %v5736
      %v5745 = vcombine.high %v5743, %v5743
      %v5747 = vunpack.c.l.s4 1983009808
      %v5748 = vunpack.c.0.s8 %v5747
      %v5749 = vlaneseq
      %v5750 = vshrl.u32 %v5749, 7
      %v5751 = vsub.s32 %v5748, %v5750
      %v5752 = vrot.slane %v5736, %v5751
      %v5754 = vunpack.c.l.s4 1983009808
      %v5755 = vunpack.c.0.s8 %v5754
      %v5756 = vlaneseq
      %v5757 = vshrl.u32 %v5756, 7
      %v5758 = vsub.s32 %v5755, %v5757
      %v5759 = vrot.slane %v5744, %v5758
      %v5761 = vunpack.c.l.s4 1983009808
      %v5762 = vunpack.c.0.s8 %v5761
      %v5763 = vlaneseq
      %v5764 = vshrl.u32 %v5763, 7
      %v5765 = vsub.s32 %v5762, %v5764
      %v5766 = vrot.slane %v5743, %v5765
      %v5768 = vunpack.c.l.s4 1983009808
      %v5769 = vunpack.c.0.s8 %v5768
      %v5770 = vlaneseq
      %v5771 = vshrl.u32 %v5770, 7
      %v5772 = vsub.s32 %v5769, %v5771
      %v5773 = vrot.slane %v5745, %v5772
      %5774 = vrot.lane.b32.xlu0 %v5752, 64
      %v5775 = vpop.permute.xlu0 %5774
      %5776 = vrot.lane.b32.xlu0 %v5759, 64
      %v5777 = vpop.permute.xlu0 %5776
      %5778 = vrot.lane.b32.xlu0 %v5766, 64
      %v5779 = vpop.permute.xlu0 %5778
      %5780 = vrot.lane.b32.xlu0 %v5773, 64
      %v5781 = vpop.permute.xlu0 %5780
      %vm5786 = vcmask 1041920
      %5787 = vst.msk [vmem:[#allocation3 + $0xc] sm:$0x3] %vm5786, %v5775
      %5788 = vst.msk [vmem:[#allocation3 + $0x1c] sm:$0x3] %vm5786, %v5777
      %5789 = vst.msk [vmem:[#allocation3 + $0x3c] sm:$0x3] %vm5786, %v5779
      %5790 = vst.msk [vmem:[#allocation3 + $0x4c] sm:$0x3] %vm5786, %v5781
      %v5792 = vcombine.high %v5701, %v5701
      %v5794 = vunpack.c.l.s4 1983009808
      %v5795 = vunpack.c.0.s8 %v5794
      %v5796 = vlaneseq
      %v5797 = vshrl.u32 %v5796, 7
      %v5798 = vsub.s32 %v5795, %v5797
      %v5799 = vrot.slane %v5701, %v5798
      %v5801 = vunpack.c.l.s4 1983009808
      %v5802 = vunpack.c.0.s8 %v5801
      %v5803 = vlaneseq
      %v5804 = vshrl.u32 %v5803, 7
      %v5805 = vsub.s32 %v5802, %v5804
      %v5806 = vrot.slane %v5792, %v5805
      %v5807 = vcombine.high %v5799, %v5799
      %v5808 = vcombine.high %v5806, %v5806
      %v5810 = vunpack.c.l.s4 1983009808
      %v5811 = vunpack.c.0.s8 %v5810
      %v5812 = vlaneseq
      %v5813 = vshrl.u32 %v5812, 7
      %v5814 = vsub.s32 %v5811, %v5813
      %v5815 = vrot.slane %v5799, %v5814
      %v5817 = vunpack.c.l.s4 1983009808
      %v5818 = vunpack.c.0.s8 %v5817
      %v5819 = vlaneseq
      %v5820 = vshrl.u32 %v5819, 7
      %v5821 = vsub.s32 %v5818, %v5820
      %v5822 = vrot.slane %v5807, %v5821
      %v5824 = vunpack.c.l.s4 1983009808
      %v5825 = vunpack.c.0.s8 %v5824
      %v5826 = vlaneseq
      %v5827 = vshrl.u32 %v5826, 7
      %v5828 = vsub.s32 %v5825, %v5827
      %v5829 = vrot.slane %v5806, %v5828
      %v5831 = vunpack.c.l.s4 1983009808
      %v5832 = vunpack.c.0.s8 %v5831
      %v5833 = vlaneseq
      %v5834 = vshrl.u32 %v5833, 7
      %v5835 = vsub.s32 %v5832, %v5834
      %v5836 = vrot.slane %v5808, %v5835
      %v5837 = vrot.slane %v5815, 7
      %v5838 = vrot.slane %v5822, 7
      %v5839 = vrot.slane %v5829, 7
      %v5840 = vrot.slane %v5836, 7
      %vm5845 = vcmask 518145
      %5846 = vst.msk [vmem:[#allocation3 + $0xc] sm:$0x6] %vm5845, %v5837
      %5847 = vst.msk [vmem:[#allocation3 + $0x1c] sm:$0x6] %vm5845, %v5838
      %5848 = vst.msk [vmem:[#allocation3 + $0x3c] sm:$0x6] %vm5845, %v5839
      %5849 = vst.msk [vmem:[#allocation3 + $0x4c] sm:$0x6] %vm5845, %v5840
      %v5851 = vcombine.high %v5706, %v5706
      %v5853 = vunpack.c.l.s4 1983009808
      %v5854 = vunpack.c.0.s8 %v5853
      %v5855 = vlaneseq
      %v5856 = vshrl.u32 %v5855, 7
      %v5857 = vsub.s32 %v5854, %v5856
      %v5858 = vrot.slane %v5706, %v5857
      %v5860 = vunpack.c.l.s4 1983009808
      %v5861 = vunpack.c.0.s8 %v5860
      %v5862 = vlaneseq
      %v5863 = vshrl.u32 %v5862, 7
      %v5864 = vsub.s32 %v5861, %v5863
      %v5865 = vrot.slane %v5851, %v5864
      %v5866 = vcombine.high %v5858, %v5858
      %v5867 = vcombine.high %v5865, %v5865
      %v5869 = vunpack.c.l.s4 1983009808
      %v5870 = vunpack.c.0.s8 %v5869
      %v5871 = vlaneseq
      %v5872 = vshrl.u32 %v5871, 7
      %v5873 = vsub.s32 %v5870, %v5872
      %v5874 = vrot.slane %v5858, %v5873
      %v5876 = vunpack.c.l.s4 1983009808
      %v5877 = vunpack.c.0.s8 %v5876
      %v5878 = vlaneseq
      %v5879 = vshrl.u32 %v5878, 7
      %v5880 = vsub.s32 %v5877, %v5879
      %v5881 = vrot.slane %v5866, %v5880
      %v5883 = vunpack.c.l.s4 1983009808
      %v5884 = vunpack.c.0.s8 %v5883
      %v5885 = vlaneseq
      %v5886 = vshrl.u32 %v5885, 7
      %v5887 = vsub.s32 %v5884, %v5886
      %v5888 = vrot.slane %v5865, %v5887
      %v5890 = vunpack.c.l.s4 1983009808
      %v5891 = vunpack.c.0.s8 %v5890
      %v5892 = vlaneseq
      %v5893 = vshrl.u32 %v5892, 7
      %v5894 = vsub.s32 %v5891, %v5893
      %v5895 = vrot.slane %v5867, %v5894
      %5896 = vrot.lane.b32.xlu0 %v5874, 64
      %v5897 = vpop.permute.xlu0 %5896
      %5898 = vrot.lane.b32.xlu0 %v5881, 64
      %v5899 = vpop.permute.xlu0 %5898
      %5900 = vrot.lane.b32.xlu0 %v5888, 64
      %v5901 = vpop.permute.xlu0 %5900
      %5902 = vrot.lane.b32.xlu0 %v5895, 64
      %v5903 = vpop.permute.xlu0 %5902
      %s5908 = scalar_lea.vmem [#allocation3], 16
      %5909 = vst.msk [vmem:[%s5908 + $0x8] sm:$0x3] %vm5786, %v5897
      %5910 = vst.msk [vmem:[%s5908 + $0x18] sm:$0x3] %vm5786, %v5899
      %5911 = vst.msk [vmem:[%s5908 + $0x38] sm:$0x3] %vm5786, %v5901
      %5912 = vst.msk [vmem:[%s5908 + $0x48] sm:$0x3] %vm5786, %v5903
      %v5914 = vcombine.high %v5709, %v5709
      %v5916 = vunpack.c.l.s4 1983009808
      %v5917 = vunpack.c.0.s8 %v5916
      %v5918 = vlaneseq
      %v5919 = vshrl.u32 %v5918, 7
      %v5920 = vsub.s32 %v5917, %v5919
      %v5921 = vrot.slane %v5709, %v5920
      %v5923 = vunpack.c.l.s4 1983009808
      %v5924 = vunpack.c.0.s8 %v5923
      %v5925 = vlaneseq
      %v5926 = vshrl.u32 %v5925, 7
      %v5927 = vsub.s32 %v5924, %v5926
      %v5928 = vrot.slane %v5914, %v5927
      %v5929 = vcombine.high %v5921, %v5921
      %v5930 = vcombine.high %v5928, %v5928
      %v5932 = vunpack.c.l.s4 1983009808
      %v5933 = vunpack.c.0.s8 %v5932
      %v5934 = vlaneseq
      %v5935 = vshrl.u32 %v5934, 7
      %v5936 = vsub.s32 %v5933, %v5935
      %v5937 = vrot.slane %v5921, %v5936
      %v5939 = vunpack.c.l.s4 1983009808
      %v5940 = vunpack.c.0.s8 %v5939
      %v5941 = vlaneseq
      %v5942 = vshrl.u32 %v5941, 7
      %v5943 = vsub.s32 %v5940, %v5942
      %v5944 = vrot.slane %v5929, %v5943
      %v5946 = vunpack.c.l.s4 1983009808
      %v5947 = vunpack.c.0.s8 %v5946
      %v5948 = vlaneseq
      %v5949 = vshrl.u32 %v5948, 7
      %v5950 = vsub.s32 %v5947, %v5949
      %v5951 = vrot.slane %v5928, %v5950
      %v5953 = vunpack.c.l.s4 1983009808
      %v5954 = vunpack.c.0.s8 %v5953
      %v5955 = vlaneseq
      %v5956 = vshrl.u32 %v5955, 7
      %v5957 = vsub.s32 %v5954, %v5956
      %v5958 = vrot.slane %v5930, %v5957
      %v5959 = vrot.slane %v5937, 7
      %v5960 = vrot.slane %v5944, 7
      %v5961 = vrot.slane %v5951, 7
      %v5962 = vrot.slane %v5958, 7
      %5967 = vst.msk [vmem:[%s5908 + $0x8] sm:$0x6] %vm5845, %v5959
      %5968 = vst.msk [vmem:[%s5908 + $0x18] sm:$0x6] %vm5845, %v5960
      %5969 = vst.msk [vmem:[%s5908 + $0x38] sm:$0x6] %vm5845, %v5961
      %5970 = vst.msk [vmem:[%s5908 + $0x48] sm:$0x6] %vm5845, %v5962
      %v5972 = vcombine.high %v5714, %v5714
      %v5974 = vunpack.c.l.s4 1983009808
      %v5975 = vunpack.c.0.s8 %v5974
      %v5976 = vlaneseq
      %v5977 = vshrl.u32 %v5976, 7
      %v5978 = vsub.s32 %v5975, %v5977
      %v5979 = vrot.slane %v5714, %v5978
      %v5981 = vunpack.c.l.s4 1983009808
      %v5982 = vunpack.c.0.s8 %v5981
      %v5983 = vlaneseq
      %v5984 = vshrl.u32 %v5983, 7
      %v5985 = vsub.s32 %v5982, %v5984
      %v5986 = vrot.slane %v5972, %v5985
      %v5987 = vcombine.high %v5979, %v5979
      %v5988 = vcombine.high %v5986, %v5986
      %v5990 = vunpack.c.l.s4 1983009808
      %v5991 = vunpack.c.0.s8 %v5990
      %v5992 = vlaneseq
      %v5993 = vshrl.u32 %v5992, 7
      %v5994 = vsub.s32 %v5991, %v5993
      %v5995 = vrot.slane %v5979, %v5994
      %v5997 = vunpack.c.l.s4 1983009808
      %v5998 = vunpack.c.0.s8 %v5997
      %v5999 = vlaneseq
      %v6000 = vshrl.u32 %v5999, 7
      %v6001 = vsub.s32 %v5998, %v6000
      %v6002 = vrot.slane %v5987, %v6001
      %v6004 = vunpack.c.l.s4 1983009808
      %v6005 = vunpack.c.0.s8 %v6004
      %v6006 = vlaneseq
      %v6007 = vshrl.u32 %v6006, 7
      %v6008 = vsub.s32 %v6005, %v6007
      %v6009 = vrot.slane %v5986, %v6008
      %v6011 = vunpack.c.l.s4 1983009808
      %v6012 = vunpack.c.0.s8 %v6011
      %v6013 = vlaneseq
      %v6014 = vshrl.u32 %v6013, 7
      %v6015 = vsub.s32 %v6012, %v6014
      %v6016 = vrot.slane %v5988, %v6015
      %6017 = vrot.lane.b32.xlu0 %v5995, 64
      %v6018 = vpop.permute.xlu0 %6017
      %6019 = vrot.lane.b32.xlu0 %v6002, 64
      %v6020 = vpop.permute.xlu0 %6019
      %6021 = vrot.lane.b32.xlu0 %v6009, 64
      %v6022 = vpop.permute.xlu0 %6021
      %6023 = vrot.lane.b32.xlu0 %v6016, 64
      %v6024 = vpop.permute.xlu0 %6023
      %s6029 = scalar_lea.vmem [#allocation3], 48
      %6030 = vst.msk [vmem:[%s6029 + $0x4] sm:$0x3] %vm5786, %v6018
      %6031 = vst.msk [vmem:[%s6029 + $0x14] sm:$0x3] %vm5786, %v6020
      %6032 = vst.msk [vmem:[%s6029 + $0x34] sm:$0x3] %vm5786, %v6022
      %6033 = vst.msk [vmem:[%s6029 + $0x44] sm:$0x3] %vm5786, %v6024
      %v6035 = vcombine.high %v5717, %v5717
      %v6037 = vunpack.c.l.s4 1983009808
      %v6038 = vunpack.c.0.s8 %v6037
      %v6039 = vlaneseq
      %v6040 = vshrl.u32 %v6039, 7
      %v6041 = vsub.s32 %v6038, %v6040
      %v6042 = vrot.slane %v5717, %v6041
      %v6044 = vunpack.c.l.s4 1983009808
      %v6045 = vunpack.c.0.s8 %v6044
      %v6046 = vlaneseq
      %v6047 = vshrl.u32 %v6046, 7
      %v6048 = vsub.s32 %v6045, %v6047
      %v6049 = vrot.slane %v6035, %v6048
      %v6050 = vcombine.high %v6042, %v6042
      %v6051 = vcombine.high %v6049, %v6049
      %v6053 = vunpack.c.l.s4 1983009808
      %v6054 = vunpack.c.0.s8 %v6053
      %v6055 = vlaneseq
      %v6056 = vshrl.u32 %v6055, 7
      %v6057 = vsub.s32 %v6054, %v6056
      %v6058 = vrot.slane %v6042, %v6057
      %v6060 = vunpack.c.l.s4 1983009808
      %v6061 = vunpack.c.0.s8 %v6060
      %v6062 = vlaneseq
      %v6063 = vshrl.u32 %v6062, 7
      %v6064 = vsub.s32 %v6061, %v6063
      %v6065 = vrot.slane %v6050, %v6064
      %v6067 = vunpack.c.l.s4 1983009808
      %v6068 = vunpack.c.0.s8 %v6067
      %v6069 = vlaneseq
      %v6070 = vshrl.u32 %v6069, 7
      %v6071 = vsub.s32 %v6068, %v6070
      %v6072 = vrot.slane %v6049, %v6071
      %v6074 = vunpack.c.l.s4 1983009808
      %v6075 = vunpack.c.0.s8 %v6074
      %v6076 = vlaneseq
      %v6077 = vshrl.u32 %v6076, 7
      %v6078 = vsub.s32 %v6075, %v6077
      %v6079 = vrot.slane %v6051, %v6078
      %v6080 = vrot.slane %v6058, 7
      %v6081 = vrot.slane %v6065, 7
      %v6082 = vrot.slane %v6072, 7
      %v6083 = vrot.slane %v6079, 7
      %6088 = vst.msk [vmem:[%s6029 + $0x4] sm:$0x6] %vm5845, %v6080
      %6089 = vst.msk [vmem:[%s6029 + $0x14] sm:$0x6] %vm5845, %v6081
      %6090 = vst.msk [vmem:[%s6029 + $0x34] sm:$0x6] %vm5845, %v6082
      %6091 = vst.msk [vmem:[%s6029 + $0x44] sm:$0x6] %vm5845, %v6083
      %v6093 = vcombine.high %v5722, %v5722
      %v6095 = vunpack.c.l.s4 1983009808
      %v6096 = vunpack.c.0.s8 %v6095
      %v6097 = vlaneseq
      %v6098 = vshrl.u32 %v6097, 7
      %v6099 = vsub.s32 %v6096, %v6098
      %v6100 = vrot.slane %v5722, %v6099
      %v6102 = vunpack.c.l.s4 1983009808
      %v6103 = vunpack.c.0.s8 %v6102
      %v6104 = vlaneseq
      %v6105 = vshrl.u32 %v6104, 7
      %v6106 = vsub.s32 %v6103, %v6105
      %v6107 = vrot.slane %v6093, %v6106
      %v6108 = vcombine.high %v6100, %v6100
      %v6109 = vcombine.high %v6107, %v6107
      %v6111 = vunpack.c.l.s4 1983009808
      %v6112 = vunpack.c.0.s8 %v6111
      %v6113 = vlaneseq
      %v6114 = vshrl.u32 %v6113, 7
      %v6115 = vsub.s32 %v6112, %v6114
      %v6116 = vrot.slane %v6100, %v6115
      %v6118 = vunpack.c.l.s4 1983009808
      %v6119 = vunpack.c.0.s8 %v6118
      %v6120 = vlaneseq
      %v6121 = vshrl.u32 %v6120, 7
      %v6122 = vsub.s32 %v6119, %v6121
      %v6123 = vrot.slane %v6108, %v6122
      %v6125 = vunpack.c.l.s4 1983009808
      %v6126 = vunpack.c.0.s8 %v6125
      %v6127 = vlaneseq
      %v6128 = vshrl.u32 %v6127, 7
      %v6129 = vsub.s32 %v6126, %v6128
      %v6130 = vrot.slane %v6107, %v6129
      %v6132 = vunpack.c.l.s4 1983009808
      %v6133 = vunpack.c.0.s8 %v6132
      %v6134 = vlaneseq
      %v6135 = vshrl.u32 %v6134, 7
      %v6136 = vsub.s32 %v6133, %v6135
      %v6137 = vrot.slane %v6109, %v6136
      %6138 = vrot.lane.b32.xlu0 %v6116, 64
      %v6139 = vpop.permute.xlu0 %6138
      %6140 = vrot.lane.b32.xlu0 %v6123, 64
      %v6141 = vpop.permute.xlu0 %6140
      %6142 = vrot.lane.b32.xlu0 %v6130, 64
      %v6143 = vpop.permute.xlu0 %6142
      %6144 = vrot.lane.b32.xlu0 %v6137, 64
      %v6145 = vpop.permute.xlu0 %6144
      %s6150 = scalar_lea.vmem [#allocation3], 64
      %6151 = vst.msk [vmem:[%s6150] sm:$0x3] %vm5786, %v6139
      %6152 = vst.msk [vmem:[%s6150 + $0x10] sm:$0x3] %vm5786, %v6141
      %6153 = vst.msk [vmem:[%s6150 + $0x30] sm:$0x3] %vm5786, %v6143
      %6154 = vst.msk [vmem:[%s6150 + $0x40] sm:$0x3] %vm5786, %v6145
      %v6156 = vcombine.high %v5725, %v5725
      %v6158 = vunpack.c.l.s4 1983009808
      %v6159 = vunpack.c.0.s8 %v6158
      %v6160 = vlaneseq
      %v6161 = vshrl.u32 %v6160, 7
      %v6162 = vsub.s32 %v6159, %v6161
      %v6163 = vrot.slane %v5725, %v6162
      %v6165 = vunpack.c.l.s4 1983009808
      %v6166 = vunpack.c.0.s8 %v6165
      %v6167 = vlaneseq
      %v6168 = vshrl.u32 %v6167, 7
      %v6169 = vsub.s32 %v6166, %v6168
      %v6170 = vrot.slane %v6156, %v6169
      %v6171 = vcombine.high %v6163, %v6163
      %v6172 = vcombine.high %v6170, %v6170
      %v6174 = vunpack.c.l.s4 1983009808
      %v6175 = vunpack.c.0.s8 %v6174
      %v6176 = vlaneseq
      %v6177 = vshrl.u32 %v6176, 7
      %v6178 = vsub.s32 %v6175, %v6177
      %v6179 = vrot.slane %v6163, %v6178
      %v6181 = vunpack.c.l.s4 1983009808
      %v6182 = vunpack.c.0.s8 %v6181
      %v6183 = vlaneseq
      %v6184 = vshrl.u32 %v6183, 7
      %v6185 = vsub.s32 %v6182, %v6184
      %v6186 = vrot.slane %v6171, %v6185
      %v6188 = vunpack.c.l.s4 1983009808
      %v6189 = vunpack.c.0.s8 %v6188
      %v6190 = vlaneseq
      %v6191 = vshrl.u32 %v6190, 7
      %v6192 = vsub.s32 %v6189, %v6191
      %v6193 = vrot.slane %v6170, %v6192
      %v6195 = vunpack.c.l.s4 1983009808
      %v6196 = vunpack.c.0.s8 %v6195
      %v6197 = vlaneseq
      %v6198 = vshrl.u32 %v6197, 7
      %v6199 = vsub.s32 %v6196, %v6198
      %v6200 = vrot.slane %v6172, %v6199
      %v6201 = vrot.slane %v6179, 7
      %v6202 = vrot.slane %v6186, 7
      %v6203 = vrot.slane %v6193, 7
      %v6204 = vrot.slane %v6200, 7
      %6209 = vst.msk [vmem:[%s6150] sm:$0x6] %vm5845, %v6201
      %6210 = vst.msk [vmem:[%s6150 + $0x10] sm:$0x6] %vm5845, %v6202
      %6211 = vst.msk [vmem:[%s6150 + $0x30] sm:$0x6] %vm5845, %v6203
      %6212 = vst.msk [vmem:[%s6150 + $0x40] sm:$0x6] %vm5845, %v6204
      %v6213 = vld [vmem:[#allocation3] sm:$0x77]
      %v6214 = vld [vmem:[#allocation3 + $0x8] sm:$0x77]
      %v6215 = vld [vmem:[#allocation3 + $0x10] sm:$0x77]
      %v6216 = vld [vmem:[#allocation3 + $0x18] sm:$0x77]
      %v6217 = vld [vmem:[#allocation3 + $0x20] sm:$0x77]
      %v6218 = vld [vmem:[#allocation3 + $0x28] sm:$0x77]
      %v6219 = vld [vmem:[#allocation3 + $0x30] sm:$0x77]
      %v6220 = vld [vmem:[#allocation3 + $0x38] sm:$0x77]
      %v6221 = vld [vmem:[#allocation3 + $0x40] sm:$0x77]
      %v6222 = vld [vmem:[#allocation3 + $0x48] sm:$0x77]
      %v6223 = vld [vmem:[#allocation3 + $0x50] sm:$0x77]
      %v6224 = vld [vmem:[#allocation3 + $0x58] sm:$0x77]
      %v6225 = vld [vmem:[#allocation3 + $0x60] sm:$0x77]
      %v6226 = vld [vmem:[#allocation3 + $0x68] sm:$0x77]
      %v6227 = vld [vmem:[#allocation3 + $0x70] sm:$0x77]
      %v6228 = vld [vmem:[#allocation3 + $0x78] sm:$0x77]
      %v6229 = vld [vmem:[#allocation3 + $0x80] sm:$0x77]
      %v6230 = vld [vmem:[#allocation3 + $0x88] sm:$0x77]
      %v6249 = vcombine.high %v6213, %v6213
      %v6250 = vcombine.high %v6214, %v6214
      %v6251 = vcombine.high %v6215, %v6215
      %v6252 = vcombine.high %v6216, %v6216
      %v6253 = vcombine.high %v6217, %v6217
      %v6254 = vcombine.high %v6218, %v6218
      %v6255 = vcombine.high %v6219, %v6219
      %v6256 = vcombine.high %v6220, %v6220
      %v6257 = vcombine.high %v6221, %v6221
      %v6258 = vcombine.high %v6222, %v6222
      %v6259 = vcombine.high %v6223, %v6223
      %v6260 = vcombine.high %v6224, %v6224
      %v6261 = vcombine.high %v6225, %v6225
      %v6262 = vcombine.high %v6226, %v6226
      %v6263 = vcombine.high %v6227, %v6227
      %v6264 = vcombine.high %v6228, %v6228
      %v6265 = vcombine.high %v6229, %v6229
      %v6266 = vcombine.high %v6230, %v6230
      %v6285 = vpack.c.bf16 %v6213, %v6213
      %v6286 = vpack.c.bf16 %v6249, %v6249
      %v6287 = vpack.c.bf16 %v6214, %v6214
      %v6288 = vpack.c.bf16 %v6250, %v6250
      %v6289 = vpack.c.bf16 %v6215, %v6215
      %v6290 = vpack.c.bf16 %v6251, %v6251
      %v6291 = vpack.c.bf16 %v6216, %v6216
      %v6292 = vpack.c.bf16 %v6252, %v6252
      %v6293 = vpack.c.bf16 %v6217, %v6217
      %v6294 = vpack.c.bf16 %v6253, %v6253
      %v6295 = vpack.c.bf16 %v6218, %v6218
      %v6296 = vpack.c.bf16 %v6254, %v6254
      %v6297 = vpack.c.bf16 %v6219, %v6219
      %v6298 = vpack.c.bf16 %v6255, %v6255
      %v6299 = vpack.c.bf16 %v6220, %v6220
      %v6300 = vpack.c.bf16 %v6256, %v6256
      %v6301 = vpack.c.bf16 %v6221, %v6221
      %v6302 = vpack.c.bf16 %v6257, %v6257
      %v6303 = vpack.c.bf16 %v6222, %v6222
      %v6304 = vpack.c.bf16 %v6258, %v6258
      %v6305 = vpack.c.bf16 %v6223, %v6223
      %v6306 = vpack.c.bf16 %v6259, %v6259
      %v6307 = vpack.c.bf16 %v6224, %v6224
      %v6308 = vpack.c.bf16 %v6260, %v6260
      %v6309 = vpack.c.bf16 %v6225, %v6225
      %v6310 = vpack.c.bf16 %v6261, %v6261
      %v6311 = vpack.c.bf16 %v6226, %v6226
      %v6312 = vpack.c.bf16 %v6262, %v6262
      %v6313 = vpack.c.bf16 %v6227, %v6227
      %v6314 = vpack.c.bf16 %v6263, %v6263
      %v6315 = vpack.c.bf16 %v6228, %v6228
      %v6316 = vpack.c.bf16 %v6264, %v6264
      %v6317 = vpack.c.bf16 %v6229, %v6229
      %v6318 = vpack.c.bf16 %v6265, %v6265
      %v6319 = vpack.c.bf16 %v6230, %v6230
      %v6320 = vpack.c.bf16 %v6266, %v6266
      %v6337 = vcombine.low %v6285, %v6286
      %v6338 = vcombine.low %v6287, %v6288
      %v6340 = vunpack.c.l.s4 1966171168
      %v6341 = vunpack.c.0.s8 %v6340
      %v6342 = vlaneseq
      %v6343 = vshrl.u32 %v6342, 7
      %v6344 = vsub.s32 %v6341, %v6343
      %v6345 = vrot.slane %v6337, %v6344
      %v6347 = vunpack.c.l.s4 1966171168
      %v6348 = vunpack.c.0.s8 %v6347
      %v6349 = vlaneseq
      %v6350 = vshrl.u32 %v6349, 7
      %v6351 = vsub.s32 %v6348, %v6350
      %v6352 = vrot.slane %v6338, %v6351
      %v6353 = vcombine.low %v6345, %v6352
      %v6355 = vunpack.c.l.s4 1966171168
      %v6356 = vunpack.c.0.s8 %v6355
      %v6357 = vlaneseq
      %v6358 = vshrl.u32 %v6357, 7
      %v6359 = vsub.s32 %v6356, %v6358
      %v6360 = vrot.slane %v6353, %v6359
      %v6361 = vcombine.low %v6289, %v6290
      %v6362 = vcombine.low %v6291, %v6292
      %v6364 = vunpack.c.l.s4 1966171168
      %v6365 = vunpack.c.0.s8 %v6364
      %v6366 = vlaneseq
      %v6367 = vshrl.u32 %v6366, 7
      %v6368 = vsub.s32 %v6365, %v6367
      %v6369 = vrot.slane %v6361, %v6368
      %v6371 = vunpack.c.l.s4 1966171168
      %v6372 = vunpack.c.0.s8 %v6371
      %v6373 = vlaneseq
      %v6374 = vshrl.u32 %v6373, 7
      %v6375 = vsub.s32 %v6372, %v6374
      %v6376 = vrot.slane %v6362, %v6375
      %v6377 = vcombine.low %v6369, %v6376
      %v6379 = vunpack.c.l.s4 1966171168
      %v6380 = vunpack.c.0.s8 %v6379
      %v6381 = vlaneseq
      %v6382 = vshrl.u32 %v6381, 7
      %v6383 = vsub.s32 %v6380, %v6382
      %v6384 = vrot.slane %v6377, %v6383
      %v6385 = vcombine.low %v6297, %v6298
      %v6386 = vcombine.low %v6299, %v6300
      %v6388 = vunpack.c.l.s4 1966171168
      %v6389 = vunpack.c.0.s8 %v6388
      %v6390 = vlaneseq
      %v6391 = vshrl.u32 %v6390, 7
      %v6392 = vsub.s32 %v6389, %v6391
      %v6393 = vrot.slane %v6385, %v6392
      %v6395 = vunpack.c.l.s4 1966171168
      %v6396 = vunpack.c.0.s8 %v6395
      %v6397 = vlaneseq
      %v6398 = vshrl.u32 %v6397, 7
      %v6399 = vsub.s32 %v6396, %v6398
      %v6400 = vrot.slane %v6386, %v6399
      %v6401 = vcombine.low %v6393, %v6400
      %v6403 = vunpack.c.l.s4 1966171168
      %v6404 = vunpack.c.0.s8 %v6403
      %v6405 = vlaneseq
      %v6406 = vshrl.u32 %v6405, 7
      %v6407 = vsub.s32 %v6404, %v6406
      %v6408 = vrot.slane %v6401, %v6407
      %v6409 = vcombine.low %v6301, %v6302
      %v6410 = vcombine.low %v6303, %v6304
      %v6412 = vunpack.c.l.s4 1966171168
      %v6413 = vunpack.c.0.s8 %v6412
      %v6414 = vlaneseq
      %v6415 = vshrl.u32 %v6414, 7
      %v6416 = vsub.s32 %v6413, %v6415
      %v6417 = vrot.slane %v6409, %v6416
      %v6419 = vunpack.c.l.s4 1966171168
      %v6420 = vunpack.c.0.s8 %v6419
      %v6421 = vlaneseq
      %v6422 = vshrl.u32 %v6421, 7
      %v6423 = vsub.s32 %v6420, %v6422
      %v6424 = vrot.slane %v6410, %v6423
      %v6425 = vcombine.low %v6417, %v6424
      %v6427 = vunpack.c.l.s4 1966171168
      %v6428 = vunpack.c.0.s8 %v6427
      %v6429 = vlaneseq
      %v6430 = vshrl.u32 %v6429, 7
      %v6431 = vsub.s32 %v6428, %v6430
      %v6432 = vrot.slane %v6425, %v6431
      %v6433 = vld [vmem:[%s6] sm:$0xf]
      %v6434 = vld [vmem:[%s6 + $0x4] sm:$0xf]
      %v6435 = vld [vmem:[%s6 + $0x8] sm:$0xf]
      %v6436 = vld [vmem:[%s6 + $0xc] sm:$0xf]
      %v6437 = vld [vmem:[%s6 + $0x10] sm:$0xf]
      %v6438 = vld [vmem:[%s6 + $0x14] sm:$0xf]
      %v6439 = vld [vmem:[%s6 + $0x18] sm:$0xf]
      %v6440 = vld [vmem:[%s6 + $0x1c] sm:$0xf]
      %v6441 = vld [vmem:[%s6 + $0x20] sm:$0xf]
      %v6442 = vld [vmem:[%s6 + $0x24] sm:$0xf]
      %v6443 = vld [vmem:[%s6 + $0x28] sm:$0xf]
      %v6444 = vld [vmem:[%s6 + $0x2c] sm:$0xf]
      %v6445 = vld [vmem:[%s6 + $0x30] sm:$0xf]
      %v6446 = vld [vmem:[%s6 + $0x34] sm:$0xf]
      %v6447 = vld [vmem:[%s6 + $0x38] sm:$0xf]
      %v6448 = vld [vmem:[%s6 + $0x3c] sm:$0xf]
      %v6449 = vld [vmem:[%s6 + $0x40] sm:$0xf]
      %v6450 = vld [vmem:[%s6 + $0x44] sm:$0xf]
      %v6451 = vld [vmem:[%s6 + $0x48] sm:$0xf]
      %v6452 = vld [vmem:[%s6 + $0x4c] sm:$0xf]
      %v6453 = vld [vmem:[%s6 + $0x50] sm:$0xf]
      %v6454 = vld [vmem:[%s6 + $0x54] sm:$0xf]
      %v6455 = vld [vmem:[%s6 + $0x58] sm:$0xf]
      %v6456 = vld [vmem:[%s6 + $0x5c] sm:$0xf]
      %v6457 = vld [vmem:[%s6 + $0x60] sm:$0xf]
      %v6458 = vld [vmem:[%s6 + $0x64] sm:$0xf]
      %v6459 = vld [vmem:[%s6 + $0x68] sm:$0xf]
      %v6460 = vld [vmem:[%s6 + $0x6c] sm:$0xf]
      %v6461 = vld [vmem:[%s6 + $0x70] sm:$0xf]
      %v6462 = vld [vmem:[%s6 + $0x74] sm:$0xf]
      %v6463 = vld [vmem:[%s6 + $0x78] sm:$0xf]
      %v6464 = vld [vmem:[%s6 + $0x7c] sm:$0xf]
      %v6465 = vld [vmem:[%s6 + $0x80] sm:$0xf]
      %v6466 = vld [vmem:[%s6 + $0x84] sm:$0xf]
      %v6467 = vld [vmem:[%s6 + $0x88] sm:$0xf]
      %v6468 = vld [vmem:[%s6 + $0x8c] sm:$0xf]
      %v6469 = vld [vmem:[%s6 + $0x90] sm:$0xf]
      %v6470 = vld [vmem:[%s6 + $0x94] sm:$0xf]
      %v6471 = vld [vmem:[%s6 + $0x98] sm:$0xf]
      %v6472 = vld [vmem:[%s6 + $0x9c] sm:$0xf]
      %v6473 = vld [vmem:[%s6 + $0xa0] sm:$0xf]
      %v6474 = vld [vmem:[%s6 + $0xa4] sm:$0xf]
      %v6475 = vld [vmem:[%s6 + $0xa8] sm:$0xf]
      %v6476 = vld [vmem:[%s6 + $0xac] sm:$0xf]
      %v6477 = vld [vmem:[%s6 + $0xb0] sm:$0xf]
      %v6478 = vld [vmem:[%s6 + $0xb4] sm:$0xf]
      %v6479 = vld [vmem:[%s6 + $0xb8] sm:$0xf]
      %v6480 = vld [vmem:[%s6 + $0xbc] sm:$0xf]
      %v6481 = vld [vmem:[%s6 + $0xc0] sm:$0xf]
      %v6482 = vld [vmem:[%s6 + $0xc4] sm:$0xf]
      %v6483 = vld [vmem:[%s6 + $0xc8] sm:$0xf]
      %v6484 = vld [vmem:[%s6 + $0xcc] sm:$0xf]
      %v6485 = vld [vmem:[%s6 + $0xd0] sm:$0xf]
      %v6486 = vld [vmem:[%s6 + $0xd4] sm:$0xf]
      %v6487 = vld [vmem:[%s6 + $0xd8] sm:$0xf]
      %v6488 = vld [vmem:[%s6 + $0xdc] sm:$0xf]
      %v6489 = vld [vmem:[%s6 + $0xe0] sm:$0xf]
      %v6490 = vld [vmem:[%s6 + $0xe4] sm:$0xf]
      %v6491 = vld [vmem:[%s6 + $0xe8] sm:$0xf]
      %v6492 = vld [vmem:[%s6 + $0xec] sm:$0xf]
      %v6493 = vld [vmem:[%s6 + $0xf0] sm:$0xf]
      %v6494 = vld [vmem:[%s6 + $0xf4] sm:$0xf]
      %v6495 = vld [vmem:[%s6 + $0xf8] sm:$0xf]
      %v6496 = vld [vmem:[%s6 + $0xfc] sm:$0xf]
      %v6497 = vcombine.high %v6345, %v6352
      %v6499 = vunpack.c.l.s4 1966171168
      %v6500 = vunpack.c.0.s8 %v6499
      %v6501 = vlaneseq
      %v6502 = vshrl.u32 %v6501, 7
      %v6503 = vsub.s32 %v6500, %v6502
      %v6504 = vrot.slane %v6497, %v6503
      %v6505 = vcombine.high %v6369, %v6376
      %v6507 = vunpack.c.l.s4 1966171168
      %v6508 = vunpack.c.0.s8 %v6507
      %v6509 = vlaneseq
      %v6510 = vshrl.u32 %v6509, 7
      %v6511 = vsub.s32 %v6508, %v6510
      %v6512 = vrot.slane %v6505, %v6511
      %v6513 = vcombine.high %v6393, %v6400
      %v6515 = vunpack.c.l.s4 1966171168
      %v6516 = vunpack.c.0.s8 %v6515
      %v6517 = vlaneseq
      %v6518 = vshrl.u32 %v6517, 7
      %v6519 = vsub.s32 %v6516, %v6518
      %v6520 = vrot.slane %v6513, %v6519
      %v6521 = vcombine.high %v6417, %v6424
      %v6523 = vunpack.c.l.s4 1966171168
      %v6524 = vunpack.c.0.s8 %v6523
      %v6525 = vlaneseq
      %v6526 = vshrl.u32 %v6525, 7
      %v6527 = vsub.s32 %v6524, %v6526
      %v6528 = vrot.slane %v6521, %v6527
      %vm6529 = vsmask.f32 256
      %vm6530 = vsmask.f32 1284
      %vm6531 = vmor %vm6529, %vm6530
      %vm6532 = vsmask.f32 2312
      %vm6533 = vmor %vm6531, %vm6532
      %vm6534 = vsmask.f32 3340
      %vm6535 = vmor %vm6533, %vm6534
      %vm6536 = vsmask.f32 4368
      %vm6537 = vmor %vm6535, %vm6536
      %vm6538 = vsmask.f32 5396
      %vm6539 = vmor %vm6537, %vm6538
      %vm6540 = vsmask.f32 6424
      %vm6541 = vmor %vm6539, %vm6540
      %vm6542 = vsmask.f32 7452
      %vm6543 = vmor %vm6541, %vm6542
      %v6545 = vshrl.u32 %v6360, 16
      %v6547 = vrot.slane %v6545, 7
      %v6548 = vrot.slane %v6547, 1
      %v6550 = vshll.u32 %v6504, 16
      %v6552 = vsel %vm6543, %v6548, %v6550
      %v6554 = vshrl.u32 %v6384, 16
      %v6556 = vrot.slane %v6554, 7
      %v6557 = vrot.slane %v6556, 1
      %v6559 = vshll.u32 %v6512, 16
      %v6561 = vsel %vm6543, %v6557, %v6559
      %v6563 = vshrl.u32 %v6408, 16
      %v6565 = vrot.slane %v6563, 7
      %v6566 = vrot.slane %v6565, 1
      %v6568 = vshll.u32 %v6520, 16
      %v6570 = vsel %vm6543, %v6566, %v6568
      %v6572 = vshrl.u32 %v6432, 16
      %v6574 = vrot.slane %v6572, 7
      %v6575 = vrot.slane %v6574, 1
      %v6577 = vshll.u32 %v6528, 16
      %v6579 = vsel %vm6543, %v6575, %v6577
      %s6580 = scalar_lea.vmem %s6, 256
      %v6581 = vld [vmem:[%s6580] sm:$0xf]
      %v6582 = vld [vmem:[%s6580 + $0x4] sm:$0xf]
      %v6583 = vld [vmem:[%s6580 + $0x8] sm:$0xf]
      %v6584 = vld [vmem:[%s6580 + $0xc] sm:$0xf]
      %v6585 = vld [vmem:[%s6580 + $0x10] sm:$0xf]
      %v6586 = vld [vmem:[%s6580 + $0x14] sm:$0xf]
      %v6587 = vld [vmem:[%s6580 + $0x18] sm:$0xf]
      %v6588 = vld [vmem:[%s6580 + $0x1c] sm:$0xf]
      %v6589 = vld [vmem:[%s6580 + $0x20] sm:$0xf]
      %v6590 = vld [vmem:[%s6580 + $0x24] sm:$0xf]
      %v6591 = vld [vmem:[%s6580 + $0x28] sm:$0xf]
      %v6592 = vld [vmem:[%s6580 + $0x2c] sm:$0xf]
      %v6593 = vld [vmem:[%s6580 + $0x30] sm:$0xf]
      %v6594 = vld [vmem:[%s6580 + $0x34] sm:$0xf]
      %v6595 = vld [vmem:[%s6580 + $0x38] sm:$0xf]
      %v6596 = vld [vmem:[%s6580 + $0x3c] sm:$0xf]
      %v6597 = vld [vmem:[%s6580 + $0x40] sm:$0xf]
      %v6598 = vld [vmem:[%s6580 + $0x44] sm:$0xf]
      %v6599 = vld [vmem:[%s6580 + $0x48] sm:$0xf]
      %v6600 = vld [vmem:[%s6580 + $0x4c] sm:$0xf]
      %v6601 = vld [vmem:[%s6580 + $0x50] sm:$0xf]
      %v6602 = vld [vmem:[%s6580 + $0x54] sm:$0xf]
      %v6603 = vld [vmem:[%s6580 + $0x58] sm:$0xf]
      %v6604 = vld [vmem:[%s6580 + $0x5c] sm:$0xf]
      %v6605 = vld [vmem:[%s6580 + $0x60] sm:$0xf]
      %v6606 = vld [vmem:[%s6580 + $0x64] sm:$0xf]
      %v6607 = vld [vmem:[%s6580 + $0x68] sm:$0xf]
      %v6608 = vld [vmem:[%s6580 + $0x6c] sm:$0xf]
      %v6609 = vld [vmem:[%s6580 + $0x70] sm:$0xf]
      %v6610 = vld [vmem:[%s6580 + $0x74] sm:$0xf]
      %v6611 = vld [vmem:[%s6580 + $0x78] sm:$0xf]
      %v6612 = vld [vmem:[%s6580 + $0x7c] sm:$0xf]
      %v6613 = vld [vmem:[%s6580 + $0x80] sm:$0xf]
      %v6614 = vld [vmem:[%s6580 + $0x84] sm:$0xf]
      %v6615 = vld [vmem:[%s6580 + $0x88] sm:$0xf]
      %v6616 = vld [vmem:[%s6580 + $0x8c] sm:$0xf]
      %v6617 = vld [vmem:[%s6580 + $0x90] sm:$0xf]
      %v6618 = vld [vmem:[%s6580 + $0x94] sm:$0xf]
      %v6619 = vld [vmem:[%s6580 + $0x98] sm:$0xf]
      %v6620 = vld [vmem:[%s6580 + $0x9c] sm:$0xf]
      %v6621 = vld [vmem:[%s6580 + $0xa0] sm:$0xf]
      %v6622 = vld [vmem:[%s6580 + $0xa4] sm:$0xf]
      %v6623 = vld [vmem:[%s6580 + $0xa8] sm:$0xf]
      %v6624 = vld [vmem:[%s6580 + $0xac] sm:$0xf]
      %v6625 = vld [vmem:[%s6580 + $0xb0] sm:$0xf]
      %v6626 = vld [vmem:[%s6580 + $0xb4] sm:$0xf]
      %v6627 = vld [vmem:[%s6580 + $0xb8] sm:$0xf]
      %v6628 = vld [vmem:[%s6580 + $0xbc] sm:$0xf]
      %v6629 = vld [vmem:[%s6580 + $0xc0] sm:$0xf]
      %v6630 = vld [vmem:[%s6580 + $0xc4] sm:$0xf]
      %v6631 = vld [vmem:[%s6580 + $0xc8] sm:$0xf]
      %v6632 = vld [vmem:[%s6580 + $0xcc] sm:$0xf]
      %v6633 = vld [vmem:[%s6580 + $0xd0] sm:$0xf]
      %v6634 = vld [vmem:[%s6580 + $0xd4] sm:$0xf]
      %v6635 = vld [vmem:[%s6580 + $0xd8] sm:$0xf]
      %v6636 = vld [vmem:[%s6580 + $0xdc] sm:$0xf]
      %v6637 = vld [vmem:[%s6580 + $0xe0] sm:$0xf]
      %v6638 = vld [vmem:[%s6580 + $0xe4] sm:$0xf]
      %v6639 = vld [vmem:[%s6580 + $0xe8] sm:$0xf]
      %v6640 = vld [vmem:[%s6580 + $0xec] sm:$0xf]
      %v6641 = vld [vmem:[%s6580 + $0xf0] sm:$0xf]
      %v6642 = vld [vmem:[%s6580 + $0xf4] sm:$0xf]
      %v6643 = vld [vmem:[%s6580 + $0xf8] sm:$0xf]
      %v6644 = vld [vmem:[%s6580 + $0xfc] sm:$0xf]
      %v6645 = vcombine.low %v6552, %v6561
      %v6646 = vcombine.low %v6570, %v6579
      %v6648 = vunpack.c.l.s4 1966171168
      %v6649 = vunpack.c.0.s8 %v6648
      %v6650 = vlaneseq
      %v6651 = vshrl.u32 %v6650, 7
      %v6652 = vsub.s32 %v6649, %v6651
      %v6653 = vrot.slane %v6645, %v6652
      %v6655 = vunpack.c.l.s4 1966171168
      %v6656 = vunpack.c.0.s8 %v6655
      %v6657 = vlaneseq
      %v6658 = vshrl.u32 %v6657, 7
      %v6659 = vsub.s32 %v6656, %v6658
      %v6660 = vrot.slane %v6646, %v6659
      %v6661 = vcombine.low %v6653, %v6660
      %v6662 = vcombine.high %v6653, %v6660
      %v6664 = vunpack.c.l.s4 1966171168
      %v6665 = vunpack.c.0.s8 %v6664
      %v6666 = vlaneseq
      %v6667 = vshrl.u32 %v6666, 7
      %v6668 = vsub.s32 %v6665, %v6667
      %v6669 = vrot.slane %v6661, %v6668
      %v6671 = vunpack.c.l.s4 1966171168
      %v6672 = vunpack.c.0.s8 %v6671
      %v6673 = vlaneseq
      %v6674 = vshrl.u32 %v6673, 7
      %v6675 = vsub.s32 %v6672, %v6674
      %v6676 = vrot.slane %v6662, %v6675
      %v6677 = vcombine.high %v6669, %v6669
      %v6678 = vcombine.high %v6676, %v6676
      %v6747 = vunpack.c.l.b16 %v6581
      %v6748 = vunpack.c.l.b16 %v6582
      %v6749 = vunpack.c.l.b16 %v6583
      %v6750 = vunpack.c.l.b16 %v6584
      %v6751 = vunpack.c.l.b16 %v6585
      %v6752 = vunpack.c.l.b16 %v6586
      %v6753 = vunpack.c.l.b16 %v6587
      %v6754 = vunpack.c.l.b16 %v6588
      %v6755 = vunpack.c.l.b16 %v6589
      %v6756 = vunpack.c.l.b16 %v6590
      %v6757 = vunpack.c.l.b16 %v6591
      %v6758 = vunpack.c.l.b16 %v6592
      %v6759 = vunpack.c.l.b16 %v6593
      %v6760 = vunpack.c.l.b16 %v6594
      %v6761 = vunpack.c.l.b16 %v6595
      %v6762 = vunpack.c.l.b16 %v6596
      %v6763 = vunpack.c.l.b16 %v6597
      %v6764 = vunpack.c.l.b16 %v6598
      %v6765 = vunpack.c.l.b16 %v6599
      %v6766 = vunpack.c.l.b16 %v6600
      %v6767 = vunpack.c.l.b16 %v6601
      %v6768 = vunpack.c.l.b16 %v6602
      %v6769 = vunpack.c.l.b16 %v6603
      %v6770 = vunpack.c.l.b16 %v6604
      %v6771 = vunpack.c.l.b16 %v6605
      %v6772 = vunpack.c.l.b16 %v6606
      %v6773 = vunpack.c.l.b16 %v6607
      %v6774 = vunpack.c.l.b16 %v6608
      %v6775 = vunpack.c.l.b16 %v6609
      %v6776 = vunpack.c.l.b16 %v6610
      %v6777 = vunpack.c.l.b16 %v6611
      %v6778 = vunpack.c.l.b16 %v6612
      %v6779 = vunpack.c.l.b16 %v6613
      %v6780 = vunpack.c.l.b16 %v6614
      %v6781 = vunpack.c.l.b16 %v6615
      %v6782 = vunpack.c.l.b16 %v6616
      %v6783 = vunpack.c.l.b16 %v6617
      %v6784 = vunpack.c.l.b16 %v6618
      %v6785 = vunpack.c.l.b16 %v6619
      %v6786 = vunpack.c.l.b16 %v6620
      %v6787 = vunpack.c.l.b16 %v6621
      %v6788 = vunpack.c.l.b16 %v6622
      %v6789 = vunpack.c.l.b16 %v6623
      %v6790 = vunpack.c.l.b16 %v6624
      %v6791 = vunpack.c.l.b16 %v6625
      %v6792 = vunpack.c.l.b16 %v6626
      %v6793 = vunpack.c.l.b16 %v6627
      %v6794 = vunpack.c.l.b16 %v6628
      %v6795 = vunpack.c.l.b16 %v6629
      %v6796 = vunpack.c.l.b16 %v6630
      %v6797 = vunpack.c.l.b16 %v6631
      %v6798 = vunpack.c.l.b16 %v6632
      %v6799 = vunpack.c.l.b16 %v6633
      %v6800 = vunpack.c.l.b16 %v6634
      %v6801 = vunpack.c.l.b16 %v6635
      %v6802 = vunpack.c.l.b16 %v6636
      %v6803 = vunpack.c.l.b16 %v6637
      %v6804 = vunpack.c.l.b16 %v6638
      %v6805 = vunpack.c.l.b16 %v6639
      %v6806 = vunpack.c.l.b16 %v6640
      %v6807 = vunpack.c.l.b16 %v6641
      %v6808 = vunpack.c.l.b16 %v6642
      %v6809 = vunpack.c.l.b16 %v6643
      %v6810 = vunpack.c.l.b16 %v6644
      %v6811 = vpack.c.b16 %v6748, %v6747
      %v6812 = vpack.c.b16 %v6750, %v6749
      %v6813 = vpack.c.b16 %v6752, %v6751
      %v6814 = vpack.c.b16 %v6754, %v6753
      %v6815 = vpack.c.b16 %v6756, %v6755
      %v6816 = vpack.c.b16 %v6758, %v6757
      %v6817 = vpack.c.b16 %v6760, %v6759
      %v6818 = vpack.c.b16 %v6762, %v6761
      %v6819 = vpack.c.b16 %v6764, %v6763
      %v6820 = vpack.c.b16 %v6766, %v6765
      %v6821 = vpack.c.b16 %v6768, %v6767
      %v6822 = vpack.c.b16 %v6770, %v6769
      %v6823 = vpack.c.b16 %v6772, %v6771
      %v6824 = vpack.c.b16 %v6774, %v6773
      %v6825 = vpack.c.b16 %v6776, %v6775
      %v6826 = vpack.c.b16 %v6778, %v6777
      %v6827 = vpack.c.b16 %v6780, %v6779
      %v6828 = vpack.c.b16 %v6782, %v6781
      %v6829 = vpack.c.b16 %v6784, %v6783
      %v6830 = vpack.c.b16 %v6786, %v6785
      %v6831 = vpack.c.b16 %v6788, %v6787
      %v6832 = vpack.c.b16 %v6790, %v6789
      %v6833 = vpack.c.b16 %v6792, %v6791
      %v6834 = vpack.c.b16 %v6794, %v6793
      %v6835 = vpack.c.b16 %v6796, %v6795
      %v6836 = vpack.c.b16 %v6798, %v6797
      %v6837 = vpack.c.b16 %v6800, %v6799
      %v6838 = vpack.c.b16 %v6802, %v6801
      %v6839 = vpack.c.b16 %v6804, %v6803
      %v6840 = vpack.c.b16 %v6806, %v6805
      %v6841 = vpack.c.b16 %v6808, %v6807
      %v6842 = vpack.c.b16 %v6810, %v6809
      %6875 = vmatprep.subr.bf16.mxu0 0
      %6876 = vmatpush1.bf16.msra.mxu0 %v6818
      %6877 = vmatprep.subr.bf16.mxu0 0
      %6878 = vmatpush1.bf16.msra.mxu0 %v6817
      %6879 = vmatprep.subr.bf16.mxu0 0
      %6880 = vmatpush1.bf16.msra.mxu0 %v6816
      %6881 = vmatprep.subr.bf16.mxu0 0
      %6882 = vmatpush1.bf16.msra.mxu0 %v6815
      %6883 = vmatprep.subr.bf16.mxu0 0
      %6884 = vmatpush1.bf16.msra.mxu0 %v6814
      %6885 = vmatprep.subr.bf16.mxu0 0
      %6886 = vmatpush1.bf16.msra.mxu0 %v6813
      %6887 = vmatprep.subr.bf16.mxu0 0
      %6888 = vmatpush1.bf16.msra.mxu0 %v6812
      %6889 = vmatprep.subr.bf16.mxu0 0
      %6890 = vmatpush1.bf16.msra.mxu0 %v6811
      %6891 = vmatprep.subr.bf16.mxu0 0
      %6892 = vmatpush2.bf16.msra.mxu0 %v6826
      %6893 = vmatprep.subr.bf16.mxu0 0
      %6894 = vmatpush2.bf16.msra.mxu0 %v6825
      %6895 = vmatprep.subr.bf16.mxu0 0
      %6896 = vmatpush2.bf16.msra.mxu0 %v6824
      %6897 = vmatprep.subr.bf16.mxu0 0
      %6898 = vmatpush2.bf16.msra.mxu0 %v6823
      %6899 = vmatprep.subr.bf16.mxu0 0
      %6900 = vmatpush2.bf16.msra.mxu0 %v6822
      %6901 = vmatprep.subr.bf16.mxu0 0
      %6902 = vmatpush2.bf16.msra.mxu0 %v6821
      %6903 = vmatprep.subr.bf16.mxu0 0
      %6904 = vmatpush2.bf16.msra.mxu0 %v6820
      %6905 = vmatprep.subr.bf16.mxu0 0
      %6906 = vmatpush2.bf16.msra.mxu0 %v6819
      %6907 = vmatprep.mubr.bf16.mxu0 %v6676
      %6908 = vmatmul.mubr.bf16.gmra.mxu0 %v6669
      %v6909 = vpop.f32.mrf.mxu0
      %v6910 = vadd.f32 0.0, %v6909
      %v6911 = vpop.f32.mrf.mxu0
      %v6912 = vpop.f32.mrf.mxu0
      %v6913 = vpop.f32.mrf.mxu0
      %6914 = vdwg.mxu0
      %6915 = vmatprep.subr.bf16.mxu0 0
      %6916 = vmatpush1.bf16.msra.mxu0 %v6834
      %6917 = vmatprep.subr.bf16.mxu0 0
      %6918 = vmatpush1.bf16.msra.mxu0 %v6833
      %6919 = vmatprep.subr.bf16.mxu0 0
      %6920 = vmatpush1.bf16.msra.mxu0 %v6832
      %6921 = vmatprep.subr.bf16.mxu0 0
      %6922 = vmatpush1.bf16.msra.mxu0 %v6831
      %6923 = vmatprep.subr.bf16.mxu0 0
      %6924 = vmatpush1.bf16.msra.mxu0 %v6830
      %6925 = vmatprep.subr.bf16.mxu0 0
      %6926 = vmatpush1.bf16.msra.mxu0 %v6829
      %6927 = vmatprep.subr.bf16.mxu0 0
      %6928 = vmatpush1.bf16.msra.mxu0 %v6828
      %6929 = vmatprep.subr.bf16.mxu0 0
      %6930 = vmatpush1.bf16.msra.mxu0 %v6827
      %6931 = vmatprep.subr.bf16.mxu0 0
      %6932 = vmatpush2.bf16.msra.mxu0 %v6842
      %6933 = vmatprep.subr.bf16.mxu0 0
      %6934 = vmatpush2.bf16.msra.mxu0 %v6841
      %6935 = vmatprep.subr.bf16.mxu0 0
      %6936 = vmatpush2.bf16.msra.mxu0 %v6840
      %6937 = vmatprep.subr.bf16.mxu0 0
      %6938 = vmatpush2.bf16.msra.mxu0 %v6839
      %6939 = vmatprep.subr.bf16.mxu0 0
      %6940 = vmatpush2.bf16.msra.mxu0 %v6838
      %6941 = vmatprep.subr.bf16.mxu0 0
      %6942 = vmatpush2.bf16.msra.mxu0 %v6837
      %6943 = vmatprep.subr.bf16.mxu0 0
      %6944 = vmatpush2.bf16.msra.mxu0 %v6836
      %6945 = vmatprep.subr.bf16.mxu0 0
      %6946 = vmatpush2.bf16.msra.mxu0 %v6835
      %6947 = vmatprep.mubr.bf16.mxu0 %v6678
      %6948 = vmatmul.mubr.bf16.gmra.mxu0 %v6677
      %v6949 = vpop.f32.mrf.mxu0
      %v6950 = vadd.f32 %v6910, %v6949
      %v6951 = vpop.f32.mrf.mxu0
      %v6952 = vpop.f32.mrf.mxu0
      %v6953 = vpop.f32.mrf.mxu0
      %6954 = vdwg.mxu0
      %v6955 = vcombine.low %v6360, %v6384
      %v6956 = vcombine.low %v6408, %v6432
      %v6958 = vunpack.c.l.s4 1966171168
      %v6959 = vunpack.c.0.s8 %v6958
      %v6960 = vlaneseq
      %v6961 = vshrl.u32 %v6960, 7
      %v6962 = vsub.s32 %v6959, %v6961
      %v6963 = vrot.slane %v6955, %v6962
      %v6965 = vunpack.c.l.s4 1966171168
      %v6966 = vunpack.c.0.s8 %v6965
      %v6967 = vlaneseq
      %v6968 = vshrl.u32 %v6967, 7
      %v6969 = vsub.s32 %v6966, %v6968
      %v6970 = vrot.slane %v6956, %v6969
      %v6971 = vcombine.low %v6963, %v6970
      %v6972 = vcombine.high %v6963, %v6970
      %v6974 = vunpack.c.l.s4 1966171168
      %v6975 = vunpack.c.0.s8 %v6974
      %v6976 = vlaneseq
      %v6977 = vshrl.u32 %v6976, 7
      %v6978 = vsub.s32 %v6975, %v6977
      %v6979 = vrot.slane %v6971, %v6978
      %v6981 = vunpack.c.l.s4 1966171168
      %v6982 = vunpack.c.0.s8 %v6981
      %v6983 = vlaneseq
      %v6984 = vshrl.u32 %v6983, 7
      %v6985 = vsub.s32 %v6982, %v6984
      %v6986 = vrot.slane %v6972, %v6985
      %v6987 = vcombine.high %v6979, %v6979
      %v6988 = vcombine.high %v6986, %v6986
      %v7057 = vunpack.c.l.b16 %v6433
      %v7058 = vunpack.c.l.b16 %v6434
      %v7059 = vunpack.c.l.b16 %v6435
      %v7060 = vunpack.c.l.b16 %v6436
      %v7061 = vunpack.c.l.b16 %v6437
      %v7062 = vunpack.c.l.b16 %v6438
      %v7063 = vunpack.c.l.b16 %v6439
      %v7064 = vunpack.c.l.b16 %v6440
      %v7065 = vunpack.c.l.b16 %v6441
      %v7066 = vunpack.c.l.b16 %v6442
      %v7067 = vunpack.c.l.b16 %v6443
      %v7068 = vunpack.c.l.b16 %v6444
      %v7069 = vunpack.c.l.b16 %v6445
      %v7070 = vunpack.c.l.b16 %v6446
      %v7071 = vunpack.c.l.b16 %v6447
      %v7072 = vunpack.c.l.b16 %v6448
      %v7073 = vunpack.c.l.b16 %v6449
      %v7074 = vunpack.c.l.b16 %v6450
      %v7075 = vunpack.c.l.b16 %v6451
      %v7076 = vunpack.c.l.b16 %v6452
      %v7077 = vunpack.c.l.b16 %v6453
      %v7078 = vunpack.c.l.b16 %v6454
      %v7079 = vunpack.c.l.b16 %v6455
      %v7080 = vunpack.c.l.b16 %v6456
      %v7081 = vunpack.c.l.b16 %v6457
      %v7082 = vunpack.c.l.b16 %v6458
      %v7083 = vunpack.c.l.b16 %v6459
      %v7084 = vunpack.c.l.b16 %v6460
      %v7085 = vunpack.c.l.b16 %v6461
      %v7086 = vunpack.c.l.b16 %v6462
      %v7087 = vunpack.c.l.b16 %v6463
      %v7088 = vunpack.c.l.b16 %v6464
      %v7089 = vunpack.c.l.b16 %v6465
      %v7090 = vunpack.c.l.b16 %v6466
      %v7091 = vunpack.c.l.b16 %v6467
      %v7092 = vunpack.c.l.b16 %v6468
      %v7093 = vunpack.c.l.b16 %v6469
      %v7094 = vunpack.c.l.b16 %v6470
      %v7095 = vunpack.c.l.b16 %v6471
      %v7096 = vunpack.c.l.b16 %v6472
      %v7097 = vunpack.c.l.b16 %v6473
      %v7098 = vunpack.c.l.b16 %v6474
      %v7099 = vunpack.c.l.b16 %v6475
      %v7100 = vunpack.c.l.b16 %v6476
      %v7101 = vunpack.c.l.b16 %v6477
      %v7102 = vunpack.c.l.b16 %v6478
      %v7103 = vunpack.c.l.b16 %v6479
      %v7104 = vunpack.c.l.b16 %v6480
      %v7105 = vunpack.c.l.b16 %v6481
      %v7106 = vunpack.c.l.b16 %v6482
      %v7107 = vunpack.c.l.b16 %v6483
      %v7108 = vunpack.c.l.b16 %v6484
      %v7109 = vunpack.c.l.b16 %v6485
      %v7110 = vunpack.c.l.b16 %v6486
      %v7111 = vunpack.c.l.b16 %v6487
      %v7112 = vunpack.c.l.b16 %v6488
      %v7113 = vunpack.c.l.b16 %v6489
      %v7114 = vunpack.c.l.b16 %v6490
      %v7115 = vunpack.c.l.b16 %v6491
      %v7116 = vunpack.c.l.b16 %v6492
      %v7117 = vunpack.c.l.b16 %v6493
      %v7118 = vunpack.c.l.b16 %v6494
      %v7119 = vunpack.c.l.b16 %v6495
      %v7120 = vunpack.c.l.b16 %v6496
      %v7121 = vpack.c.b16 %v7058, %v7057
      %v7122 = vpack.c.b16 %v7060, %v7059
      %v7123 = vpack.c.b16 %v7062, %v7061
      %v7124 = vpack.c.b16 %v7064, %v7063
      %v7125 = vpack.c.b16 %v7066, %v7065
      %v7126 = vpack.c.b16 %v7068, %v7067
      %v7127 = vpack.c.b16 %v7070, %v7069
      %v7128 = vpack.c.b16 %v7072, %v7071
      %v7129 = vpack.c.b16 %v7074, %v7073
      %v7130 = vpack.c.b16 %v7076, %v7075
      %v7131 = vpack.c.b16 %v7078, %v7077
      %v7132 = vpack.c.b16 %v7080, %v7079
      %v7133 = vpack.c.b16 %v7082, %v7081
      %v7134 = vpack.c.b16 %v7084, %v7083
      %v7135 = vpack.c.b16 %v7086, %v7085
      %v7136 = vpack.c.b16 %v7088, %v7087
      %v7137 = vpack.c.b16 %v7090, %v7089
      %v7138 = vpack.c.b16 %v7092, %v7091
      %v7139 = vpack.c.b16 %v7094, %v7093
      %v7140 = vpack.c.b16 %v7096, %v7095
      %v7141 = vpack.c.b16 %v7098, %v7097
      %v7142 = vpack.c.b16 %v7100, %v7099
      %v7143 = vpack.c.b16 %v7102, %v7101
      %v7144 = vpack.c.b16 %v7104, %v7103
      %v7145 = vpack.c.b16 %v7106, %v7105
      %v7146 = vpack.c.b16 %v7108, %v7107
      %v7147 = vpack.c.b16 %v7110, %v7109
      %v7148 = vpack.c.b16 %v7112, %v7111
      %v7149 = vpack.c.b16 %v7114, %v7113
      %v7150 = vpack.c.b16 %v7116, %v7115
      %v7151 = vpack.c.b16 %v7118, %v7117
      %v7152 = vpack.c.b16 %v7120, %v7119
      %7185 = vmatprep.subr.bf16.mxu0 0
      %7186 = vmatpush1.bf16.msra.mxu0 %v7128
      %7187 = vmatprep.subr.bf16.mxu0 0
      %7188 = vmatpush1.bf16.msra.mxu0 %v7127
      %7189 = vmatprep.subr.bf16.mxu0 0
      %7190 = vmatpush1.bf16.msra.mxu0 %v7126
      %7191 = vmatprep.subr.bf16.mxu0 0
      %7192 = vmatpush1.bf16.msra.mxu0 %v7125
      %7193 = vmatprep.subr.bf16.mxu0 0
      %7194 = vmatpush1.bf16.msra.mxu0 %v7124
      %7195 = vmatprep.subr.bf16.mxu0 0
      %7196 = vmatpush1.bf16.msra.mxu0 %v7123
      %7197 = vmatprep.subr.bf16.mxu0 0
      %7198 = vmatpush1.bf16.msra.mxu0 %v7122
      %7199 = vmatprep.subr.bf16.mxu0 0
      %7200 = vmatpush1.bf16.msra.mxu0 %v7121
      %7201 = vmatprep.subr.bf16.mxu0 0
      %7202 = vmatpush2.bf16.msra.mxu0 %v7136
      %7203 = vmatprep.subr.bf16.mxu0 0
      %7204 = vmatpush2.bf16.msra.mxu0 %v7135
      %7205 = vmatprep.subr.bf16.mxu0 0
      %7206 = vmatpush2.bf16.msra.mxu0 %v7134
      %7207 = vmatprep.subr.bf16.mxu0 0
      %7208 = vmatpush2.bf16.msra.mxu0 %v7133
      %7209 = vmatprep.subr.bf16.mxu0 0
      %7210 = vmatpush2.bf16.msra.mxu0 %v7132
      %7211 = vmatprep.subr.bf16.mxu0 0
      %7212 = vmatpush2.bf16.msra.mxu0 %v7131
      %7213 = vmatprep.subr.bf16.mxu0 0
      %7214 = vmatpush2.bf16.msra.mxu0 %v7130
      %7215 = vmatprep.subr.bf16.mxu0 0
      %7216 = vmatpush2.bf16.msra.mxu0 %v7129
      %7217 = vmatprep.mubr.bf16.mxu0 %v6986
      %7218 = vmatmul.mubr.bf16.gmra.mxu0 %v6979
      %v7219 = vpop.f32.mrf.mxu0
      %v7220 = vadd.f32 %v6950, %v7219
      %v7221 = vpop.f32.mrf.mxu0
      %v7222 = vpop.f32.mrf.mxu0
      %v7223 = vpop.f32.mrf.mxu0
      %7224 = vdwg.mxu0
      %7225 = vmatprep.subr.bf16.mxu0 0
      %7226 = vmatpush1.bf16.msra.mxu0 %v7144
      %7227 = vmatprep.subr.bf16.mxu0 0
      %7228 = vmatpush1.bf16.msra.mxu0 %v7143
      %7229 = vmatprep.subr.bf16.mxu0 0
      %7230 = vmatpush1.bf16.msra.mxu0 %v7142
      %7231 = vmatprep.subr.bf16.mxu0 0
      %7232 = vmatpush1.bf16.msra.mxu0 %v7141
      %7233 = vmatprep.subr.bf16.mxu0 0
      %7234 = vmatpush1.bf16.msra.mxu0 %v7140
      %7235 = vmatprep.subr.bf16.mxu0 0
      %7236 = vmatpush1.bf16.msra.mxu0 %v7139
      %7237 = vmatprep.subr.bf16.mxu0 0
      %7238 = vmatpush1.bf16.msra.mxu0 %v7138
      %7239 = vmatprep.subr.bf16.mxu0 0
      %7240 = vmatpush1.bf16.msra.mxu0 %v7137
      %7241 = vmatprep.subr.bf16.mxu0 0
      %7242 = vmatpush2.bf16.msra.mxu0 %v7152
      %7243 = vmatprep.subr.bf16.mxu0 0
      %7244 = vmatpush2.bf16.msra.mxu0 %v7151
      %7245 = vmatprep.subr.bf16.mxu0 0
      %7246 = vmatpush2.bf16.msra.mxu0 %v7150
      %7247 = vmatprep.subr.bf16.mxu0 0
      %7248 = vmatpush2.bf16.msra.mxu0 %v7149
      %7249 = vmatprep.subr.bf16.mxu0 0
      %7250 = vmatpush2.bf16.msra.mxu0 %v7148
      %7251 = vmatprep.subr.bf16.mxu0 0
      %7252 = vmatpush2.bf16.msra.mxu0 %v7147
      %7253 = vmatprep.subr.bf16.mxu0 0
      %7254 = vmatpush2.bf16.msra.mxu0 %v7146
      %7255 = vmatprep.subr.bf16.mxu0 0
      %7256 = vmatpush2.bf16.msra.mxu0 %v7145
      %7257 = vmatprep.mubr.bf16.mxu0 %v6988
      %7258 = vmatmul.mubr.bf16.gmra.mxu0 %v6987
      %v7259 = vpop.f32.mrf.mxu0
      %v7260 = vadd.f32 %v7220, %v7259
      %v7261 = vpop.f32.mrf.mxu0
      %v7262 = vpop.f32.mrf.mxu0
      %v7263 = vpop.f32.mrf.mxu0
      %7264 = vdwg.mxu0
      %v7273 = vcombine.low %v6293, %v6294
      %v7274 = vcombine.low %v6295, %v6296
      %v7276 = vunpack.c.l.s4 1966171168
      %v7277 = vunpack.c.0.s8 %v7276
      %v7278 = vlaneseq
      %v7279 = vshrl.u32 %v7278, 7
      %v7280 = vsub.s32 %v7277, %v7279
      %v7281 = vrot.slane %v7273, %v7280
      %v7283 = vunpack.c.l.s4 1966171168
      %v7284 = vunpack.c.0.s8 %v7283
      %v7285 = vlaneseq
      %v7286 = vshrl.u32 %v7285, 7
      %v7287 = vsub.s32 %v7284, %v7286
      %v7288 = vrot.slane %v7274, %v7287
      %v7289 = vcombine.low %v7281, %v7288
      %v7291 = vunpack.c.l.s4 1966171168
      %v7292 = vunpack.c.0.s8 %v7291
      %v7293 = vlaneseq
      %v7294 = vshrl.u32 %v7293, 7
      %v7295 = vsub.s32 %v7292, %v7294
      %v7296 = vrot.slane %v7289, %v7295
      %v7297 = vcombine.low %v6305, %v6306
      %v7298 = vcombine.low %v6307, %v6308
      %v7300 = vunpack.c.l.s4 1966171168
      %v7301 = vunpack.c.0.s8 %v7300
      %v7302 = vlaneseq
      %v7303 = vshrl.u32 %v7302, 7
      %v7304 = vsub.s32 %v7301, %v7303
      %v7305 = vrot.slane %v7297, %v7304
      %v7307 = vunpack.c.l.s4 1966171168
      %v7308 = vunpack.c.0.s8 %v7307
      %v7309 = vlaneseq
      %v7310 = vshrl.u32 %v7309, 7
      %v7311 = vsub.s32 %v7308, %v7310
      %v7312 = vrot.slane %v7298, %v7311
      %v7313 = vcombine.low %v7305, %v7312
      %v7315 = vunpack.c.l.s4 1966171168
      %v7316 = vunpack.c.0.s8 %v7315
      %v7317 = vlaneseq
      %v7318 = vshrl.u32 %v7317, 7
      %v7319 = vsub.s32 %v7316, %v7318
      %v7320 = vrot.slane %v7313, %v7319
      %s7321 = scalar_lea.vmem %s6, 512
      %v7322 = vld [vmem:[%s7321] sm:$0xf]
      %v7323 = vld [vmem:[%s7321 + $0x4] sm:$0xf]
      %v7324 = vld [vmem:[%s7321 + $0x8] sm:$0xf]
      %v7325 = vld [vmem:[%s7321 + $0xc] sm:$0xf]
      %v7326 = vld [vmem:[%s7321 + $0x10] sm:$0xf]
      %v7327 = vld [vmem:[%s7321 + $0x14] sm:$0xf]
      %v7328 = vld [vmem:[%s7321 + $0x18] sm:$0xf]
      %v7329 = vld [vmem:[%s7321 + $0x1c] sm:$0xf]
      %v7330 = vld [vmem:[%s7321 + $0x20] sm:$0xf]
      %v7331 = vld [vmem:[%s7321 + $0x24] sm:$0xf]
      %v7332 = vld [vmem:[%s7321 + $0x28] sm:$0xf]
      %v7333 = vld [vmem:[%s7321 + $0x2c] sm:$0xf]
      %v7334 = vld [vmem:[%s7321 + $0x30] sm:$0xf]
      %v7335 = vld [vmem:[%s7321 + $0x34] sm:$0xf]
      %v7336 = vld [vmem:[%s7321 + $0x38] sm:$0xf]
      %v7337 = vld [vmem:[%s7321 + $0x3c] sm:$0xf]
      %v7338 = vld [vmem:[%s7321 + $0x40] sm:$0xf]
      %v7339 = vld [vmem:[%s7321 + $0x44] sm:$0xf]
      %v7340 = vld [vmem:[%s7321 + $0x48] sm:$0xf]
      %v7341 = vld [vmem:[%s7321 + $0x4c] sm:$0xf]
      %v7342 = vld [vmem:[%s7321 + $0x50] sm:$0xf]
      %v7343 = vld [vmem:[%s7321 + $0x54] sm:$0xf]
      %v7344 = vld [vmem:[%s7321 + $0x58] sm:$0xf]
      %v7345 = vld [vmem:[%s7321 + $0x5c] sm:$0xf]
      %v7346 = vld [vmem:[%s7321 + $0x60] sm:$0xf]
      %v7347 = vld [vmem:[%s7321 + $0x64] sm:$0xf]
      %v7348 = vld [vmem:[%s7321 + $0x68] sm:$0xf]
      %v7349 = vld [vmem:[%s7321 + $0x6c] sm:$0xf]
      %v7350 = vld [vmem:[%s7321 + $0x70] sm:$0xf]
      %v7351 = vld [vmem:[%s7321 + $0x74] sm:$0xf]
      %v7352 = vld [vmem:[%s7321 + $0x78] sm:$0xf]
      %v7353 = vld [vmem:[%s7321 + $0x7c] sm:$0xf]
      %v7354 = vld [vmem:[%s7321 + $0x80] sm:$0xf]
      %v7355 = vld [vmem:[%s7321 + $0x84] sm:$0xf]
      %v7356 = vld [vmem:[%s7321 + $0x88] sm:$0xf]
      %v7357 = vld [vmem:[%s7321 + $0x8c] sm:$0xf]
      %v7358 = vld [vmem:[%s7321 + $0x90] sm:$0xf]
      %v7359 = vld [vmem:[%s7321 + $0x94] sm:$0xf]
      %v7360 = vld [vmem:[%s7321 + $0x98] sm:$0xf]
      %v7361 = vld [vmem:[%s7321 + $0x9c] sm:$0xf]
      %v7362 = vld [vmem:[%s7321 + $0xa0] sm:$0xf]
      %v7363 = vld [vmem:[%s7321 + $0xa4] sm:$0xf]
      %v7364 = vld [vmem:[%s7321 + $0xa8] sm:$0xf]
      %v7365 = vld [vmem:[%s7321 + $0xac] sm:$0xf]
      %v7366 = vld [vmem:[%s7321 + $0xb0] sm:$0xf]
      %v7367 = vld [vmem:[%s7321 + $0xb4] sm:$0xf]
      %v7368 = vld [vmem:[%s7321 + $0xb8] sm:$0xf]
      %v7369 = vld [vmem:[%s7321 + $0xbc] sm:$0xf]
      %v7370 = vld [vmem:[%s7321 + $0xc0] sm:$0xf]
      %v7371 = vld [vmem:[%s7321 + $0xc4] sm:$0xf]
      %v7372 = vld [vmem:[%s7321 + $0xc8] sm:$0xf]
      %v7373 = vld [vmem:[%s7321 + $0xcc] sm:$0xf]
      %v7374 = vld [vmem:[%s7321 + $0xd0] sm:$0xf]
      %v7375 = vld [vmem:[%s7321 + $0xd4] sm:$0xf]
      %v7376 = vld [vmem:[%s7321 + $0xd8] sm:$0xf]
      %v7377 = vld [vmem:[%s7321 + $0xdc] sm:$0xf]
      %v7378 = vld [vmem:[%s7321 + $0xe0] sm:$0xf]
      %v7379 = vld [vmem:[%s7321 + $0xe4] sm:$0xf]
      %v7380 = vld [vmem:[%s7321 + $0xe8] sm:$0xf]
      %v7381 = vld [vmem:[%s7321 + $0xec] sm:$0xf]
      %v7382 = vld [vmem:[%s7321 + $0xf0] sm:$0xf]
      %v7383 = vld [vmem:[%s7321 + $0xf4] sm:$0xf]
      %v7384 = vld [vmem:[%s7321 + $0xf8] sm:$0xf]
      %v7385 = vld [vmem:[%s7321 + $0xfc] sm:$0xf]
      %v7386 = vcombine.low %v6384, %v7296
      %v7387 = vcombine.low %v6432, %v7320
      %v7389 = vunpack.c.l.s4 1966171168
      %v7390 = vunpack.c.0.s8 %v7389
      %v7391 = vlaneseq
      %v7392 = vshrl.u32 %v7391, 7
      %v7393 = vsub.s32 %v7390, %v7392
      %v7394 = vrot.slane %v7386, %v7393
      %v7396 = vunpack.c.l.s4 1966171168
      %v7397 = vunpack.c.0.s8 %v7396
      %v7398 = vlaneseq
      %v7399 = vshrl.u32 %v7398, 7
      %v7400 = vsub.s32 %v7397, %v7399
      %v7401 = vrot.slane %v7387, %v7400
      %v7402 = vcombine.low %v7394, %v7401
      %v7403 = vcombine.high %v7394, %v7401
      %v7405 = vunpack.c.l.s4 1966171168
      %v7406 = vunpack.c.0.s8 %v7405
      %v7407 = vlaneseq
      %v7408 = vshrl.u32 %v7407, 7
      %v7409 = vsub.s32 %v7406, %v7408
      %v7410 = vrot.slane %v7402, %v7409
      %v7412 = vunpack.c.l.s4 1966171168
      %v7413 = vunpack.c.0.s8 %v7412
      %v7414 = vlaneseq
      %v7415 = vshrl.u32 %v7414, 7
      %v7416 = vsub.s32 %v7413, %v7415
      %v7417 = vrot.slane %v7403, %v7416
      %v7418 = vcombine.high %v7410, %v7410
      %v7419 = vcombine.high %v7417, %v7417
      %v7488 = vunpack.c.l.b16 %v7322
      %v7489 = vunpack.c.l.b16 %v7323
      %v7490 = vunpack.c.l.b16 %v7324
      %v7491 = vunpack.c.l.b16 %v7325
      %v7492 = vunpack.c.l.b16 %v7326
      %v7493 = vunpack.c.l.b16 %v7327
      %v7494 = vunpack.c.l.b16 %v7328
      %v7495 = vunpack.c.l.b16 %v7329
      %v7496 = vunpack.c.l.b16 %v7330
      %v7497 = vunpack.c.l.b16 %v7331
      %v7498 = vunpack.c.l.b16 %v7332
      %v7499 = vunpack.c.l.b16 %v7333
      %v7500 = vunpack.c.l.b16 %v7334
      %v7501 = vunpack.c.l.b16 %v7335
      %v7502 = vunpack.c.l.b16 %v7336
      %v7503 = vunpack.c.l.b16 %v7337
      %v7504 = vunpack.c.l.b16 %v7338
      %v7505 = vunpack.c.l.b16 %v7339
      %v7506 = vunpack.c.l.b16 %v7340
      %v7507 = vunpack.c.l.b16 %v7341
      %v7508 = vunpack.c.l.b16 %v7342
      %v7509 = vunpack.c.l.b16 %v7343
      %v7510 = vunpack.c.l.b16 %v7344
      %v7511 = vunpack.c.l.b16 %v7345
      %v7512 = vunpack.c.l.b16 %v7346
      %v7513 = vunpack.c.l.b16 %v7347
      %v7514 = vunpack.c.l.b16 %v7348
      %v7515 = vunpack.c.l.b16 %v7349
      %v7516 = vunpack.c.l.b16 %v7350
      %v7517 = vunpack.c.l.b16 %v7351
      %v7518 = vunpack.c.l.b16 %v7352
      %v7519 = vunpack.c.l.b16 %v7353
      %v7520 = vunpack.c.l.b16 %v7354
      %v7521 = vunpack.c.l.b16 %v7355
      %v7522 = vunpack.c.l.b16 %v7356
      %v7523 = vunpack.c.l.b16 %v7357
      %v7524 = vunpack.c.l.b16 %v7358
      %v7525 = vunpack.c.l.b16 %v7359
      %v7526 = vunpack.c.l.b16 %v7360
      %v7527 = vunpack.c.l.b16 %v7361
      %v7528 = vunpack.c.l.b16 %v7362
      %v7529 = vunpack.c.l.b16 %v7363
      %v7530 = vunpack.c.l.b16 %v7364
      %v7531 = vunpack.c.l.b16 %v7365
      %v7532 = vunpack.c.l.b16 %v7366
      %v7533 = vunpack.c.l.b16 %v7367
      %v7534 = vunpack.c.l.b16 %v7368
      %v7535 = vunpack.c.l.b16 %v7369
      %v7536 = vunpack.c.l.b16 %v7370
      %v7537 = vunpack.c.l.b16 %v7371
      %v7538 = vunpack.c.l.b16 %v7372
      %v7539 = vunpack.c.l.b16 %v7373
      %v7540 = vunpack.c.l.b16 %v7374
      %v7541 = vunpack.c.l.b16 %v7375
      %v7542 = vunpack.c.l.b16 %v7376
      %v7543 = vunpack.c.l.b16 %v7377
      %v7544 = vunpack.c.l.b16 %v7378
      %v7545 = vunpack.c.l.b16 %v7379
      %v7546 = vunpack.c.l.b16 %v7380
      %v7547 = vunpack.c.l.b16 %v7381
      %v7548 = vunpack.c.l.b16 %v7382
      %v7549 = vunpack.c.l.b16 %v7383
      %v7550 = vunpack.c.l.b16 %v7384
      %v7551 = vunpack.c.l.b16 %v7385
      %v7552 = vpack.c.b16 %v7489, %v7488
      %v7553 = vpack.c.b16 %v7491, %v7490
      %v7554 = vpack.c.b16 %v7493, %v7492
      %v7555 = vpack.c.b16 %v7495, %v7494
      %v7556 = vpack.c.b16 %v7497, %v7496
      %v7557 = vpack.c.b16 %v7499, %v7498
      %v7558 = vpack.c.b16 %v7501, %v7500
      %v7559 = vpack.c.b16 %v7503, %v7502
      %v7560 = vpack.c.b16 %v7505, %v7504
      %v7561 = vpack.c.b16 %v7507, %v7506
      %v7562 = vpack.c.b16 %v7509, %v7508
      %v7563 = vpack.c.b16 %v7511, %v7510
      %v7564 = vpack.c.b16 %v7513, %v7512
      %v7565 = vpack.c.b16 %v7515, %v7514
      %v7566 = vpack.c.b16 %v7517, %v7516
      %v7567 = vpack.c.b16 %v7519, %v7518
      %v7568 = vpack.c.b16 %v7521, %v7520
      %v7569 = vpack.c.b16 %v7523, %v7522
      %v7570 = vpack.c.b16 %v7525, %v7524
      %v7571 = vpack.c.b16 %v7527, %v7526
      %v7572 = vpack.c.b16 %v7529, %v7528
      %v7573 = vpack.c.b16 %v7531, %v7530
      %v7574 = vpack.c.b16 %v7533, %v7532
      %v7575 = vpack.c.b16 %v7535, %v7534
      %v7576 = vpack.c.b16 %v7537, %v7536
      %v7577 = vpack.c.b16 %v7539, %v7538
      %v7578 = vpack.c.b16 %v7541, %v7540
      %v7579 = vpack.c.b16 %v7543, %v7542
      %v7580 = vpack.c.b16 %v7545, %v7544
      %v7581 = vpack.c.b16 %v7547, %v7546
      %v7582 = vpack.c.b16 %v7549, %v7548
      %v7583 = vpack.c.b16 %v7551, %v7550
      %7616 = vmatprep.subr.bf16.mxu0 0
      %7617 = vmatpush1.bf16.msra.mxu0 %v7559
      %7618 = vmatprep.subr.bf16.mxu0 0
      %7619 = vmatpush1.bf16.msra.mxu0 %v7558
      %7620 = vmatprep.subr.bf16.mxu0 0
      %7621 = vmatpush1.bf16.msra.mxu0 %v7557
      %7622 = vmatprep.subr.bf16.mxu0 0
      %7623 = vmatpush1.bf16.msra.mxu0 %v7556
      %7624 = vmatprep.subr.bf16.mxu0 0
      %7625 = vmatpush1.bf16.msra.mxu0 %v7555
      %7626 = vmatprep.subr.bf16.mxu0 0
      %7627 = vmatpush1.bf16.msra.mxu0 %v7554
      %7628 = vmatprep.subr.bf16.mxu0 0
      %7629 = vmatpush1.bf16.msra.mxu0 %v7553
      %7630 = vmatprep.subr.bf16.mxu0 0
      %7631 = vmatpush1.bf16.msra.mxu0 %v7552
      %7632 = vmatprep.subr.bf16.mxu0 0
      %7633 = vmatpush2.bf16.msra.mxu0 %v7567
      %7634 = vmatprep.subr.bf16.mxu0 0
      %7635 = vmatpush2.bf16.msra.mxu0 %v7566
      %7636 = vmatprep.subr.bf16.mxu0 0
      %7637 = vmatpush2.bf16.msra.mxu0 %v7565
      %7638 = vmatprep.subr.bf16.mxu0 0
      %7639 = vmatpush2.bf16.msra.mxu0 %v7564
      %7640 = vmatprep.subr.bf16.mxu0 0
      %7641 = vmatpush2.bf16.msra.mxu0 %v7563
      %7642 = vmatprep.subr.bf16.mxu0 0
      %7643 = vmatpush2.bf16.msra.mxu0 %v7562
      %7644 = vmatprep.subr.bf16.mxu0 0
      %7645 = vmatpush2.bf16.msra.mxu0 %v7561
      %7646 = vmatprep.subr.bf16.mxu0 0
      %7647 = vmatpush2.bf16.msra.mxu0 %v7560
      %7648 = vmatprep.mubr.bf16.mxu0 %v7417
      %7649 = vmatmul.mubr.bf16.gmra.mxu0 %v7410
      %v7650 = vpop.f32.mrf.mxu0
      %v7651 = vadd.f32 0.0, %v7650
      %v7652 = vpop.f32.mrf.mxu0
      %v7653 = vpop.f32.mrf.mxu0
      %v7654 = vpop.f32.mrf.mxu0
      %7655 = vdwg.mxu0
      %7656 = vmatprep.subr.bf16.mxu0 0
      %7657 = vmatpush1.bf16.msra.mxu0 %v7575
      %7658 = vmatprep.subr.bf16.mxu0 0
      %7659 = vmatpush1.bf16.msra.mxu0 %v7574
      %7660 = vmatprep.subr.bf16.mxu0 0
      %7661 = vmatpush1.bf16.msra.mxu0 %v7573
      %7662 = vmatprep.subr.bf16.mxu0 0
      %7663 = vmatpush1.bf16.msra.mxu0 %v7572
      %7664 = vmatprep.subr.bf16.mxu0 0
      %7665 = vmatpush1.bf16.msra.mxu0 %v7571
      %7666 = vmatprep.subr.bf16.mxu0 0
      %7667 = vmatpush1.bf16.msra.mxu0 %v7570
      %7668 = vmatprep.subr.bf16.mxu0 0
      %7669 = vmatpush1.bf16.msra.mxu0 %v7569
      %7670 = vmatprep.subr.bf16.mxu0 0
      %7671 = vmatpush1.bf16.msra.mxu0 %v7568
      %7672 = vmatprep.subr.bf16.mxu0 0
      %7673 = vmatpush2.bf16.msra.mxu0 %v7583
      %7674 = vmatprep.subr.bf16.mxu0 0
      %7675 = vmatpush2.bf16.msra.mxu0 %v7582
      %7676 = vmatprep.subr.bf16.mxu0 0
      %7677 = vmatpush2.bf16.msra.mxu0 %v7581
      %7678 = vmatprep.subr.bf16.mxu0 0
      %7679 = vmatpush2.bf16.msra.mxu0 %v7580
      %7680 = vmatprep.subr.bf16.mxu0 0
      %7681 = vmatpush2.bf16.msra.mxu0 %v7579
      %7682 = vmatprep.subr.bf16.mxu0 0
      %7683 = vmatpush2.bf16.msra.mxu0 %v7578
      %7684 = vmatprep.subr.bf16.mxu0 0
      %7685 = vmatpush2.bf16.msra.mxu0 %v7577
      %7686 = vmatprep.subr.bf16.mxu0 0
      %7687 = vmatpush2.bf16.msra.mxu0 %v7576
      %7688 = vmatprep.mubr.bf16.mxu0 %v7419
      %7689 = vmatmul.mubr.bf16.gmra.mxu0 %v7418
      %v7690 = vpop.f32.mrf.mxu0
      %v7691 = vadd.f32 %v7651, %v7690
      %v7692 = vpop.f32.mrf.mxu0
      %v7693 = vpop.f32.mrf.mxu0
      %v7694 = vpop.f32.mrf.mxu0
      %7695 = vdwg.mxu0
      %v7696 = vadd.f32 %v7260, %v7691
      %v7697 = vcombine.high %v7281, %v7288
      %v7699 = vunpack.c.l.s4 1966171168
      %v7700 = vunpack.c.0.s8 %v7699
      %v7701 = vlaneseq
      %v7702 = vshrl.u32 %v7701, 7
      %v7703 = vsub.s32 %v7700, %v7702
      %v7704 = vrot.slane %v7697, %v7703
      %v7705 = vcombine.high %v7305, %v7312
      %v7707 = vunpack.c.l.s4 1966171168
      %v7708 = vunpack.c.0.s8 %v7707
      %v7709 = vlaneseq
      %v7710 = vshrl.u32 %v7709, 7
      %v7711 = vsub.s32 %v7708, %v7710
      %v7712 = vrot.slane %v7705, %v7711
      %v7714 = vshrl.u32 %v7296, 16
      %v7716 = vrot.slane %v7714, 7
      %v7717 = vrot.slane %v7716, 1
      %v7719 = vshll.u32 %v7704, 16
      %v7721 = vsel %vm6543, %v7717, %v7719
      %v7723 = vshrl.u32 %v7320, 16
      %v7725 = vrot.slane %v7723, 7
      %v7726 = vrot.slane %v7725, 1
      %v7728 = vshll.u32 %v7712, 16
      %v7730 = vsel %vm6543, %v7726, %v7728
      %s7731 = scalar_lea.vmem %s6, 768
      %v7732 = vld [vmem:[%s7731] sm:$0xf]
      %v7733 = vld [vmem:[%s7731 + $0x4] sm:$0xf]
      %v7734 = vld [vmem:[%s7731 + $0x8] sm:$0xf]
      %v7735 = vld [vmem:[%s7731 + $0xc] sm:$0xf]
      %v7736 = vld [vmem:[%s7731 + $0x10] sm:$0xf]
      %v7737 = vld [vmem:[%s7731 + $0x14] sm:$0xf]
      %v7738 = vld [vmem:[%s7731 + $0x18] sm:$0xf]
      %v7739 = vld [vmem:[%s7731 + $0x1c] sm:$0xf]
      %v7740 = vld [vmem:[%s7731 + $0x20] sm:$0xf]
      %v7741 = vld [vmem:[%s7731 + $0x24] sm:$0xf]
      %v7742 = vld [vmem:[%s7731 + $0x28] sm:$0xf]
      %v7743 = vld [vmem:[%s7731 + $0x2c] sm:$0xf]
      %v7744 = vld [vmem:[%s7731 + $0x30] sm:$0xf]
      %v7745 = vld [vmem:[%s7731 + $0x34] sm:$0xf]
      %v7746 = vld [vmem:[%s7731 + $0x38] sm:$0xf]
      %v7747 = vld [vmem:[%s7731 + $0x3c] sm:$0xf]
      %v7748 = vld [vmem:[%s7731 + $0x40] sm:$0xf]
      %v7749 = vld [vmem:[%s7731 + $0x44] sm:$0xf]
      %v7750 = vld [vmem:[%s7731 + $0x48] sm:$0xf]
      %v7751 = vld [vmem:[%s7731 + $0x4c] sm:$0xf]
      %v7752 = vld [vmem:[%s7731 + $0x50] sm:$0xf]
      %v7753 = vld [vmem:[%s7731 + $0x54] sm:$0xf]
      %v7754 = vld [vmem:[%s7731 + $0x58] sm:$0xf]
      %v7755 = vld [vmem:[%s7731 + $0x5c] sm:$0xf]
      %v7756 = vld [vmem:[%s7731 + $0x60] sm:$0xf]
      %v7757 = vld [vmem:[%s7731 + $0x64] sm:$0xf]
      %v7758 = vld [vmem:[%s7731 + $0x68] sm:$0xf]
      %v7759 = vld [vmem:[%s7731 + $0x6c] sm:$0xf]
      %v7760 = vld [vmem:[%s7731 + $0x70] sm:$0xf]
      %v7761 = vld [vmem:[%s7731 + $0x74] sm:$0xf]
      %v7762 = vld [vmem:[%s7731 + $0x78] sm:$0xf]
      %v7763 = vld [vmem:[%s7731 + $0x7c] sm:$0xf]
      %v7764 = vld [vmem:[%s7731 + $0x80] sm:$0xf]
      %v7765 = vld [vmem:[%s7731 + $0x84] sm:$0xf]
      %v7766 = vld [vmem:[%s7731 + $0x88] sm:$0xf]
      %v7767 = vld [vmem:[%s7731 + $0x8c] sm:$0xf]
      %v7768 = vld [vmem:[%s7731 + $0x90] sm:$0xf]
      %v7769 = vld [vmem:[%s7731 + $0x94] sm:$0xf]
      %v7770 = vld [vmem:[%s7731 + $0x98] sm:$0xf]
      %v7771 = vld [vmem:[%s7731 + $0x9c] sm:$0xf]
      %v7772 = vld [vmem:[%s7731 + $0xa0] sm:$0xf]
      %v7773 = vld [vmem:[%s7731 + $0xa4] sm:$0xf]
      %v7774 = vld [vmem:[%s7731 + $0xa8] sm:$0xf]
      %v7775 = vld [vmem:[%s7731 + $0xac] sm:$0xf]
      %v7776 = vld [vmem:[%s7731 + $0xb0] sm:$0xf]
      %v7777 = vld [vmem:[%s7731 + $0xb4] sm:$0xf]
      %v7778 = vld [vmem:[%s7731 + $0xb8] sm:$0xf]
      %v7779 = vld [vmem:[%s7731 + $0xbc] sm:$0xf]
      %v7780 = vld [vmem:[%s7731 + $0xc0] sm:$0xf]
      %v7781 = vld [vmem:[%s7731 + $0xc4] sm:$0xf]
      %v7782 = vld [vmem:[%s7731 + $0xc8] sm:$0xf]
      %v7783 = vld [vmem:[%s7731 + $0xcc] sm:$0xf]
      %v7784 = vld [vmem:[%s7731 + $0xd0] sm:$0xf]
      %v7785 = vld [vmem:[%s7731 + $0xd4] sm:$0xf]
      %v7786 = vld [vmem:[%s7731 + $0xd8] sm:$0xf]
      %v7787 = vld [vmem:[%s7731 + $0xdc] sm:$0xf]
      %v7788 = vld [vmem:[%s7731 + $0xe0] sm:$0xf]
      %v7789 = vld [vmem:[%s7731 + $0xe4] sm:$0xf]
      %v7790 = vld [vmem:[%s7731 + $0xe8] sm:$0xf]
      %v7791 = vld [vmem:[%s7731 + $0xec] sm:$0xf]
      %v7792 = vld [vmem:[%s7731 + $0xf0] sm:$0xf]
      %v7793 = vld [vmem:[%s7731 + $0xf4] sm:$0xf]
      %v7794 = vld [vmem:[%s7731 + $0xf8] sm:$0xf]
      %v7795 = vld [vmem:[%s7731 + $0xfc] sm:$0xf]
      %v7796 = vcombine.low %v6561, %v7721
      %v7797 = vcombine.low %v6579, %v7730
      %v7799 = vunpack.c.l.s4 1966171168
      %v7800 = vunpack.c.0.s8 %v7799
      %v7801 = vlaneseq
      %v7802 = vshrl.u32 %v7801, 7
      %v7803 = vsub.s32 %v7800, %v7802
      %v7804 = vrot.slane %v7796, %v7803
      %v7806 = vunpack.c.l.s4 1966171168
      %v7807 = vunpack.c.0.s8 %v7806
      %v7808 = vlaneseq
      %v7809 = vshrl.u32 %v7808, 7
      %v7810 = vsub.s32 %v7807, %v7809
      %v7811 = vrot.slane %v7797, %v7810
      %v7812 = vcombine.low %v7804, %v7811
      %v7813 = vcombine.high %v7804, %v7811
      %v7815 = vunpack.c.l.s4 1966171168
      %v7816 = vunpack.c.0.s8 %v7815
      %v7817 = vlaneseq
      %v7818 = vshrl.u32 %v7817, 7
      %v7819 = vsub.s32 %v7816, %v7818
      %v7820 = vrot.slane %v7812, %v7819
      %v7822 = vunpack.c.l.s4 1966171168
      %v7823 = vunpack.c.0.s8 %v7822
      %v7824 = vlaneseq
      %v7825 = vshrl.u32 %v7824, 7
      %v7826 = vsub.s32 %v7823, %v7825
      %v7827 = vrot.slane %v7813, %v7826
      %v7828 = vcombine.high %v7820, %v7820
      %v7829 = vcombine.high %v7827, %v7827
      %v7898 = vunpack.c.l.b16 %v7732
      %v7899 = vunpack.c.l.b16 %v7733
      %v7900 = vunpack.c.l.b16 %v7734
      %v7901 = vunpack.c.l.b16 %v7735
      %v7902 = vunpack.c.l.b16 %v7736
      %v7903 = vunpack.c.l.b16 %v7737
      %v7904 = vunpack.c.l.b16 %v7738
      %v7905 = vunpack.c.l.b16 %v7739
      %v7906 = vunpack.c.l.b16 %v7740
      %v7907 = vunpack.c.l.b16 %v7741
      %v7908 = vunpack.c.l.b16 %v7742
      %v7909 = vunpack.c.l.b16 %v7743
      %v7910 = vunpack.c.l.b16 %v7744
      %v7911 = vunpack.c.l.b16 %v7745
      %v7912 = vunpack.c.l.b16 %v7746
      %v7913 = vunpack.c.l.b16 %v7747
      %v7914 = vunpack.c.l.b16 %v7748
      %v7915 = vunpack.c.l.b16 %v7749
      %v7916 = vunpack.c.l.b16 %v7750
      %v7917 = vunpack.c.l.b16 %v7751
      %v7918 = vunpack.c.l.b16 %v7752
      %v7919 = vunpack.c.l.b16 %v7753
      %v7920 = vunpack.c.l.b16 %v7754
      %v7921 = vunpack.c.l.b16 %v7755
      %v7922 = vunpack.c.l.b16 %v7756
      %v7923 = vunpack.c.l.b16 %v7757
      %v7924 = vunpack.c.l.b16 %v7758
      %v7925 = vunpack.c.l.b16 %v7759
      %v7926 = vunpack.c.l.b16 %v7760
      %v7927 = vunpack.c.l.b16 %v7761
      %v7928 = vunpack.c.l.b16 %v7762
      %v7929 = vunpack.c.l.b16 %v7763
      %v7930 = vunpack.c.l.b16 %v7764
      %v7931 = vunpack.c.l.b16 %v7765
      %v7932 = vunpack.c.l.b16 %v7766
      %v7933 = vunpack.c.l.b16 %v7767
      %v7934 = vunpack.c.l.b16 %v7768
      %v7935 = vunpack.c.l.b16 %v7769
      %v7936 = vunpack.c.l.b16 %v7770
      %v7937 = vunpack.c.l.b16 %v7771
      %v7938 = vunpack.c.l.b16 %v7772
      %v7939 = vunpack.c.l.b16 %v7773
      %v7940 = vunpack.c.l.b16 %v7774
      %v7941 = vunpack.c.l.b16 %v7775
      %v7942 = vunpack.c.l.b16 %v7776
      %v7943 = vunpack.c.l.b16 %v7777
      %v7944 = vunpack.c.l.b16 %v7778
      %v7945 = vunpack.c.l.b16 %v7779
      %v7946 = vunpack.c.l.b16 %v7780
      %v7947 = vunpack.c.l.b16 %v7781
      %v7948 = vunpack.c.l.b16 %v7782
      %v7949 = vunpack.c.l.b16 %v7783
      %v7950 = vunpack.c.l.b16 %v7784
      %v7951 = vunpack.c.l.b16 %v7785
      %v7952 = vunpack.c.l.b16 %v7786
      %v7953 = vunpack.c.l.b16 %v7787
      %v7954 = vunpack.c.l.b16 %v7788
      %v7955 = vunpack.c.l.b16 %v7789
      %v7956 = vunpack.c.l.b16 %v7790
      %v7957 = vunpack.c.l.b16 %v7791
      %v7958 = vunpack.c.l.b16 %v7792
      %v7959 = vunpack.c.l.b16 %v7793
      %v7960 = vunpack.c.l.b16 %v7794
      %v7961 = vunpack.c.l.b16 %v7795
      %v7962 = vpack.c.b16 %v7899, %v7898
      %v7963 = vpack.c.b16 %v7901, %v7900
      %v7964 = vpack.c.b16 %v7903, %v7902
      %v7965 = vpack.c.b16 %v7905, %v7904
      %v7966 = vpack.c.b16 %v7907, %v7906
      %v7967 = vpack.c.b16 %v7909, %v7908
      %v7968 = vpack.c.b16 %v7911, %v7910
      %v7969 = vpack.c.b16 %v7913, %v7912
      %v7970 = vpack.c.b16 %v7915, %v7914
      %v7971 = vpack.c.b16 %v7917, %v7916
      %v7972 = vpack.c.b16 %v7919, %v7918
      %v7973 = vpack.c.b16 %v7921, %v7920
      %v7974 = vpack.c.b16 %v7923, %v7922
      %v7975 = vpack.c.b16 %v7925, %v7924
      %v7976 = vpack.c.b16 %v7927, %v7926
      %v7977 = vpack.c.b16 %v7929, %v7928
      %v7978 = vpack.c.b16 %v7931, %v7930
      %v7979 = vpack.c.b16 %v7933, %v7932
      %v7980 = vpack.c.b16 %v7935, %v7934
      %v7981 = vpack.c.b16 %v7937, %v7936
      %v7982 = vpack.c.b16 %v7939, %v7938
      %v7983 = vpack.c.b16 %v7941, %v7940
      %v7984 = vpack.c.b16 %v7943, %v7942
      %v7985 = vpack.c.b16 %v7945, %v7944
      %v7986 = vpack.c.b16 %v7947, %v7946
      %v7987 = vpack.c.b16 %v7949, %v7948
      %v7988 = vpack.c.b16 %v7951, %v7950
      %v7989 = vpack.c.b16 %v7953, %v7952
      %v7990 = vpack.c.b16 %v7955, %v7954
      %v7991 = vpack.c.b16 %v7957, %v7956
      %v7992 = vpack.c.b16 %v7959, %v7958
      %v7993 = vpack.c.b16 %v7961, %v7960
      %8026 = vmatprep.subr.bf16.mxu0 0
      %8027 = vmatpush1.bf16.msra.mxu0 %v7969
      %8028 = vmatprep.subr.bf16.mxu0 0
      %8029 = vmatpush1.bf16.msra.mxu0 %v7968
      %8030 = vmatprep.subr.bf16.mxu0 0
      %8031 = vmatpush1.bf16.msra.mxu0 %v7967
      %8032 = vmatprep.subr.bf16.mxu0 0
      %8033 = vmatpush1.bf16.msra.mxu0 %v7966
      %8034 = vmatprep.subr.bf16.mxu0 0
      %8035 = vmatpush1.bf16.msra.mxu0 %v7965
      %8036 = vmatprep.subr.bf16.mxu0 0
      %8037 = vmatpush1.bf16.msra.mxu0 %v7964
      %8038 = vmatprep.subr.bf16.mxu0 0
      %8039 = vmatpush1.bf16.msra.mxu0 %v7963
      %8040 = vmatprep.subr.bf16.mxu0 0
      %8041 = vmatpush1.bf16.msra.mxu0 %v7962
      %8042 = vmatprep.subr.bf16.mxu0 0
      %8043 = vmatpush2.bf16.msra.mxu0 %v7977
      %8044 = vmatprep.subr.bf16.mxu0 0
      %8045 = vmatpush2.bf16.msra.mxu0 %v7976
      %8046 = vmatprep.subr.bf16.mxu0 0
      %8047 = vmatpush2.bf16.msra.mxu0 %v7975
      %8048 = vmatprep.subr.bf16.mxu0 0
      %8049 = vmatpush2.bf16.msra.mxu0 %v7974
      %8050 = vmatprep.subr.bf16.mxu0 0
      %8051 = vmatpush2.bf16.msra.mxu0 %v7973
      %8052 = vmatprep.subr.bf16.mxu0 0
      %8053 = vmatpush2.bf16.msra.mxu0 %v7972
      %8054 = vmatprep.subr.bf16.mxu0 0
      %8055 = vmatpush2.bf16.msra.mxu0 %v7971
      %8056 = vmatprep.subr.bf16.mxu0 0
      %8057 = vmatpush2.bf16.msra.mxu0 %v7970
      %8058 = vmatprep.mubr.bf16.mxu0 %v7827
      %8059 = vmatmul.mubr.bf16.gmra.mxu0 %v7820
      %v8060 = vpop.f32.mrf.mxu0
      %v8061 = vadd.f32 0.0, %v8060
      %v8062 = vpop.f32.mrf.mxu0
      %v8063 = vpop.f32.mrf.mxu0
      %v8064 = vpop.f32.mrf.mxu0
      %8065 = vdwg.mxu0
      %8066 = vmatprep.subr.bf16.mxu0 0
      %8067 = vmatpush1.bf16.msra.mxu0 %v7985
      %8068 = vmatprep.subr.bf16.mxu0 0
      %8069 = vmatpush1.bf16.msra.mxu0 %v7984
      %8070 = vmatprep.subr.bf16.mxu0 0
      %8071 = vmatpush1.bf16.msra.mxu0 %v7983
      %8072 = vmatprep.subr.bf16.mxu0 0
      %8073 = vmatpush1.bf16.msra.mxu0 %v7982
      %8074 = vmatprep.subr.bf16.mxu0 0
      %8075 = vmatpush1.bf16.msra.mxu0 %v7981
      %8076 = vmatprep.subr.bf16.mxu0 0
      %8077 = vmatpush1.bf16.msra.mxu0 %v7980
      %8078 = vmatprep.subr.bf16.mxu0 0
      %8079 = vmatpush1.bf16.msra.mxu0 %v7979
      %8080 = vmatprep.subr.bf16.mxu0 0
      %8081 = vmatpush1.bf16.msra.mxu0 %v7978
      %8082 = vmatprep.subr.bf16.mxu0 0
      %8083 = vmatpush2.bf16.msra.mxu0 %v7993
      %8084 = vmatprep.subr.bf16.mxu0 0
      %8085 = vmatpush2.bf16.msra.mxu0 %v7992
      %8086 = vmatprep.subr.bf16.mxu0 0
      %8087 = vmatpush2.bf16.msra.mxu0 %v7991
      %8088 = vmatprep.subr.bf16.mxu0 0
      %8089 = vmatpush2.bf16.msra.mxu0 %v7990
      %8090 = vmatprep.subr.bf16.mxu0 0
      %8091 = vmatpush2.bf16.msra.mxu0 %v7989
      %8092 = vmatprep.subr.bf16.mxu0 0
      %8093 = vmatpush2.bf16.msra.mxu0 %v7988
      %8094 = vmatprep.subr.bf16.mxu0 0
      %8095 = vmatpush2.bf16.msra.mxu0 %v7987
      %8096 = vmatprep.subr.bf16.mxu0 0
      %8097 = vmatpush2.bf16.msra.mxu0 %v7986
      %8098 = vmatprep.mubr.bf16.mxu0 %v7829
      %8099 = vmatmul.mubr.bf16.gmra.mxu0 %v7828
      %v8100 = vpop.f32.mrf.mxu0
      %v8101 = vadd.f32 %v8061, %v8100
      %v8102 = vpop.f32.mrf.mxu0
      %v8103 = vpop.f32.mrf.mxu0
      %v8104 = vpop.f32.mrf.mxu0
      %8105 = vdwg.mxu0
      %v8106 = vadd.f32 %v7696, %v8101
      %v8115 = vcombine.low %v6309, %v6310
      %v8116 = vcombine.low %v6311, %v6312
      %v8118 = vunpack.c.l.s4 1966171168
      %v8119 = vunpack.c.0.s8 %v8118
      %v8120 = vlaneseq
      %v8121 = vshrl.u32 %v8120, 7
      %v8122 = vsub.s32 %v8119, %v8121
      %v8123 = vrot.slane %v8115, %v8122
      %v8125 = vunpack.c.l.s4 1966171168
      %v8126 = vunpack.c.0.s8 %v8125
      %v8127 = vlaneseq
      %v8128 = vshrl.u32 %v8127, 7
      %v8129 = vsub.s32 %v8126, %v8128
      %v8130 = vrot.slane %v8116, %v8129
      %v8131 = vcombine.low %v8123, %v8130
      %v8133 = vunpack.c.l.s4 1966171168
      %v8134 = vunpack.c.0.s8 %v8133
      %v8135 = vlaneseq
      %v8136 = vshrl.u32 %v8135, 7
      %v8137 = vsub.s32 %v8134, %v8136
      %v8138 = vrot.slane %v8131, %v8137
      %v8139 = vcombine.low %v6313, %v6314
      %v8140 = vcombine.low %v6315, %v6316
      %v8142 = vunpack.c.l.s4 1966171168
      %v8143 = vunpack.c.0.s8 %v8142
      %v8144 = vlaneseq
      %v8145 = vshrl.u32 %v8144, 7
      %v8146 = vsub.s32 %v8143, %v8145
      %v8147 = vrot.slane %v8139, %v8146
      %v8149 = vunpack.c.l.s4 1966171168
      %v8150 = vunpack.c.0.s8 %v8149
      %v8151 = vlaneseq
      %v8152 = vshrl.u32 %v8151, 7
      %v8153 = vsub.s32 %v8150, %v8152
      %v8154 = vrot.slane %v8140, %v8153
      %v8155 = vcombine.low %v8147, %v8154
      %v8157 = vunpack.c.l.s4 1966171168
      %v8158 = vunpack.c.0.s8 %v8157
      %v8159 = vlaneseq
      %v8160 = vshrl.u32 %v8159, 7
      %v8161 = vsub.s32 %v8158, %v8160
      %v8162 = vrot.slane %v8155, %v8161
      %s8163 = scalar_lea.vmem %s6, 1024
      %v8164 = vld [vmem:[%s8163] sm:$0xf]
      %v8165 = vld [vmem:[%s8163 + $0x4] sm:$0xf]
      %v8166 = vld [vmem:[%s8163 + $0x8] sm:$0xf]
      %v8167 = vld [vmem:[%s8163 + $0xc] sm:$0xf]
      %v8168 = vld [vmem:[%s8163 + $0x10] sm:$0xf]
      %v8169 = vld [vmem:[%s8163 + $0x14] sm:$0xf]
      %v8170 = vld [vmem:[%s8163 + $0x18] sm:$0xf]
      %v8171 = vld [vmem:[%s8163 + $0x1c] sm:$0xf]
      %v8172 = vld [vmem:[%s8163 + $0x20] sm:$0xf]
      %v8173 = vld [vmem:[%s8163 + $0x24] sm:$0xf]
      %v8174 = vld [vmem:[%s8163 + $0x28] sm:$0xf]
      %v8175 = vld [vmem:[%s8163 + $0x2c] sm:$0xf]
      %v8176 = vld [vmem:[%s8163 + $0x30] sm:$0xf]
      %v8177 = vld [vmem:[%s8163 + $0x34] sm:$0xf]
      %v8178 = vld [vmem:[%s8163 + $0x38] sm:$0xf]
      %v8179 = vld [vmem:[%s8163 + $0x3c] sm:$0xf]
      %v8180 = vld [vmem:[%s8163 + $0x40] sm:$0xf]
      %v8181 = vld [vmem:[%s8163 + $0x44] sm:$0xf]
      %v8182 = vld [vmem:[%s8163 + $0x48] sm:$0xf]
      %v8183 = vld [vmem:[%s8163 + $0x4c] sm:$0xf]
      %v8184 = vld [vmem:[%s8163 + $0x50] sm:$0xf]
      %v8185 = vld [vmem:[%s8163 + $0x54] sm:$0xf]
      %v8186 = vld [vmem:[%s8163 + $0x58] sm:$0xf]
      %v8187 = vld [vmem:[%s8163 + $0x5c] sm:$0xf]
      %v8188 = vld [vmem:[%s8163 + $0x60] sm:$0xf]
      %v8189 = vld [vmem:[%s8163 + $0x64] sm:$0xf]
      %v8190 = vld [vmem:[%s8163 + $0x68] sm:$0xf]
      %v8191 = vld [vmem:[%s8163 + $0x6c] sm:$0xf]
      %v8192 = vld [vmem:[%s8163 + $0x70] sm:$0xf]
      %v8193 = vld [vmem:[%s8163 + $0x74] sm:$0xf]
      %v8194 = vld [vmem:[%s8163 + $0x78] sm:$0xf]
      %v8195 = vld [vmem:[%s8163 + $0x7c] sm:$0xf]
      %v8196 = vld [vmem:[%s8163 + $0x80] sm:$0xf]
      %v8197 = vld [vmem:[%s8163 + $0x84] sm:$0xf]
      %v8198 = vld [vmem:[%s8163 + $0x88] sm:$0xf]
      %v8199 = vld [vmem:[%s8163 + $0x8c] sm:$0xf]
      %v8200 = vld [vmem:[%s8163 + $0x90] sm:$0xf]
      %v8201 = vld [vmem:[%s8163 + $0x94] sm:$0xf]
      %v8202 = vld [vmem:[%s8163 + $0x98] sm:$0xf]
      %v8203 = vld [vmem:[%s8163 + $0x9c] sm:$0xf]
      %v8204 = vld [vmem:[%s8163 + $0xa0] sm:$0xf]
      %v8205 = vld [vmem:[%s8163 + $0xa4] sm:$0xf]
      %v8206 = vld [vmem:[%s8163 + $0xa8] sm:$0xf]
      %v8207 = vld [vmem:[%s8163 + $0xac] sm:$0xf]
      %v8208 = vld [vmem:[%s8163 + $0xb0] sm:$0xf]
      %v8209 = vld [vmem:[%s8163 + $0xb4] sm:$0xf]
      %v8210 = vld [vmem:[%s8163 + $0xb8] sm:$0xf]
      %v8211 = vld [vmem:[%s8163 + $0xbc] sm:$0xf]
      %v8212 = vld [vmem:[%s8163 + $0xc0] sm:$0xf]
      %v8213 = vld [vmem:[%s8163 + $0xc4] sm:$0xf]
      %v8214 = vld [vmem:[%s8163 + $0xc8] sm:$0xf]
      %v8215 = vld [vmem:[%s8163 + $0xcc] sm:$0xf]
      %v8216 = vld [vmem:[%s8163 + $0xd0] sm:$0xf]
      %v8217 = vld [vmem:[%s8163 + $0xd4] sm:$0xf]
      %v8218 = vld [vmem:[%s8163 + $0xd8] sm:$0xf]
      %v8219 = vld [vmem:[%s8163 + $0xdc] sm:$0xf]
      %v8220 = vld [vmem:[%s8163 + $0xe0] sm:$0xf]
      %v8221 = vld [vmem:[%s8163 + $0xe4] sm:$0xf]
      %v8222 = vld [vmem:[%s8163 + $0xe8] sm:$0xf]
      %v8223 = vld [vmem:[%s8163 + $0xec] sm:$0xf]
      %v8224 = vld [vmem:[%s8163 + $0xf0] sm:$0xf]
      %v8225 = vld [vmem:[%s8163 + $0xf4] sm:$0xf]
      %v8226 = vld [vmem:[%s8163 + $0xf8] sm:$0xf]
      %v8227 = vld [vmem:[%s8163 + $0xfc] sm:$0xf]
      %v8228 = vcombine.low %v8138, %v8162
      %v8230 = vunpack.c.l.s4 1966171168
      %v8231 = vunpack.c.0.s8 %v8230
      %v8232 = vlaneseq
      %v8233 = vshrl.u32 %v8232, 7
      %v8234 = vsub.s32 %v8231, %v8233
      %v8235 = vrot.slane %v8228, %v8234
      %v8236 = vcombine.low %v6970, %v8235
      %v8237 = vcombine.high %v6970, %v8235
      %v8239 = vunpack.c.l.s4 1966171168
      %v8240 = vunpack.c.0.s8 %v8239
      %v8241 = vlaneseq
      %v8242 = vshrl.u32 %v8241, 7
      %v8243 = vsub.s32 %v8240, %v8242
      %v8244 = vrot.slane %v8236, %v8243
      %v8246 = vunpack.c.l.s4 1966171168
      %v8247 = vunpack.c.0.s8 %v8246
      %v8248 = vlaneseq
      %v8249 = vshrl.u32 %v8248, 7
      %v8250 = vsub.s32 %v8247, %v8249
      %v8251 = vrot.slane %v8237, %v8250
      %v8252 = vcombine.high %v8244, %v8244
      %v8253 = vcombine.high %v8251, %v8251
      %v8322 = vunpack.c.l.b16 %v8164
      %v8323 = vunpack.c.l.b16 %v8165
      %v8324 = vunpack.c.l.b16 %v8166
      %v8325 = vunpack.c.l.b16 %v8167
      %v8326 = vunpack.c.l.b16 %v8168
      %v8327 = vunpack.c.l.b16 %v8169
      %v8328 = vunpack.c.l.b16 %v8170
      %v8329 = vunpack.c.l.b16 %v8171
      %v8330 = vunpack.c.l.b16 %v8172
      %v8331 = vunpack.c.l.b16 %v8173
      %v8332 = vunpack.c.l.b16 %v8174
      %v8333 = vunpack.c.l.b16 %v8175
      %v8334 = vunpack.c.l.b16 %v8176
      %v8335 = vunpack.c.l.b16 %v8177
      %v8336 = vunpack.c.l.b16 %v8178
      %v8337 = vunpack.c.l.b16 %v8179
      %v8338 = vunpack.c.l.b16 %v8180
      %v8339 = vunpack.c.l.b16 %v8181
      %v8340 = vunpack.c.l.b16 %v8182
      %v8341 = vunpack.c.l.b16 %v8183
      %v8342 = vunpack.c.l.b16 %v8184
      %v8343 = vunpack.c.l.b16 %v8185
      %v8344 = vunpack.c.l.b16 %v8186
      %v8345 = vunpack.c.l.b16 %v8187
      %v8346 = vunpack.c.l.b16 %v8188
      %v8347 = vunpack.c.l.b16 %v8189
      %v8348 = vunpack.c.l.b16 %v8190
      %v8349 = vunpack.c.l.b16 %v8191
      %v8350 = vunpack.c.l.b16 %v8192
      %v8351 = vunpack.c.l.b16 %v8193
      %v8352 = vunpack.c.l.b16 %v8194
      %v8353 = vunpack.c.l.b16 %v8195
      %v8354 = vunpack.c.l.b16 %v8196
      %v8355 = vunpack.c.l.b16 %v8197
      %v8356 = vunpack.c.l.b16 %v8198
      %v8357 = vunpack.c.l.b16 %v8199
      %v8358 = vunpack.c.l.b16 %v8200
      %v8359 = vunpack.c.l.b16 %v8201
      %v8360 = vunpack.c.l.b16 %v8202
      %v8361 = vunpack.c.l.b16 %v8203
      %v8362 = vunpack.c.l.b16 %v8204
      %v8363 = vunpack.c.l.b16 %v8205
      %v8364 = vunpack.c.l.b16 %v8206
      %v8365 = vunpack.c.l.b16 %v8207
      %v8366 = vunpack.c.l.b16 %v8208
      %v8367 = vunpack.c.l.b16 %v8209
      %v8368 = vunpack.c.l.b16 %v8210
      %v8369 = vunpack.c.l.b16 %v8211
      %v8370 = vunpack.c.l.b16 %v8212
      %v8371 = vunpack.c.l.b16 %v8213
      %v8372 = vunpack.c.l.b16 %v8214
      %v8373 = vunpack.c.l.b16 %v8215
      %v8374 = vunpack.c.l.b16 %v8216
      %v8375 = vunpack.c.l.b16 %v8217
      %v8376 = vunpack.c.l.b16 %v8218
      %v8377 = vunpack.c.l.b16 %v8219
      %v8378 = vunpack.c.l.b16 %v8220
      %v8379 = vunpack.c.l.b16 %v8221
      %v8380 = vunpack.c.l.b16 %v8222
      %v8381 = vunpack.c.l.b16 %v8223
      %v8382 = vunpack.c.l.b16 %v8224
      %v8383 = vunpack.c.l.b16 %v8225
      %v8384 = vunpack.c.l.b16 %v8226
      %v8385 = vunpack.c.l.b16 %v8227
      %v8386 = vpack.c.b16 %v8323, %v8322
      %v8387 = vpack.c.b16 %v8325, %v8324
      %v8388 = vpack.c.b16 %v8327, %v8326
      %v8389 = vpack.c.b16 %v8329, %v8328
      %v8390 = vpack.c.b16 %v8331, %v8330
      %v8391 = vpack.c.b16 %v8333, %v8332
      %v8392 = vpack.c.b16 %v8335, %v8334
      %v8393 = vpack.c.b16 %v8337, %v8336
      %v8394 = vpack.c.b16 %v8339, %v8338
      %v8395 = vpack.c.b16 %v8341, %v8340
      %v8396 = vpack.c.b16 %v8343, %v8342
      %v8397 = vpack.c.b16 %v8345, %v8344
      %v8398 = vpack.c.b16 %v8347, %v8346
      %v8399 = vpack.c.b16 %v8349, %v8348
      %v8400 = vpack.c.b16 %v8351, %v8350
      %v8401 = vpack.c.b16 %v8353, %v8352
      %v8402 = vpack.c.b16 %v8355, %v8354
      %v8403 = vpack.c.b16 %v8357, %v8356
      %v8404 = vpack.c.b16 %v8359, %v8358
      %v8405 = vpack.c.b16 %v8361, %v8360
      %v8406 = vpack.c.b16 %v8363, %v8362
      %v8407 = vpack.c.b16 %v8365, %v8364
      %v8408 = vpack.c.b16 %v8367, %v8366
      %v8409 = vpack.c.b16 %v8369, %v8368
      %v8410 = vpack.c.b16 %v8371, %v8370
      %v8411 = vpack.c.b16 %v8373, %v8372
      %v8412 = vpack.c.b16 %v8375, %v8374
      %v8413 = vpack.c.b16 %v8377, %v8376
      %v8414 = vpack.c.b16 %v8379, %v8378
      %v8415 = vpack.c.b16 %v8381, %v8380
      %v8416 = vpack.c.b16 %v8383, %v8382
      %v8417 = vpack.c.b16 %v8385, %v8384
      %8450 = vmatprep.subr.bf16.mxu0 0
      %8451 = vmatpush1.bf16.msra.mxu0 %v8393
      %8452 = vmatprep.subr.bf16.mxu0 0
      %8453 = vmatpush1.bf16.msra.mxu0 %v8392
      %8454 = vmatprep.subr.bf16.mxu0 0
      %8455 = vmatpush1.bf16.msra.mxu0 %v8391
      %8456 = vmatprep.subr.bf16.mxu0 0
      %8457 = vmatpush1.bf16.msra.mxu0 %v8390
      %8458 = vmatprep.subr.bf16.mxu0 0
      %8459 = vmatpush1.bf16.msra.mxu0 %v8389
      %8460 = vmatprep.subr.bf16.mxu0 0
      %8461 = vmatpush1.bf16.msra.mxu0 %v8388
      %8462 = vmatprep.subr.bf16.mxu0 0
      %8463 = vmatpush1.bf16.msra.mxu0 %v8387
      %8464 = vmatprep.subr.bf16.mxu0 0
      %8465 = vmatpush1.bf16.msra.mxu0 %v8386
      %8466 = vmatprep.subr.bf16.mxu0 0
      %8467 = vmatpush2.bf16.msra.mxu0 %v8401
      %8468 = vmatprep.subr.bf16.mxu0 0
      %8469 = vmatpush2.bf16.msra.mxu0 %v8400
      %8470 = vmatprep.subr.bf16.mxu0 0
      %8471 = vmatpush2.bf16.msra.mxu0 %v8399
      %8472 = vmatprep.subr.bf16.mxu0 0
      %8473 = vmatpush2.bf16.msra.mxu0 %v8398
      %8474 = vmatprep.subr.bf16.mxu0 0
      %8475 = vmatpush2.bf16.msra.mxu0 %v8397
      %8476 = vmatprep.subr.bf16.mxu0 0
      %8477 = vmatpush2.bf16.msra.mxu0 %v8396
      %8478 = vmatprep.subr.bf16.mxu0 0
      %8479 = vmatpush2.bf16.msra.mxu0 %v8395
      %8480 = vmatprep.subr.bf16.mxu0 0
      %8481 = vmatpush2.bf16.msra.mxu0 %v8394
      %8482 = vmatprep.mubr.bf16.mxu0 %v8251
      %8483 = vmatmul.mubr.bf16.gmra.mxu0 %v8244
      %v8484 = vpop.f32.mrf.mxu0
      %v8485 = vadd.f32 0.0, %v8484
      %v8486 = vpop.f32.mrf.mxu0
      %v8487 = vpop.f32.mrf.mxu0
      %v8488 = vpop.f32.mrf.mxu0
      %8489 = vdwg.mxu0
      %8490 = vmatprep.subr.bf16.mxu0 0
      %8491 = vmatpush1.bf16.msra.mxu0 %v8409
      %8492 = vmatprep.subr.bf16.mxu0 0
      %8493 = vmatpush1.bf16.msra.mxu0 %v8408
      %8494 = vmatprep.subr.bf16.mxu0 0
      %8495 = vmatpush1.bf16.msra.mxu0 %v8407
      %8496 = vmatprep.subr.bf16.mxu0 0
      %8497 = vmatpush1.bf16.msra.mxu0 %v8406
      %8498 = vmatprep.subr.bf16.mxu0 0
      %8499 = vmatpush1.bf16.msra.mxu0 %v8405
      %8500 = vmatprep.subr.bf16.mxu0 0
      %8501 = vmatpush1.bf16.msra.mxu0 %v8404
      %8502 = vmatprep.subr.bf16.mxu0 0
      %8503 = vmatpush1.bf16.msra.mxu0 %v8403
      %8504 = vmatprep.subr.bf16.mxu0 0
      %8505 = vmatpush1.bf16.msra.mxu0 %v8402
      %8506 = vmatprep.subr.bf16.mxu0 0
      %8507 = vmatpush2.bf16.msra.mxu0 %v8417
      %8508 = vmatprep.subr.bf16.mxu0 0
      %8509 = vmatpush2.bf16.msra.mxu0 %v8416
      %8510 = vmatprep.subr.bf16.mxu0 0
      %8511 = vmatpush2.bf16.msra.mxu0 %v8415
      %8512 = vmatprep.subr.bf16.mxu0 0
      %8513 = vmatpush2.bf16.msra.mxu0 %v8414
      %8514 = vmatprep.subr.bf16.mxu0 0
      %8515 = vmatpush2.bf16.msra.mxu0 %v8413
      %8516 = vmatprep.subr.bf16.mxu0 0
      %8517 = vmatpush2.bf16.msra.mxu0 %v8412
      %8518 = vmatprep.subr.bf16.mxu0 0
      %8519 = vmatpush2.bf16.msra.mxu0 %v8411
      %8520 = vmatprep.subr.bf16.mxu0 0
      %8521 = vmatpush2.bf16.msra.mxu0 %v8410
      %8522 = vmatprep.mubr.bf16.mxu0 %v8253
      %8523 = vmatmul.mubr.bf16.gmra.mxu0 %v8252
      %v8524 = vpop.f32.mrf.mxu0
      %v8525 = vadd.f32 %v8485, %v8524
      %v8526 = vpop.f32.mrf.mxu0
      %v8527 = vpop.f32.mrf.mxu0
      %v8528 = vpop.f32.mrf.mxu0
      %8529 = vdwg.mxu0
      %v8530 = vadd.f32 %v8106, %v8525
      %v8531 = vcombine.high %v8123, %v8130
      %v8533 = vunpack.c.l.s4 1966171168
      %v8534 = vunpack.c.0.s8 %v8533
      %v8535 = vlaneseq
      %v8536 = vshrl.u32 %v8535, 7
      %v8537 = vsub.s32 %v8534, %v8536
      %v8538 = vrot.slane %v8531, %v8537
      %v8539 = vcombine.high %v8147, %v8154
      %v8541 = vunpack.c.l.s4 1966171168
      %v8542 = vunpack.c.0.s8 %v8541
      %v8543 = vlaneseq
      %v8544 = vshrl.u32 %v8543, 7
      %v8545 = vsub.s32 %v8542, %v8544
      %v8546 = vrot.slane %v8539, %v8545
      %v8548 = vshrl.u32 %v8138, 16
      %v8550 = vrot.slane %v8548, 7
      %v8551 = vrot.slane %v8550, 1
      %v8553 = vshll.u32 %v8538, 16
      %v8555 = vsel %vm6543, %v8551, %v8553
      %v8557 = vshrl.u32 %v8162, 16
      %v8559 = vrot.slane %v8557, 7
      %v8560 = vrot.slane %v8559, 1
      %v8562 = vshll.u32 %v8546, 16
      %v8564 = vsel %vm6543, %v8560, %v8562
      %s8565 = scalar_lea.vmem %s6, 1280
      %v8566 = vld [vmem:[%s8565] sm:$0xf]
      %v8567 = vld [vmem:[%s8565 + $0x4] sm:$0xf]
      %v8568 = vld [vmem:[%s8565 + $0x8] sm:$0xf]
      %v8569 = vld [vmem:[%s8565 + $0xc] sm:$0xf]
      %v8570 = vld [vmem:[%s8565 + $0x10] sm:$0xf]
      %v8571 = vld [vmem:[%s8565 + $0x14] sm:$0xf]
      %v8572 = vld [vmem:[%s8565 + $0x18] sm:$0xf]
      %v8573 = vld [vmem:[%s8565 + $0x1c] sm:$0xf]
      %v8574 = vld [vmem:[%s8565 + $0x20] sm:$0xf]
      %v8575 = vld [vmem:[%s8565 + $0x24] sm:$0xf]
      %v8576 = vld [vmem:[%s8565 + $0x28] sm:$0xf]
      %v8577 = vld [vmem:[%s8565 + $0x2c] sm:$0xf]
      %v8578 = vld [vmem:[%s8565 + $0x30] sm:$0xf]
      %v8579 = vld [vmem:[%s8565 + $0x34] sm:$0xf]
      %v8580 = vld [vmem:[%s8565 + $0x38] sm:$0xf]
      %v8581 = vld [vmem:[%s8565 + $0x3c] sm:$0xf]
      %v8582 = vld [vmem:[%s8565 + $0x40] sm:$0xf]
      %v8583 = vld [vmem:[%s8565 + $0x44] sm:$0xf]
      %v8584 = vld [vmem:[%s8565 + $0x48] sm:$0xf]
      %v8585 = vld [vmem:[%s8565 + $0x4c] sm:$0xf]
      %v8586 = vld [vmem:[%s8565 + $0x50] sm:$0xf]
      %v8587 = vld [vmem:[%s8565 + $0x54] sm:$0xf]
      %v8588 = vld [vmem:[%s8565 + $0x58] sm:$0xf]
      %v8589 = vld [vmem:[%s8565 + $0x5c] sm:$0xf]
      %v8590 = vld [vmem:[%s8565 + $0x60] sm:$0xf]
      %v8591 = vld [vmem:[%s8565 + $0x64] sm:$0xf]
      %v8592 = vld [vmem:[%s8565 + $0x68] sm:$0xf]
      %v8593 = vld [vmem:[%s8565 + $0x6c] sm:$0xf]
      %v8594 = vld [vmem:[%s8565 + $0x70] sm:$0xf]
      %v8595 = vld [vmem:[%s8565 + $0x74] sm:$0xf]
      %v8596 = vld [vmem:[%s8565 + $0x78] sm:$0xf]
      %v8597 = vld [vmem:[%s8565 + $0x7c] sm:$0xf]
      %v8598 = vld [vmem:[%s8565 + $0x80] sm:$0xf]
      %v8599 = vld [vmem:[%s8565 + $0x84] sm:$0xf]
      %v8600 = vld [vmem:[%s8565 + $0x88] sm:$0xf]
      %v8601 = vld [vmem:[%s8565 + $0x8c] sm:$0xf]
      %v8602 = vld [vmem:[%s8565 + $0x90] sm:$0xf]
      %v8603 = vld [vmem:[%s8565 + $0x94] sm:$0xf]
      %v8604 = vld [vmem:[%s8565 + $0x98] sm:$0xf]
      %v8605 = vld [vmem:[%s8565 + $0x9c] sm:$0xf]
      %v8606 = vld [vmem:[%s8565 + $0xa0] sm:$0xf]
      %v8607 = vld [vmem:[%s8565 + $0xa4] sm:$0xf]
      %v8608 = vld [vmem:[%s8565 + $0xa8] sm:$0xf]
      %v8609 = vld [vmem:[%s8565 + $0xac] sm:$0xf]
      %v8610 = vld [vmem:[%s8565 + $0xb0] sm:$0xf]
      %v8611 = vld [vmem:[%s8565 + $0xb4] sm:$0xf]
      %v8612 = vld [vmem:[%s8565 + $0xb8] sm:$0xf]
      %v8613 = vld [vmem:[%s8565 + $0xbc] sm:$0xf]
      %v8614 = vld [vmem:[%s8565 + $0xc0] sm:$0xf]
      %v8615 = vld [vmem:[%s8565 + $0xc4] sm:$0xf]
      %v8616 = vld [vmem:[%s8565 + $0xc8] sm:$0xf]
      %v8617 = vld [vmem:[%s8565 + $0xcc] sm:$0xf]
      %v8618 = vld [vmem:[%s8565 + $0xd0] sm:$0xf]
      %v8619 = vld [vmem:[%s8565 + $0xd4] sm:$0xf]
      %v8620 = vld [vmem:[%s8565 + $0xd8] sm:$0xf]
      %v8621 = vld [vmem:[%s8565 + $0xdc] sm:$0xf]
      %v8622 = vld [vmem:[%s8565 + $0xe0] sm:$0xf]
      %v8623 = vld [vmem:[%s8565 + $0xe4] sm:$0xf]
      %v8624 = vld [vmem:[%s8565 + $0xe8] sm:$0xf]
      %v8625 = vld [vmem:[%s8565 + $0xec] sm:$0xf]
      %v8626 = vld [vmem:[%s8565 + $0xf0] sm:$0xf]
      %v8627 = vld [vmem:[%s8565 + $0xf4] sm:$0xf]
      %v8628 = vld [vmem:[%s8565 + $0xf8] sm:$0xf]
      %v8629 = vld [vmem:[%s8565 + $0xfc] sm:$0xf]
      %v8630 = vcombine.low %v8555, %v8564
      %v8632 = vunpack.c.l.s4 1966171168
      %v8633 = vunpack.c.0.s8 %v8632
      %v8634 = vlaneseq
      %v8635 = vshrl.u32 %v8634, 7
      %v8636 = vsub.s32 %v8633, %v8635
      %v8637 = vrot.slane %v8630, %v8636
      %v8638 = vcombine.low %v6660, %v8637
      %v8639 = vcombine.high %v6660, %v8637
      %v8641 = vunpack.c.l.s4 1966171168
      %v8642 = vunpack.c.0.s8 %v8641
      %v8643 = vlaneseq
      %v8644 = vshrl.u32 %v8643, 7
      %v8645 = vsub.s32 %v8642, %v8644
      %v8646 = vrot.slane %v8638, %v8645
      %v8648 = vunpack.c.l.s4 1966171168
      %v8649 = vunpack.c.0.s8 %v8648
      %v8650 = vlaneseq
      %v8651 = vshrl.u32 %v8650, 7
      %v8652 = vsub.s32 %v8649, %v8651
      %v8653 = vrot.slane %v8639, %v8652
      %v8654 = vcombine.high %v8646, %v8646
      %v8655 = vcombine.high %v8653, %v8653
      %v8724 = vunpack.c.l.b16 %v8566
      %v8725 = vunpack.c.l.b16 %v8567
      %v8726 = vunpack.c.l.b16 %v8568
      %v8727 = vunpack.c.l.b16 %v8569
      %v8728 = vunpack.c.l.b16 %v8570
      %v8729 = vunpack.c.l.b16 %v8571
      %v8730 = vunpack.c.l.b16 %v8572
      %v8731 = vunpack.c.l.b16 %v8573
      %v8732 = vunpack.c.l.b16 %v8574
      %v8733 = vunpack.c.l.b16 %v8575
      %v8734 = vunpack.c.l.b16 %v8576
      %v8735 = vunpack.c.l.b16 %v8577
      %v8736 = vunpack.c.l.b16 %v8578
      %v8737 = vunpack.c.l.b16 %v8579
      %v8738 = vunpack.c.l.b16 %v8580
      %v8739 = vunpack.c.l.b16 %v8581
      %v8740 = vunpack.c.l.b16 %v8582
      %v8741 = vunpack.c.l.b16 %v8583
      %v8742 = vunpack.c.l.b16 %v8584
      %v8743 = vunpack.c.l.b16 %v8585
      %v8744 = vunpack.c.l.b16 %v8586
      %v8745 = vunpack.c.l.b16 %v8587
      %v8746 = vunpack.c.l.b16 %v8588
      %v8747 = vunpack.c.l.b16 %v8589
      %v8748 = vunpack.c.l.b16 %v8590
      %v8749 = vunpack.c.l.b16 %v8591
      %v8750 = vunpack.c.l.b16 %v8592
      %v8751 = vunpack.c.l.b16 %v8593
      %v8752 = vunpack.c.l.b16 %v8594
      %v8753 = vunpack.c.l.b16 %v8595
      %v8754 = vunpack.c.l.b16 %v8596
      %v8755 = vunpack.c.l.b16 %v8597
      %v8756 = vunpack.c.l.b16 %v8598
      %v8757 = vunpack.c.l.b16 %v8599
      %v8758 = vunpack.c.l.b16 %v8600
      %v8759 = vunpack.c.l.b16 %v8601
      %v8760 = vunpack.c.l.b16 %v8602
      %v8761 = vunpack.c.l.b16 %v8603
      %v8762 = vunpack.c.l.b16 %v8604
      %v8763 = vunpack.c.l.b16 %v8605
      %v8764 = vunpack.c.l.b16 %v8606
      %v8765 = vunpack.c.l.b16 %v8607
      %v8766 = vunpack.c.l.b16 %v8608
      %v8767 = vunpack.c.l.b16 %v8609
      %v8768 = vunpack.c.l.b16 %v8610
      %v8769 = vunpack.c.l.b16 %v8611
      %v8770 = vunpack.c.l.b16 %v8612
      %v8771 = vunpack.c.l.b16 %v8613
      %v8772 = vunpack.c.l.b16 %v8614
      %v8773 = vunpack.c.l.b16 %v8615
      %v8774 = vunpack.c.l.b16 %v8616
      %v8775 = vunpack.c.l.b16 %v8617
      %v8776 = vunpack.c.l.b16 %v8618
      %v8777 = vunpack.c.l.b16 %v8619
      %v8778 = vunpack.c.l.b16 %v8620
      %v8779 = vunpack.c.l.b16 %v8621
      %v8780 = vunpack.c.l.b16 %v8622
      %v8781 = vunpack.c.l.b16 %v8623
      %v8782 = vunpack.c.l.b16 %v8624
      %v8783 = vunpack.c.l.b16 %v8625
      %v8784 = vunpack.c.l.b16 %v8626
      %v8785 = vunpack.c.l.b16 %v8627
      %v8786 = vunpack.c.l.b16 %v8628
      %v8787 = vunpack.c.l.b16 %v8629
      %v8788 = vpack.c.b16 %v8725, %v8724
      %v8789 = vpack.c.b16 %v8727, %v8726
      %v8790 = vpack.c.b16 %v8729, %v8728
      %v8791 = vpack.c.b16 %v8731, %v8730
      %v8792 = vpack.c.b16 %v8733, %v8732
      %v8793 = vpack.c.b16 %v8735, %v8734
      %v8794 = vpack.c.b16 %v8737, %v8736
      %v8795 = vpack.c.b16 %v8739, %v8738
      %v8796 = vpack.c.b16 %v8741, %v8740
      %v8797 = vpack.c.b16 %v8743, %v8742
      %v8798 = vpack.c.b16 %v8745, %v8744
      %v8799 = vpack.c.b16 %v8747, %v8746
      %v8800 = vpack.c.b16 %v8749, %v8748
      %v8801 = vpack.c.b16 %v8751, %v8750
      %v8802 = vpack.c.b16 %v8753, %v8752
      %v8803 = vpack.c.b16 %v8755, %v8754
      %v8804 = vpack.c.b16 %v8757, %v8756
      %v8805 = vpack.c.b16 %v8759, %v8758
      %v8806 = vpack.c.b16 %v8761, %v8760
      %v8807 = vpack.c.b16 %v8763, %v8762
      %v8808 = vpack.c.b16 %v8765, %v8764
      %v8809 = vpack.c.b16 %v8767, %v8766
      %v8810 = vpack.c.b16 %v8769, %v8768
      %v8811 = vpack.c.b16 %v8771, %v8770
      %v8812 = vpack.c.b16 %v8773, %v8772
      %v8813 = vpack.c.b16 %v8775, %v8774
      %v8814 = vpack.c.b16 %v8777, %v8776
      %v8815 = vpack.c.b16 %v8779, %v8778
      %v8816 = vpack.c.b16 %v8781, %v8780
      %v8817 = vpack.c.b16 %v8783, %v8782
      %v8818 = vpack.c.b16 %v8785, %v8784
      %v8819 = vpack.c.b16 %v8787, %v8786
      %8852 = vmatprep.subr.bf16.mxu0 0
      %8853 = vmatpush1.bf16.msra.mxu0 %v8795
      %8854 = vmatprep.subr.bf16.mxu0 0
      %8855 = vmatpush1.bf16.msra.mxu0 %v8794
      %8856 = vmatprep.subr.bf16.mxu0 0
      %8857 = vmatpush1.bf16.msra.mxu0 %v8793
      %8858 = vmatprep.subr.bf16.mxu0 0
      %8859 = vmatpush1.bf16.msra.mxu0 %v8792
      %8860 = vmatprep.subr.bf16.mxu0 0
      %8861 = vmatpush1.bf16.msra.mxu0 %v8791
      %8862 = vmatprep.subr.bf16.mxu0 0
      %8863 = vmatpush1.bf16.msra.mxu0 %v8790
      %8864 = vmatprep.subr.bf16.mxu0 0
      %8865 = vmatpush1.bf16.msra.mxu0 %v8789
      %8866 = vmatprep.subr.bf16.mxu0 0
      %8867 = vmatpush1.bf16.msra.mxu0 %v8788
      %8868 = vmatprep.subr.bf16.mxu0 0
      %8869 = vmatpush2.bf16.msra.mxu0 %v8803
      %8870 = vmatprep.subr.bf16.mxu0 0
      %8871 = vmatpush2.bf16.msra.mxu0 %v8802
      %8872 = vmatprep.subr.bf16.mxu0 0
      %8873 = vmatpush2.bf16.msra.mxu0 %v8801
      %8874 = vmatprep.subr.bf16.mxu0 0
      %8875 = vmatpush2.bf16.msra.mxu0 %v8800
      %8876 = vmatprep.subr.bf16.mxu0 0
      %8877 = vmatpush2.bf16.msra.mxu0 %v8799
      %8878 = vmatprep.subr.bf16.mxu0 0
      %8879 = vmatpush2.bf16.msra.mxu0 %v8798
      %8880 = vmatprep.subr.bf16.mxu0 0
      %8881 = vmatpush2.bf16.msra.mxu0 %v8797
      %8882 = vmatprep.subr.bf16.mxu0 0
      %8883 = vmatpush2.bf16.msra.mxu0 %v8796
      %8884 = vmatprep.mubr.bf16.mxu0 %v8653
      %8885 = vmatmul.mubr.bf16.gmra.mxu0 %v8646
      %v8886 = vpop.f32.mrf.mxu0
      %v8887 = vadd.f32 0.0, %v8886
      %v8888 = vpop.f32.mrf.mxu0
      %v8889 = vpop.f32.mrf.mxu0
      %v8890 = vpop.f32.mrf.mxu0
      %8891 = vdwg.mxu0
      %8892 = vmatprep.subr.bf16.mxu0 0
      %8893 = vmatpush1.bf16.msra.mxu0 %v8811
      %8894 = vmatprep.subr.bf16.mxu0 0
      %8895 = vmatpush1.bf16.msra.mxu0 %v8810
      %8896 = vmatprep.subr.bf16.mxu0 0
      %8897 = vmatpush1.bf16.msra.mxu0 %v8809
      %8898 = vmatprep.subr.bf16.mxu0 0
      %8899 = vmatpush1.bf16.msra.mxu0 %v8808
      %8900 = vmatprep.subr.bf16.mxu0 0
      %8901 = vmatpush1.bf16.msra.mxu0 %v8807
      %8902 = vmatprep.subr.bf16.mxu0 0
      %8903 = vmatpush1.bf16.msra.mxu0 %v8806
      %8904 = vmatprep.subr.bf16.mxu0 0
      %8905 = vmatpush1.bf16.msra.mxu0 %v8805
      %8906 = vmatprep.subr.bf16.mxu0 0
      %8907 = vmatpush1.bf16.msra.mxu0 %v8804
      %8908 = vmatprep.subr.bf16.mxu0 0
      %8909 = vmatpush2.bf16.msra.mxu0 %v8819
      %8910 = vmatprep.subr.bf16.mxu0 0
      %8911 = vmatpush2.bf16.msra.mxu0 %v8818
      %8912 = vmatprep.subr.bf16.mxu0 0
      %8913 = vmatpush2.bf16.msra.mxu0 %v8817
      %8914 = vmatprep.subr.bf16.mxu0 0
      %8915 = vmatpush2.bf16.msra.mxu0 %v8816
      %8916 = vmatprep.subr.bf16.mxu0 0
      %8917 = vmatpush2.bf16.msra.mxu0 %v8815
      %8918 = vmatprep.subr.bf16.mxu0 0
      %8919 = vmatpush2.bf16.msra.mxu0 %v8814
      %8920 = vmatprep.subr.bf16.mxu0 0
      %8921 = vmatpush2.bf16.msra.mxu0 %v8813
      %8922 = vmatprep.subr.bf16.mxu0 0
      %8923 = vmatpush2.bf16.msra.mxu0 %v8812
      %8924 = vmatprep.mubr.bf16.mxu0 %v8655
      %8925 = vmatmul.mubr.bf16.gmra.mxu0 %v8654
      %v8926 = vpop.f32.mrf.mxu0
      %v8927 = vadd.f32 %v8887, %v8926
      %v8928 = vpop.f32.mrf.mxu0
      %v8929 = vpop.f32.mrf.mxu0
      %v8930 = vpop.f32.mrf.mxu0
      %8931 = vdwg.mxu0
      %v8932 = vadd.f32 %v8530, %v8927
      %v8937 = vcombine.low %v6317, %v6318
      %v8938 = vcombine.low %v6319, %v6320
      %v8940 = vunpack.c.l.s4 1966171168
      %v8941 = vunpack.c.0.s8 %v8940
      %v8942 = vlaneseq
      %v8943 = vshrl.u32 %v8942, 7
      %v8944 = vsub.s32 %v8941, %v8943
      %v8945 = vrot.slane %v8937, %v8944
      %v8947 = vunpack.c.l.s4 1966171168
      %v8948 = vunpack.c.0.s8 %v8947
      %v8949 = vlaneseq
      %v8950 = vshrl.u32 %v8949, 7
      %v8951 = vsub.s32 %v8948, %v8950
      %v8952 = vrot.slane %v8938, %v8951
      %v8953 = vcombine.low %v8945, %v8952
      %v8955 = vunpack.c.l.s4 1966171168
      %v8956 = vunpack.c.0.s8 %v8955
      %v8957 = vlaneseq
      %v8958 = vshrl.u32 %v8957, 7
      %v8959 = vsub.s32 %v8956, %v8958
      %v8960 = vrot.slane %v8953, %v8959
      %s8961 = scalar_lea.vmem %s6, 1536
      %v8962 = vld [vmem:[%s8961] sm:$0xf]
      %v8963 = vld [vmem:[%s8961 + $0x4] sm:$0xf]
      %v8964 = vld [vmem:[%s8961 + $0x8] sm:$0xf]
      %v8965 = vld [vmem:[%s8961 + $0xc] sm:$0xf]
      %v8966 = vld [vmem:[%s8961 + $0x10] sm:$0xf]
      %v8967 = vld [vmem:[%s8961 + $0x14] sm:$0xf]
      %v8968 = vld [vmem:[%s8961 + $0x18] sm:$0xf]
      %v8969 = vld [vmem:[%s8961 + $0x1c] sm:$0xf]
      %v8970 = vld [vmem:[%s8961 + $0x20] sm:$0xf]
      %v8971 = vld [vmem:[%s8961 + $0x24] sm:$0xf]
      %v8972 = vld [vmem:[%s8961 + $0x28] sm:$0xf]
      %v8973 = vld [vmem:[%s8961 + $0x2c] sm:$0xf]
      %v8974 = vld [vmem:[%s8961 + $0x30] sm:$0xf]
      %v8975 = vld [vmem:[%s8961 + $0x34] sm:$0xf]
      %v8976 = vld [vmem:[%s8961 + $0x38] sm:$0xf]
      %v8977 = vld [vmem:[%s8961 + $0x3c] sm:$0xf]
      %v8978 = vld [vmem:[%s8961 + $0x40] sm:$0xf]
      %v8979 = vld [vmem:[%s8961 + $0x44] sm:$0xf]
      %v8980 = vld [vmem:[%s8961 + $0x48] sm:$0xf]
      %v8981 = vld [vmem:[%s8961 + $0x4c] sm:$0xf]
      %v8982 = vld [vmem:[%s8961 + $0x50] sm:$0xf]
      %v8983 = vld [vmem:[%s8961 + $0x54] sm:$0xf]
      %v8984 = vld [vmem:[%s8961 + $0x58] sm:$0xf]
      %v8985 = vld [vmem:[%s8961 + $0x5c] sm:$0xf]
      %v8986 = vld [vmem:[%s8961 + $0x60] sm:$0xf]
      %v8987 = vld [vmem:[%s8961 + $0x64] sm:$0xf]
      %v8988 = vld [vmem:[%s8961 + $0x68] sm:$0xf]
      %v8989 = vld [vmem:[%s8961 + $0x6c] sm:$0xf]
      %v8990 = vld [vmem:[%s8961 + $0x70] sm:$0xf]
      %v8991 = vld [vmem:[%s8961 + $0x74] sm:$0xf]
      %v8992 = vld [vmem:[%s8961 + $0x78] sm:$0xf]
      %v8993 = vld [vmem:[%s8961 + $0x7c] sm:$0xf]
      %v8994 = vld [vmem:[%s8961 + $0x80] sm:$0xf]
      %v8995 = vld [vmem:[%s8961 + $0x84] sm:$0xf]
      %v8996 = vld [vmem:[%s8961 + $0x88] sm:$0xf]
      %v8997 = vld [vmem:[%s8961 + $0x8c] sm:$0xf]
      %v8998 = vld [vmem:[%s8961 + $0x90] sm:$0xf]
      %v8999 = vld [vmem:[%s8961 + $0x94] sm:$0xf]
      %v9000 = vld [vmem:[%s8961 + $0x98] sm:$0xf]
      %v9001 = vld [vmem:[%s8961 + $0x9c] sm:$0xf]
      %v9002 = vld [vmem:[%s8961 + $0xa0] sm:$0xf]
      %v9003 = vld [vmem:[%s8961 + $0xa4] sm:$0xf]
      %v9004 = vld [vmem:[%s8961 + $0xa8] sm:$0xf]
      %v9005 = vld [vmem:[%s8961 + $0xac] sm:$0xf]
      %v9006 = vld [vmem:[%s8961 + $0xb0] sm:$0xf]
      %v9007 = vld [vmem:[%s8961 + $0xb4] sm:$0xf]
      %v9008 = vld [vmem:[%s8961 + $0xb8] sm:$0xf]
      %v9009 = vld [vmem:[%s8961 + $0xbc] sm:$0xf]
      %v9010 = vld [vmem:[%s8961 + $0xc0] sm:$0xf]
      %v9011 = vld [vmem:[%s8961 + $0xc4] sm:$0xf]
      %v9012 = vld [vmem:[%s8961 + $0xc8] sm:$0xf]
      %v9013 = vld [vmem:[%s8961 + $0xcc] sm:$0xf]
      %v9014 = vld [vmem:[%s8961 + $0xd0] sm:$0xf]
      %v9015 = vld [vmem:[%s8961 + $0xd4] sm:$0xf]
      %v9016 = vld [vmem:[%s8961 + $0xd8] sm:$0xf]
      %v9017 = vld [vmem:[%s8961 + $0xdc] sm:$0xf]
      %v9018 = vld [vmem:[%s8961 + $0xe0] sm:$0xf]
      %v9019 = vld [vmem:[%s8961 + $0xe4] sm:$0xf]
      %v9020 = vld [vmem:[%s8961 + $0xe8] sm:$0xf]
      %v9021 = vld [vmem:[%s8961 + $0xec] sm:$0xf]
      %v9022 = vld [vmem:[%s8961 + $0xf0] sm:$0xf]
      %v9023 = vld [vmem:[%s8961 + $0xf4] sm:$0xf]
      %v9024 = vld [vmem:[%s8961 + $0xf8] sm:$0xf]
      %v9025 = vld [vmem:[%s8961 + $0xfc] sm:$0xf]
      %v9026 = vcombine.low %v8162, %v8960
      %v9028 = vunpack.c.l.s4 1966171168
      %v9029 = vunpack.c.0.s8 %v9028
      %v9030 = vlaneseq
      %v9031 = vshrl.u32 %v9030, 7
      %v9032 = vsub.s32 %v9029, %v9031
      %v9033 = vrot.slane %v9026, %v9032
      %v9034 = vcombine.low %v7401, %v9033
      %v9035 = vcombine.high %v7401, %v9033
      %v9037 = vunpack.c.l.s4 1966171168
      %v9038 = vunpack.c.0.s8 %v9037
      %v9039 = vlaneseq
      %v9040 = vshrl.u32 %v9039, 7
      %v9041 = vsub.s32 %v9038, %v9040
      %v9042 = vrot.slane %v9034, %v9041
      %v9044 = vunpack.c.l.s4 1966171168
      %v9045 = vunpack.c.0.s8 %v9044
      %v9046 = vlaneseq
      %v9047 = vshrl.u32 %v9046, 7
      %v9048 = vsub.s32 %v9045, %v9047
      %v9049 = vrot.slane %v9035, %v9048
      %v9050 = vcombine.high %v9042, %v9042
      %v9051 = vcombine.high %v9049, %v9049
      %v9120 = vunpack.c.l.b16 %v8962
      %v9121 = vunpack.c.l.b16 %v8963
      %v9122 = vunpack.c.l.b16 %v8964
      %v9123 = vunpack.c.l.b16 %v8965
      %v9124 = vunpack.c.l.b16 %v8966
      %v9125 = vunpack.c.l.b16 %v8967
      %v9126 = vunpack.c.l.b16 %v8968
      %v9127 = vunpack.c.l.b16 %v8969
      %v9128 = vunpack.c.l.b16 %v8970
      %v9129 = vunpack.c.l.b16 %v8971
      %v9130 = vunpack.c.l.b16 %v8972
      %v9131 = vunpack.c.l.b16 %v8973
      %v9132 = vunpack.c.l.b16 %v8974
      %v9133 = vunpack.c.l.b16 %v8975
      %v9134 = vunpack.c.l.b16 %v8976
      %v9135 = vunpack.c.l.b16 %v8977
      %v9136 = vunpack.c.l.b16 %v8978
      %v9137 = vunpack.c.l.b16 %v8979
      %v9138 = vunpack.c.l.b16 %v8980
      %v9139 = vunpack.c.l.b16 %v8981
      %v9140 = vunpack.c.l.b16 %v8982
      %v9141 = vunpack.c.l.b16 %v8983
      %v9142 = vunpack.c.l.b16 %v8984
      %v9143 = vunpack.c.l.b16 %v8985
      %v9144 = vunpack.c.l.b16 %v8986
      %v9145 = vunpack.c.l.b16 %v8987
      %v9146 = vunpack.c.l.b16 %v8988
      %v9147 = vunpack.c.l.b16 %v8989
      %v9148 = vunpack.c.l.b16 %v8990
      %v9149 = vunpack.c.l.b16 %v8991
      %v9150 = vunpack.c.l.b16 %v8992
      %v9151 = vunpack.c.l.b16 %v8993
      %v9152 = vunpack.c.l.b16 %v8994
      %v9153 = vunpack.c.l.b16 %v8995
      %v9154 = vunpack.c.l.b16 %v8996
      %v9155 = vunpack.c.l.b16 %v8997
      %v9156 = vunpack.c.l.b16 %v8998
      %v9157 = vunpack.c.l.b16 %v8999
      %v9158 = vunpack.c.l.b16 %v9000
      %v9159 = vunpack.c.l.b16 %v9001
      %v9160 = vunpack.c.l.b16 %v9002
      %v9161 = vunpack.c.l.b16 %v9003
      %v9162 = vunpack.c.l.b16 %v9004
      %v9163 = vunpack.c.l.b16 %v9005
      %v9164 = vunpack.c.l.b16 %v9006
      %v9165 = vunpack.c.l.b16 %v9007
      %v9166 = vunpack.c.l.b16 %v9008
      %v9167 = vunpack.c.l.b16 %v9009
      %v9168 = vunpack.c.l.b16 %v9010
      %v9169 = vunpack.c.l.b16 %v9011
      %v9170 = vunpack.c.l.b16 %v9012
      %v9171 = vunpack.c.l.b16 %v9013
      %v9172 = vunpack.c.l.b16 %v9014
      %v9173 = vunpack.c.l.b16 %v9015
      %v9174 = vunpack.c.l.b16 %v9016
      %v9175 = vunpack.c.l.b16 %v9017
      %v9176 = vunpack.c.l.b16 %v9018
      %v9177 = vunpack.c.l.b16 %v9019
      %v9178 = vunpack.c.l.b16 %v9020
      %v9179 = vunpack.c.l.b16 %v9021
      %v9180 = vunpack.c.l.b16 %v9022
      %v9181 = vunpack.c.l.b16 %v9023
      %v9182 = vunpack.c.l.b16 %v9024
      %v9183 = vunpack.c.l.b16 %v9025
      %v9184 = vpack.c.b16 %v9121, %v9120
      %v9185 = vpack.c.b16 %v9123, %v9122
      %v9186 = vpack.c.b16 %v9125, %v9124
      %v9187 = vpack.c.b16 %v9127, %v9126
      %v9188 = vpack.c.b16 %v9129, %v9128
      %v9189 = vpack.c.b16 %v9131, %v9130
      %v9190 = vpack.c.b16 %v9133, %v9132
      %v9191 = vpack.c.b16 %v9135, %v9134
      %v9192 = vpack.c.b16 %v9137, %v9136
      %v9193 = vpack.c.b16 %v9139, %v9138
      %v9194 = vpack.c.b16 %v9141, %v9140
      %v9195 = vpack.c.b16 %v9143, %v9142
      %v9196 = vpack.c.b16 %v9145, %v9144
      %v9197 = vpack.c.b16 %v9147, %v9146
      %v9198 = vpack.c.b16 %v9149, %v9148
      %v9199 = vpack.c.b16 %v9151, %v9150
      %v9200 = vpack.c.b16 %v9153, %v9152
      %v9201 = vpack.c.b16 %v9155, %v9154
      %v9202 = vpack.c.b16 %v9157, %v9156
      %v9203 = vpack.c.b16 %v9159, %v9158
      %v9204 = vpack.c.b16 %v9161, %v9160
      %v9205 = vpack.c.b16 %v9163, %v9162
      %v9206 = vpack.c.b16 %v9165, %v9164
      %v9207 = vpack.c.b16 %v9167, %v9166
      %v9208 = vpack.c.b16 %v9169, %v9168
      %v9209 = vpack.c.b16 %v9171, %v9170
      %v9210 = vpack.c.b16 %v9173, %v9172
      %v9211 = vpack.c.b16 %v9175, %v9174
      %v9212 = vpack.c.b16 %v9177, %v9176
      %v9213 = vpack.c.b16 %v9179, %v9178
      %v9214 = vpack.c.b16 %v9181, %v9180
      %v9215 = vpack.c.b16 %v9183, %v9182
      %9248 = vmatprep.subr.bf16.mxu0 0
      %9249 = vmatpush1.bf16.msra.mxu0 %v9191
      %9250 = vmatprep.subr.bf16.mxu0 0
      %9251 = vmatpush1.bf16.msra.mxu0 %v9190
      %9252 = vmatprep.subr.bf16.mxu0 0
      %9253 = vmatpush1.bf16.msra.mxu0 %v9189
      %9254 = vmatprep.subr.bf16.mxu0 0
      %9255 = vmatpush1.bf16.msra.mxu0 %v9188
      %9256 = vmatprep.subr.bf16.mxu0 0
      %9257 = vmatpush1.bf16.msra.mxu0 %v9187
      %9258 = vmatprep.subr.bf16.mxu0 0
      %9259 = vmatpush1.bf16.msra.mxu0 %v9186
      %9260 = vmatprep.subr.bf16.mxu0 0
      %9261 = vmatpush1.bf16.msra.mxu0 %v9185
      %9262 = vmatprep.subr.bf16.mxu0 0
      %9263 = vmatpush1.bf16.msra.mxu0 %v9184
      %9264 = vmatprep.subr.bf16.mxu0 0
      %9265 = vmatpush2.bf16.msra.mxu0 %v9199
      %9266 = vmatprep.subr.bf16.mxu0 0
      %9267 = vmatpush2.bf16.msra.mxu0 %v9198
      %9268 = vmatprep.subr.bf16.mxu0 0
      %9269 = vmatpush2.bf16.msra.mxu0 %v9197
      %9270 = vmatprep.subr.bf16.mxu0 0
      %9271 = vmatpush2.bf16.msra.mxu0 %v9196
      %9272 = vmatprep.subr.bf16.mxu0 0
      %9273 = vmatpush2.bf16.msra.mxu0 %v9195
      %9274 = vmatprep.subr.bf16.mxu0 0
      %9275 = vmatpush2.bf16.msra.mxu0 %v9194
      %9276 = vmatprep.subr.bf16.mxu0 0
      %9277 = vmatpush2.bf16.msra.mxu0 %v9193
      %9278 = vmatprep.subr.bf16.mxu0 0
      %9279 = vmatpush2.bf16.msra.mxu0 %v9192
      %9280 = vmatprep.mubr.bf16.mxu0 %v9049
      %9281 = vmatmul.mubr.bf16.gmra.mxu0 %v9042
      %v9282 = vpop.f32.mrf.mxu0
      %v9283 = vadd.f32 0.0, %v9282
      %v9284 = vpop.f32.mrf.mxu0
      %v9285 = vpop.f32.mrf.mxu0
      %v9286 = vpop.f32.mrf.mxu0
      %9287 = vdwg.mxu0
      %9288 = vmatprep.subr.bf16.mxu0 0
      %9289 = vmatpush1.bf16.msra.mxu0 %v9207
      %9290 = vmatprep.subr.bf16.mxu0 0
      %9291 = vmatpush1.bf16.msra.mxu0 %v9206
      %9292 = vmatprep.subr.bf16.mxu0 0
      %9293 = vmatpush1.bf16.msra.mxu0 %v9205
      %9294 = vmatprep.subr.bf16.mxu0 0
      %9295 = vmatpush1.bf16.msra.mxu0 %v9204
      %9296 = vmatprep.subr.bf16.mxu0 0
      %9297 = vmatpush1.bf16.msra.mxu0 %v9203
      %9298 = vmatprep.subr.bf16.mxu0 0
      %9299 = vmatpush1.bf16.msra.mxu0 %v9202
      %9300 = vmatprep.subr.bf16.mxu0 0
      %9301 = vmatpush1.bf16.msra.mxu0 %v9201
      %9302 = vmatprep.subr.bf16.mxu0 0
      %9303 = vmatpush1.bf16.msra.mxu0 %v9200
      %9304 = vmatprep.subr.bf16.mxu0 0
      %9305 = vmatpush2.bf16.msra.mxu0 %v9215
      %9306 = vmatprep.subr.bf16.mxu0 0
      %9307 = vmatpush2.bf16.msra.mxu0 %v9214
      %9308 = vmatprep.subr.bf16.mxu0 0
      %9309 = vmatpush2.bf16.msra.mxu0 %v9213
      %9310 = vmatprep.subr.bf16.mxu0 0
      %9311 = vmatpush2.bf16.msra.mxu0 %v9212
      %9312 = vmatprep.subr.bf16.mxu0 0
      %9313 = vmatpush2.bf16.msra.mxu0 %v9211
      %9314 = vmatprep.subr.bf16.mxu0 0
      %9315 = vmatpush2.bf16.msra.mxu0 %v9210
      %9316 = vmatprep.subr.bf16.mxu0 0
      %9317 = vmatpush2.bf16.msra.mxu0 %v9209
      %9318 = vmatprep.subr.bf16.mxu0 0
      %9319 = vmatpush2.bf16.msra.mxu0 %v9208
      %9320 = vmatprep.mubr.bf16.mxu0 %v9051
      %9321 = vmatmul.mubr.bf16.gmra.mxu0 %v9050
      %v9322 = vpop.f32.mrf.mxu0
      %v9323 = vadd.f32 %v9283, %v9322
      %v9324 = vpop.f32.mrf.mxu0
      %v9325 = vpop.f32.mrf.mxu0
      %v9326 = vpop.f32.mrf.mxu0
      %9327 = vdwg.mxu0
      %v9328 = vadd.f32 %v8932, %v9323
      %v9329 = vcombine.high %v8945, %v8952
      %v9331 = vunpack.c.l.s4 1966171168
      %v9332 = vunpack.c.0.s8 %v9331
      %v9333 = vlaneseq
      %v9334 = vshrl.u32 %v9333, 7
      %v9335 = vsub.s32 %v9332, %v9334
      %v9336 = vrot.slane %v9329, %v9335
      %v9338 = vshrl.u32 %v8960, 16
      %v9340 = vrot.slane %v9338, 7
      %v9341 = vrot.slane %v9340, 1
      %v9343 = vshll.u32 %v9336, 16
      %v9345 = vsel %vm6543, %v9341, %v9343
      %s9346 = scalar_lea.vmem %s6, 1792
      %v9347 = vld [vmem:[%s9346] sm:$0xf]
      %v9348 = vld [vmem:[%s9346 + $0x4] sm:$0xf]
      %v9349 = vld [vmem:[%s9346 + $0x8] sm:$0xf]
      %v9350 = vld [vmem:[%s9346 + $0xc] sm:$0xf]
      %v9351 = vld [vmem:[%s9346 + $0x10] sm:$0xf]
      %v9352 = vld [vmem:[%s9346 + $0x14] sm:$0xf]
      %v9353 = vld [vmem:[%s9346 + $0x18] sm:$0xf]
      %v9354 = vld [vmem:[%s9346 + $0x1c] sm:$0xf]
      %v9355 = vld [vmem:[%s9346 + $0x20] sm:$0xf]
      %v9356 = vld [vmem:[%s9346 + $0x24] sm:$0xf]
      %v9357 = vld [vmem:[%s9346 + $0x28] sm:$0xf]
      %v9358 = vld [vmem:[%s9346 + $0x2c] sm:$0xf]
      %v9359 = vld [vmem:[%s9346 + $0x30] sm:$0xf]
      %v9360 = vld [vmem:[%s9346 + $0x34] sm:$0xf]
      %v9361 = vld [vmem:[%s9346 + $0x38] sm:$0xf]
      %v9362 = vld [vmem:[%s9346 + $0x3c] sm:$0xf]
      %v9363 = vld [vmem:[%s9346 + $0x40] sm:$0xf]
      %v9364 = vld [vmem:[%s9346 + $0x44] sm:$0xf]
      %v9365 = vld [vmem:[%s9346 + $0x48] sm:$0xf]
      %v9366 = vld [vmem:[%s9346 + $0x4c] sm:$0xf]
      %v9367 = vld [vmem:[%s9346 + $0x50] sm:$0xf]
      %v9368 = vld [vmem:[%s9346 + $0x54] sm:$0xf]
      %v9369 = vld [vmem:[%s9346 + $0x58] sm:$0xf]
      %v9370 = vld [vmem:[%s9346 + $0x5c] sm:$0xf]
      %v9371 = vld [vmem:[%s9346 + $0x60] sm:$0xf]
      %v9372 = vld [vmem:[%s9346 + $0x64] sm:$0xf]
      %v9373 = vld [vmem:[%s9346 + $0x68] sm:$0xf]
      %v9374 = vld [vmem:[%s9346 + $0x6c] sm:$0xf]
      %v9375 = vld [vmem:[%s9346 + $0x70] sm:$0xf]
      %v9376 = vld [vmem:[%s9346 + $0x74] sm:$0xf]
      %v9377 = vld [vmem:[%s9346 + $0x78] sm:$0xf]
      %v9378 = vld [vmem:[%s9346 + $0x7c] sm:$0xf]
      %v9379 = vld [vmem:[%s9346 + $0x80] sm:$0xf]
      %v9380 = vld [vmem:[%s9346 + $0x84] sm:$0xf]
      %v9381 = vld [vmem:[%s9346 + $0x88] sm:$0xf]
      %v9382 = vld [vmem:[%s9346 + $0x8c] sm:$0xf]
      %v9383 = vld [vmem:[%s9346 + $0x90] sm:$0xf]
      %v9384 = vld [vmem:[%s9346 + $0x94] sm:$0xf]
      %v9385 = vld [vmem:[%s9346 + $0x98] sm:$0xf]
      %v9386 = vld [vmem:[%s9346 + $0x9c] sm:$0xf]
      %v9387 = vld [vmem:[%s9346 + $0xa0] sm:$0xf]
      %v9388 = vld [vmem:[%s9346 + $0xa4] sm:$0xf]
      %v9389 = vld [vmem:[%s9346 + $0xa8] sm:$0xf]
      %v9390 = vld [vmem:[%s9346 + $0xac] sm:$0xf]
      %v9391 = vld [vmem:[%s9346 + $0xb0] sm:$0xf]
      %v9392 = vld [vmem:[%s9346 + $0xb4] sm:$0xf]
      %v9393 = vld [vmem:[%s9346 + $0xb8] sm:$0xf]
      %v9394 = vld [vmem:[%s9346 + $0xbc] sm:$0xf]
      %v9395 = vld [vmem:[%s9346 + $0xc0] sm:$0xf]
      %v9396 = vld [vmem:[%s9346 + $0xc4] sm:$0xf]
      %v9397 = vld [vmem:[%s9346 + $0xc8] sm:$0xf]
      %v9398 = vld [vmem:[%s9346 + $0xcc] sm:$0xf]
      %v9399 = vld [vmem:[%s9346 + $0xd0] sm:$0xf]
      %v9400 = vld [vmem:[%s9346 + $0xd4] sm:$0xf]
      %v9401 = vld [vmem:[%s9346 + $0xd8] sm:$0xf]
      %v9402 = vld [vmem:[%s9346 + $0xdc] sm:$0xf]
      %v9403 = vld [vmem:[%s9346 + $0xe0] sm:$0xf]
      %v9404 = vld [vmem:[%s9346 + $0xe4] sm:$0xf]
      %v9405 = vld [vmem:[%s9346 + $0xe8] sm:$0xf]
      %v9406 = vld [vmem:[%s9346 + $0xec] sm:$0xf]
      %v9407 = vld [vmem:[%s9346 + $0xf0] sm:$0xf]
      %v9408 = vld [vmem:[%s9346 + $0xf4] sm:$0xf]
      %v9409 = vld [vmem:[%s9346 + $0xf8] sm:$0xf]
      %v9410 = vld [vmem:[%s9346 + $0xfc] sm:$0xf]
      %v9411 = vcombine.low %v8564, %v9345
      %v9413 = vunpack.c.l.s4 1966171168
      %v9414 = vunpack.c.0.s8 %v9413
      %v9415 = vlaneseq
      %v9416 = vshrl.u32 %v9415, 7
      %v9417 = vsub.s32 %v9414, %v9416
      %v9418 = vrot.slane %v9411, %v9417
      %v9419 = vcombine.low %v7811, %v9418
      %v9420 = vcombine.high %v7811, %v9418
      %v9422 = vunpack.c.l.s4 1966171168
      %v9423 = vunpack.c.0.s8 %v9422
      %v9424 = vlaneseq
      %v9425 = vshrl.u32 %v9424, 7
      %v9426 = vsub.s32 %v9423, %v9425
      %v9427 = vrot.slane %v9419, %v9426
      %v9429 = vunpack.c.l.s4 1966171168
      %v9430 = vunpack.c.0.s8 %v9429
      %v9431 = vlaneseq
      %v9432 = vshrl.u32 %v9431, 7
      %v9433 = vsub.s32 %v9430, %v9432
      %v9434 = vrot.slane %v9420, %v9433
      %v9435 = vcombine.high %v9427, %v9427
      %v9436 = vcombine.high %v9434, %v9434
      %v9505 = vunpack.c.l.b16 %v9347
      %v9506 = vunpack.c.l.b16 %v9348
      %v9507 = vunpack.c.l.b16 %v9349
      %v9508 = vunpack.c.l.b16 %v9350
      %v9509 = vunpack.c.l.b16 %v9351
      %v9510 = vunpack.c.l.b16 %v9352
      %v9511 = vunpack.c.l.b16 %v9353
      %v9512 = vunpack.c.l.b16 %v9354
      %v9513 = vunpack.c.l.b16 %v9355
      %v9514 = vunpack.c.l.b16 %v9356
      %v9515 = vunpack.c.l.b16 %v9357
      %v9516 = vunpack.c.l.b16 %v9358
      %v9517 = vunpack.c.l.b16 %v9359
      %v9518 = vunpack.c.l.b16 %v9360
      %v9519 = vunpack.c.l.b16 %v9361
      %v9520 = vunpack.c.l.b16 %v9362
      %v9521 = vunpack.c.l.b16 %v9363
      %v9522 = vunpack.c.l.b16 %v9364
      %v9523 = vunpack.c.l.b16 %v9365
      %v9524 = vunpack.c.l.b16 %v9366
      %v9525 = vunpack.c.l.b16 %v9367
      %v9526 = vunpack.c.l.b16 %v9368
      %v9527 = vunpack.c.l.b16 %v9369
      %v9528 = vunpack.c.l.b16 %v9370
      %v9529 = vunpack.c.l.b16 %v9371
      %v9530 = vunpack.c.l.b16 %v9372
      %v9531 = vunpack.c.l.b16 %v9373
      %v9532 = vunpack.c.l.b16 %v9374
      %v9533 = vunpack.c.l.b16 %v9375
      %v9534 = vunpack.c.l.b16 %v9376
      %v9535 = vunpack.c.l.b16 %v9377
      %v9536 = vunpack.c.l.b16 %v9378
      %v9537 = vunpack.c.l.b16 %v9379
      %v9538 = vunpack.c.l.b16 %v9380
      %v9539 = vunpack.c.l.b16 %v9381
      %v9540 = vunpack.c.l.b16 %v9382
      %v9541 = vunpack.c.l.b16 %v9383
      %v9542 = vunpack.c.l.b16 %v9384
      %v9543 = vunpack.c.l.b16 %v9385
      %v9544 = vunpack.c.l.b16 %v9386
      %v9545 = vunpack.c.l.b16 %v9387
      %v9546 = vunpack.c.l.b16 %v9388
      %v9547 = vunpack.c.l.b16 %v9389
      %v9548 = vunpack.c.l.b16 %v9390
      %v9549 = vunpack.c.l.b16 %v9391
      %v9550 = vunpack.c.l.b16 %v9392
      %v9551 = vunpack.c.l.b16 %v9393
      %v9552 = vunpack.c.l.b16 %v9394
      %v9553 = vunpack.c.l.b16 %v9395
      %v9554 = vunpack.c.l.b16 %v9396
      %v9555 = vunpack.c.l.b16 %v9397
      %v9556 = vunpack.c.l.b16 %v9398
      %v9557 = vunpack.c.l.b16 %v9399
      %v9558 = vunpack.c.l.b16 %v9400
      %v9559 = vunpack.c.l.b16 %v9401
      %v9560 = vunpack.c.l.b16 %v9402
      %v9561 = vunpack.c.l.b16 %v9403
      %v9562 = vunpack.c.l.b16 %v9404
      %v9563 = vunpack.c.l.b16 %v9405
      %v9564 = vunpack.c.l.b16 %v9406
      %v9565 = vunpack.c.l.b16 %v9407
      %v9566 = vunpack.c.l.b16 %v9408
      %v9567 = vunpack.c.l.b16 %v9409
      %v9568 = vunpack.c.l.b16 %v9410
      %v9569 = vpack.c.b16 %v9506, %v9505
      %v9570 = vpack.c.b16 %v9508, %v9507
      %v9571 = vpack.c.b16 %v9510, %v9509
      %v9572 = vpack.c.b16 %v9512, %v9511
      %v9573 = vpack.c.b16 %v9514, %v9513
      %v9574 = vpack.c.b16 %v9516, %v9515
      %v9575 = vpack.c.b16 %v9518, %v9517
      %v9576 = vpack.c.b16 %v9520, %v9519
      %v9577 = vpack.c.b16 %v9522, %v9521
      %v9578 = vpack.c.b16 %v9524, %v9523
      %v9579 = vpack.c.b16 %v9526, %v9525
      %v9580 = vpack.c.b16 %v9528, %v9527
      %v9581 = vpack.c.b16 %v9530, %v9529
      %v9582 = vpack.c.b16 %v9532, %v9531
      %v9583 = vpack.c.b16 %v9534, %v9533
      %v9584 = vpack.c.b16 %v9536, %v9535
      %v9585 = vpack.c.b16 %v9538, %v9537
      %v9586 = vpack.c.b16 %v9540, %v9539
      %v9587 = vpack.c.b16 %v9542, %v9541
      %v9588 = vpack.c.b16 %v9544, %v9543
      %v9589 = vpack.c.b16 %v9546, %v9545
      %v9590 = vpack.c.b16 %v9548, %v9547
      %v9591 = vpack.c.b16 %v9550, %v9549
      %v9592 = vpack.c.b16 %v9552, %v9551
      %v9593 = vpack.c.b16 %v9554, %v9553
      %v9594 = vpack.c.b16 %v9556, %v9555
      %v9595 = vpack.c.b16 %v9558, %v9557
      %v9596 = vpack.c.b16 %v9560, %v9559
      %v9597 = vpack.c.b16 %v9562, %v9561
      %v9598 = vpack.c.b16 %v9564, %v9563
      %v9599 = vpack.c.b16 %v9566, %v9565
      %v9600 = vpack.c.b16 %v9568, %v9567
      %9633 = vmatprep.subr.bf16.mxu0 0
      %9634 = vmatpush1.bf16.msra.mxu0 %v9576
      %9635 = vmatprep.subr.bf16.mxu0 0
      %9636 = vmatpush1.bf16.msra.mxu0 %v9575
      %9637 = vmatprep.subr.bf16.mxu0 0
      %9638 = vmatpush1.bf16.msra.mxu0 %v9574
      %9639 = vmatprep.subr.bf16.mxu0 0
      %9640 = vmatpush1.bf16.msra.mxu0 %v9573
      %9641 = vmatprep.subr.bf16.mxu0 0
      %9642 = vmatpush1.bf16.msra.mxu0 %v9572
      %9643 = vmatprep.subr.bf16.mxu0 0
      %9644 = vmatpush1.bf16.msra.mxu0 %v9571
      %9645 = vmatprep.subr.bf16.mxu0 0
      %9646 = vmatpush1.bf16.msra.mxu0 %v9570
      %9647 = vmatprep.subr.bf16.mxu0 0
      %9648 = vmatpush1.bf16.msra.mxu0 %v9569
      %9649 = vmatprep.subr.bf16.mxu0 0
      %9650 = vmatpush2.bf16.msra.mxu0 %v9584
      %9651 = vmatprep.subr.bf16.mxu0 0
      %9652 = vmatpush2.bf16.msra.mxu0 %v9583
      %9653 = vmatprep.subr.bf16.mxu0 0
      %9654 = vmatpush2.bf16.msra.mxu0 %v9582
      %9655 = vmatprep.subr.bf16.mxu0 0
      %9656 = vmatpush2.bf16.msra.mxu0 %v9581
      %9657 = vmatprep.subr.bf16.mxu0 0
      %9658 = vmatpush2.bf16.msra.mxu0 %v9580
      %9659 = vmatprep.subr.bf16.mxu0 0
      %9660 = vmatpush2.bf16.msra.mxu0 %v9579
      %9661 = vmatprep.subr.bf16.mxu0 0
      %9662 = vmatpush2.bf16.msra.mxu0 %v9578
      %9663 = vmatprep.subr.bf16.mxu0 0
      %9664 = vmatpush2.bf16.msra.mxu0 %v9577
      %9665 = vmatprep.mubr.bf16.mxu0 %v9434
      %9666 = vmatmul.mubr.bf16.gmra.mxu0 %v9427
      %v9667 = vpop.f32.mrf.mxu0
      %v9668 = vadd.f32 0.0, %v9667
      %v9669 = vpop.f32.mrf.mxu0
      %v9670 = vpop.f32.mrf.mxu0
      %v9671 = vpop.f32.mrf.mxu0
      %9672 = vdwg.mxu0
      %9673 = vmatprep.subr.bf16.mxu0 0
      %9674 = vmatpush1.bf16.msra.mxu0 %v9592
      %9675 = vmatprep.subr.bf16.mxu0 0
      %9676 = vmatpush1.bf16.msra.mxu0 %v9591
      %9677 = vmatprep.subr.bf16.mxu0 0
      %9678 = vmatpush1.bf16.msra.mxu0 %v9590
      %9679 = vmatprep.subr.bf16.mxu0 0
      %9680 = vmatpush1.bf16.msra.mxu0 %v9589
      %9681 = vmatprep.subr.bf16.mxu0 0
      %9682 = vmatpush1.bf16.msra.mxu0 %v9588
      %9683 = vmatprep.subr.bf16.mxu0 0
      %9684 = vmatpush1.bf16.msra.mxu0 %v9587
      %9685 = vmatprep.subr.bf16.mxu0 0
      %9686 = vmatpush1.bf16.msra.mxu0 %v9586
      %9687 = vmatprep.subr.bf16.mxu0 0
      %9688 = vmatpush1.bf16.msra.mxu0 %v9585
      %9689 = vmatprep.subr.bf16.mxu0 0
      %9690 = vmatpush2.bf16.msra.mxu0 %v9600
      %9691 = vmatprep.subr.bf16.mxu0 0
      %9692 = vmatpush2.bf16.msra.mxu0 %v9599
      %9693 = vmatprep.subr.bf16.mxu0 0
      %9694 = vmatpush2.bf16.msra.mxu0 %v9598
      %9695 = vmatprep.subr.bf16.mxu0 0
      %9696 = vmatpush2.bf16.msra.mxu0 %v9597
      %9697 = vmatprep.subr.bf16.mxu0 0
      %9698 = vmatpush2.bf16.msra.mxu0 %v9596
      %9699 = vmatprep.subr.bf16.mxu0 0
      %9700 = vmatpush2.bf16.msra.mxu0 %v9595
      %9701 = vmatprep.subr.bf16.mxu0 0
      %9702 = vmatpush2.bf16.msra.mxu0 %v9594
      %9703 = vmatprep.subr.bf16.mxu0 0
      %9704 = vmatpush2.bf16.msra.mxu0 %v9593
      %9705 = vmatprep.mubr.bf16.mxu0 %v9436
      %9706 = vmatmul.mubr.bf16.gmra.mxu0 %v9435
      %v9707 = vpop.f32.mrf.mxu0
      %v9708 = vadd.f32 %v9668, %v9707
      %v9709 = vpop.f32.mrf.mxu0
      %v9710 = vpop.f32.mrf.mxu0
      %v9711 = vpop.f32.mrf.mxu0
      %9712 = vdwg.mxu0
      %v9713 = vadd.f32 %v9328, %v9708
      %v9714 = vld [vmem:[%s7] sm:$0x1]
      %v9716 = vlaneseq
      %v9717 = vshrl.u32 %v9716, 7
      %v9718 = vsub.s32 0, %v9717
      %v9719 = vrot.slane %v9714, %v9718
      %v9721 = vadd.f32 %v9713, %v9719
      %v9722 = vsub.f32 0.0, %v9721
      %v9723 = vmul.f32 %v9722, 1.442695
      %v9724 = vpow.pop %v9723
      %v9725 = vadd.f32 %v9724, 1.0
      %v9726 = vrcp.pop %v9725
      %v9727 = vmul.f32 1.0, %v9726
      %v9728 = vadd.f32 %v9727, 2.0
      %v9729 = vmul.f32 %v9727, %v9728
      %v9730 = vmul.f32 %v9721, %v9729
      %v9731 = vadd.f32 %v9729, 2.0
      %v9732 = vrcp.pop %v9731
      %v9733 = vmul.f32 %v9730, %v9732
      %v9734 = vrot.slane %v9733, 4
      %v9735 = vadd.f32 %v9733, %v9734
      %v9736 = vrot.slane %v9735, 2
      %v9737 = vadd.f32 %v9735, %v9736
      %v9738 = vrot.slane %v9737, 1
      %v9739 = vadd.f32 %v9737, %v9738
      %v9740 = vmul.f32 %v9739, 0.125
      %v9741 = vsub.f32 %v9733, %v9740
      %v9742 = vmul.f32 %v9741, %v9741
      %v9743 = vrot.slane %v9742, 4
      %v9744 = vadd.f32 %v9742, %v9743
      %v9745 = vrot.slane %v9744, 2
      %v9746 = vadd.f32 %v9744, %v9745
      %v9747 = vrot.slane %v9746, 1
      %v9748 = vadd.f32 %v9746, %v9747
      %v9749 = vmul.f32 %v9748, 0.125
      %v9750 = vadd.f32 %v9749, 1e-05
      %v9751 = vrsqrt.pop %v9750
      %v9752 = vmul.f32 %v9741, %v9751
      %vm9753 = vcmp.ge.f32.partialorder %v9752, 0.0
      %v9754 = vmul.f32 %v9752, 0.2
      %v9755 = vsel %vm9753, %v9752, %v9754
      %v9756 = vld [vmem:[%s8] sm:$0xff]
      %v9757 = vmul.f32 %v9755, %v9756
      %9758 = vadd.xlane.f32.xlu0 %v9757
      %v9759 = vpop.xlane.xlu0 %9758
      %v9760 = vrot.slane %v9759, 4
      %v9761 = vadd.f32 %v9759, %v9760
      %v9762 = vrot.slane %v9761, 2
      %v9763 = vadd.f32 %v9761, %v9762
      %v9764 = vrot.slane %v9763, 1
      %v9765 = vadd.f32 %v9763, %v9764
      %v9766 = vld [vmem:[#allocation4] sm:$0x1]
      %v9767 = vadd.f32 %v9765, %v9766
      %v9768 = vsub.f32 0.0, %v9767
      %v9769 = vmul.f32 %v9768, 1.442695
      %v9770 = vpow.pop %v9769
      %v9771 = vadd.f32 %v9770, 1.0
      %v9772 = vrcp.pop %v9771
      %v9773 = vmul.f32 1.0, %v9772
      %v9774 = vadd.f32 %v9773, 2.0
      %v9775 = vmul.f32 %v9773, %v9774
      %v9776 = vmul.f32 %v9767, %v9775
      %v9777 = vadd.f32 %v9775, 2.0
      %v9778 = vrcp.pop %v9777
      %v9779 = vmul.f32 %v9776, %v9778
      %vm9780 = vcmask 0
      %9781 = vst.msk [vmem:[%s357] sm:$0x1] %vm9780, %v9779
      %p9782 = scmp.lt.s32.totalorder %s23, 1
      %s9783 = scalar_select %p9782, %s23, 1
      %s9784 = scalar_lea.vmem %s10, %s9783
      // Predicated region
      $region61: #{spectral_discriminator_forward.1} parent=59 // pred_check
        %p9785 = pneg %p256
      $region62: #{spectral_discriminator_forward.1} parent=59 // pred_check_branch
        %9787 = sbr.rel (%p9785) target = $region64
      $region63: #{spectral_discriminator_forward.1} parent=59 // pred_region
        _
      $region64: #{spectral_discriminator_forward.1} parent=59 // pred_fallthru
        _
    $region60: #{spectral_discriminator_forward.1} parent=5 // pred_fallthru
      _
    %p9788 = scmp.le.s32.totalorder 2, %s18
    // Predicated region
    $region65: #{spectral_discriminator_forward.1} parent=5 // pred_check
      %p9789 = pneg %p9788
    $region66: #{spectral_discriminator_forward.1} parent=5 // pred_check_branch
      %9791 = sbr.rel (%p9789) target = $region68
    $region67: #{spectral_discriminator_forward.1} parent=5 // pred_region
      %s9792 = ssub.s32 %s18, 2
      // Predicated region
      $region69: #{spectral_discriminator_forward.1} parent=67 // pred_check
        %p9793 = pneg %p262
      $region70: #{spectral_discriminator_forward.1} parent=67 // pred_check_branch
        %9795 = sbr.rel (%p9793) target = $region72
      $region71: #{spectral_discriminator_forward.1} parent=67 // pred_region
        %p9796 = scmp.lt.s32.totalorder %s24, 1
        %s9797 = scalar_select %p9796, %s24, 1
        %s9798 = scalar_lea.vmem %s10, %s9797
      $region72: #{spectral_discriminator_forward.1} parent=67 // pred_fallthru
        _
    $region68: #{spectral_discriminator_forward.1} parent=5 // pred_fallthru
      _
  $region6: #{spectral_discriminator_forward.1} parent=0 // loop_footer
    %s22 = sadd.s32 1, %s18
  $region7: #{spectral_discriminator_forward.1} parent=0 // loop_footer_branch
    %17 = sbr.rel target = $region3
  $region8: #{spectral_discriminator_forward.1} parent=0 // loop_exit
    _

</llo_original>
